<compile_context>
chip_gen: v7x
topology: tpu7x:2x2x1
jax: 0.10.0
libtpu: 0.0.40
codegen_flags: <defaults>
</compile_context>

<pallas_src>
import functools

import jax
import jax.numpy as jnp
import numpy as np
from jax.experimental import pallas as pl
from jax.experimental.pallas import tpu as pltpu


# ----------------------------------------------------------------------------
# Kernel
# ----------------------------------------------------------------------------
def _conv3x3_bn_relu(xp, w_ref, s, b, H, W, Cin, Cout):
    """xp: (H+2, W+2, Cin) zero-padded image (f32 value).

    3x3 'same' conv as 9 shifted plain 2-D MXU matmuls
    (H*W, Cin) @ (Cin, Cout), accumulated in f32, followed by the folded
    BatchNorm affine and ReLU.  Returns (H*W, Cout) f32.
    """
    acc = jnp.zeros((H * W, Cout), jnp.float32)
    for t in range(9):
        dy, dx = divmod(t, 3)
        patch = xp[dy:dy + H, dx:dx + W, :].reshape(H * W, Cin)
        acc = acc + jnp.dot(patch, w_ref[t],
                            preferred_element_type=jnp.float32)
    return jnp.maximum(acc * s + b, 0.0)


def _unet_dec_kernel(x_ref, w1_ref, s1_ref, b1_ref, w2_ref, s2_ref, b2_ref,
                     o_ref, xpad_ref, ypad_ref, row_ref,
                     *, H, W, Cin, Cmid, Cout):
    # ---- zero-pad the input tile inside VMEM (no wrapper jnp.pad HBM trip) --
    xpad_ref[...] = jnp.zeros_like(xpad_ref)
    xpad_ref[pl.ds(1, H), pl.ds(1, W), :] = x_ref[0]

    # ---- conv1 + folded-BN + ReLU -------------------------------------------
    y1 = _conv3x3_bn_relu(xpad_ref[...], w1_ref, s1_ref[...], b1_ref[...],
                          H, W, Cin, Cmid)                     # (H*W, Cmid)

    # ---- re-pad the intermediate in VMEM (never touches HBM) ----------------
    ypad_ref[...] = jnp.zeros_like(ypad_ref)
    ypad_ref[pl.ds(1, H), pl.ds(1, W), :] = y1.reshape(H, W, Cmid)

    # ---- conv2 + folded-BN + ReLU -------------------------------------------
    y2 = _conv3x3_bn_relu(ypad_ref[...], w2_ref, s2_ref[...], b2_ref[...],
                          H, W, Cmid, Cout)                    # (H*W, Cout)
    # Dropout(0.2) in eval mode is the identity (applied here, before pooling).

    # ---- MaxPool2d(2, stride=2): H-pool via a layout-preserving leading-dim
    #      split, W-pool via strided sublane reads from a small VMEM scratch. -
    a = jnp.max(y2.reshape(H // 2, 2, W, Cout), axis=1)        # (H/2, W, Cout)
    row_ref[...] = a
    cols_even = row_ref[:, pl.ds(0, W // 2, 2), :]
    cols_odd = row_ref[:, pl.ds(1, W // 2, 2), :]
    o_ref[0] = jnp.maximum(cols_even, cols_odd).astype(o_ref.dtype)


# ----------------------------------------------------------------------------
# Wrapper
# ----------------------------------------------------------------------------
def unet_dec_forward(x_nchw, params):
    """UNetDec forward. x_nchw: (N, Cin, H, W) -> (N, Cout, H/2, W/2)."""
    w1, s1, b1, w2, s2, b2 = params
    N, Cin, H, W = x_nchw.shape
    Cmid, Cout = w1.shape[-1], w2.shape[-1]
    # TODO(synk): MaxPool ceil_mode ragged edge for odd H/W not handled.
    assert H % 2 == 0 and W % 2 == 0

    # NCHW -> NHWC (tiny boundary transpose; C stays the lane dim in-kernel).
    x = jnp.transpose(x_nchw, (0, 2, 3, 1))

    kern = functools.partial(_unet_dec_kernel, H=H, W=W,
                             Cin=Cin, Cmid=Cmid, Cout=Cout)

    flops = 2 * N * H * W * 9 * (Cin * Cmid + Cmid * Cout)
    bytes_accessed = 4 * (N * H * W * Cin
                          + 9 * Cin * Cmid + 9 * Cmid * Cout
                          + 2 * Cmid + 2 * Cout
                          + N * (H // 2) * (W // 2) * Cout)

    # TODO(synk): for v7x (2 TensorCores) at real UNet sizes, add a second
    # "parallel" grid axis over H row tiles (with a 2-row halo) and set
    # vmem_limit_bytes explicitly; unnecessary at these toy shapes.
    y = pl.pallas_call(
        kern,
        out_shape=jax.ShapeDtypeStruct((N, H // 2, W // 2, Cout), jnp.float32),
        grid_spec=pltpu.PrefetchScalarGridSpec(
            num_scalar_prefetch=0,
            grid=(N,),
            in_specs=[
                pl.BlockSpec((1, H, W, Cin), lambda n: (n, 0, 0, 0)),
                pl.BlockSpec((9, Cin, Cmid), lambda n: (0, 0, 0)),
                pl.BlockSpec((1, Cmid), lambda n: (0, 0)),
                pl.BlockSpec((1, Cmid), lambda n: (0, 0)),
                pl.BlockSpec((9, Cmid, Cout), lambda n: (0, 0, 0)),
                pl.BlockSpec((1, Cout), lambda n: (0, 0)),
                pl.BlockSpec((1, Cout), lambda n: (0, 0)),
            ],
            out_specs=pl.BlockSpec((1, H // 2, W // 2, Cout),
                                   lambda n: (n, 0, 0, 0)),
            scratch_shapes=[
                pltpu.VMEM((H + 2, W + 2, Cin), jnp.float32),   # padded input
                pltpu.VMEM((H + 2, W + 2, Cmid), jnp.float32),  # padded y1
                pltpu.VMEM((H // 2, W, Cout), jnp.float32),     # pool rows
            ],
        ),
        compiler_params=pltpu.CompilerParams(
            dimension_semantics=("parallel",)),
        cost_estimate=pl.CostEstimate(flops=flops, transcendentals=0,
                                      bytes_accessed=bytes_accessed),
    )(x, w1, s1, b1, w2, s2, b2)

    return jnp.transpose(y, (0, 3, 1, 2))                      # NHWC -> NCHW


# ----------------------------------------------------------------------------
# Deterministic parameter init (PyTorch shapes) + BN folding
# ----------------------------------------------------------------------------
def init_unet_dec_params(key, in_channels, out_channels, eps=1e-5):
    keys = jax.random.split(key, 12)

    def conv_init(kw, kb, cin, cout):
        bound = 1.0 / np.sqrt(cin * 9)
        w = jax.random.uniform(kw, (cout, cin, 3, 3), jnp.float32, -bound, bound)
        b = jax.random.uniform(kb, (cout,), jnp.float32, -bound, bound)
        return w, b

    def bn_init(kg, kb2, km, kv, c):
        gamma = jax.random.uniform(kg, (c,), jnp.float32, 0.5, 1.5)
        beta = 0.1 * jax.random.normal(kb2, (c,), jnp.float32)
        mean = 0.1 * jax.random.normal(km, (c,), jnp.float32)
        var = jax.random.uniform(kv, (c,), jnp.float32, 0.5, 1.5)
        return gamma, beta, mean, var

    w1, cb1 = conv_init(keys[0], keys[1], in_channels, out_channels)
    g1, be1, m1, v1 = bn_init(keys[2], keys[3], keys[4], keys[5], out_channels)
    w2, cb2 = conv_init(keys[6], keys[7], out_channels, out_channels)
    g2, be2, m2, v2 = bn_init(keys[8], keys[9], keys[10], keys[11], out_channels)

    def fold(w, cb, g, be, m, v):
        cout, cin = w.shape[0], w.shape[1]
        # (Cout, Cin, kh, kw) -> (kh*kw, Cin, Cout) taps for channels-last matmul
        taps = jnp.transpose(w, (2, 3, 1, 0)).reshape(9, cin, cout)
        scale = g / jnp.sqrt(v + eps)
        bias = (cb - m) * scale + be
        return taps, scale[None, :], bias[None, :]

    return fold(w1, cb1, g1, be1, m1, v1) + fold(w2, cb2, g2, be2, m2, v2)


# ----------------------------------------------------------------------------
# Pure-JAX reference (same math) for validation
# ----------------------------------------------------------------------------
def _ref_forward(x_nchw, params):
    w1, s1, b1, w2, s2, b2 = params
    x = jnp.transpose(x_nchw, (0, 2, 3, 1))

    def conv_bn_relu(x, taps, s, b):
        N, H, W, Cin = x.shape
        Cout = taps.shape[-1]
        xp = jnp.pad(x, ((0, 0), (1, 1), (1, 1), (0, 0)))
        acc = jnp.zeros((N, H, W, Cout), jnp.float32)
        for t in range(9):
            dy, dx = divmod(t, 3)
            acc = acc + jnp.einsum('nhwc,cd->nhwd',
                                   xp[:, dy:dy + H, dx:dx + W, :], taps[t])
        return jnp.maximum(acc * s[0] + b[0], 0.0)

    y = conv_bn_relu(x, w1, s1, b1)
    y = conv_bn_relu(y, w2, s2, b2)
    N, H, W, C = y.shape
    y = jnp.max(y.reshape(N, H // 2, 2, W // 2, 2, C), axis=(2, 4))
    return jnp.transpose(y, (0, 3, 1, 2))


if __name__ == "__main__":
    key = jax.random.PRNGKey(0)
    pkey, xkey = jax.random.split(key)

    N, Cin, H, W = 2, 4, 16, 16          # small NCHW input
    Cout = 8                             # UNetDec(in_channels=4, out_channels=8)

    params = init_unet_dec_params(pkey, Cin, Cout)
    x = jax.random.normal(xkey, (N, Cin, H, W), jnp.float32)

    out = jax.block_until_ready(unet_dec_forward(x, params))
    assert out.shape == (N, Cout, H // 2, W // 2), out.shape

    ref = jax.block_until_ready(_ref_forward(x, params))
    np.testing.assert_allclose(np.asarray(out), np.asarray(ref),
                               rtol=5e-4, atol=5e-4)
    print("KERNEL_OK")
</pallas_src>

<mosaic_0001>
module attributes {stable_mosaic.version = 11 : i64} {
  func.func @_unet_dec_kernel(%arg0: i32, %arg1: memref<1x16x16x4xf32, #tpu.memory_space<vmem>>, %arg2: memref<9x4x8xf32, #tpu.memory_space<vmem>>, %arg3: memref<1x8xf32, #tpu.memory_space<vmem>>, %arg4: memref<1x8xf32, #tpu.memory_space<vmem>>, %arg5: memref<9x8x8xf32, #tpu.memory_space<vmem>>, %arg6: memref<1x8xf32, #tpu.memory_space<vmem>>, %arg7: memref<1x8xf32, #tpu.memory_space<vmem>>, %arg8: memref<1x8x8x8xf32, #tpu.memory_space<vmem>>, %arg9: memref<18x18x4xf32, #tpu.memory_space<vmem>>, %arg10: memref<18x18x8xf32, #tpu.memory_space<vmem>>, %arg11: memref<8x16x8xf32, #tpu.memory_space<vmem>>) attributes {dimension_semantics = [#tpu.dimension_semantics<parallel>], iteration_bounds = array<i64: 2>, scalar_prefetch = 0 : i64, scratch_operands = 3 : i64, tpu.core_type = #tpu.core_type<tc>, window_params = [{transform_indices = @transform_0, window_bounds = array<i64: 1, 16, 16, 4>}, {pipeline_mode = #tpu.pipeline_mode<synchronous>, transform_indices = @transform_1, window_bounds = array<i64: 9, 4, 8>}, {pipeline_mode = #tpu.pipeline_mode<synchronous>, transform_indices = @transform_2, window_bounds = array<i64: 1, 8>}, {pipeline_mode = #tpu.pipeline_mode<synchronous>, transform_indices = @transform_3, window_bounds = array<i64: 1, 8>}, {pipeline_mode = #tpu.pipeline_mode<synchronous>, transform_indices = @transform_4, window_bounds = array<i64: 9, 8, 8>}, {pipeline_mode = #tpu.pipeline_mode<synchronous>, transform_indices = @transform_5, window_bounds = array<i64: 1, 8>}, {pipeline_mode = #tpu.pipeline_mode<synchronous>, transform_indices = @transform_6, window_bounds = array<i64: 1, 8>}, {transform_indices = @transform_7, window_bounds = array<i64: 1, 8, 8, 8>}]} {
    %cst = arith.constant 0.000000e+00 : f32
    %0 = vector.broadcast %cst : f32 to vector<18x18x4xf32>
    %c0 = arith.constant 0 : index
    %c0_0 = arith.constant 0 : index
    %c0_1 = arith.constant 0 : index
    %1 = vector.load %arg9[%c0, %c0_0, %c0_1] : memref<18x18x4xf32, #tpu.memory_space<vmem>>, vector<18x18x4xf32>
    tpu.vector_store %arg9[%c0, %c0_0, %c0_1], %0 {strides = array<i32>} : memref<18x18x4xf32, #tpu.memory_space<vmem>>, vector<18x18x4xf32>,
    %c0_2 = arith.constant 0 : index
    %c0_3 = arith.constant 0 : index
    %c0_4 = arith.constant 0 : index
    %c0_5 = arith.constant 0 : index
    %2 = vector.load %arg1[%c0_2, %c0_3, %c0_4, %c0_5] : memref<1x16x16x4xf32, #tpu.memory_space<vmem>>, vector<1x16x16x4xf32>
    %3 = vector.shape_cast %2 : vector<1x16x16x4xf32> to vector<16x16x4xf32>
    %c1 = arith.constant 1 : index
    %c1_6 = arith.constant 1 : index
    %c0_7 = arith.constant 0 : index
    %4 = vector.load %arg9[%c1, %c1_6, %c0_7] : memref<18x18x4xf32, #tpu.memory_space<vmem>>, vector<16x16x4xf32>
    tpu.vector_store %arg9[%c1, %c1_6, %c0_7], %3 {strides = array<i32>} : memref<18x18x4xf32, #tpu.memory_space<vmem>>, vector<16x16x4xf32>,
    %c0_8 = arith.constant 0 : index
    %c0_9 = arith.constant 0 : index
    %c0_10 = arith.constant 0 : index
    %5 = vector.load %arg9[%c0_8, %c0_9, %c0_10] : memref<18x18x4xf32, #tpu.memory_space<vmem>>, vector<18x18x4xf32>
    %c0_11 = arith.constant 0 : index
    %c0_12 = arith.constant 0 : index
    %6 = vector.load %arg3[%c0_11, %c0_12] : memref<1x8xf32, #tpu.memory_space<vmem>>, vector<1x8xf32>
    %c0_13 = arith.constant 0 : index
    %c0_14 = arith.constant 0 : index
    %7 = vector.load %arg4[%c0_13, %c0_14] : memref<1x8xf32, #tpu.memory_space<vmem>>, vector<1x8xf32>
    %cst_15 = arith.constant 0.000000e+00 : f32
    %8 = vector.broadcast %cst_15 : f32 to vector<256x8xf32>
    %9 = vector.extract_strided_slice %5 {offsets = [0, 0, 0], sizes = [16, 16, 4], strides = [1, 1, 1]} : vector<18x18x4xf32> to vector<16x16x4xf32>
    %10 = vector.shape_cast %9 : vector<16x16x4xf32> to vector<256x4xf32>
    %c0_16 = arith.constant 0 : index
    %c0_17 = arith.constant 0 : index
    %c0_18 = arith.constant 0 : index
    %11 = vector.load %arg2[%c0_16, %c0_17, %c0_18] : memref<9x4x8xf32, #tpu.memory_space<vmem>>, vector<1x4x8xf32>
    %12 = vector.shape_cast %11 : vector<1x4x8xf32> to vector<4x8xf32>
    %cst_19 = arith.constant dense<0.000000e+00> : vector<256x8xf32>
    %13 = tpu.matmul %10, %12, %cst_19 {dimension_numbers = #tpu.dot_dimension_numbers<[1], [0], [0], [1], [0, 0, 1, 1], [], []>} : vector<256x4xf32>, vector<4x8xf32>, vector<256x8xf32> -> vector<256x8xf32>
    %14 = arith.addf %8, %13 : vector<256x8xf32>
    %15 = vector.extract_strided_slice %5 {offsets = [0, 1, 0], sizes = [16, 16, 4], strides = [1, 1, 1]} : vector<18x18x4xf32> to vector<16x16x4xf32>
    %16 = vector.shape_cast %15 : vector<16x16x4xf32> to vector<256x4xf32>
    %c1_20 = arith.constant 1 : index
    %c0_21 = arith.constant 0 : index
    %c0_22 = arith.constant 0 : index
    %17 = vector.load %arg2[%c1_20, %c0_21, %c0_22] : memref<9x4x8xf32, #tpu.memory_space<vmem>>, vector<1x4x8xf32>
    %18 = vector.shape_cast %17 : vector<1x4x8xf32> to vector<4x8xf32>
    %cst_23 = arith.constant dense<0.000000e+00> : vector<256x8xf32>
    %19 = tpu.matmul %16, %18, %cst_23 {dimension_numbers = #tpu.dot_dimension_numbers<[1], [0], [0], [1], [0, 0, 1, 1], [], []>} : vector<256x4xf32>, vector<4x8xf32>, vector<256x8xf32> -> vector<256x8xf32>
    %20 = arith.addf %14, %19 : vector<256x8xf32>
    %21 = vector.extract_strided_slice %5 {offsets = [0, 2, 0], sizes = [16, 16, 4], strides = [1, 1, 1]} : vector<18x18x4xf32> to vector<16x16x4xf32>
    %22 = vector.shape_cast %21 : vector<16x16x4xf32> to vector<256x4xf32>
    %c2 = arith.constant 2 : index
    %c0_24 = arith.constant 0 : index
    %c0_25 = arith.constant 0 : index
    %23 = vector.load %arg2[%c2, %c0_24, %c0_25] : memref<9x4x8xf32, #tpu.memory_space<vmem>>, vector<1x4x8xf32>
    %24 = vector.shape_cast %23 : vector<1x4x8xf32> to vector<4x8xf32>
    %cst_26 = arith.constant dense<0.000000e+00> : vector<256x8xf32>
    %25 = tpu.matmul %22, %24, %cst_26 {dimension_numbers = #tpu.dot_dimension_numbers<[1], [0], [0], [1], [0, 0, 1, 1], [], []>} : vector<256x4xf32>, vector<4x8xf32>, vector<256x8xf32> -> vector<256x8xf32>
    %26 = arith.addf %20, %25 : vector<256x8xf32>
    %27 = vector.extract_strided_slice %5 {offsets = [1, 0, 0], sizes = [16, 16, 4], strides = [1, 1, 1]} : vector<18x18x4xf32> to vector<16x16x4xf32>
    %28 = vector.shape_cast %27 : vector<16x16x4xf32> to vector<256x4xf32>
    %c3 = arith.constant 3 : index
    %c0_27 = arith.constant 0 : index
    %c0_28 = arith.constant 0 : index
    %29 = vector.load %arg2[%c3, %c0_27, %c0_28] : memref<9x4x8xf32, #tpu.memory_space<vmem>>, vector<1x4x8xf32>
    %30 = vector.shape_cast %29 : vector<1x4x8xf32> to vector<4x8xf32>
    %cst_29 = arith.constant dense<0.000000e+00> : vector<256x8xf32>
    %31 = tpu.matmul %28, %30, %cst_29 {dimension_numbers = #tpu.dot_dimension_numbers<[1], [0], [0], [1], [0, 0, 1, 1], [], []>} : vector<256x4xf32>, vector<4x8xf32>, vector<256x8xf32> -> vector<256x8xf32>
    %32 = arith.addf %26, %31 : vector<256x8xf32>
    %33 = vector.extract_strided_slice %5 {offsets = [1, 1, 0], sizes = [16, 16, 4], strides = [1, 1, 1]} : vector<18x18x4xf32> to vector<16x16x4xf32>
    %34 = vector.shape_cast %33 : vector<16x16x4xf32> to vector<256x4xf32>
    %c4 = arith.constant 4 : index
    %c0_30 = arith.constant 0 : index
    %c0_31 = arith.constant 0 : index
    %35 = vector.load %arg2[%c4, %c0_30, %c0_31] : memref<9x4x8xf32, #tpu.memory_space<vmem>>, vector<1x4x8xf32>
    %36 = vector.shape_cast %35 : vector<1x4x8xf32> to vector<4x8xf32>
    %cst_32 = arith.constant dense<0.000000e+00> : vector<256x8xf32>
    %37 = tpu.matmul %34, %36, %cst_32 {dimension_numbers = #tpu.dot_dimension_numbers<[1], [0], [0], [1], [0, 0, 1, 1], [], []>} : vector<256x4xf32>, vector<4x8xf32>, vector<256x8xf32> -> vector<256x8xf32>
    %38 = arith.addf %32, %37 : vector<256x8xf32>
    %39 = vector.extract_strided_slice %5 {offsets = [1, 2, 0], sizes = [16, 16, 4], strides = [1, 1, 1]} : vector<18x18x4xf32> to vector<16x16x4xf32>
    %40 = vector.shape_cast %39 : vector<16x16x4xf32> to vector<256x4xf32>
    %c5 = arith.constant 5 : index
    %c0_33 = arith.constant 0 : index
    %c0_34 = arith.constant 0 : index
    %41 = vector.load %arg2[%c5, %c0_33, %c0_34] : memref<9x4x8xf32, #tpu.memory_space<vmem>>, vector<1x4x8xf32>
    %42 = vector.shape_cast %41 : vector<1x4x8xf32> to vector<4x8xf32>
    %cst_35 = arith.constant dense<0.000000e+00> : vector<256x8xf32>
    %43 = tpu.matmul %40, %42, %cst_35 {dimension_numbers = #tpu.dot_dimension_numbers<[1], [0], [0], [1], [0, 0, 1, 1], [], []>} : vector<256x4xf32>, vector<4x8xf32>, vector<256x8xf32> -> vector<256x8xf32>
    %44 = arith.addf %38, %43 : vector<256x8xf32>
    %45 = vector.extract_strided_slice %5 {offsets = [2, 0, 0], sizes = [16, 16, 4], strides = [1, 1, 1]} : vector<18x18x4xf32> to vector<16x16x4xf32>
    %46 = vector.shape_cast %45 : vector<16x16x4xf32> to vector<256x4xf32>
    %c6 = arith.constant 6 : index
    %c0_36 = arith.constant 0 : index
    %c0_37 = arith.constant 0 : index
    %47 = vector.load %arg2[%c6, %c0_36, %c0_37] : memref<9x4x8xf32, #tpu.memory_space<vmem>>, vector<1x4x8xf32>
    %48 = vector.shape_cast %47 : vector<1x4x8xf32> to vector<4x8xf32>
    %cst_38 = arith.constant dense<0.000000e+00> : vector<256x8xf32>
    %49 = tpu.matmul %46, %48, %cst_38 {dimension_numbers = #tpu.dot_dimension_numbers<[1], [0], [0], [1], [0, 0, 1, 1], [], []>} : vector<256x4xf32>, vector<4x8xf32>, vector<256x8xf32> -> vector<256x8xf32>
    %50 = arith.addf %44, %49 : vector<256x8xf32>
    %51 = vector.extract_strided_slice %5 {offsets = [2, 1, 0], sizes = [16, 16, 4], strides = [1, 1, 1]} : vector<18x18x4xf32> to vector<16x16x4xf32>
    %52 = vector.shape_cast %51 : vector<16x16x4xf32> to vector<256x4xf32>
    %c7 = arith.constant 7 : index
    %c0_39 = arith.constant 0 : index
    %c0_40 = arith.constant 0 : index
    %53 = vector.load %arg2[%c7, %c0_39, %c0_40] : memref<9x4x8xf32, #tpu.memory_space<vmem>>, vector<1x4x8xf32>
    %54 = vector.shape_cast %53 : vector<1x4x8xf32> to vector<4x8xf32>
    %cst_41 = arith.constant dense<0.000000e+00> : vector<256x8xf32>
    %55 = tpu.matmul %52, %54, %cst_41 {dimension_numbers = #tpu.dot_dimension_numbers<[1], [0], [0], [1], [0, 0, 1, 1], [], []>} : vector<256x4xf32>, vector<4x8xf32>, vector<256x8xf32> -> vector<256x8xf32>
    %56 = arith.addf %50, %55 : vector<256x8xf32>
    %57 = vector.extract_strided_slice %5 {offsets = [2, 2, 0], sizes = [16, 16, 4], strides = [1, 1, 1]} : vector<18x18x4xf32> to vector<16x16x4xf32>
    %58 = vector.shape_cast %57 : vector<16x16x4xf32> to vector<256x4xf32>
    %c8 = arith.constant 8 : index
    %c0_42 = arith.constant 0 : index
    %c0_43 = arith.constant 0 : index
    %59 = vector.load %arg2[%c8, %c0_42, %c0_43] : memref<9x4x8xf32, #tpu.memory_space<vmem>>, vector<1x4x8xf32>
    %60 = vector.shape_cast %59 : vector<1x4x8xf32> to vector<4x8xf32>
    %cst_44 = arith.constant dense<0.000000e+00> : vector<256x8xf32>
    %61 = tpu.matmul %58, %60, %cst_44 {dimension_numbers = #tpu.dot_dimension_numbers<[1], [0], [0], [1], [0, 0, 1, 1], [], []>} : vector<256x4xf32>, vector<4x8xf32>, vector<256x8xf32> -> vector<256x8xf32>
    %62 = arith.addf %56, %61 : vector<256x8xf32>
    %63 = vector.broadcast %6 : vector<1x8xf32> to vector<256x8xf32>
    %64 = arith.mulf %62, %63 : vector<256x8xf32>
    %65 = vector.broadcast %7 : vector<1x8xf32> to vector<256x8xf32>
    %66 = arith.addf %64, %65 : vector<256x8xf32>
    %cst_45 = arith.constant 0.000000e+00 : f32
    %67 = vector.broadcast %cst_45 : f32 to vector<256x8xf32>
    %68 = arith.maximumf %66, %67 : vector<256x8xf32>
    %cst_46 = arith.constant 0.000000e+00 : f32
    %69 = vector.broadcast %cst_46 : f32 to vector<18x18x8xf32>
    %c0_47 = arith.constant 0 : index
    %c0_48 = arith.constant 0 : index
    %c0_49 = arith.constant 0 : index
    %70 = vector.load %arg10[%c0_47, %c0_48, %c0_49] : memref<18x18x8xf32, #tpu.memory_space<vmem>>, vector<18x18x8xf32>
    tpu.vector_store %arg10[%c0_47, %c0_48, %c0_49], %69 {strides = array<i32>} : memref<18x18x8xf32, #tpu.memory_space<vmem>>, vector<18x18x8xf32>,
    %71 = vector.shape_cast %68 : vector<256x8xf32> to vector<16x16x8xf32>
    %c1_50 = arith.constant 1 : index
    %c1_51 = arith.constant 1 : index
    %c0_52 = arith.constant 0 : index
    %72 = vector.load %arg10[%c1_50, %c1_51, %c0_52] : memref<18x18x8xf32, #tpu.memory_space<vmem>>, vector<16x16x8xf32>
    tpu.vector_store %arg10[%c1_50, %c1_51, %c0_52], %71 {strides = array<i32>} : memref<18x18x8xf32, #tpu.memory_space<vmem>>, vector<16x16x8xf32>,
    %c0_53 = arith.constant 0 : index
    %c0_54 = arith.constant 0 : index
    %c0_55 = arith.constant 0 : index
    %73 = vector.load %arg10[%c0_53, %c0_54, %c0_55] : memref<18x18x8xf32, #tpu.memory_space<vmem>>, vector<18x18x8xf32>
    %c0_56 = arith.constant 0 : index
    %c0_57 = arith.constant 0 : index
    %74 = vector.load %arg6[%c0_56, %c0_57] : memref<1x8xf32, #tpu.memory_space<vmem>>, vector<1x8xf32>
    %c0_58 = arith.constant 0 : index
    %c0_59 = arith.constant 0 : index
    %75 = vector.load %arg7[%c0_58, %c0_59] : memref<1x8xf32, #tpu.memory_space<vmem>>, vector<1x8xf32>
    %cst_60 = arith.constant 0.000000e+00 : f32
    %76 = vector.broadcast %cst_60 : f32 to vector<256x8xf32>
    %77 = vector.extract_strided_slice %73 {offsets = [0, 0, 0], sizes = [16, 16, 8], strides = [1, 1, 1]} : vector<18x18x8xf32> to vector<16x16x8xf32>
    %78 = vector.shape_cast %77 : vector<16x16x8xf32> to vector<256x8xf32>
    %c0_61 = arith.constant 0 : index
    %c0_62 = arith.constant 0 : index
    %c0_63 = arith.constant 0 : index
    %79 = vector.load %arg5[%c0_61, %c0_62, %c0_63] : memref<9x8x8xf32, #tpu.memory_space<vmem>>, vector<1x8x8xf32>
    %80 = vector.shape_cast %79 : vector<1x8x8xf32> to vector<8x8xf32>
    %cst_64 = arith.constant dense<0.000000e+00> : vector<256x8xf32>
    %81 = tpu.matmul %78, %80, %cst_64 {dimension_numbers = #tpu.dot_dimension_numbers<[1], [0], [0], [1], [0, 0, 1, 1], [], []>} : vector<256x8xf32>, vector<8x8xf32>, vector<256x8xf32> -> vector<256x8xf32>
    %82 = arith.addf %76, %81 : vector<256x8xf32>
    %83 = vector.extract_strided_slice %73 {offsets = [0, 1, 0], sizes = [16, 16, 8], strides = [1, 1, 1]} : vector<18x18x8xf32> to vector<16x16x8xf32>
    %84 = vector.shape_cast %83 : vector<16x16x8xf32> to vector<256x8xf32>
    %c1_65 = arith.constant 1 : index
    %c0_66 = arith.constant 0 : index
    %c0_67 = arith.constant 0 : index
    %85 = vector.load %arg5[%c1_65, %c0_66, %c0_67] : memref<9x8x8xf32, #tpu.memory_space<vmem>>, vector<1x8x8xf32>
    %86 = vector.shape_cast %85 : vector<1x8x8xf32> to vector<8x8xf32>
    %cst_68 = arith.constant dense<0.000000e+00> : vector<256x8xf32>
    %87 = tpu.matmul %84, %86, %cst_68 {dimension_numbers = #tpu.dot_dimension_numbers<[1], [0], [0], [1], [0, 0, 1, 1], [], []>} : vector<256x8xf32>, vector<8x8xf32>, vector<256x8xf32> -> vector<256x8xf32>
    %88 = arith.addf %82, %87 : vector<256x8xf32>
    %89 = vector.extract_strided_slice %73 {offsets = [0, 2, 0], sizes = [16, 16, 8], strides = [1, 1, 1]} : vector<18x18x8xf32> to vector<16x16x8xf32>
    %90 = vector.shape_cast %89 : vector<16x16x8xf32> to vector<256x8xf32>
    %c2_69 = arith.constant 2 : index
    %c0_70 = arith.constant 0 : index
    %c0_71 = arith.constant 0 : index
    %91 = vector.load %arg5[%c2_69, %c0_70, %c0_71] : memref<9x8x8xf32, #tpu.memory_space<vmem>>, vector<1x8x8xf32>
    %92 = vector.shape_cast %91 : vector<1x8x8xf32> to vector<8x8xf32>
    %cst_72 = arith.constant dense<0.000000e+00> : vector<256x8xf32>
    %93 = tpu.matmul %90, %92, %cst_72 {dimension_numbers = #tpu.dot_dimension_numbers<[1], [0], [0], [1], [0, 0, 1, 1], [], []>} : vector<256x8xf32>, vector<8x8xf32>, vector<256x8xf32> -> vector<256x8xf32>
    %94 = arith.addf %88, %93 : vector<256x8xf32>
    %95 = vector.extract_strided_slice %73 {offsets = [1, 0, 0], sizes = [16, 16, 8], strides = [1, 1, 1]} : vector<18x18x8xf32> to vector<16x16x8xf32>
    %96 = vector.shape_cast %95 : vector<16x16x8xf32> to vector<256x8xf32>
    %c3_73 = arith.constant 3 : index
    %c0_74 = arith.constant 0 : index
    %c0_75 = arith.constant 0 : index
    %97 = vector.load %arg5[%c3_73, %c0_74, %c0_75] : memref<9x8x8xf32, #tpu.memory_space<vmem>>, vector<1x8x8xf32>
    %98 = vector.shape_cast %97 : vector<1x8x8xf32> to vector<8x8xf32>
    %cst_76 = arith.constant dense<0.000000e+00> : vector<256x8xf32>
    %99 = tpu.matmul %96, %98, %cst_76 {dimension_numbers = #tpu.dot_dimension_numbers<[1], [0], [0], [1], [0, 0, 1, 1], [], []>} : vector<256x8xf32>, vector<8x8xf32>, vector<256x8xf32> -> vector<256x8xf32>
    %100 = arith.addf %94, %99 : vector<256x8xf32>
    %101 = vector.extract_strided_slice %73 {offsets = [1, 1, 0], sizes = [16, 16, 8], strides = [1, 1, 1]} : vector<18x18x8xf32> to vector<16x16x8xf32>
    %102 = vector.shape_cast %101 : vector<16x16x8xf32> to vector<256x8xf32>
    %c4_77 = arith.constant 4 : index
    %c0_78 = arith.constant 0 : index
    %c0_79 = arith.constant 0 : index
    %103 = vector.load %arg5[%c4_77, %c0_78, %c0_79] : memref<9x8x8xf32, #tpu.memory_space<vmem>>, vector<1x8x8xf32>
    %104 = vector.shape_cast %103 : vector<1x8x8xf32> to vector<8x8xf32>
    %cst_80 = arith.constant dense<0.000000e+00> : vector<256x8xf32>
    %105 = tpu.matmul %102, %104, %cst_80 {dimension_numbers = #tpu.dot_dimension_numbers<[1], [0], [0], [1], [0, 0, 1, 1], [], []>} : vector<256x8xf32>, vector<8x8xf32>, vector<256x8xf32> -> vector<256x8xf32>
    %106 = arith.addf %100, %105 : vector<256x8xf32>
    %107 = vector.extract_strided_slice %73 {offsets = [1, 2, 0], sizes = [16, 16, 8], strides = [1, 1, 1]} : vector<18x18x8xf32> to vector<16x16x8xf32>
    %108 = vector.shape_cast %107 : vector<16x16x8xf32> to vector<256x8xf32>
    %c5_81 = arith.constant 5 : index
    %c0_82 = arith.constant 0 : index
    %c0_83 = arith.constant 0 : index
    %109 = vector.load %arg5[%c5_81, %c0_82, %c0_83] : memref<9x8x8xf32, #tpu.memory_space<vmem>>, vector<1x8x8xf32>
    %110 = vector.shape_cast %109 : vector<1x8x8xf32> to vector<8x8xf32>
    %cst_84 = arith.constant dense<0.000000e+00> : vector<256x8xf32>
    %111 = tpu.matmul %108, %110, %cst_84 {dimension_numbers = #tpu.dot_dimension_numbers<[1], [0], [0], [1], [0, 0, 1, 1], [], []>} : vector<256x8xf32>, vector<8x8xf32>, vector<256x8xf32> -> vector<256x8xf32>
    %112 = arith.addf %106, %111 : vector<256x8xf32>
    %113 = vector.extract_strided_slice %73 {offsets = [2, 0, 0], sizes = [16, 16, 8], strides = [1, 1, 1]} : vector<18x18x8xf32> to vector<16x16x8xf32>
    %114 = vector.shape_cast %113 : vector<16x16x8xf32> to vector<256x8xf32>
    %c6_85 = arith.constant 6 : index
    %c0_86 = arith.constant 0 : index
    %c0_87 = arith.constant 0 : index
    %115 = vector.load %arg5[%c6_85, %c0_86, %c0_87] : memref<9x8x8xf32, #tpu.memory_space<vmem>>, vector<1x8x8xf32>
    %116 = vector.shape_cast %115 : vector<1x8x8xf32> to vector<8x8xf32>
    %cst_88 = arith.constant dense<0.000000e+00> : vector<256x8xf32>
    %117 = tpu.matmul %114, %116, %cst_88 {dimension_numbers = #tpu.dot_dimension_numbers<[1], [0], [0], [1], [0, 0, 1, 1], [], []>} : vector<256x8xf32>, vector<8x8xf32>, vector<256x8xf32> -> vector<256x8xf32>
    %118 = arith.addf %112, %117 : vector<256x8xf32>
    %119 = vector.extract_strided_slice %73 {offsets = [2, 1, 0], sizes = [16, 16, 8], strides = [1, 1, 1]} : vector<18x18x8xf32> to vector<16x16x8xf32>
    %120 = vector.shape_cast %119 : vector<16x16x8xf32> to vector<256x8xf32>
    %c7_89 = arith.constant 7 : index
    %c0_90 = arith.constant 0 : index
    %c0_91 = arith.constant 0 : index
    %121 = vector.load %arg5[%c7_89, %c0_90, %c0_91] : memref<9x8x8xf32, #tpu.memory_space<vmem>>, vector<1x8x8xf32>
    %122 = vector.shape_cast %121 : vector<1x8x8xf32> to vector<8x8xf32>
    %cst_92 = arith.constant dense<0.000000e+00> : vector<256x8xf32>
    %123 = tpu.matmul %120, %122, %cst_92 {dimension_numbers = #tpu.dot_dimension_numbers<[1], [0], [0], [1], [0, 0, 1, 1], [], []>} : vector<256x8xf32>, vector<8x8xf32>, vector<256x8xf32> -> vector<256x8xf32>
    %124 = arith.addf %118, %123 : vector<256x8xf32>
    %125 = vector.extract_strided_slice %73 {offsets = [2, 2, 0], sizes = [16, 16, 8], strides = [1, 1, 1]} : vector<18x18x8xf32> to vector<16x16x8xf32>
    %126 = vector.shape_cast %125 : vector<16x16x8xf32> to vector<256x8xf32>
    %c8_93 = arith.constant 8 : index
    %c0_94 = arith.constant 0 : index
    %c0_95 = arith.constant 0 : index
    %127 = vector.load %arg5[%c8_93, %c0_94, %c0_95] : memref<9x8x8xf32, #tpu.memory_space<vmem>>, vector<1x8x8xf32>
    %128 = vector.shape_cast %127 : vector<1x8x8xf32> to vector<8x8xf32>
    %cst_96 = arith.constant dense<0.000000e+00> : vector<256x8xf32>
    %129 = tpu.matmul %126, %128, %cst_96 {dimension_numbers = #tpu.dot_dimension_numbers<[1], [0], [0], [1], [0, 0, 1, 1], [], []>} : vector<256x8xf32>, vector<8x8xf32>, vector<256x8xf32> -> vector<256x8xf32>
    %130 = arith.addf %124, %129 : vector<256x8xf32>
    %131 = vector.broadcast %74 : vector<1x8xf32> to vector<256x8xf32>
    %132 = arith.mulf %130, %131 : vector<256x8xf32>
    %133 = vector.broadcast %75 : vector<1x8xf32> to vector<256x8xf32>
    %134 = arith.addf %132, %133 : vector<256x8xf32>
    %cst_97 = arith.constant 0.000000e+00 : f32
    %135 = vector.broadcast %cst_97 : f32 to vector<256x8xf32>
    %136 = arith.maximumf %134, %135 : vector<256x8xf32>
    %137 = vector.shape_cast %136 : vector<256x8xf32> to vector<8x2x16x8xf32>
    %cst_98 = arith.constant dense<0xFF800000> : vector<8x16x8xf32>
    %138 = vector.multi_reduction <maximumf>, %137, %cst_98 [1] : vector<8x2x16x8xf32> to vector<8x16x8xf32>
    %c0_99 = arith.constant 0 : index
    %c0_100 = arith.constant 0 : index
    %c0_101 = arith.constant 0 : index
    %139 = vector.load %arg11[%c0_99, %c0_100, %c0_101] : memref<8x16x8xf32, #tpu.memory_space<vmem>>, vector<8x16x8xf32>
    tpu.vector_store %arg11[%c0_99, %c0_100, %c0_101], %138 {strides = array<i32>} : memref<8x16x8xf32, #tpu.memory_space<vmem>>, vector<8x16x8xf32>,
    %c0_102 = arith.constant 0 : index
    %c0_103 = arith.constant 0 : index
    %c0_104 = arith.constant 0 : index
    %140 = tpu.strided_load %arg11[%c0_102, %c0_103, %c0_104] {strides = array<i32: 1, 2, 1>} : memref<8x16x8xf32, #tpu.memory_space<vmem>>, vector<8x8x8xf32>
    %c0_105 = arith.constant 0 : index
    %c1_106 = arith.constant 1 : index
    %c0_107 = arith.constant 0 : index
    %141 = tpu.strided_load %arg11[%c0_105, %c1_106, %c0_107] {strides = array<i32: 1, 2, 1>} : memref<8x16x8xf32, #tpu.memory_space<vmem>>, vector<8x8x8xf32>
    %142 = arith.maximumf %140, %141 : vector<8x8x8xf32>
    %c0_108 = arith.constant 0 : index
    %c0_109 = arith.constant 0 : index
    %c0_110 = arith.constant 0 : index
    %c0_111 = arith.constant 0 : index
    %143 = vector.load %arg8[%c0_108, %c0_109, %c0_110, %c0_111] : memref<1x8x8x8xf32, #tpu.memory_space<vmem>>, vector<1x8x8x8xf32>
    %144 = vector.shape_cast %143 : vector<1x8x8x8xf32> to vector<8x8x8xf32>
    %145 = vector.shape_cast %142 : vector<8x8x8xf32> to vector<1x8x8x8xf32>
    tpu.vector_store %arg8[%c0_108, %c0_109, %c0_110, %c0_111], %145 {strides = array<i32>} : memref<1x8x8x8xf32, #tpu.memory_space<vmem>>, vector<1x8x8x8xf32>,
    return
  }
  func.func @transform_0(%arg0: i32) -> (i32, i32, i32, i32) {
    %c0_i32 = arith.constant 0 : i32
    %c0_i32_0 = arith.constant 0 : i32
    %c0_i32_1 = arith.constant 0 : i32
    %c0_i32_2 = arith.constant 0 : i32
    return %arg0, %c0_i32, %c0_i32_0, %c0_i32_1 : i32, i32, i32, i32
  }
  func.func @transform_1(%arg0: i32) -> (i32, i32, i32) {
    %c0_i32 = arith.constant 0 : i32
    %c0_i32_0 = arith.constant 0 : i32
    %c0_i32_1 = arith.constant 0 : i32
    %c0_i32_2 = arith.constant 0 : i32
    return %c0_i32, %c0_i32_0, %c0_i32_1 : i32, i32, i32
  }
  func.func @transform_2(%arg0: i32) -> (i32, i32) {
    %c0_i32 = arith.constant 0 : i32
    %c0_i32_0 = arith.constant 0 : i32
    %c0_i32_1 = arith.constant 0 : i32
    return %c0_i32, %c0_i32_0 : i32, i32
  }
  func.func @transform_3(%arg0: i32) -> (i32, i32) {
    %c0_i32 = arith.constant 0 : i32
    %c0_i32_0 = arith.constant 0 : i32
    %c0_i32_1 = arith.constant 0 : i32
    return %c0_i32, %c0_i32_0 : i32, i32
  }
  func.func @transform_4(%arg0: i32) -> (i32, i32, i32) {
    %c0_i32 = arith.constant 0 : i32
    %c0_i32_0 = arith.constant 0 : i32
    %c0_i32_1 = arith.constant 0 : i32
    %c0_i32_2 = arith.constant 0 : i32
    return %c0_i32, %c0_i32_0, %c0_i32_1 : i32, i32, i32
  }
  func.func @transform_5(%arg0: i32) -> (i32, i32) {
    %c0_i32 = arith.constant 0 : i32
    %c0_i32_0 = arith.constant 0 : i32
    %c0_i32_1 = arith.constant 0 : i32
    return %c0_i32, %c0_i32_0 : i32, i32
  }
  func.func @transform_6(%arg0: i32) -> (i32, i32) {
    %c0_i32 = arith.constant 0 : i32
    %c0_i32_0 = arith.constant 0 : i32
    %c0_i32_1 = arith.constant 0 : i32
    return %c0_i32, %c0_i32_0 : i32, i32
  }
  func.func @transform_7(%arg0: i32) -> (i32, i32, i32, i32) {
    %c0_i32 = arith.constant 0 : i32
    %c0_i32_0 = arith.constant 0 : i32
    %c0_i32_1 = arith.constant 0 : i32
    %c0_i32_2 = arith.constant 0 : i32
    return %arg0, %c0_i32, %c0_i32_0, %c0_i32_1 : i32, i32, i32, i32
  }
}

</mosaic_0001>

<llo_original>
// kernel: tpu_custom_call.1
$region0: #{tpu_custom_call.1}
  #allocation0 [shape = 'u32[]', space=smem, size = 0x4, offset = 0x4, fixed_abs, tag = 'smem constant byte address 0x4 - core index']
  #allocation1 [shape = 'u32[144,128]{1,0:T(1,128)}', space=vmem, size = 0x12000, scoped, tag = 'internal scratch']
  #allocation2 [shape = 'f32[18,18,4]{2,1,0:T(8,128)}', space=vmem, size = 0x36000, scoped, tag = 'scratch operand']
  #allocation3 [shape = 'f32[18,18,8]{2,1,0:T(8,128)}', space=vmem, size = 0x36000, scoped, tag = 'scratch operand']
  #allocation4 [shape = 'f32[8,16,8]{2,1,0:T(8,128)}', space=vmem, size = 0x10000, scoped, tag = 'scratch operand']
  %s0 = inlined_call_operand.vmem [shape: f32[2,16,16,4], index: 0, kind: input, shape index: {}]
  %s1 = inlined_call_operand.vmem [shape: f32[9,4,8], index: 1, kind: input, shape index: {}]
  %s2 = inlined_call_operand.vmem [shape: f32[1,8], index: 2, kind: input, shape index: {}]
  %s3 = inlined_call_operand.vmem [shape: f32[1,8], index: 3, kind: input, shape index: {}]
  %s4 = inlined_call_operand.vmem [shape: f32[9,8,8], index: 4, kind: input, shape index: {}]
  %s5 = inlined_call_operand.vmem [shape: f32[1,8], index: 5, kind: input, shape index: {}]
  %s6 = inlined_call_operand.vmem [shape: f32[1,8], index: 6, kind: input, shape index: {}]
  %s7 = inlined_call_operand.hbm [shape: f32[2,8,8,8], index: 7, kind: output, shape index: {}]
  %s8 = sld [smem:[#allocation0]]
  $region61: #{tpu_custom_call.1} parent=0
    _
  %s10 = ssub.s32 1, %s8
  %s11 = scalar_select 0, %s10, %s8
  $region1: #{tpu_custom_call.1} parent=0
    #allocation5 [shape = 'u8[65536]{0}', space=vmem, size = 0x10000, scoped, tag = 'output window, operand 0']
    #allocation6 [shape = 's32[2]{0}', space=sflag, size = 0x8, scoped, tag = 'scoped memory for tpu_custom_call.1']
    %12 = vsyncpa [#allocation6], 0
    %s13 = scalar_lea.sflag [#allocation6], 1
    %14 = vsyncpa %s13, 0
    loop: start=0, step=1, limit=4
    $region2: #{tpu_custom_call.1} parent=1 // loop_pre_header
      _
    $region3: #{tpu_custom_call.1} parent=1 // loop_header
      %s16 = sphi 0, %s20
      %p17 = scmp.ge.s32.totalorder %s16, 4
      %s26 = sphi 0, %s28
      %s29 = sphi 0, %s26
      %s30 = sphi 0, %s29
      %s46 = sphi 0, %s30
      %s50 = sphi 0, %s50
      %s52 = sphi 0, %s50
      %s53 = sphi 0, %s52
      %s67 = sphi 0, %s53
      %s71 = sphi 0, %s71
      %s73 = sphi 0, %s71
      %s74 = sphi 0, %s73
      %s88 = sphi 0, %s74
      %s92 = sphi 0, %s92
      %s94 = sphi 0, %s92
      %s95 = sphi 0, %s94
      %s109 = sphi 0, %s95
      %s113 = sphi 0, %s113
      %s115 = sphi 0, %s113
      %s116 = sphi 0, %s115
      %s130 = sphi 0, %s116
      %s134 = sphi 0, %s134
      %s136 = sphi 0, %s134
      %s137 = sphi 0, %s136
      %s151 = sphi 0, %s137
      %s155 = sphi 0, %s155
      %s157 = sphi 0, %s155
      %s158 = sphi 0, %s157
      %s172 = sphi 0, %s158
      %s178 = sphi 0, %s180
      %s181 = sphi 0, %s178
      %s182 = sphi 0, %s181
      %s198 = sphi 0, %s182
    $region4: #{tpu_custom_call.1} parent=1 // loop_header_branch
      %19 = sbr.rel (%p17) target = $region8
    $region5: #{tpu_custom_call.1} parent=1 // loop_body
      %s21 = ssub.s32 %s16, 1
      %s22 = ssub.s32 %s16, 2
      %s23 = sadd.s32 %s16, 1
      %s24 = ssub.s32 %s16, %s23
      %p25 = scmp.eq.s32.totalorder %s24, 0
      %s27 = sadd.s32 %s26, 1
      %s28 = scalar_select %p25, %s26, %s27
      %p31 = pneg %p25
      %p32 = scmp.eq.s32.totalorder %s16, 1
      %p33 = por %p31, %p32
      %p34 = scmp.ne.s32.totalorder %s26, %s29
      %p35 = scmp.eq.s32.totalorder %s16, 0
      %p36 = por %p34, %p35
      %p37 = scmp.ne.s32.totalorder %s26, %s29
      %p38 = scmp.eq.s32.totalorder %s21, 1
      %p39 = por %p37, %p38
      %p40 = scmp.ne.s32.totalorder %s29, %s30
      %p41 = scmp.eq.s32.totalorder %s21, 0
      %p42 = por %p40, %p41
      %p43 = scmp.ne.s32.totalorder %s29, %s30
      %p44 = scmp.eq.s32.totalorder %s22, 1
      %p45 = por %p43, %p44
      %p47 = scmp.ne.s32.totalorder %s30, %s46
      %p48 = scmp.eq.s32.totalorder %s22, 0
      %p49 = por %p47, %p48
      %s51 = sadd.s32 %s50, 1
      %p54 = scmp.eq.s32.totalorder %s16, 1
      %p55 = scmp.ne.s32.totalorder %s50, %s52
      %p56 = scmp.eq.s32.totalorder %s16, 0
      %p57 = por %p55, %p56
      %p58 = scmp.ne.s32.totalorder %s50, %s52
      %p59 = scmp.eq.s32.totalorder %s21, 1
      %p60 = por %p58, %p59
      %p61 = scmp.ne.s32.totalorder %s52, %s53
      %p62 = scmp.eq.s32.totalorder %s21, 0
      %p63 = por %p61, %p62
      %p64 = scmp.ne.s32.totalorder %s52, %s53
      %p65 = scmp.eq.s32.totalorder %s22, 1
      %p66 = por %p64, %p65
      %p68 = scmp.ne.s32.totalorder %s53, %s67
      %p69 = scmp.eq.s32.totalorder %s22, 0
      %p70 = por %p68, %p69
      %s72 = sadd.s32 %s71, 1
      %p75 = scmp.eq.s32.totalorder %s16, 1
      %p76 = scmp.ne.s32.totalorder %s71, %s73
      %p77 = scmp.eq.s32.totalorder %s16, 0
      %p78 = por %p76, %p77
      %p79 = scmp.ne.s32.totalorder %s71, %s73
      %p80 = scmp.eq.s32.totalorder %s21, 1
      %p81 = por %p79, %p80
      %p82 = scmp.ne.s32.totalorder %s73, %s74
      %p83 = scmp.eq.s32.totalorder %s21, 0
      %p84 = por %p82, %p83
      %p85 = scmp.ne.s32.totalorder %s73, %s74
      %p86 = scmp.eq.s32.totalorder %s22, 1
      %p87 = por %p85, %p86
      %p89 = scmp.ne.s32.totalorder %s74, %s88
      %p90 = scmp.eq.s32.totalorder %s22, 0
      %p91 = por %p89, %p90
      %s93 = sadd.s32 %s92, 1
      %p96 = scmp.eq.s32.totalorder %s16, 1
      %p97 = scmp.ne.s32.totalorder %s92, %s94
      %p98 = scmp.eq.s32.totalorder %s16, 0
      %p99 = por %p97, %p98
      %p100 = scmp.ne.s32.totalorder %s92, %s94
      %p101 = scmp.eq.s32.totalorder %s21, 1
      %p102 = por %p100, %p101
      %p103 = scmp.ne.s32.totalorder %s94, %s95
      %p104 = scmp.eq.s32.totalorder %s21, 0
      %p105 = por %p103, %p104
      %p106 = scmp.ne.s32.totalorder %s94, %s95
      %p107 = scmp.eq.s32.totalorder %s22, 1
      %p108 = por %p106, %p107
      %p110 = scmp.ne.s32.totalorder %s95, %s109
      %p111 = scmp.eq.s32.totalorder %s22, 0
      %p112 = por %p110, %p111
      %s114 = sadd.s32 %s113, 1
      %p117 = scmp.eq.s32.totalorder %s16, 1
      %p118 = scmp.ne.s32.totalorder %s113, %s115
      %p119 = scmp.eq.s32.totalorder %s16, 0
      %p120 = por %p118, %p119
      %p121 = scmp.ne.s32.totalorder %s113, %s115
      %p122 = scmp.eq.s32.totalorder %s21, 1
      %p123 = por %p121, %p122
      %p124 = scmp.ne.s32.totalorder %s115, %s116
      %p125 = scmp.eq.s32.totalorder %s21, 0
      %p126 = por %p124, %p125
      %p127 = scmp.ne.s32.totalorder %s115, %s116
      %p128 = scmp.eq.s32.totalorder %s22, 1
      %p129 = por %p127, %p128
      %p131 = scmp.ne.s32.totalorder %s116, %s130
      %p132 = scmp.eq.s32.totalorder %s22, 0
      %p133 = por %p131, %p132
      %s135 = sadd.s32 %s134, 1
      %p138 = scmp.eq.s32.totalorder %s16, 1
      %p139 = scmp.ne.s32.totalorder %s134, %s136
      %p140 = scmp.eq.s32.totalorder %s16, 0
      %p141 = por %p139, %p140
      %p142 = scmp.ne.s32.totalorder %s134, %s136
      %p143 = scmp.eq.s32.totalorder %s21, 1
      %p144 = por %p142, %p143
      %p145 = scmp.ne.s32.totalorder %s136, %s137
      %p146 = scmp.eq.s32.totalorder %s21, 0
      %p147 = por %p145, %p146
      %p148 = scmp.ne.s32.totalorder %s136, %s137
      %p149 = scmp.eq.s32.totalorder %s22, 1
      %p150 = por %p148, %p149
      %p152 = scmp.ne.s32.totalorder %s137, %s151
      %p153 = scmp.eq.s32.totalorder %s22, 0
      %p154 = por %p152, %p153
      %s156 = sadd.s32 %s155, 1
      %p159 = scmp.eq.s32.totalorder %s16, 1
      %p160 = scmp.ne.s32.totalorder %s155, %s157
      %p161 = scmp.eq.s32.totalorder %s16, 0
      %p162 = por %p160, %p161
      %p163 = scmp.ne.s32.totalorder %s155, %s157
      %p164 = scmp.eq.s32.totalorder %s21, 1
      %p165 = por %p163, %p164
      %p166 = scmp.ne.s32.totalorder %s157, %s158
      %p167 = scmp.eq.s32.totalorder %s21, 0
      %p168 = por %p166, %p167
      %p169 = scmp.ne.s32.totalorder %s157, %s158
      %p170 = scmp.eq.s32.totalorder %s22, 1
      %p171 = por %p169, %p170
      %p173 = scmp.ne.s32.totalorder %s158, %s172
      %p174 = scmp.eq.s32.totalorder %s22, 0
      %p175 = por %p173, %p174
      %s176 = ssub.s32 %s16, %s23
      %p177 = scmp.eq.s32.totalorder %s176, 0
      %s179 = sadd.s32 %s178, 1
      %s180 = scalar_select %p177, %s178, %s179
      %p183 = pneg %p177
      %p184 = scmp.eq.s32.totalorder %s16, 1
      %p185 = por %p183, %p184
      %p186 = scmp.ne.s32.totalorder %s178, %s181
      %p187 = scmp.eq.s32.totalorder %s16, 0
      %p188 = por %p186, %p187
      %p189 = scmp.ne.s32.totalorder %s178, %s181
      %p190 = scmp.eq.s32.totalorder %s21, 1
      %p191 = por %p189, %p190
      %p192 = scmp.ne.s32.totalorder %s181, %s182
      %p193 = scmp.eq.s32.totalorder %s21, 0
      %p194 = por %p192, %p193
      %p195 = scmp.ne.s32.totalorder %s181, %s182
      %p196 = scmp.eq.s32.totalorder %s22, 1
      %p197 = por %p195, %p196
      %p199 = scmp.ne.s32.totalorder %s182, %s198
      %p200 = scmp.eq.s32.totalorder %s22, 0
      %p201 = por %p199, %p200
      %p202 = scmp.le.s32.totalorder 1, %s16
      %p203 = scmp.lt.s32.totalorder %s16, 3
      %p204 = pnand %p202, %p203
      %p205 = pneg %p204
      // Predicated region
      $region9: #{tpu_custom_call.1} parent=5 // pred_check
        _
      $region10: #{tpu_custom_call.1} parent=5 // pred_check_branch
        %207 = sbr.rel (%p204) target = $region12
      $region11: #{tpu_custom_call.1} parent=5 // pred_region
        %s208 = ssub.s32 %s16, 1
        // Predicated region
        $region13: #{tpu_custom_call.1} parent=11 // pred_check
          %p209 = pneg %p63
        $region14: #{tpu_custom_call.1} parent=11 // pred_check_branch
          %211 = sbr.rel (%p209) target = $region16
        $region15: #{tpu_custom_call.1} parent=11 // pred_region
          _
        $region16: #{tpu_custom_call.1} parent=11 // pred_fallthru
          _
        // Predicated region
        $region17: #{tpu_custom_call.1} parent=11 // pred_check
          %p212 = pneg %p84
        $region18: #{tpu_custom_call.1} parent=11 // pred_check_branch
          %214 = sbr.rel (%p212) target = $region20
        $region19: #{tpu_custom_call.1} parent=11 // pred_region
          _
        $region20: #{tpu_custom_call.1} parent=11 // pred_fallthru
          _
        // Predicated region
        $region21: #{tpu_custom_call.1} parent=11 // pred_check
          %p215 = pneg %p105
        $region22: #{tpu_custom_call.1} parent=11 // pred_check_branch
          %217 = sbr.rel (%p215) target = $region24
        $region23: #{tpu_custom_call.1} parent=11 // pred_region
          _
        $region24: #{tpu_custom_call.1} parent=11 // pred_fallthru
          _
        // Predicated region
        $region25: #{tpu_custom_call.1} parent=11 // pred_check
          %p218 = pneg %p126
        $region26: #{tpu_custom_call.1} parent=11 // pred_check_branch
          %220 = sbr.rel (%p218) target = $region28
        $region27: #{tpu_custom_call.1} parent=11 // pred_region
          _
        $region28: #{tpu_custom_call.1} parent=11 // pred_fallthru
          _
        // Predicated region
        $region29: #{tpu_custom_call.1} parent=11 // pred_check
          %p221 = pneg %p147
        $region30: #{tpu_custom_call.1} parent=11 // pred_check_branch
          %223 = sbr.rel (%p221) target = $region32
        $region31: #{tpu_custom_call.1} parent=11 // pred_region
          _
        $region32: #{tpu_custom_call.1} parent=11 // pred_fallthru
          _
        // Predicated region
        $region33: #{tpu_custom_call.1} parent=11 // pred_check
          %p224 = pneg %p168
        $region34: #{tpu_custom_call.1} parent=11 // pred_check_branch
          %226 = sbr.rel (%p224) target = $region36
        $region35: #{tpu_custom_call.1} parent=11 // pred_region
          _
        $region36: #{tpu_custom_call.1} parent=11 // pred_fallthru
          _
      $region12: #{tpu_custom_call.1} parent=5 // pred_fallthru
        _
      %p227 = scmp.lt.s32.totalorder %s16, 2
      // Predicated region
      $region37: #{tpu_custom_call.1} parent=5 // pred_check
        %p228 = pneg %p227
      $region38: #{tpu_custom_call.1} parent=5 // pred_check_branch
        %230 = sbr.rel (%p228) target = $region40
      $region39: #{tpu_custom_call.1} parent=5 // pred_region
        // Predicated region
        $region41: #{tpu_custom_call.1} parent=39 // pred_check
          %p231 = pneg %p36
        $region42: #{tpu_custom_call.1} parent=39 // pred_check_branch
          %233 = sbr.rel (%p231) target = $region44
        $region43: #{tpu_custom_call.1} parent=39 // pred_region
          %p234 = scmp.lt.s32.totalorder %s16, 1
          %s235 = scalar_select %p234, %s16, 1
          %s236 = smul.addr %s235, 32
          %s237 = smul.addr %s236, 8
          %s238 = scalar_lea.vmem %s0, %s237
        $region44: #{tpu_custom_call.1} parent=39 // pred_fallthru
          _
      $region40: #{tpu_custom_call.1} parent=5 // pred_fallthru
        _
      %p239 = scmp.le.s32.totalorder 1, %s16
      %p240 = scmp.lt.s32.totalorder %s16, 3
      %p241 = pnand %p239, %p240
      %p242 = pneg %p241
      // Predicated region
      $region45: #{tpu_custom_call.1} parent=5 // pred_check
        _
      $region46: #{tpu_custom_call.1} parent=5 // pred_check_branch
        %244 = sbr.rel (%p241) target = $region48
      $region47: #{tpu_custom_call.1} parent=5 // pred_region
        %s245 = ssub.s32 %s16, 1
        %p246 = scmp.lt.s32.totalorder %s21, 1
        %s247 = scalar_select %p246, %s21, 1
        %s248 = smul.addr %s247, 32
        %s249 = smul.addr %s248, 8
        %s250 = scalar_lea.vmem %s0, %s249
        %p251 = pneg %p42
        %p252 = pneg %p39
        %p253 = pneg %p63
        %p254 = pneg %p60
        %p255 = pneg %p84
        %p256 = pneg %p81
        %p257 = pneg %p105
        %p258 = pneg %p102
        %p259 = pneg %p126
        %p260 = pneg %p123
        %p261 = pneg %p147
        %p262 = pneg %p144
        %p263 = pneg %p168
        %p264 = pneg %p165
        %p265 = pneg %p194
        %p266 = pneg %p191
        %s267 = sand.u32 %s181, 1
        %s268 = scalar_lea.sflag [#allocation6], %s267
        %s269 = sand.u32 %s181, 1
        %s270 = smul.addr %s269, 64
        %s271 = scalar_lea.vmem [#allocation5], %s270
        %p272 = scmp.lt.s32.totalorder %s21, 1
        %s273 = scalar_select %p272, %s21, 1
        %s274 = smul.addr %s273, 32
        %s275 = smul.addr %s274, 8
        %s276 = scalar_lea.vmem %s0, %s275
        %vm277 = vcmask 31744
        %278 = vst.msk [vmem:[#allocation2] sm:$0xff] %vm277, 0.0
        %279 = vst.msk [vmem:[#allocation2 + $0x8] sm:$0xff] %vm277, 0.0
        %vm280 = vcmask 25600
        %281 = vst.msk [vmem:[#allocation2 + $0x10] sm:$0x3] %vm280, 0.0
        %282 = vst.msk [vmem:[#allocation2 + $0x18] sm:$0xff] %vm277, 0.0
        %283 = vst.msk [vmem:[#allocation2 + $0x20] sm:$0xff] %vm277, 0.0
        %284 = vst.msk [vmem:[#allocation2 + $0x28] sm:$0x3] %vm280, 0.0
        %285 = vst.msk [vmem:[#allocation2 + $0x30] sm:$0xff] %vm277, 0.0
        %286 = vst.msk [vmem:[#allocation2 + $0x38] sm:$0xff] %vm277, 0.0
        %287 = vst.msk [vmem:[#allocation2 + $0x40] sm:$0x3] %vm280, 0.0
        %288 = vst.msk [vmem:[#allocation2 + $0x48] sm:$0xff] %vm277, 0.0
        %289 = vst.msk [vmem:[#allocation2 + $0x50] sm:$0xff] %vm277, 0.0
        %290 = vst.msk [vmem:[#allocation2 + $0x58] sm:$0x3] %vm280, 0.0
        %291 = vst.msk [vmem:[#allocation2 + $0x60] sm:$0xff] %vm277, 0.0
        %292 = vst.msk [vmem:[#allocation2 + $0x68] sm:$0xff] %vm277, 0.0
        %293 = vst.msk [vmem:[#allocation2 + $0x70] sm:$0x3] %vm280, 0.0
        %294 = vst.msk [vmem:[#allocation2 + $0x78] sm:$0xff] %vm277, 0.0
        %295 = vst.msk [vmem:[#allocation2 + $0x80] sm:$0xff] %vm277, 0.0
        %296 = vst.msk [vmem:[#allocation2 + $0x88] sm:$0x3] %vm280, 0.0
        %297 = vst.msk [vmem:[#allocation2 + $0x90] sm:$0xff] %vm277, 0.0
        %298 = vst.msk [vmem:[#allocation2 + $0x98] sm:$0xff] %vm277, 0.0
        %299 = vst.msk [vmem:[#allocation2 + $0xa0] sm:$0x3] %vm280, 0.0
        %300 = vst.msk [vmem:[#allocation2 + $0xa8] sm:$0xff] %vm277, 0.0
        %301 = vst.msk [vmem:[#allocation2 + $0xb0] sm:$0xff] %vm277, 0.0
        %302 = vst.msk [vmem:[#allocation2 + $0xb8] sm:$0x3] %vm280, 0.0
        %303 = vst.msk [vmem:[#allocation2 + $0xc0] sm:$0xff] %vm277, 0.0
        %304 = vst.msk [vmem:[#allocation2 + $0xc8] sm:$0xff] %vm277, 0.0
        %305 = vst.msk [vmem:[#allocation2 + $0xd0] sm:$0x3] %vm280, 0.0
        %306 = vst.msk [vmem:[#allocation2 + $0xd8] sm:$0xff] %vm277, 0.0
        %307 = vst.msk [vmem:[#allocation2 + $0xe0] sm:$0xff] %vm277, 0.0
        %308 = vst.msk [vmem:[#allocation2 + $0xe8] sm:$0x3] %vm280, 0.0
        %309 = vst.msk [vmem:[#allocation2 + $0xf0] sm:$0xff] %vm277, 0.0
        %310 = vst.msk [vmem:[#allocation2 + $0xf8] sm:$0xff] %vm277, 0.0
        %311 = vst.msk [vmem:[#allocation2 + $0x100] sm:$0x3] %vm280, 0.0
        %312 = vst.msk [vmem:[#allocation2 + $0x108] sm:$0xff] %vm277, 0.0
        %313 = vst.msk [vmem:[#allocation2 + $0x110] sm:$0xff] %vm277, 0.0
        %314 = vst.msk [vmem:[#allocation2 + $0x118] sm:$0x3] %vm280, 0.0
        %315 = vst.msk [vmem:[#allocation2 + $0x120] sm:$0xff] %vm277, 0.0
        %316 = vst.msk [vmem:[#allocation2 + $0x128] sm:$0xff] %vm277, 0.0
        %317 = vst.msk [vmem:[#allocation2 + $0x130] sm:$0x3] %vm280, 0.0
        %318 = vst.msk [vmem:[#allocation2 + $0x138] sm:$0xff] %vm277, 0.0
        %319 = vst.msk [vmem:[#allocation2 + $0x140] sm:$0xff] %vm277, 0.0
        %320 = vst.msk [vmem:[#allocation2 + $0x148] sm:$0x3] %vm280, 0.0
        %321 = vst.msk [vmem:[#allocation2 + $0x150] sm:$0xff] %vm277, 0.0
        %322 = vst.msk [vmem:[#allocation2 + $0x158] sm:$0xff] %vm277, 0.0
        %323 = vst.msk [vmem:[#allocation2 + $0x160] sm:$0x3] %vm280, 0.0
        %324 = vst.msk [vmem:[#allocation2 + $0x168] sm:$0xff] %vm277, 0.0
        %325 = vst.msk [vmem:[#allocation2 + $0x170] sm:$0xff] %vm277, 0.0
        %326 = vst.msk [vmem:[#allocation2 + $0x178] sm:$0x3] %vm280, 0.0
        %327 = vst.msk [vmem:[#allocation2 + $0x180] sm:$0xff] %vm277, 0.0
        %328 = vst.msk [vmem:[#allocation2 + $0x188] sm:$0xff] %vm277, 0.0
        %329 = vst.msk [vmem:[#allocation2 + $0x190] sm:$0x3] %vm280, 0.0
        %330 = vst.msk [vmem:[#allocation2 + $0x198] sm:$0xff] %vm277, 0.0
        %331 = vst.msk [vmem:[#allocation2 + $0x1a0] sm:$0xff] %vm277, 0.0
        %332 = vst.msk [vmem:[#allocation2 + $0x1a8] sm:$0x3] %vm280, 0.0
        %v333 = vld [vmem:[%s276] sm:$0xff]
        %v334 = vld [vmem:[%s276 + $0x8] sm:$0xff]
        %v335 = vld [vmem:[%s276 + $0x10] sm:$0xff]
        %v336 = vld [vmem:[%s276 + $0x18] sm:$0xff]
        %v337 = vld [vmem:[%s276 + $0x20] sm:$0xff]
        %v338 = vld [vmem:[%s276 + $0x28] sm:$0xff]
        %v339 = vld [vmem:[%s276 + $0x30] sm:$0xff]
        %v340 = vld [vmem:[%s276 + $0x38] sm:$0xff]
        %v341 = vld [vmem:[%s276 + $0x40] sm:$0xff]
        %v342 = vld [vmem:[%s276 + $0x48] sm:$0xff]
        %v343 = vld [vmem:[%s276 + $0x50] sm:$0xff]
        %v344 = vld [vmem:[%s276 + $0x58] sm:$0xff]
        %v345 = vld [vmem:[%s276 + $0x60] sm:$0xff]
        %v346 = vld [vmem:[%s276 + $0x68] sm:$0xff]
        %v347 = vld [vmem:[%s276 + $0x70] sm:$0xff]
        %v348 = vld [vmem:[%s276 + $0x78] sm:$0xff]
        %v349 = vld [vmem:[%s276 + $0x80] sm:$0xff]
        %v350 = vld [vmem:[%s276 + $0x88] sm:$0xff]
        %v351 = vld [vmem:[%s276 + $0x90] sm:$0xff]
        %v352 = vld [vmem:[%s276 + $0x98] sm:$0xff]
        %v353 = vld [vmem:[%s276 + $0xa0] sm:$0xff]
        %v354 = vld [vmem:[%s276 + $0xa8] sm:$0xff]
        %v355 = vld [vmem:[%s276 + $0xb0] sm:$0xff]
        %v356 = vld [vmem:[%s276 + $0xb8] sm:$0xff]
        %v357 = vld [vmem:[%s276 + $0xc0] sm:$0xff]
        %v358 = vld [vmem:[%s276 + $0xc8] sm:$0xff]
        %v359 = vld [vmem:[%s276 + $0xd0] sm:$0xff]
        %v360 = vld [vmem:[%s276 + $0xd8] sm:$0xff]
        %v361 = vld [vmem:[%s276 + $0xe0] sm:$0xff]
        %v362 = vld [vmem:[%s276 + $0xe8] sm:$0xff]
        %v363 = vld [vmem:[%s276 + $0xf0] sm:$0xff]
        %v364 = vld [vmem:[%s276 + $0xf8] sm:$0xff]
        %s365 = scalar_lea.vmem [#allocation2], 24
        %366 = vst.msk [vmem:[%s365 + $0x1] sm:$0xff] %vm277, %v333
        %367 = vst.msk [vmem:[%s365 + $0x9] sm:$0xff] %vm277, %v334
        %368 = vst.msk [vmem:[%s365 + $0x19] sm:$0xff] %vm277, %v335
        %369 = vst.msk [vmem:[%s365 + $0x21] sm:$0xff] %vm277, %v336
        %370 = vst.msk [vmem:[%s365 + $0x31] sm:$0xff] %vm277, %v337
        %371 = vst.msk [vmem:[%s365 + $0x39] sm:$0xff] %vm277, %v338
        %372 = vst.msk [vmem:[%s365 + $0x49] sm:$0xff] %vm277, %v339
        %373 = vst.msk [vmem:[%s365 + $0x51] sm:$0xff] %vm277, %v340
        %374 = vst.msk [vmem:[%s365 + $0x61] sm:$0xff] %vm277, %v341
        %375 = vst.msk [vmem:[%s365 + $0x69] sm:$0xff] %vm277, %v342
        %376 = vst.msk [vmem:[%s365 + $0x79] sm:$0xff] %vm277, %v343
        %377 = vst.msk [vmem:[%s365 + $0x81] sm:$0xff] %vm277, %v344
        %378 = vst.msk [vmem:[%s365 + $0x91] sm:$0xff] %vm277, %v345
        %379 = vst.msk [vmem:[%s365 + $0x99] sm:$0xff] %vm277, %v346
        %380 = vst.msk [vmem:[%s365 + $0xa9] sm:$0xff] %vm277, %v347
        %381 = vst.msk [vmem:[%s365 + $0xb1] sm:$0xff] %vm277, %v348
        %382 = vst.msk [vmem:[%s365 + $0xc1] sm:$0xff] %vm277, %v349
        %383 = vst.msk [vmem:[%s365 + $0xc9] sm:$0xff] %vm277, %v350
        %384 = vst.msk [vmem:[%s365 + $0xd9] sm:$0xff] %vm277, %v351
        %385 = vst.msk [vmem:[%s365 + $0xe1] sm:$0xff] %vm277, %v352
        %386 = vst.msk [vmem:[%s365 + $0xf1] sm:$0xff] %vm277, %v353
        %387 = vst.msk [vmem:[%s365 + $0xf9] sm:$0xff] %vm277, %v354
        %388 = vst.msk [vmem:[%s365 + $0x109] sm:$0xff] %vm277, %v355
        %389 = vst.msk [vmem:[%s365 + $0x111] sm:$0xff] %vm277, %v356
        %390 = vst.msk [vmem:[%s365 + $0x121] sm:$0xff] %vm277, %v357
        %391 = vst.msk [vmem:[%s365 + $0x129] sm:$0xff] %vm277, %v358
        %392 = vst.msk [vmem:[%s365 + $0x139] sm:$0xff] %vm277, %v359
        %393 = vst.msk [vmem:[%s365 + $0x141] sm:$0xff] %vm277, %v360
        %394 = vst.msk [vmem:[%s365 + $0x151] sm:$0xff] %vm277, %v361
        %395 = vst.msk [vmem:[%s365 + $0x159] sm:$0xff] %vm277, %v362
        %396 = vst.msk [vmem:[%s365 + $0x169] sm:$0xff] %vm277, %v363
        %397 = vst.msk [vmem:[%s365 + $0x171] sm:$0xff] %vm277, %v364
        %v398 = vld [vmem:[#allocation2] sm:$0xff]
        %v399 = vld [vmem:[#allocation2 + $0x8] sm:$0xff]
        %v400 = vld [vmem:[#allocation2 + $0x10] sm:$0x3]
        %v401 = vld [vmem:[#allocation2 + $0x18] sm:$0xff]
        %v402 = vld [vmem:[#allocation2 + $0x20] sm:$0xff]
        %v403 = vld [vmem:[#allocation2 + $0x28] sm:$0x3]
        %v404 = vld [vmem:[#allocation2 + $0x30] sm:$0xff]
        %v405 = vld [vmem:[#allocation2 + $0x38] sm:$0xff]
        %v406 = vld [vmem:[#allocation2 + $0x40] sm:$0x3]
        %v407 = vld [vmem:[#allocation2 + $0x48] sm:$0xff]
        %v408 = vld [vmem:[#allocation2 + $0x50] sm:$0xff]
        %v409 = vld [vmem:[#allocation2 + $0x58] sm:$0x3]
        %v410 = vld [vmem:[#allocation2 + $0x60] sm:$0xff]
        %v411 = vld [vmem:[#allocation2 + $0x68] sm:$0xff]
        %v412 = vld [vmem:[#allocation2 + $0x70] sm:$0x3]
        %v413 = vld [vmem:[#allocation2 + $0x78] sm:$0xff]
        %v414 = vld [vmem:[#allocation2 + $0x80] sm:$0xff]
        %v415 = vld [vmem:[#allocation2 + $0x88] sm:$0x3]
        %v416 = vld [vmem:[#allocation2 + $0x90] sm:$0xff]
        %v417 = vld [vmem:[#allocation2 + $0x98] sm:$0xff]
        %v418 = vld [vmem:[#allocation2 + $0xa0] sm:$0x3]
        %v419 = vld [vmem:[#allocation2 + $0xa8] sm:$0xff]
        %v420 = vld [vmem:[#allocation2 + $0xb0] sm:$0xff]
        %v421 = vld [vmem:[#allocation2 + $0xb8] sm:$0x3]
        %v422 = vld [vmem:[#allocation2 + $0xc0] sm:$0xff]
        %v423 = vld [vmem:[#allocation2 + $0xc8] sm:$0xff]
        %v424 = vld [vmem:[#allocation2 + $0xd0] sm:$0x3]
        %v425 = vld [vmem:[#allocation2 + $0xd8] sm:$0xff]
        %v426 = vld [vmem:[#allocation2 + $0xe0] sm:$0xff]
        %v427 = vld [vmem:[#allocation2 + $0xe8] sm:$0x3]
        %v428 = vld [vmem:[#allocation2 + $0xf0] sm:$0xff]
        %v429 = vld [vmem:[#allocation2 + $0xf8] sm:$0xff]
        %v430 = vld [vmem:[#allocation2 + $0x100] sm:$0x3]
        %v431 = vld [vmem:[#allocation2 + $0x108] sm:$0xff]
        %v432 = vld [vmem:[#allocation2 + $0x110] sm:$0xff]
        %v433 = vld [vmem:[#allocation2 + $0x118] sm:$0x3]
        %v434 = vld [vmem:[#allocation2 + $0x120] sm:$0xff]
        %v435 = vld [vmem:[#allocation2 + $0x128] sm:$0xff]
        %v436 = vld [vmem:[#allocation2 + $0x130] sm:$0x3]
        %v437 = vld [vmem:[#allocation2 + $0x138] sm:$0xff]
        %v438 = vld [vmem:[#allocation2 + $0x140] sm:$0xff]
        %v439 = vld [vmem:[#allocation2 + $0x148] sm:$0x3]
        %v440 = vld [vmem:[#allocation2 + $0x150] sm:$0xff]
        %v441 = vld [vmem:[#allocation2 + $0x158] sm:$0xff]
        %v442 = vld [vmem:[#allocation2 + $0x160] sm:$0x3]
        %v443 = vld [vmem:[#allocation2 + $0x168] sm:$0xff]
        %v444 = vld [vmem:[#allocation2 + $0x170] sm:$0xff]
        %v445 = vld [vmem:[#allocation2 + $0x178] sm:$0x3]
        %v446 = vld [vmem:[#allocation2 + $0x180] sm:$0xff]
        %v447 = vld [vmem:[#allocation2 + $0x188] sm:$0xff]
        %v448 = vld [vmem:[#allocation2 + $0x190] sm:$0x3]
        %v449 = vld [vmem:[#allocation2 + $0x198] sm:$0xff]
        %v450 = vld [vmem:[#allocation2 + $0x1a0] sm:$0xff]
        %v451 = vld [vmem:[#allocation2 + $0x1a8] sm:$0x3]
        %v452 = vld [vmem:[%s2] sm:$0x1]
        %v453 = vld [vmem:[%s3] sm:$0x1]
        %v454 = vld [vmem:[%s1] sm:$0xf]
        %vm503 = vcmask 1046528
        %v504 = vrot.slane %v398, 1
        %v505 = vrot.slane %v399, 1
        %v506 = vsel %vm503, %v504, %v505
        %v507 = vrot.slane %v400, 1
        %v508 = vsel %vm503, %v505, %v507
        %v509 = vrot.slane %v401, 1
        %v510 = vrot.slane %v402, 1
        %v511 = vsel %vm503, %v509, %v510
        %v512 = vrot.slane %v403, 1
        %v513 = vsel %vm503, %v510, %v512
        %v514 = vrot.slane %v404, 1
        %v515 = vrot.slane %v405, 1
        %v516 = vsel %vm503, %v514, %v515
        %v517 = vrot.slane %v406, 1
        %v518 = vsel %vm503, %v515, %v517
        %v519 = vrot.slane %v407, 1
        %v520 = vrot.slane %v408, 1
        %v521 = vsel %vm503, %v519, %v520
        %v522 = vrot.slane %v409, 1
        %v523 = vsel %vm503, %v520, %v522
        %v524 = vrot.slane %v410, 1
        %v525 = vrot.slane %v411, 1
        %v526 = vsel %vm503, %v524, %v525
        %v527 = vrot.slane %v412, 1
        %v528 = vsel %vm503, %v525, %v527
        %v529 = vrot.slane %v413, 1
        %v530 = vrot.slane %v414, 1
        %v531 = vsel %vm503, %v529, %v530
        %v532 = vrot.slane %v415, 1
        %v533 = vsel %vm503, %v530, %v532
        %v534 = vrot.slane %v416, 1
        %v535 = vrot.slane %v417, 1
        %v536 = vsel %vm503, %v534, %v535
        %v537 = vrot.slane %v418, 1
        %v538 = vsel %vm503, %v535, %v537
        %v539 = vrot.slane %v419, 1
        %v540 = vrot.slane %v420, 1
        %v541 = vsel %vm503, %v539, %v540
        %v542 = vrot.slane %v421, 1
        %v543 = vsel %vm503, %v540, %v542
        %v544 = vrot.slane %v422, 1
        %v545 = vrot.slane %v423, 1
        %v546 = vsel %vm503, %v544, %v545
        %v547 = vrot.slane %v424, 1
        %v548 = vsel %vm503, %v545, %v547
        %v549 = vrot.slane %v425, 1
        %v550 = vrot.slane %v426, 1
        %v551 = vsel %vm503, %v549, %v550
        %v552 = vrot.slane %v427, 1
        %v553 = vsel %vm503, %v550, %v552
        %v554 = vrot.slane %v428, 1
        %v555 = vrot.slane %v429, 1
        %v556 = vsel %vm503, %v554, %v555
        %v557 = vrot.slane %v430, 1
        %v558 = vsel %vm503, %v555, %v557
        %v559 = vrot.slane %v431, 1
        %v560 = vrot.slane %v432, 1
        %v561 = vsel %vm503, %v559, %v560
        %v562 = vrot.slane %v433, 1
        %v563 = vsel %vm503, %v560, %v562
        %v564 = vrot.slane %v434, 1
        %v565 = vrot.slane %v435, 1
        %v566 = vsel %vm503, %v564, %v565
        %v567 = vrot.slane %v436, 1
        %v568 = vsel %vm503, %v565, %v567
        %v569 = vrot.slane %v437, 1
        %v570 = vrot.slane %v438, 1
        %v571 = vsel %vm503, %v569, %v570
        %v572 = vrot.slane %v439, 1
        %v573 = vsel %vm503, %v570, %v572
        %v574 = vrot.slane %v440, 1
        %v575 = vrot.slane %v441, 1
        %v576 = vsel %vm503, %v574, %v575
        %v577 = vrot.slane %v442, 1
        %v578 = vsel %vm503, %v575, %v577
        %v579 = vrot.slane %v443, 1
        %v580 = vrot.slane %v444, 1
        %v581 = vsel %vm503, %v579, %v580
        %v582 = vrot.slane %v445, 1
        %v583 = vsel %vm503, %v580, %v582
        %s584 = scalar_lea.vmem %s1, 4
        %v585 = vld [vmem:[%s584] sm:$0xf]
        %v586 = vsel %vm277, %v506, 0
        %v588 = vsel %vm277, %v508, 0
        %v590 = vsel %vm277, %v511, 0
        %v592 = vsel %vm277, %v513, 0
        %v594 = vsel %vm277, %v516, 0
        %v596 = vsel %vm277, %v518, 0
        %v598 = vsel %vm277, %v521, 0
        %v600 = vsel %vm277, %v523, 0
        %v602 = vsel %vm277, %v526, 0
        %v604 = vsel %vm277, %v528, 0
        %v606 = vsel %vm277, %v531, 0
        %v608 = vsel %vm277, %v533, 0
        %v610 = vsel %vm277, %v536, 0
        %v612 = vsel %vm277, %v538, 0
        %v614 = vsel %vm277, %v541, 0
        %v616 = vsel %vm277, %v543, 0
        %v618 = vsel %vm277, %v546, 0
        %v620 = vsel %vm277, %v548, 0
        %v622 = vsel %vm277, %v551, 0
        %v624 = vsel %vm277, %v553, 0
        %v626 = vsel %vm277, %v556, 0
        %v628 = vsel %vm277, %v558, 0
        %v630 = vsel %vm277, %v561, 0
        %v632 = vsel %vm277, %v563, 0
        %v634 = vsel %vm277, %v566, 0
        %v636 = vsel %vm277, %v568, 0
        %v638 = vsel %vm277, %v571, 0
        %v640 = vsel %vm277, %v573, 0
        %v642 = vsel %vm277, %v576, 0
        %v644 = vsel %vm277, %v578, 0
        %v646 = vsel %vm277, %v581, 0
        %v648 = vsel %vm277, %v583, 0
        %vm650 = vcmask 1043456
        %v652 = vsel %vm650, %v585, 0
        %654 = vmatprep.subr.mxu0 0.0
        %655 = vmatpush1.msra.mxu0 %v652
        %656 = vmatprep.subr.mxu0 0.0
        %657 = vmatpush1.msra.mxu0 0.0
        %658 = vmatprep.subr.mxu0 0.0
        %659 = vmatpush1.msra.mxu0 0.0
        %660 = vmatprep.subr.mxu0 0.0
        %661 = vmatpush1.msra.mxu0 0.0
        %662 = vmatprep.subr.mxu0 0.0
        %663 = vmatpush1.msra.mxu0 0.0
        %664 = vmatprep.subr.mxu0 0.0
        %665 = vmatpush1.msra.mxu0 0.0
        %666 = vmatprep.subr.mxu0 0.0
        %667 = vmatpush1.msra.mxu0 0.0
        %668 = vmatprep.subr.mxu0 0.0
        %669 = vmatpush1.msra.mxu0 0.0
        %670 = vmatprep.subr.mxu0 0.0
        %671 = vmatpush1.msra.mxu0 0.0
        %672 = vmatprep.subr.mxu0 0.0
        %673 = vmatpush1.msra.mxu0 0.0
        %674 = vmatprep.subr.mxu0 0.0
        %675 = vmatpush1.msra.mxu0 0.0
        %676 = vmatprep.subr.mxu0 0.0
        %677 = vmatpush1.msra.mxu0 0.0
        %678 = vmatprep.subr.mxu0 0.0
        %679 = vmatpush1.msra.mxu0 0.0
        %680 = vmatprep.subr.mxu0 0.0
        %681 = vmatpush1.msra.mxu0 0.0
        %682 = vmatprep.subr.mxu0 0.0
        %683 = vmatpush1.msra.mxu0 0.0
        %684 = vmatprep.subr.mxu0 0.0
        %685 = vmatpush1.msra.mxu0 0.0
        %686 = vmatprep.subr.mxu0 0.0
        %687 = vmatpush1.msra.mxu0 0.0
        %688 = vmatprep.subr.mxu0 0.0
        %689 = vmatpush1.msra.mxu0 0.0
        %690 = vmatprep.subr.mxu0 0.0
        %691 = vmatpush1.msra.mxu0 0.0
        %692 = vmatprep.subr.mxu0 0.0
        %693 = vmatpush1.msra.mxu0 0.0
        %694 = vmatprep.subr.mxu0 0.0
        %695 = vmatpush1.msra.mxu0 0.0
        %696 = vmatprep.subr.mxu0 0.0
        %697 = vmatpush1.msra.mxu0 0.0
        %698 = vmatprep.subr.mxu0 0.0
        %699 = vmatpush1.msra.mxu0 0.0
        %700 = vmatprep.subr.mxu0 0.0
        %701 = vmatpush1.msra.mxu0 0.0
        %702 = vmatprep.subr.mxu0 0.0
        %703 = vmatpush1.msra.mxu0 0.0
        %704 = vmatprep.subr.mxu0 0.0
        %705 = vmatpush1.msra.mxu0 0.0
        %706 = vmatprep.subr.mxu0 0.0
        %707 = vmatpush1.msra.mxu0 0.0
        %708 = vmatprep.subr.mxu0 0.0
        %709 = vmatpush1.msra.mxu0 0.0
        %710 = vmatprep.subr.mxu0 0.0
        %711 = vmatpush1.msra.mxu0 0.0
        %712 = vmatprep.subr.mxu0 0.0
        %713 = vmatpush1.msra.mxu0 0.0
        %714 = vmatprep.subr.mxu0 0.0
        %715 = vmatpush1.msra.mxu0 0.0
        %716 = vmatprep.subr.mxu0 0.0
        %717 = vmatpush1.msra.mxu0 0.0
        %718 = vmatprep.mubr.f32.mxu0 0.0
        %719 = vmatmul.mubr.f32.gmra.mrb[0].mxu0 %v586
        %v720 = vpop.f32.mrb[0].mxu0
        %v721 = vadd.f32 0.0, %v720
        %v722 = vpop.f32.mrb[0].mxu0
        %723 = vmatprep.mubr.f32.mxu0 0.0
        %724 = vmatmul.mubr.f32.gmra.mrb[0].mxu0 %v588
        %v725 = vpop.f32.mrb[0].mxu0
        %v726 = vadd.f32 0.0, %v725
        %v727 = vpop.f32.mrb[0].mxu0
        %728 = vmatprep.mubr.f32.mxu0 0.0
        %729 = vmatmul.mubr.f32.gmra.mrb[0].mxu0 %v590
        %v730 = vpop.f32.mrb[0].mxu0
        %v731 = vadd.f32 0.0, %v730
        %v732 = vpop.f32.mrb[0].mxu0
        %733 = vmatprep.mubr.f32.mxu0 0.0
        %734 = vmatmul.mubr.f32.gmra.mrb[0].mxu0 %v592
        %v735 = vpop.f32.mrb[0].mxu0
        %v736 = vadd.f32 0.0, %v735
        %v737 = vpop.f32.mrb[0].mxu0
        %738 = vmatprep.mubr.f32.mxu0 0.0
        %739 = vmatmul.mubr.f32.gmra.mrb[0].mxu0 %v594
        %v740 = vpop.f32.mrb[0].mxu0
        %v741 = vadd.f32 0.0, %v740
        %v742 = vpop.f32.mrb[0].mxu0
        %743 = vmatprep.mubr.f32.mxu0 0.0
        %744 = vmatmul.mubr.f32.gmra.mrb[0].mxu0 %v596
        %v745 = vpop.f32.mrb[0].mxu0
        %v746 = vadd.f32 0.0, %v745
        %v747 = vpop.f32.mrb[0].mxu0
        %748 = vmatprep.mubr.f32.mxu0 0.0
        %749 = vmatmul.mubr.f32.gmra.mrb[0].mxu0 %v598
        %v750 = vpop.f32.mrb[0].mxu0
        %v751 = vadd.f32 0.0, %v750
        %v752 = vpop.f32.mrb[0].mxu0
        %753 = vmatprep.mubr.f32.mxu0 0.0
        %754 = vmatmul.mubr.f32.gmra.mrb[0].mxu0 %v600
        %v755 = vpop.f32.mrb[0].mxu0
        %v756 = vadd.f32 0.0, %v755
        %v757 = vpop.f32.mrb[0].mxu0
        %758 = vmatprep.mubr.f32.mxu0 0.0
        %759 = vmatmul.mubr.f32.gmra.mrb[0].mxu0 %v602
        %v760 = vpop.f32.mrb[0].mxu0
        %v761 = vadd.f32 0.0, %v760
        %v762 = vpop.f32.mrb[0].mxu0
        %763 = vmatprep.mubr.f32.mxu0 0.0
        %764 = vmatmul.mubr.f32.gmra.mrb[0].mxu0 %v604
        %v765 = vpop.f32.mrb[0].mxu0
        %v766 = vadd.f32 0.0, %v765
        %v767 = vpop.f32.mrb[0].mxu0
        %768 = vmatprep.mubr.f32.mxu0 0.0
        %769 = vmatmul.mubr.f32.gmra.mrb[0].mxu0 %v606
        %v770 = vpop.f32.mrb[0].mxu0
        %v771 = vadd.f32 0.0, %v770
        %v772 = vpop.f32.mrb[0].mxu0
        %773 = vmatprep.mubr.f32.mxu0 0.0
        %774 = vmatmul.mubr.f32.gmra.mrb[0].mxu0 %v608
        %v775 = vpop.f32.mrb[0].mxu0
        %v776 = vadd.f32 0.0, %v775
        %v777 = vpop.f32.mrb[0].mxu0
        %778 = vmatprep.mubr.f32.mxu0 0.0
        %779 = vmatmul.mubr.f32.gmra.mrb[0].mxu0 %v610
        %v780 = vpop.f32.mrb[0].mxu0
        %v781 = vadd.f32 0.0, %v780
        %v782 = vpop.f32.mrb[0].mxu0
        %783 = vmatprep.mubr.f32.mxu0 0.0
        %784 = vmatmul.mubr.f32.gmra.mrb[0].mxu0 %v612
        %v785 = vpop.f32.mrb[0].mxu0
        %v786 = vadd.f32 0.0, %v785
        %v787 = vpop.f32.mrb[0].mxu0
        %788 = vmatprep.mubr.f32.mxu0 0.0
        %789 = vmatmul.mubr.f32.gmra.mrb[0].mxu0 %v614
        %v790 = vpop.f32.mrb[0].mxu0
        %v791 = vadd.f32 0.0, %v790
        %v792 = vpop.f32.mrb[0].mxu0
        %793 = vmatprep.mubr.f32.mxu0 0.0
        %794 = vmatmul.mubr.f32.gmra.mrb[0].mxu0 %v616
        %v795 = vpop.f32.mrb[0].mxu0
        %v796 = vadd.f32 0.0, %v795
        %v797 = vpop.f32.mrb[0].mxu0
        %798 = vmatprep.mubr.f32.mxu0 0.0
        %799 = vmatmul.mubr.f32.gmra.mrb[0].mxu0 %v618
        %v800 = vpop.f32.mrb[0].mxu0
        %v801 = vadd.f32 0.0, %v800
        %v802 = vpop.f32.mrb[0].mxu0
        %803 = vmatprep.mubr.f32.mxu0 0.0
        %804 = vmatmul.mubr.f32.gmra.mrb[0].mxu0 %v620
        %v805 = vpop.f32.mrb[0].mxu0
        %v806 = vadd.f32 0.0, %v805
        %v807 = vpop.f32.mrb[0].mxu0
        %808 = vmatprep.mubr.f32.mxu0 0.0
        %809 = vmatmul.mubr.f32.gmra.mrb[0].mxu0 %v622
        %v810 = vpop.f32.mrb[0].mxu0
        %v811 = vadd.f32 0.0, %v810
        %v812 = vpop.f32.mrb[0].mxu0
        %813 = vmatprep.mubr.f32.mxu0 0.0
        %814 = vmatmul.mubr.f32.gmra.mrb[0].mxu0 %v624
        %v815 = vpop.f32.mrb[0].mxu0
        %v816 = vadd.f32 0.0, %v815
        %v817 = vpop.f32.mrb[0].mxu0
        %818 = vmatprep.mubr.f32.mxu0 0.0
        %819 = vmatmul.mubr.f32.gmra.mrb[0].mxu0 %v626
        %v820 = vpop.f32.mrb[0].mxu0
        %v821 = vadd.f32 0.0, %v820
        %v822 = vpop.f32.mrb[0].mxu0
        %823 = vmatprep.mubr.f32.mxu0 0.0
        %824 = vmatmul.mubr.f32.gmra.mrb[0].mxu0 %v628
        %v825 = vpop.f32.mrb[0].mxu0
        %v826 = vadd.f32 0.0, %v825
        %v827 = vpop.f32.mrb[0].mxu0
        %828 = vmatprep.mubr.f32.mxu0 0.0
        %829 = vmatmul.mubr.f32.gmra.mrb[0].mxu0 %v630
        %v830 = vpop.f32.mrb[0].mxu0
        %v831 = vadd.f32 0.0, %v830
        %v832 = vpop.f32.mrb[0].mxu0
        %833 = vmatprep.mubr.f32.mxu0 0.0
        %834 = vmatmul.mubr.f32.gmra.mrb[0].mxu0 %v632
        %v835 = vpop.f32.mrb[0].mxu0
        %v836 = vadd.f32 0.0, %v835
        %v837 = vpop.f32.mrb[0].mxu0
        %838 = vmatprep.mubr.f32.mxu0 0.0
        %839 = vmatmul.mubr.f32.gmra.mrb[0].mxu0 %v634
        %v840 = vpop.f32.mrb[0].mxu0
        %v841 = vadd.f32 0.0, %v840
        %v842 = vpop.f32.mrb[0].mxu0
        %843 = vmatprep.mubr.f32.mxu0 0.0
        %844 = vmatmul.mubr.f32.gmra.mrb[0].mxu0 %v636
        %v845 = vpop.f32.mrb[0].mxu0
        %v846 = vadd.f32 0.0, %v845
        %v847 = vpop.f32.mrb[0].mxu0
        %848 = vmatprep.mubr.f32.mxu0 0.0
        %849 = vmatmul.mubr.f32.gmra.mrb[0].mxu0 %v638
        %v850 = vpop.f32.mrb[0].mxu0
        %v851 = vadd.f32 0.0, %v850
        %v852 = vpop.f32.mrb[0].mxu0
        %853 = vmatprep.mubr.f32.mxu0 0.0
        %854 = vmatmul.mubr.f32.gmra.mrb[0].mxu0 %v640
        %v855 = vpop.f32.mrb[0].mxu0
        %v856 = vadd.f32 0.0, %v855
        %v857 = vpop.f32.mrb[0].mxu0
        %858 = vmatprep.mubr.f32.mxu0 0.0
        %859 = vmatmul.mubr.f32.gmra.mrb[0].mxu0 %v642
        %v860 = vpop.f32.mrb[0].mxu0
        %v861 = vadd.f32 0.0, %v860
        %v862 = vpop.f32.mrb[0].mxu0
        %863 = vmatprep.mubr.f32.mxu0 0.0
        %864 = vmatmul.mubr.f32.gmra.mrb[0].mxu0 %v644
        %v865 = vpop.f32.mrb[0].mxu0
        %v866 = vadd.f32 0.0, %v865
        %v867 = vpop.f32.mrb[0].mxu0
        %868 = vmatprep.mubr.f32.mxu0 0.0
        %869 = vmatmul.mubr.f32.gmra.mrb[0].mxu0 %v646
        %v870 = vpop.f32.mrb[0].mxu0
        %v871 = vadd.f32 0.0, %v870
        %v872 = vpop.f32.mrb[0].mxu0
        %873 = vmatprep.mubr.f32.mxu0 0.0
        %874 = vmatmul.mubr.f32.gmra.mrb[0].mxu0 %v648
        %v875 = vpop.f32.mrb[0].mxu0
        %v876 = vadd.f32 0.0, %v875
        %v877 = vpop.f32.mrb[0].mxu0
        %878 = vdwg.mxu0
        %v879 = vsel %vm277, %v398, 0
        %v881 = vsel %vm277, %v399, 0
        %v883 = vsel %vm277, %v401, 0
        %v885 = vsel %vm277, %v402, 0
        %v887 = vsel %vm277, %v404, 0
        %v889 = vsel %vm277, %v405, 0
        %v891 = vsel %vm277, %v407, 0
        %v893 = vsel %vm277, %v408, 0
        %v895 = vsel %vm277, %v410, 0
        %v897 = vsel %vm277, %v411, 0
        %v899 = vsel %vm277, %v413, 0
        %v901 = vsel %vm277, %v414, 0
        %v903 = vsel %vm277, %v416, 0
        %v905 = vsel %vm277, %v417, 0
        %v907 = vsel %vm277, %v419, 0
        %v909 = vsel %vm277, %v420, 0
        %v911 = vsel %vm277, %v422, 0
        %v913 = vsel %vm277, %v423, 0
        %v915 = vsel %vm277, %v425, 0
        %v917 = vsel %vm277, %v426, 0
        %v919 = vsel %vm277, %v428, 0
        %v921 = vsel %vm277, %v429, 0
        %v923 = vsel %vm277, %v431, 0
        %v925 = vsel %vm277, %v432, 0
        %v927 = vsel %vm277, %v434, 0
        %v929 = vsel %vm277, %v435, 0
        %v931 = vsel %vm277, %v437, 0
        %v933 = vsel %vm277, %v438, 0
        %v935 = vsel %vm277, %v440, 0
        %v937 = vsel %vm277, %v441, 0
        %v939 = vsel %vm277, %v443, 0
        %v941 = vsel %vm277, %v444, 0
        %v944 = vsel %vm650, %v454, 0
        %946 = vmatprep.subr.mxu0 0.0
        %947 = vmatpush1.msra.mxu0 %v944
        %948 = vmatprep.subr.mxu0 0.0
        %949 = vmatpush1.msra.mxu0 0.0
        %950 = vmatprep.subr.mxu0 0.0
        %951 = vmatpush1.msra.mxu0 0.0
        %952 = vmatprep.subr.mxu0 0.0
        %953 = vmatpush1.msra.mxu0 0.0
        %954 = vmatprep.subr.mxu0 0.0
        %955 = vmatpush1.msra.mxu0 0.0
        %956 = vmatprep.subr.mxu0 0.0
        %957 = vmatpush1.msra.mxu0 0.0
        %958 = vmatprep.subr.mxu0 0.0
        %959 = vmatpush1.msra.mxu0 0.0
        %960 = vmatprep.subr.mxu0 0.0
        %961 = vmatpush1.msra.mxu0 0.0
        %962 = vmatprep.subr.mxu0 0.0
        %963 = vmatpush1.msra.mxu0 0.0
        %964 = vmatprep.subr.mxu0 0.0
        %965 = vmatpush1.msra.mxu0 0.0
        %966 = vmatprep.subr.mxu0 0.0
        %967 = vmatpush1.msra.mxu0 0.0
        %968 = vmatprep.subr.mxu0 0.0
        %969 = vmatpush1.msra.mxu0 0.0
        %970 = vmatprep.subr.mxu0 0.0
        %971 = vmatpush1.msra.mxu0 0.0
        %972 = vmatprep.subr.mxu0 0.0
        %973 = vmatpush1.msra.mxu0 0.0
        %974 = vmatprep.subr.mxu0 0.0
        %975 = vmatpush1.msra.mxu0 0.0
        %976 = vmatprep.subr.mxu0 0.0
        %977 = vmatpush1.msra.mxu0 0.0
        %978 = vmatprep.subr.mxu0 0.0
        %979 = vmatpush1.msra.mxu0 0.0
        %980 = vmatprep.subr.mxu0 0.0
        %981 = vmatpush1.msra.mxu0 0.0
        %982 = vmatprep.subr.mxu0 0.0
        %983 = vmatpush1.msra.mxu0 0.0
        %984 = vmatprep.subr.mxu0 0.0
        %985 = vmatpush1.msra.mxu0 0.0
        %986 = vmatprep.subr.mxu0 0.0
        %987 = vmatpush1.msra.mxu0 0.0
        %988 = vmatprep.subr.mxu0 0.0
        %989 = vmatpush1.msra.mxu0 0.0
        %990 = vmatprep.subr.mxu0 0.0
        %991 = vmatpush1.msra.mxu0 0.0
        %992 = vmatprep.subr.mxu0 0.0
        %993 = vmatpush1.msra.mxu0 0.0
        %994 = vmatprep.subr.mxu0 0.0
        %995 = vmatpush1.msra.mxu0 0.0
        %996 = vmatprep.subr.mxu0 0.0
        %997 = vmatpush1.msra.mxu0 0.0
        %998 = vmatprep.subr.mxu0 0.0
        %999 = vmatpush1.msra.mxu0 0.0
        %1000 = vmatprep.subr.mxu0 0.0
        %1001 = vmatpush1.msra.mxu0 0.0
        %1002 = vmatprep.subr.mxu0 0.0
        %1003 = vmatpush1.msra.mxu0 0.0
        %1004 = vmatprep.subr.mxu0 0.0
        %1005 = vmatpush1.msra.mxu0 0.0
        %1006 = vmatprep.subr.mxu0 0.0
        %1007 = vmatpush1.msra.mxu0 0.0
        %1008 = vmatprep.subr.mxu0 0.0
        %1009 = vmatpush1.msra.mxu0 0.0
        %1010 = vmatprep.mubr.f32.mxu0 0.0
        %1011 = vmatmul.mubr.f32.gmra.mrb[0].mxu0 %v879
        %v1012 = vpop.f32.mrb[0].mxu0
        %v1013 = vadd.f32 %v721, %v1012
        %v1014 = vpop.f32.mrb[0].mxu0
        %1015 = vmatprep.mubr.f32.mxu0 0.0
        %1016 = vmatmul.mubr.f32.gmra.mrb[0].mxu0 %v881
        %v1017 = vpop.f32.mrb[0].mxu0
        %v1018 = vadd.f32 %v726, %v1017
        %v1019 = vpop.f32.mrb[0].mxu0
        %1020 = vmatprep.mubr.f32.mxu0 0.0
        %1021 = vmatmul.mubr.f32.gmra.mrb[0].mxu0 %v883
        %v1022 = vpop.f32.mrb[0].mxu0
        %v1023 = vadd.f32 %v731, %v1022
        %v1024 = vpop.f32.mrb[0].mxu0
        %1025 = vmatprep.mubr.f32.mxu0 0.0
        %1026 = vmatmul.mubr.f32.gmra.mrb[0].mxu0 %v885
        %v1027 = vpop.f32.mrb[0].mxu0
        %v1028 = vadd.f32 %v736, %v1027
        %v1029 = vpop.f32.mrb[0].mxu0
        %1030 = vmatprep.mubr.f32.mxu0 0.0
        %1031 = vmatmul.mubr.f32.gmra.mrb[0].mxu0 %v887
        %v1032 = vpop.f32.mrb[0].mxu0
        %v1033 = vadd.f32 %v741, %v1032
        %v1034 = vpop.f32.mrb[0].mxu0
        %1035 = vmatprep.mubr.f32.mxu0 0.0
        %1036 = vmatmul.mubr.f32.gmra.mrb[0].mxu0 %v889
        %v1037 = vpop.f32.mrb[0].mxu0
        %v1038 = vadd.f32 %v746, %v1037
        %v1039 = vpop.f32.mrb[0].mxu0
        %1040 = vmatprep.mubr.f32.mxu0 0.0
        %1041 = vmatmul.mubr.f32.gmra.mrb[0].mxu0 %v891
        %v1042 = vpop.f32.mrb[0].mxu0
        %v1043 = vadd.f32 %v751, %v1042
        %v1044 = vpop.f32.mrb[0].mxu0
        %1045 = vmatprep.mubr.f32.mxu0 0.0
        %1046 = vmatmul.mubr.f32.gmra.mrb[0].mxu0 %v893
        %v1047 = vpop.f32.mrb[0].mxu0
        %v1048 = vadd.f32 %v756, %v1047
        %v1049 = vpop.f32.mrb[0].mxu0
        %1050 = vmatprep.mubr.f32.mxu0 0.0
        %1051 = vmatmul.mubr.f32.gmra.mrb[0].mxu0 %v895
        %v1052 = vpop.f32.mrb[0].mxu0
        %v1053 = vadd.f32 %v761, %v1052
        %v1054 = vpop.f32.mrb[0].mxu0
        %1055 = vmatprep.mubr.f32.mxu0 0.0
        %1056 = vmatmul.mubr.f32.gmra.mrb[0].mxu0 %v897
        %v1057 = vpop.f32.mrb[0].mxu0
        %v1058 = vadd.f32 %v766, %v1057
        %v1059 = vpop.f32.mrb[0].mxu0
        %1060 = vmatprep.mubr.f32.mxu0 0.0
        %1061 = vmatmul.mubr.f32.gmra.mrb[0].mxu0 %v899
        %v1062 = vpop.f32.mrb[0].mxu0
        %v1063 = vadd.f32 %v771, %v1062
        %v1064 = vpop.f32.mrb[0].mxu0
        %1065 = vmatprep.mubr.f32.mxu0 0.0
        %1066 = vmatmul.mubr.f32.gmra.mrb[0].mxu0 %v901
        %v1067 = vpop.f32.mrb[0].mxu0
        %v1068 = vadd.f32 %v776, %v1067
        %v1069 = vpop.f32.mrb[0].mxu0
        %1070 = vmatprep.mubr.f32.mxu0 0.0
        %1071 = vmatmul.mubr.f32.gmra.mrb[0].mxu0 %v903
        %v1072 = vpop.f32.mrb[0].mxu0
        %v1073 = vadd.f32 %v781, %v1072
        %v1074 = vpop.f32.mrb[0].mxu0
        %1075 = vmatprep.mubr.f32.mxu0 0.0
        %1076 = vmatmul.mubr.f32.gmra.mrb[0].mxu0 %v905
        %v1077 = vpop.f32.mrb[0].mxu0
        %v1078 = vadd.f32 %v786, %v1077
        %v1079 = vpop.f32.mrb[0].mxu0
        %1080 = vmatprep.mubr.f32.mxu0 0.0
        %1081 = vmatmul.mubr.f32.gmra.mrb[0].mxu0 %v907
        %v1082 = vpop.f32.mrb[0].mxu0
        %v1083 = vadd.f32 %v791, %v1082
        %v1084 = vpop.f32.mrb[0].mxu0
        %1085 = vmatprep.mubr.f32.mxu0 0.0
        %1086 = vmatmul.mubr.f32.gmra.mrb[0].mxu0 %v909
        %v1087 = vpop.f32.mrb[0].mxu0
        %v1088 = vadd.f32 %v796, %v1087
        %v1089 = vpop.f32.mrb[0].mxu0
        %1090 = vmatprep.mubr.f32.mxu0 0.0
        %1091 = vmatmul.mubr.f32.gmra.mrb[0].mxu0 %v911
        %v1092 = vpop.f32.mrb[0].mxu0
        %v1093 = vadd.f32 %v801, %v1092
        %v1094 = vpop.f32.mrb[0].mxu0
        %1095 = vmatprep.mubr.f32.mxu0 0.0
        %1096 = vmatmul.mubr.f32.gmra.mrb[0].mxu0 %v913
        %v1097 = vpop.f32.mrb[0].mxu0
        %v1098 = vadd.f32 %v806, %v1097
        %v1099 = vpop.f32.mrb[0].mxu0
        %1100 = vmatprep.mubr.f32.mxu0 0.0
        %1101 = vmatmul.mubr.f32.gmra.mrb[0].mxu0 %v915
        %v1102 = vpop.f32.mrb[0].mxu0
        %v1103 = vadd.f32 %v811, %v1102
        %v1104 = vpop.f32.mrb[0].mxu0
        %1105 = vmatprep.mubr.f32.mxu0 0.0
        %1106 = vmatmul.mubr.f32.gmra.mrb[0].mxu0 %v917
        %v1107 = vpop.f32.mrb[0].mxu0
        %v1108 = vadd.f32 %v816, %v1107
        %v1109 = vpop.f32.mrb[0].mxu0
        %1110 = vmatprep.mubr.f32.mxu0 0.0
        %1111 = vmatmul.mubr.f32.gmra.mrb[0].mxu0 %v919
        %v1112 = vpop.f32.mrb[0].mxu0
        %v1113 = vadd.f32 %v821, %v1112
        %v1114 = vpop.f32.mrb[0].mxu0
        %1115 = vmatprep.mubr.f32.mxu0 0.0
        %1116 = vmatmul.mubr.f32.gmra.mrb[0].mxu0 %v921
        %v1117 = vpop.f32.mrb[0].mxu0
        %v1118 = vadd.f32 %v826, %v1117
        %v1119 = vpop.f32.mrb[0].mxu0
        %1120 = vmatprep.mubr.f32.mxu0 0.0
        %1121 = vmatmul.mubr.f32.gmra.mrb[0].mxu0 %v923
        %v1122 = vpop.f32.mrb[0].mxu0
        %v1123 = vadd.f32 %v831, %v1122
        %v1124 = vpop.f32.mrb[0].mxu0
        %1125 = vmatprep.mubr.f32.mxu0 0.0
        %1126 = vmatmul.mubr.f32.gmra.mrb[0].mxu0 %v925
        %v1127 = vpop.f32.mrb[0].mxu0
        %v1128 = vadd.f32 %v836, %v1127
        %v1129 = vpop.f32.mrb[0].mxu0
        %1130 = vmatprep.mubr.f32.mxu0 0.0
        %1131 = vmatmul.mubr.f32.gmra.mrb[0].mxu0 %v927
        %v1132 = vpop.f32.mrb[0].mxu0
        %v1133 = vadd.f32 %v841, %v1132
        %v1134 = vpop.f32.mrb[0].mxu0
        %1135 = vmatprep.mubr.f32.mxu0 0.0
        %1136 = vmatmul.mubr.f32.gmra.mrb[0].mxu0 %v929
        %v1137 = vpop.f32.mrb[0].mxu0
        %v1138 = vadd.f32 %v846, %v1137
        %v1139 = vpop.f32.mrb[0].mxu0
        %1140 = vmatprep.mubr.f32.mxu0 0.0
        %1141 = vmatmul.mubr.f32.gmra.mrb[0].mxu0 %v931
        %v1142 = vpop.f32.mrb[0].mxu0
        %v1143 = vadd.f32 %v851, %v1142
        %v1144 = vpop.f32.mrb[0].mxu0
        %1145 = vmatprep.mubr.f32.mxu0 0.0
        %1146 = vmatmul.mubr.f32.gmra.mrb[0].mxu0 %v933
        %v1147 = vpop.f32.mrb[0].mxu0
        %v1148 = vadd.f32 %v856, %v1147
        %v1149 = vpop.f32.mrb[0].mxu0
        %1150 = vmatprep.mubr.f32.mxu0 0.0
        %1151 = vmatmul.mubr.f32.gmra.mrb[0].mxu0 %v935
        %v1152 = vpop.f32.mrb[0].mxu0
        %v1153 = vadd.f32 %v861, %v1152
        %v1154 = vpop.f32.mrb[0].mxu0
        %1155 = vmatprep.mubr.f32.mxu0 0.0
        %1156 = vmatmul.mubr.f32.gmra.mrb[0].mxu0 %v937
        %v1157 = vpop.f32.mrb[0].mxu0
        %v1158 = vadd.f32 %v866, %v1157
        %v1159 = vpop.f32.mrb[0].mxu0
        %1160 = vmatprep.mubr.f32.mxu0 0.0
        %1161 = vmatmul.mubr.f32.gmra.mrb[0].mxu0 %v939
        %v1162 = vpop.f32.mrb[0].mxu0
        %v1163 = vadd.f32 %v871, %v1162
        %v1164 = vpop.f32.mrb[0].mxu0
        %1165 = vmatprep.mubr.f32.mxu0 0.0
        %1166 = vmatmul.mubr.f32.gmra.mrb[0].mxu0 %v941
        %v1167 = vpop.f32.mrb[0].mxu0
        %v1168 = vadd.f32 %v876, %v1167
        %v1169 = vpop.f32.mrb[0].mxu0
        %1170 = vdwg.mxu0
        %vm1171 = vcmask 1045504
        %v1172 = vrot.slane %v398, 2
        %v1173 = vrot.slane %v399, 2
        %v1174 = vsel %vm1171, %v1172, %v1173
        %v1175 = vrot.slane %v400, 2
        %v1176 = vsel %vm1171, %v1173, %v1175
        %v1177 = vrot.slane %v401, 2
        %v1178 = vrot.slane %v402, 2
        %v1179 = vsel %vm1171, %v1177, %v1178
        %v1180 = vrot.slane %v403, 2
        %v1181 = vsel %vm1171, %v1178, %v1180
        %v1182 = vrot.slane %v404, 2
        %v1183 = vrot.slane %v405, 2
        %v1184 = vsel %vm1171, %v1182, %v1183
        %v1185 = vrot.slane %v406, 2
        %v1186 = vsel %vm1171, %v1183, %v1185
        %v1187 = vrot.slane %v407, 2
        %v1188 = vrot.slane %v408, 2
        %v1189 = vsel %vm1171, %v1187, %v1188
        %v1190 = vrot.slane %v409, 2
        %v1191 = vsel %vm1171, %v1188, %v1190
        %v1192 = vrot.slane %v410, 2
        %v1193 = vrot.slane %v411, 2
        %v1194 = vsel %vm1171, %v1192, %v1193
        %v1195 = vrot.slane %v412, 2
        %v1196 = vsel %vm1171, %v1193, %v1195
        %v1197 = vrot.slane %v413, 2
        %v1198 = vrot.slane %v414, 2
        %v1199 = vsel %vm1171, %v1197, %v1198
        %v1200 = vrot.slane %v415, 2
        %v1201 = vsel %vm1171, %v1198, %v1200
        %v1202 = vrot.slane %v416, 2
        %v1203 = vrot.slane %v417, 2
        %v1204 = vsel %vm1171, %v1202, %v1203
        %v1205 = vrot.slane %v418, 2
        %v1206 = vsel %vm1171, %v1203, %v1205
        %v1207 = vrot.slane %v419, 2
        %v1208 = vrot.slane %v420, 2
        %v1209 = vsel %vm1171, %v1207, %v1208
        %v1210 = vrot.slane %v421, 2
        %v1211 = vsel %vm1171, %v1208, %v1210
        %v1212 = vrot.slane %v422, 2
        %v1213 = vrot.slane %v423, 2
        %v1214 = vsel %vm1171, %v1212, %v1213
        %v1215 = vrot.slane %v424, 2
        %v1216 = vsel %vm1171, %v1213, %v1215
        %v1217 = vrot.slane %v425, 2
        %v1218 = vrot.slane %v426, 2
        %v1219 = vsel %vm1171, %v1217, %v1218
        %v1220 = vrot.slane %v427, 2
        %v1221 = vsel %vm1171, %v1218, %v1220
        %v1222 = vrot.slane %v428, 2
        %v1223 = vrot.slane %v429, 2
        %v1224 = vsel %vm1171, %v1222, %v1223
        %v1225 = vrot.slane %v430, 2
        %v1226 = vsel %vm1171, %v1223, %v1225
        %v1227 = vrot.slane %v431, 2
        %v1228 = vrot.slane %v432, 2
        %v1229 = vsel %vm1171, %v1227, %v1228
        %v1230 = vrot.slane %v433, 2
        %v1231 = vsel %vm1171, %v1228, %v1230
        %v1232 = vrot.slane %v434, 2
        %v1233 = vrot.slane %v435, 2
        %v1234 = vsel %vm1171, %v1232, %v1233
        %v1235 = vrot.slane %v436, 2
        %v1236 = vsel %vm1171, %v1233, %v1235
        %v1237 = vrot.slane %v437, 2
        %v1238 = vrot.slane %v438, 2
        %v1239 = vsel %vm1171, %v1237, %v1238
        %v1240 = vrot.slane %v439, 2
        %v1241 = vsel %vm1171, %v1238, %v1240
        %v1242 = vrot.slane %v440, 2
        %v1243 = vrot.slane %v441, 2
        %v1244 = vsel %vm1171, %v1242, %v1243
        %v1245 = vrot.slane %v442, 2
        %v1246 = vsel %vm1171, %v1243, %v1245
        %v1247 = vrot.slane %v443, 2
        %v1248 = vrot.slane %v444, 2
        %v1249 = vsel %vm1171, %v1247, %v1248
        %v1250 = vrot.slane %v445, 2
        %v1251 = vsel %vm1171, %v1248, %v1250
        %s1252 = scalar_lea.vmem %s1, 8
        %v1253 = vld [vmem:[%s1252] sm:$0xf]
        %v1254 = vsel %vm277, %v1174, 0
        %v1256 = vsel %vm277, %v1176, 0
        %v1258 = vsel %vm277, %v1179, 0
        %v1260 = vsel %vm277, %v1181, 0
        %v1262 = vsel %vm277, %v1184, 0
        %v1264 = vsel %vm277, %v1186, 0
        %v1266 = vsel %vm277, %v1189, 0
        %v1268 = vsel %vm277, %v1191, 0
        %v1270 = vsel %vm277, %v1194, 0
        %v1272 = vsel %vm277, %v1196, 0
        %v1274 = vsel %vm277, %v1199, 0
        %v1276 = vsel %vm277, %v1201, 0
        %v1278 = vsel %vm277, %v1204, 0
        %v1280 = vsel %vm277, %v1206, 0
        %v1282 = vsel %vm277, %v1209, 0
        %v1284 = vsel %vm277, %v1211, 0
        %v1286 = vsel %vm277, %v1214, 0
        %v1288 = vsel %vm277, %v1216, 0
        %v1290 = vsel %vm277, %v1219, 0
        %v1292 = vsel %vm277, %v1221, 0
        %v1294 = vsel %vm277, %v1224, 0
        %v1296 = vsel %vm277, %v1226, 0
        %v1298 = vsel %vm277, %v1229, 0
        %v1300 = vsel %vm277, %v1231, 0
        %v1302 = vsel %vm277, %v1234, 0
        %v1304 = vsel %vm277, %v1236, 0
        %v1306 = vsel %vm277, %v1239, 0
        %v1308 = vsel %vm277, %v1241, 0
        %v1310 = vsel %vm277, %v1244, 0
        %v1312 = vsel %vm277, %v1246, 0
        %v1314 = vsel %vm277, %v1249, 0
        %v1316 = vsel %vm277, %v1251, 0
        %v1319 = vsel %vm650, %v1253, 0
        %1321 = vmatprep.subr.mxu0 0.0
        %1322 = vmatpush1.msra.mxu0 %v1319
        %1323 = vmatprep.subr.mxu0 0.0
        %1324 = vmatpush1.msra.mxu0 0.0
        %1325 = vmatprep.subr.mxu0 0.0
        %1326 = vmatpush1.msra.mxu0 0.0
        %1327 = vmatprep.subr.mxu0 0.0
        %1328 = vmatpush1.msra.mxu0 0.0
        %1329 = vmatprep.subr.mxu0 0.0
        %1330 = vmatpush1.msra.mxu0 0.0
        %1331 = vmatprep.subr.mxu0 0.0
        %1332 = vmatpush1.msra.mxu0 0.0
        %1333 = vmatprep.subr.mxu0 0.0
        %1334 = vmatpush1.msra.mxu0 0.0
        %1335 = vmatprep.subr.mxu0 0.0
        %1336 = vmatpush1.msra.mxu0 0.0
        %1337 = vmatprep.subr.mxu0 0.0
        %1338 = vmatpush1.msra.mxu0 0.0
        %1339 = vmatprep.subr.mxu0 0.0
        %1340 = vmatpush1.msra.mxu0 0.0
        %1341 = vmatprep.subr.mxu0 0.0
        %1342 = vmatpush1.msra.mxu0 0.0
        %1343 = vmatprep.subr.mxu0 0.0
        %1344 = vmatpush1.msra.mxu0 0.0
        %1345 = vmatprep.subr.mxu0 0.0
        %1346 = vmatpush1.msra.mxu0 0.0
        %1347 = vmatprep.subr.mxu0 0.0
        %1348 = vmatpush1.msra.mxu0 0.0
        %1349 = vmatprep.subr.mxu0 0.0
        %1350 = vmatpush1.msra.mxu0 0.0
        %1351 = vmatprep.subr.mxu0 0.0
        %1352 = vmatpush1.msra.mxu0 0.0
        %1353 = vmatprep.subr.mxu0 0.0
        %1354 = vmatpush1.msra.mxu0 0.0
        %1355 = vmatprep.subr.mxu0 0.0
        %1356 = vmatpush1.msra.mxu0 0.0
        %1357 = vmatprep.subr.mxu0 0.0
        %1358 = vmatpush1.msra.mxu0 0.0
        %1359 = vmatprep.subr.mxu0 0.0
        %1360 = vmatpush1.msra.mxu0 0.0
        %1361 = vmatprep.subr.mxu0 0.0
        %1362 = vmatpush1.msra.mxu0 0.0
        %1363 = vmatprep.subr.mxu0 0.0
        %1364 = vmatpush1.msra.mxu0 0.0
        %1365 = vmatprep.subr.mxu0 0.0
        %1366 = vmatpush1.msra.mxu0 0.0
        %1367 = vmatprep.subr.mxu0 0.0
        %1368 = vmatpush1.msra.mxu0 0.0
        %1369 = vmatprep.subr.mxu0 0.0
        %1370 = vmatpush1.msra.mxu0 0.0
        %1371 = vmatprep.subr.mxu0 0.0
        %1372 = vmatpush1.msra.mxu0 0.0
        %1373 = vmatprep.subr.mxu0 0.0
        %1374 = vmatpush1.msra.mxu0 0.0
        %1375 = vmatprep.subr.mxu0 0.0
        %1376 = vmatpush1.msra.mxu0 0.0
        %1377 = vmatprep.subr.mxu0 0.0
        %1378 = vmatpush1.msra.mxu0 0.0
        %1379 = vmatprep.subr.mxu0 0.0
        %1380 = vmatpush1.msra.mxu0 0.0
        %1381 = vmatprep.subr.mxu0 0.0
        %1382 = vmatpush1.msra.mxu0 0.0
        %1383 = vmatprep.subr.mxu0 0.0
        %1384 = vmatpush1.msra.mxu0 0.0
        %1385 = vmatprep.mubr.f32.mxu0 0.0
        %1386 = vmatmul.mubr.f32.gmra.mrb[0].mxu0 %v1254
        %v1387 = vpop.f32.mrb[0].mxu0
        %v1388 = vadd.f32 0.0, %v1387
        %v1389 = vpop.f32.mrb[0].mxu0
        %1390 = vmatprep.mubr.f32.mxu0 0.0
        %1391 = vmatmul.mubr.f32.gmra.mrb[0].mxu0 %v1256
        %v1392 = vpop.f32.mrb[0].mxu0
        %v1393 = vadd.f32 0.0, %v1392
        %v1394 = vpop.f32.mrb[0].mxu0
        %1395 = vmatprep.mubr.f32.mxu0 0.0
        %1396 = vmatmul.mubr.f32.gmra.mrb[0].mxu0 %v1258
        %v1397 = vpop.f32.mrb[0].mxu0
        %v1398 = vadd.f32 0.0, %v1397
        %v1399 = vpop.f32.mrb[0].mxu0
        %1400 = vmatprep.mubr.f32.mxu0 0.0
        %1401 = vmatmul.mubr.f32.gmra.mrb[0].mxu0 %v1260
        %v1402 = vpop.f32.mrb[0].mxu0
        %v1403 = vadd.f32 0.0, %v1402
        %v1404 = vpop.f32.mrb[0].mxu0
        %1405 = vmatprep.mubr.f32.mxu0 0.0
        %1406 = vmatmul.mubr.f32.gmra.mrb[0].mxu0 %v1262
        %v1407 = vpop.f32.mrb[0].mxu0
        %v1408 = vadd.f32 0.0, %v1407
        %v1409 = vpop.f32.mrb[0].mxu0
        %1410 = vmatprep.mubr.f32.mxu0 0.0
        %1411 = vmatmul.mubr.f32.gmra.mrb[0].mxu0 %v1264
        %v1412 = vpop.f32.mrb[0].mxu0
        %v1413 = vadd.f32 0.0, %v1412
        %v1414 = vpop.f32.mrb[0].mxu0
        %1415 = vmatprep.mubr.f32.mxu0 0.0
        %1416 = vmatmul.mubr.f32.gmra.mrb[0].mxu0 %v1266
        %v1417 = vpop.f32.mrb[0].mxu0
        %v1418 = vadd.f32 0.0, %v1417
        %v1419 = vpop.f32.mrb[0].mxu0
        %1420 = vmatprep.mubr.f32.mxu0 0.0
        %1421 = vmatmul.mubr.f32.gmra.mrb[0].mxu0 %v1268
        %v1422 = vpop.f32.mrb[0].mxu0
        %v1423 = vadd.f32 0.0, %v1422
        %v1424 = vpop.f32.mrb[0].mxu0
        %1425 = vmatprep.mubr.f32.mxu0 0.0
        %1426 = vmatmul.mubr.f32.gmra.mrb[0].mxu0 %v1270
        %v1427 = vpop.f32.mrb[0].mxu0
        %v1428 = vadd.f32 0.0, %v1427
        %v1429 = vpop.f32.mrb[0].mxu0
        %1430 = vmatprep.mubr.f32.mxu0 0.0
        %1431 = vmatmul.mubr.f32.gmra.mrb[0].mxu0 %v1272
        %v1432 = vpop.f32.mrb[0].mxu0
        %v1433 = vadd.f32 0.0, %v1432
        %v1434 = vpop.f32.mrb[0].mxu0
        %1435 = vmatprep.mubr.f32.mxu0 0.0
        %1436 = vmatmul.mubr.f32.gmra.mrb[0].mxu0 %v1274
        %v1437 = vpop.f32.mrb[0].mxu0
        %v1438 = vadd.f32 0.0, %v1437
        %v1439 = vpop.f32.mrb[0].mxu0
        %1440 = vmatprep.mubr.f32.mxu0 0.0
        %1441 = vmatmul.mubr.f32.gmra.mrb[0].mxu0 %v1276
        %v1442 = vpop.f32.mrb[0].mxu0
        %v1443 = vadd.f32 0.0, %v1442
        %v1444 = vpop.f32.mrb[0].mxu0
        %1445 = vmatprep.mubr.f32.mxu0 0.0
        %1446 = vmatmul.mubr.f32.gmra.mrb[0].mxu0 %v1278
        %v1447 = vpop.f32.mrb[0].mxu0
        %v1448 = vadd.f32 0.0, %v1447
        %v1449 = vpop.f32.mrb[0].mxu0
        %1450 = vmatprep.mubr.f32.mxu0 0.0
        %1451 = vmatmul.mubr.f32.gmra.mrb[0].mxu0 %v1280
        %v1452 = vpop.f32.mrb[0].mxu0
        %v1453 = vadd.f32 0.0, %v1452
        %v1454 = vpop.f32.mrb[0].mxu0
        %1455 = vmatprep.mubr.f32.mxu0 0.0
        %1456 = vmatmul.mubr.f32.gmra.mrb[0].mxu0 %v1282
        %v1457 = vpop.f32.mrb[0].mxu0
        %v1458 = vadd.f32 0.0, %v1457
        %v1459 = vpop.f32.mrb[0].mxu0
        %1460 = vmatprep.mubr.f32.mxu0 0.0
        %1461 = vmatmul.mubr.f32.gmra.mrb[0].mxu0 %v1284
        %v1462 = vpop.f32.mrb[0].mxu0
        %v1463 = vadd.f32 0.0, %v1462
        %v1464 = vpop.f32.mrb[0].mxu0
        %1465 = vmatprep.mubr.f32.mxu0 0.0
        %1466 = vmatmul.mubr.f32.gmra.mrb[0].mxu0 %v1286
        %v1467 = vpop.f32.mrb[0].mxu0
        %v1468 = vadd.f32 0.0, %v1467
        %v1469 = vpop.f32.mrb[0].mxu0
        %1470 = vmatprep.mubr.f32.mxu0 0.0
        %1471 = vmatmul.mubr.f32.gmra.mrb[0].mxu0 %v1288
        %v1472 = vpop.f32.mrb[0].mxu0
        %v1473 = vadd.f32 0.0, %v1472
        %v1474 = vpop.f32.mrb[0].mxu0
        %1475 = vmatprep.mubr.f32.mxu0 0.0
        %1476 = vmatmul.mubr.f32.gmra.mrb[0].mxu0 %v1290
        %v1477 = vpop.f32.mrb[0].mxu0
        %v1478 = vadd.f32 0.0, %v1477
        %v1479 = vpop.f32.mrb[0].mxu0
        %1480 = vmatprep.mubr.f32.mxu0 0.0
        %1481 = vmatmul.mubr.f32.gmra.mrb[0].mxu0 %v1292
        %v1482 = vpop.f32.mrb[0].mxu0
        %v1483 = vadd.f32 0.0, %v1482
        %v1484 = vpop.f32.mrb[0].mxu0
        %1485 = vmatprep.mubr.f32.mxu0 0.0
        %1486 = vmatmul.mubr.f32.gmra.mrb[0].mxu0 %v1294
        %v1487 = vpop.f32.mrb[0].mxu0
        %v1488 = vadd.f32 0.0, %v1487
        %v1489 = vpop.f32.mrb[0].mxu0
        %1490 = vmatprep.mubr.f32.mxu0 0.0
        %1491 = vmatmul.mubr.f32.gmra.mrb[0].mxu0 %v1296
        %v1492 = vpop.f32.mrb[0].mxu0
        %v1493 = vadd.f32 0.0, %v1492
        %v1494 = vpop.f32.mrb[0].mxu0
        %1495 = vmatprep.mubr.f32.mxu0 0.0
        %1496 = vmatmul.mubr.f32.gmra.mrb[0].mxu0 %v1298
        %v1497 = vpop.f32.mrb[0].mxu0
        %v1498 = vadd.f32 0.0, %v1497
        %v1499 = vpop.f32.mrb[0].mxu0
        %1500 = vmatprep.mubr.f32.mxu0 0.0
        %1501 = vmatmul.mubr.f32.gmra.mrb[0].mxu0 %v1300
        %v1502 = vpop.f32.mrb[0].mxu0
        %v1503 = vadd.f32 0.0, %v1502
        %v1504 = vpop.f32.mrb[0].mxu0
        %1505 = vmatprep.mubr.f32.mxu0 0.0
        %1506 = vmatmul.mubr.f32.gmra.mrb[0].mxu0 %v1302
        %v1507 = vpop.f32.mrb[0].mxu0
        %v1508 = vadd.f32 0.0, %v1507
        %v1509 = vpop.f32.mrb[0].mxu0
        %1510 = vmatprep.mubr.f32.mxu0 0.0
        %1511 = vmatmul.mubr.f32.gmra.mrb[0].mxu0 %v1304
        %v1512 = vpop.f32.mrb[0].mxu0
        %v1513 = vadd.f32 0.0, %v1512
        %v1514 = vpop.f32.mrb[0].mxu0
        %1515 = vmatprep.mubr.f32.mxu0 0.0
        %1516 = vmatmul.mubr.f32.gmra.mrb[0].mxu0 %v1306
        %v1517 = vpop.f32.mrb[0].mxu0
        %v1518 = vadd.f32 0.0, %v1517
        %v1519 = vpop.f32.mrb[0].mxu0
        %1520 = vmatprep.mubr.f32.mxu0 0.0
        %1521 = vmatmul.mubr.f32.gmra.mrb[0].mxu0 %v1308
        %v1522 = vpop.f32.mrb[0].mxu0
        %v1523 = vadd.f32 0.0, %v1522
        %v1524 = vpop.f32.mrb[0].mxu0
        %1525 = vmatprep.mubr.f32.mxu0 0.0
        %1526 = vmatmul.mubr.f32.gmra.mrb[0].mxu0 %v1310
        %v1527 = vpop.f32.mrb[0].mxu0
        %v1528 = vadd.f32 0.0, %v1527
        %v1529 = vpop.f32.mrb[0].mxu0
        %1530 = vmatprep.mubr.f32.mxu0 0.0
        %1531 = vmatmul.mubr.f32.gmra.mrb[0].mxu0 %v1312
        %v1532 = vpop.f32.mrb[0].mxu0
        %v1533 = vadd.f32 0.0, %v1532
        %v1534 = vpop.f32.mrb[0].mxu0
        %1535 = vmatprep.mubr.f32.mxu0 0.0
        %1536 = vmatmul.mubr.f32.gmra.mrb[0].mxu0 %v1314
        %v1537 = vpop.f32.mrb[0].mxu0
        %v1538 = vadd.f32 0.0, %v1537
        %v1539 = vpop.f32.mrb[0].mxu0
        %1540 = vmatprep.mubr.f32.mxu0 0.0
        %1541 = vmatmul.mubr.f32.gmra.mrb[0].mxu0 %v1316
        %v1542 = vpop.f32.mrb[0].mxu0
        %v1543 = vadd.f32 0.0, %v1542
        %v1544 = vpop.f32.mrb[0].mxu0
        %1545 = vdwg.mxu0
        %v1546 = vadd.f32 %v1013, %v1388
        %v1547 = vadd.f32 %v1018, %v1393
        %v1548 = vadd.f32 %v1023, %v1398
        %v1549 = vadd.f32 %v1028, %v1403
        %v1550 = vadd.f32 %v1033, %v1408
        %v1551 = vadd.f32 %v1038, %v1413
        %v1552 = vadd.f32 %v1043, %v1418
        %v1553 = vadd.f32 %v1048, %v1423
        %v1554 = vadd.f32 %v1053, %v1428
        %v1555 = vadd.f32 %v1058, %v1433
        %v1556 = vadd.f32 %v1063, %v1438
        %v1557 = vadd.f32 %v1068, %v1443
        %v1558 = vadd.f32 %v1073, %v1448
        %v1559 = vadd.f32 %v1078, %v1453
        %v1560 = vadd.f32 %v1083, %v1458
        %v1561 = vadd.f32 %v1088, %v1463
        %v1562 = vadd.f32 %v1093, %v1468
        %v1563 = vadd.f32 %v1098, %v1473
        %v1564 = vadd.f32 %v1103, %v1478
        %v1565 = vadd.f32 %v1108, %v1483
        %v1566 = vadd.f32 %v1113, %v1488
        %v1567 = vadd.f32 %v1118, %v1493
        %v1568 = vadd.f32 %v1123, %v1498
        %v1569 = vadd.f32 %v1128, %v1503
        %v1570 = vadd.f32 %v1133, %v1508
        %v1571 = vadd.f32 %v1138, %v1513
        %v1572 = vadd.f32 %v1143, %v1518
        %v1573 = vadd.f32 %v1148, %v1523
        %v1574 = vadd.f32 %v1153, %v1528
        %v1575 = vadd.f32 %v1158, %v1533
        %v1576 = vadd.f32 %v1163, %v1538
        %v1577 = vadd.f32 %v1168, %v1543
        %s1578 = scalar_lea.vmem %s1, 12
        %v1579 = vld [vmem:[%s1578] sm:$0xf]
        %v1581 = vsel %vm277, %v446, 0
        %v1584 = vsel %vm277, %v447, 0
        %v1587 = vsel %vm650, %v1579, 0
        %1589 = vmatprep.subr.mxu0 0.0
        %1590 = vmatpush1.msra.mxu0 %v1587
        %1591 = vmatprep.subr.mxu0 0.0
        %1592 = vmatpush1.msra.mxu0 0.0
        %1593 = vmatprep.subr.mxu0 0.0
        %1594 = vmatpush1.msra.mxu0 0.0
        %1595 = vmatprep.subr.mxu0 0.0
        %1596 = vmatpush1.msra.mxu0 0.0
        %1597 = vmatprep.subr.mxu0 0.0
        %1598 = vmatpush1.msra.mxu0 0.0
        %1599 = vmatprep.subr.mxu0 0.0
        %1600 = vmatpush1.msra.mxu0 0.0
        %1601 = vmatprep.subr.mxu0 0.0
        %1602 = vmatpush1.msra.mxu0 0.0
        %1603 = vmatprep.subr.mxu0 0.0
        %1604 = vmatpush1.msra.mxu0 0.0
        %1605 = vmatprep.subr.mxu0 0.0
        %1606 = vmatpush1.msra.mxu0 0.0
        %1607 = vmatprep.subr.mxu0 0.0
        %1608 = vmatpush1.msra.mxu0 0.0
        %1609 = vmatprep.subr.mxu0 0.0
        %1610 = vmatpush1.msra.mxu0 0.0
        %1611 = vmatprep.subr.mxu0 0.0
        %1612 = vmatpush1.msra.mxu0 0.0
        %1613 = vmatprep.subr.mxu0 0.0
        %1614 = vmatpush1.msra.mxu0 0.0
        %1615 = vmatprep.subr.mxu0 0.0
        %1616 = vmatpush1.msra.mxu0 0.0
        %1617 = vmatprep.subr.mxu0 0.0
        %1618 = vmatpush1.msra.mxu0 0.0
        %1619 = vmatprep.subr.mxu0 0.0
        %1620 = vmatpush1.msra.mxu0 0.0
        %1621 = vmatprep.subr.mxu0 0.0
        %1622 = vmatpush1.msra.mxu0 0.0
        %1623 = vmatprep.subr.mxu0 0.0
        %1624 = vmatpush1.msra.mxu0 0.0
        %1625 = vmatprep.subr.mxu0 0.0
        %1626 = vmatpush1.msra.mxu0 0.0
        %1627 = vmatprep.subr.mxu0 0.0
        %1628 = vmatpush1.msra.mxu0 0.0
        %1629 = vmatprep.subr.mxu0 0.0
        %1630 = vmatpush1.msra.mxu0 0.0
        %1631 = vmatprep.subr.mxu0 0.0
        %1632 = vmatpush1.msra.mxu0 0.0
        %1633 = vmatprep.subr.mxu0 0.0
        %1634 = vmatpush1.msra.mxu0 0.0
        %1635 = vmatprep.subr.mxu0 0.0
        %1636 = vmatpush1.msra.mxu0 0.0
        %1637 = vmatprep.subr.mxu0 0.0
        %1638 = vmatpush1.msra.mxu0 0.0
        %1639 = vmatprep.subr.mxu0 0.0
        %1640 = vmatpush1.msra.mxu0 0.0
        %1641 = vmatprep.subr.mxu0 0.0
        %1642 = vmatpush1.msra.mxu0 0.0
        %1643 = vmatprep.subr.mxu0 0.0
        %1644 = vmatpush1.msra.mxu0 0.0
        %1645 = vmatprep.subr.mxu0 0.0
        %1646 = vmatpush1.msra.mxu0 0.0
        %1647 = vmatprep.subr.mxu0 0.0
        %1648 = vmatpush1.msra.mxu0 0.0
        %1649 = vmatprep.subr.mxu0 0.0
        %1650 = vmatpush1.msra.mxu0 0.0
        %1651 = vmatprep.subr.mxu0 0.0
        %1652 = vmatpush1.msra.mxu0 0.0
        %1653 = vmatprep.mubr.f32.mxu0 0.0
        %1654 = vmatmul.mubr.f32.gmra.mrb[0].mxu0 %v883
        %v1655 = vpop.f32.mrb[0].mxu0
        %v1656 = vadd.f32 0.0, %v1655
        %v1657 = vpop.f32.mrb[0].mxu0
        %1658 = vmatprep.mubr.f32.mxu0 0.0
        %1659 = vmatmul.mubr.f32.gmra.mrb[0].mxu0 %v885
        %v1660 = vpop.f32.mrb[0].mxu0
        %v1661 = vadd.f32 0.0, %v1660
        %v1662 = vpop.f32.mrb[0].mxu0
        %1663 = vmatprep.mubr.f32.mxu0 0.0
        %1664 = vmatmul.mubr.f32.gmra.mrb[0].mxu0 %v887
        %v1665 = vpop.f32.mrb[0].mxu0
        %v1666 = vadd.f32 0.0, %v1665
        %v1667 = vpop.f32.mrb[0].mxu0
        %1668 = vmatprep.mubr.f32.mxu0 0.0
        %1669 = vmatmul.mubr.f32.gmra.mrb[0].mxu0 %v889
        %v1670 = vpop.f32.mrb[0].mxu0
        %v1671 = vadd.f32 0.0, %v1670
        %v1672 = vpop.f32.mrb[0].mxu0
        %1673 = vmatprep.mubr.f32.mxu0 0.0
        %1674 = vmatmul.mubr.f32.gmra.mrb[0].mxu0 %v891
        %v1675 = vpop.f32.mrb[0].mxu0
        %v1676 = vadd.f32 0.0, %v1675
        %v1677 = vpop.f32.mrb[0].mxu0
        %1678 = vmatprep.mubr.f32.mxu0 0.0
        %1679 = vmatmul.mubr.f32.gmra.mrb[0].mxu0 %v893
        %v1680 = vpop.f32.mrb[0].mxu0
        %v1681 = vadd.f32 0.0, %v1680
        %v1682 = vpop.f32.mrb[0].mxu0
        %1683 = vmatprep.mubr.f32.mxu0 0.0
        %1684 = vmatmul.mubr.f32.gmra.mrb[0].mxu0 %v895
        %v1685 = vpop.f32.mrb[0].mxu0
        %v1686 = vadd.f32 0.0, %v1685
        %v1687 = vpop.f32.mrb[0].mxu0
        %1688 = vmatprep.mubr.f32.mxu0 0.0
        %1689 = vmatmul.mubr.f32.gmra.mrb[0].mxu0 %v897
        %v1690 = vpop.f32.mrb[0].mxu0
        %v1691 = vadd.f32 0.0, %v1690
        %v1692 = vpop.f32.mrb[0].mxu0
        %1693 = vmatprep.mubr.f32.mxu0 0.0
        %1694 = vmatmul.mubr.f32.gmra.mrb[0].mxu0 %v899
        %v1695 = vpop.f32.mrb[0].mxu0
        %v1696 = vadd.f32 0.0, %v1695
        %v1697 = vpop.f32.mrb[0].mxu0
        %1698 = vmatprep.mubr.f32.mxu0 0.0
        %1699 = vmatmul.mubr.f32.gmra.mrb[0].mxu0 %v901
        %v1700 = vpop.f32.mrb[0].mxu0
        %v1701 = vadd.f32 0.0, %v1700
        %v1702 = vpop.f32.mrb[0].mxu0
        %1703 = vmatprep.mubr.f32.mxu0 0.0
        %1704 = vmatmul.mubr.f32.gmra.mrb[0].mxu0 %v903
        %v1705 = vpop.f32.mrb[0].mxu0
        %v1706 = vadd.f32 0.0, %v1705
        %v1707 = vpop.f32.mrb[0].mxu0
        %1708 = vmatprep.mubr.f32.mxu0 0.0
        %1709 = vmatmul.mubr.f32.gmra.mrb[0].mxu0 %v905
        %v1710 = vpop.f32.mrb[0].mxu0
        %v1711 = vadd.f32 0.0, %v1710
        %v1712 = vpop.f32.mrb[0].mxu0
        %1713 = vmatprep.mubr.f32.mxu0 0.0
        %1714 = vmatmul.mubr.f32.gmra.mrb[0].mxu0 %v907
        %v1715 = vpop.f32.mrb[0].mxu0
        %v1716 = vadd.f32 0.0, %v1715
        %v1717 = vpop.f32.mrb[0].mxu0
        %1718 = vmatprep.mubr.f32.mxu0 0.0
        %1719 = vmatmul.mubr.f32.gmra.mrb[0].mxu0 %v909
        %v1720 = vpop.f32.mrb[0].mxu0
        %v1721 = vadd.f32 0.0, %v1720
        %v1722 = vpop.f32.mrb[0].mxu0
        %1723 = vmatprep.mubr.f32.mxu0 0.0
        %1724 = vmatmul.mubr.f32.gmra.mrb[0].mxu0 %v911
        %v1725 = vpop.f32.mrb[0].mxu0
        %v1726 = vadd.f32 0.0, %v1725
        %v1727 = vpop.f32.mrb[0].mxu0
        %1728 = vmatprep.mubr.f32.mxu0 0.0
        %1729 = vmatmul.mubr.f32.gmra.mrb[0].mxu0 %v913
        %v1730 = vpop.f32.mrb[0].mxu0
        %v1731 = vadd.f32 0.0, %v1730
        %v1732 = vpop.f32.mrb[0].mxu0
        %1733 = vmatprep.mubr.f32.mxu0 0.0
        %1734 = vmatmul.mubr.f32.gmra.mrb[0].mxu0 %v915
        %v1735 = vpop.f32.mrb[0].mxu0
        %v1736 = vadd.f32 0.0, %v1735
        %v1737 = vpop.f32.mrb[0].mxu0
        %1738 = vmatprep.mubr.f32.mxu0 0.0
        %1739 = vmatmul.mubr.f32.gmra.mrb[0].mxu0 %v917
        %v1740 = vpop.f32.mrb[0].mxu0
        %v1741 = vadd.f32 0.0, %v1740
        %v1742 = vpop.f32.mrb[0].mxu0
        %1743 = vmatprep.mubr.f32.mxu0 0.0
        %1744 = vmatmul.mubr.f32.gmra.mrb[0].mxu0 %v919
        %v1745 = vpop.f32.mrb[0].mxu0
        %v1746 = vadd.f32 0.0, %v1745
        %v1747 = vpop.f32.mrb[0].mxu0
        %1748 = vmatprep.mubr.f32.mxu0 0.0
        %1749 = vmatmul.mubr.f32.gmra.mrb[0].mxu0 %v921
        %v1750 = vpop.f32.mrb[0].mxu0
        %v1751 = vadd.f32 0.0, %v1750
        %v1752 = vpop.f32.mrb[0].mxu0
        %1753 = vmatprep.mubr.f32.mxu0 0.0
        %1754 = vmatmul.mubr.f32.gmra.mrb[0].mxu0 %v923
        %v1755 = vpop.f32.mrb[0].mxu0
        %v1756 = vadd.f32 0.0, %v1755
        %v1757 = vpop.f32.mrb[0].mxu0
        %1758 = vmatprep.mubr.f32.mxu0 0.0
        %1759 = vmatmul.mubr.f32.gmra.mrb[0].mxu0 %v925
        %v1760 = vpop.f32.mrb[0].mxu0
        %v1761 = vadd.f32 0.0, %v1760
        %v1762 = vpop.f32.mrb[0].mxu0
        %1763 = vmatprep.mubr.f32.mxu0 0.0
        %1764 = vmatmul.mubr.f32.gmra.mrb[0].mxu0 %v927
        %v1765 = vpop.f32.mrb[0].mxu0
        %v1766 = vadd.f32 0.0, %v1765
        %v1767 = vpop.f32.mrb[0].mxu0
        %1768 = vmatprep.mubr.f32.mxu0 0.0
        %1769 = vmatmul.mubr.f32.gmra.mrb[0].mxu0 %v929
        %v1770 = vpop.f32.mrb[0].mxu0
        %v1771 = vadd.f32 0.0, %v1770
        %v1772 = vpop.f32.mrb[0].mxu0
        %1773 = vmatprep.mubr.f32.mxu0 0.0
        %1774 = vmatmul.mubr.f32.gmra.mrb[0].mxu0 %v931
        %v1775 = vpop.f32.mrb[0].mxu0
        %v1776 = vadd.f32 0.0, %v1775
        %v1777 = vpop.f32.mrb[0].mxu0
        %1778 = vmatprep.mubr.f32.mxu0 0.0
        %1779 = vmatmul.mubr.f32.gmra.mrb[0].mxu0 %v933
        %v1780 = vpop.f32.mrb[0].mxu0
        %v1781 = vadd.f32 0.0, %v1780
        %v1782 = vpop.f32.mrb[0].mxu0
        %1783 = vmatprep.mubr.f32.mxu0 0.0
        %1784 = vmatmul.mubr.f32.gmra.mrb[0].mxu0 %v935
        %v1785 = vpop.f32.mrb[0].mxu0
        %v1786 = vadd.f32 0.0, %v1785
        %v1787 = vpop.f32.mrb[0].mxu0
        %1788 = vmatprep.mubr.f32.mxu0 0.0
        %1789 = vmatmul.mubr.f32.gmra.mrb[0].mxu0 %v937
        %v1790 = vpop.f32.mrb[0].mxu0
        %v1791 = vadd.f32 0.0, %v1790
        %v1792 = vpop.f32.mrb[0].mxu0
        %1793 = vmatprep.mubr.f32.mxu0 0.0
        %1794 = vmatmul.mubr.f32.gmra.mrb[0].mxu0 %v939
        %v1795 = vpop.f32.mrb[0].mxu0
        %v1796 = vadd.f32 0.0, %v1795
        %v1797 = vpop.f32.mrb[0].mxu0
        %1798 = vmatprep.mubr.f32.mxu0 0.0
        %1799 = vmatmul.mubr.f32.gmra.mrb[0].mxu0 %v941
        %v1800 = vpop.f32.mrb[0].mxu0
        %v1801 = vadd.f32 0.0, %v1800
        %v1802 = vpop.f32.mrb[0].mxu0
        %1803 = vmatprep.mubr.f32.mxu0 0.0
        %1804 = vmatmul.mubr.f32.gmra.mrb[0].mxu0 %v1581
        %v1805 = vpop.f32.mrb[0].mxu0
        %v1806 = vadd.f32 0.0, %v1805
        %v1807 = vpop.f32.mrb[0].mxu0
        %1808 = vmatprep.mubr.f32.mxu0 0.0
        %1809 = vmatmul.mubr.f32.gmra.mrb[0].mxu0 %v1584
        %v1810 = vpop.f32.mrb[0].mxu0
        %v1811 = vadd.f32 0.0, %v1810
        %v1812 = vpop.f32.mrb[0].mxu0
        %1813 = vdwg.mxu0
        %v1814 = vadd.f32 %v1546, %v1656
        %v1815 = vadd.f32 %v1547, %v1661
        %v1816 = vadd.f32 %v1548, %v1666
        %v1817 = vadd.f32 %v1549, %v1671
        %v1818 = vadd.f32 %v1550, %v1676
        %v1819 = vadd.f32 %v1551, %v1681
        %v1820 = vadd.f32 %v1552, %v1686
        %v1821 = vadd.f32 %v1553, %v1691
        %v1822 = vadd.f32 %v1554, %v1696
        %v1823 = vadd.f32 %v1555, %v1701
        %v1824 = vadd.f32 %v1556, %v1706
        %v1825 = vadd.f32 %v1557, %v1711
        %v1826 = vadd.f32 %v1558, %v1716
        %v1827 = vadd.f32 %v1559, %v1721
        %v1828 = vadd.f32 %v1560, %v1726
        %v1829 = vadd.f32 %v1561, %v1731
        %v1830 = vadd.f32 %v1562, %v1736
        %v1831 = vadd.f32 %v1563, %v1741
        %v1832 = vadd.f32 %v1564, %v1746
        %v1833 = vadd.f32 %v1565, %v1751
        %v1834 = vadd.f32 %v1566, %v1756
        %v1835 = vadd.f32 %v1567, %v1761
        %v1836 = vadd.f32 %v1568, %v1766
        %v1837 = vadd.f32 %v1569, %v1771
        %v1838 = vadd.f32 %v1570, %v1776
        %v1839 = vadd.f32 %v1571, %v1781
        %v1840 = vadd.f32 %v1572, %v1786
        %v1841 = vadd.f32 %v1573, %v1791
        %v1842 = vadd.f32 %v1574, %v1796
        %v1843 = vadd.f32 %v1575, %v1801
        %v1844 = vadd.f32 %v1576, %v1806
        %v1845 = vadd.f32 %v1577, %v1811
        %v1847 = vrot.slane %v446, 1
        %v1848 = vrot.slane %v447, 1
        %v1849 = vsel %vm503, %v1847, %v1848
        %v1850 = vrot.slane %v448, 1
        %v1851 = vsel %vm503, %v1848, %v1850
        %s1852 = scalar_lea.vmem %s1, 16
        %v1853 = vld [vmem:[%s1852] sm:$0xf]
        %v1854 = vsel %vm277, %v1849, 0
        %v1856 = vsel %vm277, %v1851, 0
        %v1859 = vsel %vm650, %v1853, 0
        %1861 = vmatprep.subr.mxu0 0.0
        %1862 = vmatpush1.msra.mxu0 %v1859
        %1863 = vmatprep.subr.mxu0 0.0
        %1864 = vmatpush1.msra.mxu0 0.0
        %1865 = vmatprep.subr.mxu0 0.0
        %1866 = vmatpush1.msra.mxu0 0.0
        %1867 = vmatprep.subr.mxu0 0.0
        %1868 = vmatpush1.msra.mxu0 0.0
        %1869 = vmatprep.subr.mxu0 0.0
        %1870 = vmatpush1.msra.mxu0 0.0
        %1871 = vmatprep.subr.mxu0 0.0
        %1872 = vmatpush1.msra.mxu0 0.0
        %1873 = vmatprep.subr.mxu0 0.0
        %1874 = vmatpush1.msra.mxu0 0.0
        %1875 = vmatprep.subr.mxu0 0.0
        %1876 = vmatpush1.msra.mxu0 0.0
        %1877 = vmatprep.subr.mxu0 0.0
        %1878 = vmatpush1.msra.mxu0 0.0
        %1879 = vmatprep.subr.mxu0 0.0
        %1880 = vmatpush1.msra.mxu0 0.0
        %1881 = vmatprep.subr.mxu0 0.0
        %1882 = vmatpush1.msra.mxu0 0.0
        %1883 = vmatprep.subr.mxu0 0.0
        %1884 = vmatpush1.msra.mxu0 0.0
        %1885 = vmatprep.subr.mxu0 0.0
        %1886 = vmatpush1.msra.mxu0 0.0
        %1887 = vmatprep.subr.mxu0 0.0
        %1888 = vmatpush1.msra.mxu0 0.0
        %1889 = vmatprep.subr.mxu0 0.0
        %1890 = vmatpush1.msra.mxu0 0.0
        %1891 = vmatprep.subr.mxu0 0.0
        %1892 = vmatpush1.msra.mxu0 0.0
        %1893 = vmatprep.subr.mxu0 0.0
        %1894 = vmatpush1.msra.mxu0 0.0
        %1895 = vmatprep.subr.mxu0 0.0
        %1896 = vmatpush1.msra.mxu0 0.0
        %1897 = vmatprep.subr.mxu0 0.0
        %1898 = vmatpush1.msra.mxu0 0.0
        %1899 = vmatprep.subr.mxu0 0.0
        %1900 = vmatpush1.msra.mxu0 0.0
        %1901 = vmatprep.subr.mxu0 0.0
        %1902 = vmatpush1.msra.mxu0 0.0
        %1903 = vmatprep.subr.mxu0 0.0
        %1904 = vmatpush1.msra.mxu0 0.0
        %1905 = vmatprep.subr.mxu0 0.0
        %1906 = vmatpush1.msra.mxu0 0.0
        %1907 = vmatprep.subr.mxu0 0.0
        %1908 = vmatpush1.msra.mxu0 0.0
        %1909 = vmatprep.subr.mxu0 0.0
        %1910 = vmatpush1.msra.mxu0 0.0
        %1911 = vmatprep.subr.mxu0 0.0
        %1912 = vmatpush1.msra.mxu0 0.0
        %1913 = vmatprep.subr.mxu0 0.0
        %1914 = vmatpush1.msra.mxu0 0.0
        %1915 = vmatprep.subr.mxu0 0.0
        %1916 = vmatpush1.msra.mxu0 0.0
        %1917 = vmatprep.subr.mxu0 0.0
        %1918 = vmatpush1.msra.mxu0 0.0
        %1919 = vmatprep.subr.mxu0 0.0
        %1920 = vmatpush1.msra.mxu0 0.0
        %1921 = vmatprep.subr.mxu0 0.0
        %1922 = vmatpush1.msra.mxu0 0.0
        %1923 = vmatprep.subr.mxu0 0.0
        %1924 = vmatpush1.msra.mxu0 0.0
        %1925 = vmatprep.mubr.f32.mxu0 0.0
        %1926 = vmatmul.mubr.f32.gmra.mrb[0].mxu0 %v590
        %v1927 = vpop.f32.mrb[0].mxu0
        %v1928 = vadd.f32 0.0, %v1927
        %v1929 = vpop.f32.mrb[0].mxu0
        %1930 = vmatprep.mubr.f32.mxu0 0.0
        %1931 = vmatmul.mubr.f32.gmra.mrb[0].mxu0 %v592
        %v1932 = vpop.f32.mrb[0].mxu0
        %v1933 = vadd.f32 0.0, %v1932
        %v1934 = vpop.f32.mrb[0].mxu0
        %1935 = vmatprep.mubr.f32.mxu0 0.0
        %1936 = vmatmul.mubr.f32.gmra.mrb[0].mxu0 %v594
        %v1937 = vpop.f32.mrb[0].mxu0
        %v1938 = vadd.f32 0.0, %v1937
        %v1939 = vpop.f32.mrb[0].mxu0
        %1940 = vmatprep.mubr.f32.mxu0 0.0
        %1941 = vmatmul.mubr.f32.gmra.mrb[0].mxu0 %v596
        %v1942 = vpop.f32.mrb[0].mxu0
        %v1943 = vadd.f32 0.0, %v1942
        %v1944 = vpop.f32.mrb[0].mxu0
        %1945 = vmatprep.mubr.f32.mxu0 0.0
        %1946 = vmatmul.mubr.f32.gmra.mrb[0].mxu0 %v598
        %v1947 = vpop.f32.mrb[0].mxu0
        %v1948 = vadd.f32 0.0, %v1947
        %v1949 = vpop.f32.mrb[0].mxu0
        %1950 = vmatprep.mubr.f32.mxu0 0.0
        %1951 = vmatmul.mubr.f32.gmra.mrb[0].mxu0 %v600
        %v1952 = vpop.f32.mrb[0].mxu0
        %v1953 = vadd.f32 0.0, %v1952
        %v1954 = vpop.f32.mrb[0].mxu0
        %1955 = vmatprep.mubr.f32.mxu0 0.0
        %1956 = vmatmul.mubr.f32.gmra.mrb[0].mxu0 %v602
        %v1957 = vpop.f32.mrb[0].mxu0
        %v1958 = vadd.f32 0.0, %v1957
        %v1959 = vpop.f32.mrb[0].mxu0
        %1960 = vmatprep.mubr.f32.mxu0 0.0
        %1961 = vmatmul.mubr.f32.gmra.mrb[0].mxu0 %v604
        %v1962 = vpop.f32.mrb[0].mxu0
        %v1963 = vadd.f32 0.0, %v1962
        %v1964 = vpop.f32.mrb[0].mxu0
        %1965 = vmatprep.mubr.f32.mxu0 0.0
        %1966 = vmatmul.mubr.f32.gmra.mrb[0].mxu0 %v606
        %v1967 = vpop.f32.mrb[0].mxu0
        %v1968 = vadd.f32 0.0, %v1967
        %v1969 = vpop.f32.mrb[0].mxu0
        %1970 = vmatprep.mubr.f32.mxu0 0.0
        %1971 = vmatmul.mubr.f32.gmra.mrb[0].mxu0 %v608
        %v1972 = vpop.f32.mrb[0].mxu0
        %v1973 = vadd.f32 0.0, %v1972
        %v1974 = vpop.f32.mrb[0].mxu0
        %1975 = vmatprep.mubr.f32.mxu0 0.0
        %1976 = vmatmul.mubr.f32.gmra.mrb[0].mxu0 %v610
        %v1977 = vpop.f32.mrb[0].mxu0
        %v1978 = vadd.f32 0.0, %v1977
        %v1979 = vpop.f32.mrb[0].mxu0
        %1980 = vmatprep.mubr.f32.mxu0 0.0
        %1981 = vmatmul.mubr.f32.gmra.mrb[0].mxu0 %v612
        %v1982 = vpop.f32.mrb[0].mxu0
        %v1983 = vadd.f32 0.0, %v1982
        %v1984 = vpop.f32.mrb[0].mxu0
        %1985 = vmatprep.mubr.f32.mxu0 0.0
        %1986 = vmatmul.mubr.f32.gmra.mrb[0].mxu0 %v614
        %v1987 = vpop.f32.mrb[0].mxu0
        %v1988 = vadd.f32 0.0, %v1987
        %v1989 = vpop.f32.mrb[0].mxu0
        %1990 = vmatprep.mubr.f32.mxu0 0.0
        %1991 = vmatmul.mubr.f32.gmra.mrb[0].mxu0 %v616
        %v1992 = vpop.f32.mrb[0].mxu0
        %v1993 = vadd.f32 0.0, %v1992
        %v1994 = vpop.f32.mrb[0].mxu0
        %1995 = vmatprep.mubr.f32.mxu0 0.0
        %1996 = vmatmul.mubr.f32.gmra.mrb[0].mxu0 %v618
        %v1997 = vpop.f32.mrb[0].mxu0
        %v1998 = vadd.f32 0.0, %v1997
        %v1999 = vpop.f32.mrb[0].mxu0
        %2000 = vmatprep.mubr.f32.mxu0 0.0
        %2001 = vmatmul.mubr.f32.gmra.mrb[0].mxu0 %v620
        %v2002 = vpop.f32.mrb[0].mxu0
        %v2003 = vadd.f32 0.0, %v2002
        %v2004 = vpop.f32.mrb[0].mxu0
        %2005 = vmatprep.mubr.f32.mxu0 0.0
        %2006 = vmatmul.mubr.f32.gmra.mrb[0].mxu0 %v622
        %v2007 = vpop.f32.mrb[0].mxu0
        %v2008 = vadd.f32 0.0, %v2007
        %v2009 = vpop.f32.mrb[0].mxu0
        %2010 = vmatprep.mubr.f32.mxu0 0.0
        %2011 = vmatmul.mubr.f32.gmra.mrb[0].mxu0 %v624
        %v2012 = vpop.f32.mrb[0].mxu0
        %v2013 = vadd.f32 0.0, %v2012
        %v2014 = vpop.f32.mrb[0].mxu0
        %2015 = vmatprep.mubr.f32.mxu0 0.0
        %2016 = vmatmul.mubr.f32.gmra.mrb[0].mxu0 %v626
        %v2017 = vpop.f32.mrb[0].mxu0
        %v2018 = vadd.f32 0.0, %v2017
        %v2019 = vpop.f32.mrb[0].mxu0
        %2020 = vmatprep.mubr.f32.mxu0 0.0
        %2021 = vmatmul.mubr.f32.gmra.mrb[0].mxu0 %v628
        %v2022 = vpop.f32.mrb[0].mxu0
        %v2023 = vadd.f32 0.0, %v2022
        %v2024 = vpop.f32.mrb[0].mxu0
        %2025 = vmatprep.mubr.f32.mxu0 0.0
        %2026 = vmatmul.mubr.f32.gmra.mrb[0].mxu0 %v630
        %v2027 = vpop.f32.mrb[0].mxu0
        %v2028 = vadd.f32 0.0, %v2027
        %v2029 = vpop.f32.mrb[0].mxu0
        %2030 = vmatprep.mubr.f32.mxu0 0.0
        %2031 = vmatmul.mubr.f32.gmra.mrb[0].mxu0 %v632
        %v2032 = vpop.f32.mrb[0].mxu0
        %v2033 = vadd.f32 0.0, %v2032
        %v2034 = vpop.f32.mrb[0].mxu0
        %2035 = vmatprep.mubr.f32.mxu0 0.0
        %2036 = vmatmul.mubr.f32.gmra.mrb[0].mxu0 %v634
        %v2037 = vpop.f32.mrb[0].mxu0
        %v2038 = vadd.f32 0.0, %v2037
        %v2039 = vpop.f32.mrb[0].mxu0
        %2040 = vmatprep.mubr.f32.mxu0 0.0
        %2041 = vmatmul.mubr.f32.gmra.mrb[0].mxu0 %v636
        %v2042 = vpop.f32.mrb[0].mxu0
        %v2043 = vadd.f32 0.0, %v2042
        %v2044 = vpop.f32.mrb[0].mxu0
        %2045 = vmatprep.mubr.f32.mxu0 0.0
        %2046 = vmatmul.mubr.f32.gmra.mrb[0].mxu0 %v638
        %v2047 = vpop.f32.mrb[0].mxu0
        %v2048 = vadd.f32 0.0, %v2047
        %v2049 = vpop.f32.mrb[0].mxu0
        %2050 = vmatprep.mubr.f32.mxu0 0.0
        %2051 = vmatmul.mubr.f32.gmra.mrb[0].mxu0 %v640
        %v2052 = vpop.f32.mrb[0].mxu0
        %v2053 = vadd.f32 0.0, %v2052
        %v2054 = vpop.f32.mrb[0].mxu0
        %2055 = vmatprep.mubr.f32.mxu0 0.0
        %2056 = vmatmul.mubr.f32.gmra.mrb[0].mxu0 %v642
        %v2057 = vpop.f32.mrb[0].mxu0
        %v2058 = vadd.f32 0.0, %v2057
        %v2059 = vpop.f32.mrb[0].mxu0
        %2060 = vmatprep.mubr.f32.mxu0 0.0
        %2061 = vmatmul.mubr.f32.gmra.mrb[0].mxu0 %v644
        %v2062 = vpop.f32.mrb[0].mxu0
        %v2063 = vadd.f32 0.0, %v2062
        %v2064 = vpop.f32.mrb[0].mxu0
        %2065 = vmatprep.mubr.f32.mxu0 0.0
        %2066 = vmatmul.mubr.f32.gmra.mrb[0].mxu0 %v646
        %v2067 = vpop.f32.mrb[0].mxu0
        %v2068 = vadd.f32 0.0, %v2067
        %v2069 = vpop.f32.mrb[0].mxu0
        %2070 = vmatprep.mubr.f32.mxu0 0.0
        %2071 = vmatmul.mubr.f32.gmra.mrb[0].mxu0 %v648
        %v2072 = vpop.f32.mrb[0].mxu0
        %v2073 = vadd.f32 0.0, %v2072
        %v2074 = vpop.f32.mrb[0].mxu0
        %2075 = vmatprep.mubr.f32.mxu0 0.0
        %2076 = vmatmul.mubr.f32.gmra.mrb[0].mxu0 %v1854
        %v2077 = vpop.f32.mrb[0].mxu0
        %v2078 = vadd.f32 0.0, %v2077
        %v2079 = vpop.f32.mrb[0].mxu0
        %2080 = vmatprep.mubr.f32.mxu0 0.0
        %2081 = vmatmul.mubr.f32.gmra.mrb[0].mxu0 %v1856
        %v2082 = vpop.f32.mrb[0].mxu0
        %v2083 = vadd.f32 0.0, %v2082
        %v2084 = vpop.f32.mrb[0].mxu0
        %2085 = vdwg.mxu0
        %v2086 = vadd.f32 %v1814, %v1928
        %v2087 = vadd.f32 %v1815, %v1933
        %v2088 = vadd.f32 %v1816, %v1938
        %v2089 = vadd.f32 %v1817, %v1943
        %v2090 = vadd.f32 %v1818, %v1948
        %v2091 = vadd.f32 %v1819, %v1953
        %v2092 = vadd.f32 %v1820, %v1958
        %v2093 = vadd.f32 %v1821, %v1963
        %v2094 = vadd.f32 %v1822, %v1968
        %v2095 = vadd.f32 %v1823, %v1973
        %v2096 = vadd.f32 %v1824, %v1978
        %v2097 = vadd.f32 %v1825, %v1983
        %v2098 = vadd.f32 %v1826, %v1988
        %v2099 = vadd.f32 %v1827, %v1993
        %v2100 = vadd.f32 %v1828, %v1998
        %v2101 = vadd.f32 %v1829, %v2003
        %v2102 = vadd.f32 %v1830, %v2008
        %v2103 = vadd.f32 %v1831, %v2013
        %v2104 = vadd.f32 %v1832, %v2018
        %v2105 = vadd.f32 %v1833, %v2023
        %v2106 = vadd.f32 %v1834, %v2028
        %v2107 = vadd.f32 %v1835, %v2033
        %v2108 = vadd.f32 %v1836, %v2038
        %v2109 = vadd.f32 %v1837, %v2043
        %v2110 = vadd.f32 %v1838, %v2048
        %v2111 = vadd.f32 %v1839, %v2053
        %v2112 = vadd.f32 %v1840, %v2058
        %v2113 = vadd.f32 %v1841, %v2063
        %v2114 = vadd.f32 %v1842, %v2068
        %v2115 = vadd.f32 %v1843, %v2073
        %v2116 = vadd.f32 %v1844, %v2078
        %v2117 = vadd.f32 %v1845, %v2083
        %v2118 = vrot.slane %v446, 2
        %v2119 = vrot.slane %v447, 2
        %v2120 = vsel %vm1171, %v2118, %v2119
        %v2121 = vrot.slane %v448, 2
        %v2122 = vsel %vm1171, %v2119, %v2121
        %s2123 = scalar_lea.vmem %s1, 20
        %v2124 = vld [vmem:[%s2123] sm:$0xf]
        %v2125 = vsel %vm277, %v2120, 0
        %v2127 = vsel %vm277, %v2122, 0
        %v2130 = vsel %vm650, %v2124, 0
        %2132 = vmatprep.subr.mxu0 0.0
        %2133 = vmatpush1.msra.mxu0 %v2130
        %2134 = vmatprep.subr.mxu0 0.0
        %2135 = vmatpush1.msra.mxu0 0.0
        %2136 = vmatprep.subr.mxu0 0.0
        %2137 = vmatpush1.msra.mxu0 0.0
        %2138 = vmatprep.subr.mxu0 0.0
        %2139 = vmatpush1.msra.mxu0 0.0
        %2140 = vmatprep.subr.mxu0 0.0
        %2141 = vmatpush1.msra.mxu0 0.0
        %2142 = vmatprep.subr.mxu0 0.0
        %2143 = vmatpush1.msra.mxu0 0.0
        %2144 = vmatprep.subr.mxu0 0.0
        %2145 = vmatpush1.msra.mxu0 0.0
        %2146 = vmatprep.subr.mxu0 0.0
        %2147 = vmatpush1.msra.mxu0 0.0
        %2148 = vmatprep.subr.mxu0 0.0
        %2149 = vmatpush1.msra.mxu0 0.0
        %2150 = vmatprep.subr.mxu0 0.0
        %2151 = vmatpush1.msra.mxu0 0.0
        %2152 = vmatprep.subr.mxu0 0.0
        %2153 = vmatpush1.msra.mxu0 0.0
        %2154 = vmatprep.subr.mxu0 0.0
        %2155 = vmatpush1.msra.mxu0 0.0
        %2156 = vmatprep.subr.mxu0 0.0
        %2157 = vmatpush1.msra.mxu0 0.0
        %2158 = vmatprep.subr.mxu0 0.0
        %2159 = vmatpush1.msra.mxu0 0.0
        %2160 = vmatprep.subr.mxu0 0.0
        %2161 = vmatpush1.msra.mxu0 0.0
        %2162 = vmatprep.subr.mxu0 0.0
        %2163 = vmatpush1.msra.mxu0 0.0
        %2164 = vmatprep.subr.mxu0 0.0
        %2165 = vmatpush1.msra.mxu0 0.0
        %2166 = vmatprep.subr.mxu0 0.0
        %2167 = vmatpush1.msra.mxu0 0.0
        %2168 = vmatprep.subr.mxu0 0.0
        %2169 = vmatpush1.msra.mxu0 0.0
        %2170 = vmatprep.subr.mxu0 0.0
        %2171 = vmatpush1.msra.mxu0 0.0
        %2172 = vmatprep.subr.mxu0 0.0
        %2173 = vmatpush1.msra.mxu0 0.0
        %2174 = vmatprep.subr.mxu0 0.0
        %2175 = vmatpush1.msra.mxu0 0.0
        %2176 = vmatprep.subr.mxu0 0.0
        %2177 = vmatpush1.msra.mxu0 0.0
        %2178 = vmatprep.subr.mxu0 0.0
        %2179 = vmatpush1.msra.mxu0 0.0
        %2180 = vmatprep.subr.mxu0 0.0
        %2181 = vmatpush1.msra.mxu0 0.0
        %2182 = vmatprep.subr.mxu0 0.0
        %2183 = vmatpush1.msra.mxu0 0.0
        %2184 = vmatprep.subr.mxu0 0.0
        %2185 = vmatpush1.msra.mxu0 0.0
        %2186 = vmatprep.subr.mxu0 0.0
        %2187 = vmatpush1.msra.mxu0 0.0
        %2188 = vmatprep.subr.mxu0 0.0
        %2189 = vmatpush1.msra.mxu0 0.0
        %2190 = vmatprep.subr.mxu0 0.0
        %2191 = vmatpush1.msra.mxu0 0.0
        %2192 = vmatprep.subr.mxu0 0.0
        %2193 = vmatpush1.msra.mxu0 0.0
        %2194 = vmatprep.subr.mxu0 0.0
        %2195 = vmatpush1.msra.mxu0 0.0
        %2196 = vmatprep.mubr.f32.mxu0 0.0
        %2197 = vmatmul.mubr.f32.gmra.mrb[0].mxu0 %v1258
        %v2198 = vpop.f32.mrb[0].mxu0
        %v2199 = vadd.f32 0.0, %v2198
        %v2200 = vpop.f32.mrb[0].mxu0
        %2201 = vmatprep.mubr.f32.mxu0 0.0
        %2202 = vmatmul.mubr.f32.gmra.mrb[0].mxu0 %v1260
        %v2203 = vpop.f32.mrb[0].mxu0
        %v2204 = vadd.f32 0.0, %v2203
        %v2205 = vpop.f32.mrb[0].mxu0
        %2206 = vmatprep.mubr.f32.mxu0 0.0
        %2207 = vmatmul.mubr.f32.gmra.mrb[0].mxu0 %v1262
        %v2208 = vpop.f32.mrb[0].mxu0
        %v2209 = vadd.f32 0.0, %v2208
        %v2210 = vpop.f32.mrb[0].mxu0
        %2211 = vmatprep.mubr.f32.mxu0 0.0
        %2212 = vmatmul.mubr.f32.gmra.mrb[0].mxu0 %v1264
        %v2213 = vpop.f32.mrb[0].mxu0
        %v2214 = vadd.f32 0.0, %v2213
        %v2215 = vpop.f32.mrb[0].mxu0
        %2216 = vmatprep.mubr.f32.mxu0 0.0
        %2217 = vmatmul.mubr.f32.gmra.mrb[0].mxu0 %v1266
        %v2218 = vpop.f32.mrb[0].mxu0
        %v2219 = vadd.f32 0.0, %v2218
        %v2220 = vpop.f32.mrb[0].mxu0
        %2221 = vmatprep.mubr.f32.mxu0 0.0
        %2222 = vmatmul.mubr.f32.gmra.mrb[0].mxu0 %v1268
        %v2223 = vpop.f32.mrb[0].mxu0
        %v2224 = vadd.f32 0.0, %v2223
        %v2225 = vpop.f32.mrb[0].mxu0
        %2226 = vmatprep.mubr.f32.mxu0 0.0
        %2227 = vmatmul.mubr.f32.gmra.mrb[0].mxu0 %v1270
        %v2228 = vpop.f32.mrb[0].mxu0
        %v2229 = vadd.f32 0.0, %v2228
        %v2230 = vpop.f32.mrb[0].mxu0
        %2231 = vmatprep.mubr.f32.mxu0 0.0
        %2232 = vmatmul.mubr.f32.gmra.mrb[0].mxu0 %v1272
        %v2233 = vpop.f32.mrb[0].mxu0
        %v2234 = vadd.f32 0.0, %v2233
        %v2235 = vpop.f32.mrb[0].mxu0
        %2236 = vmatprep.mubr.f32.mxu0 0.0
        %2237 = vmatmul.mubr.f32.gmra.mrb[0].mxu0 %v1274
        %v2238 = vpop.f32.mrb[0].mxu0
        %v2239 = vadd.f32 0.0, %v2238
        %v2240 = vpop.f32.mrb[0].mxu0
        %2241 = vmatprep.mubr.f32.mxu0 0.0
        %2242 = vmatmul.mubr.f32.gmra.mrb[0].mxu0 %v1276
        %v2243 = vpop.f32.mrb[0].mxu0
        %v2244 = vadd.f32 0.0, %v2243
        %v2245 = vpop.f32.mrb[0].mxu0
        %2246 = vmatprep.mubr.f32.mxu0 0.0
        %2247 = vmatmul.mubr.f32.gmra.mrb[0].mxu0 %v1278
        %v2248 = vpop.f32.mrb[0].mxu0
        %v2249 = vadd.f32 0.0, %v2248
        %v2250 = vpop.f32.mrb[0].mxu0
        %2251 = vmatprep.mubr.f32.mxu0 0.0
        %2252 = vmatmul.mubr.f32.gmra.mrb[0].mxu0 %v1280
        %v2253 = vpop.f32.mrb[0].mxu0
        %v2254 = vadd.f32 0.0, %v2253
        %v2255 = vpop.f32.mrb[0].mxu0
        %2256 = vmatprep.mubr.f32.mxu0 0.0
        %2257 = vmatmul.mubr.f32.gmra.mrb[0].mxu0 %v1282
        %v2258 = vpop.f32.mrb[0].mxu0
        %v2259 = vadd.f32 0.0, %v2258
        %v2260 = vpop.f32.mrb[0].mxu0
        %2261 = vmatprep.mubr.f32.mxu0 0.0
        %2262 = vmatmul.mubr.f32.gmra.mrb[0].mxu0 %v1284
        %v2263 = vpop.f32.mrb[0].mxu0
        %v2264 = vadd.f32 0.0, %v2263
        %v2265 = vpop.f32.mrb[0].mxu0
        %2266 = vmatprep.mubr.f32.mxu0 0.0
        %2267 = vmatmul.mubr.f32.gmra.mrb[0].mxu0 %v1286
        %v2268 = vpop.f32.mrb[0].mxu0
        %v2269 = vadd.f32 0.0, %v2268
        %v2270 = vpop.f32.mrb[0].mxu0
        %2271 = vmatprep.mubr.f32.mxu0 0.0
        %2272 = vmatmul.mubr.f32.gmra.mrb[0].mxu0 %v1288
        %v2273 = vpop.f32.mrb[0].mxu0
        %v2274 = vadd.f32 0.0, %v2273
        %v2275 = vpop.f32.mrb[0].mxu0
        %2276 = vmatprep.mubr.f32.mxu0 0.0
        %2277 = vmatmul.mubr.f32.gmra.mrb[0].mxu0 %v1290
        %v2278 = vpop.f32.mrb[0].mxu0
        %v2279 = vadd.f32 0.0, %v2278
        %v2280 = vpop.f32.mrb[0].mxu0
        %2281 = vmatprep.mubr.f32.mxu0 0.0
        %2282 = vmatmul.mubr.f32.gmra.mrb[0].mxu0 %v1292
        %v2283 = vpop.f32.mrb[0].mxu0
        %v2284 = vadd.f32 0.0, %v2283
        %v2285 = vpop.f32.mrb[0].mxu0
        %2286 = vmatprep.mubr.f32.mxu0 0.0
        %2287 = vmatmul.mubr.f32.gmra.mrb[0].mxu0 %v1294
        %v2288 = vpop.f32.mrb[0].mxu0
        %v2289 = vadd.f32 0.0, %v2288
        %v2290 = vpop.f32.mrb[0].mxu0
        %2291 = vmatprep.mubr.f32.mxu0 0.0
        %2292 = vmatmul.mubr.f32.gmra.mrb[0].mxu0 %v1296
        %v2293 = vpop.f32.mrb[0].mxu0
        %v2294 = vadd.f32 0.0, %v2293
        %v2295 = vpop.f32.mrb[0].mxu0
        %2296 = vmatprep.mubr.f32.mxu0 0.0
        %2297 = vmatmul.mubr.f32.gmra.mrb[0].mxu0 %v1298
        %v2298 = vpop.f32.mrb[0].mxu0
        %v2299 = vadd.f32 0.0, %v2298
        %v2300 = vpop.f32.mrb[0].mxu0
        %2301 = vmatprep.mubr.f32.mxu0 0.0
        %2302 = vmatmul.mubr.f32.gmra.mrb[0].mxu0 %v1300
        %v2303 = vpop.f32.mrb[0].mxu0
        %v2304 = vadd.f32 0.0, %v2303
        %v2305 = vpop.f32.mrb[0].mxu0
        %2306 = vmatprep.mubr.f32.mxu0 0.0
        %2307 = vmatmul.mubr.f32.gmra.mrb[0].mxu0 %v1302
        %v2308 = vpop.f32.mrb[0].mxu0
        %v2309 = vadd.f32 0.0, %v2308
        %v2310 = vpop.f32.mrb[0].mxu0
        %2311 = vmatprep.mubr.f32.mxu0 0.0
        %2312 = vmatmul.mubr.f32.gmra.mrb[0].mxu0 %v1304
        %v2313 = vpop.f32.mrb[0].mxu0
        %v2314 = vadd.f32 0.0, %v2313
        %v2315 = vpop.f32.mrb[0].mxu0
        %2316 = vmatprep.mubr.f32.mxu0 0.0
        %2317 = vmatmul.mubr.f32.gmra.mrb[0].mxu0 %v1306
        %v2318 = vpop.f32.mrb[0].mxu0
        %v2319 = vadd.f32 0.0, %v2318
        %v2320 = vpop.f32.mrb[0].mxu0
        %2321 = vmatprep.mubr.f32.mxu0 0.0
        %2322 = vmatmul.mubr.f32.gmra.mrb[0].mxu0 %v1308
        %v2323 = vpop.f32.mrb[0].mxu0
        %v2324 = vadd.f32 0.0, %v2323
        %v2325 = vpop.f32.mrb[0].mxu0
        %2326 = vmatprep.mubr.f32.mxu0 0.0
        %2327 = vmatmul.mubr.f32.gmra.mrb[0].mxu0 %v1310
        %v2328 = vpop.f32.mrb[0].mxu0
        %v2329 = vadd.f32 0.0, %v2328
        %v2330 = vpop.f32.mrb[0].mxu0
        %2331 = vmatprep.mubr.f32.mxu0 0.0
        %2332 = vmatmul.mubr.f32.gmra.mrb[0].mxu0 %v1312
        %v2333 = vpop.f32.mrb[0].mxu0
        %v2334 = vadd.f32 0.0, %v2333
        %v2335 = vpop.f32.mrb[0].mxu0
        %2336 = vmatprep.mubr.f32.mxu0 0.0
        %2337 = vmatmul.mubr.f32.gmra.mrb[0].mxu0 %v1314
        %v2338 = vpop.f32.mrb[0].mxu0
        %v2339 = vadd.f32 0.0, %v2338
        %v2340 = vpop.f32.mrb[0].mxu0
        %2341 = vmatprep.mubr.f32.mxu0 0.0
        %2342 = vmatmul.mubr.f32.gmra.mrb[0].mxu0 %v1316
        %v2343 = vpop.f32.mrb[0].mxu0
        %v2344 = vadd.f32 0.0, %v2343
        %v2345 = vpop.f32.mrb[0].mxu0
        %2346 = vmatprep.mubr.f32.mxu0 0.0
        %2347 = vmatmul.mubr.f32.gmra.mrb[0].mxu0 %v2125
        %v2348 = vpop.f32.mrb[0].mxu0
        %v2349 = vadd.f32 0.0, %v2348
        %v2350 = vpop.f32.mrb[0].mxu0
        %2351 = vmatprep.mubr.f32.mxu0 0.0
        %2352 = vmatmul.mubr.f32.gmra.mrb[0].mxu0 %v2127
        %v2353 = vpop.f32.mrb[0].mxu0
        %v2354 = vadd.f32 0.0, %v2353
        %v2355 = vpop.f32.mrb[0].mxu0
        %2356 = vdwg.mxu0
        %v2357 = vadd.f32 %v2086, %v2199
        %v2358 = vadd.f32 %v2087, %v2204
        %v2359 = vadd.f32 %v2088, %v2209
        %v2360 = vadd.f32 %v2089, %v2214
        %v2361 = vadd.f32 %v2090, %v2219
        %v2362 = vadd.f32 %v2091, %v2224
        %v2363 = vadd.f32 %v2092, %v2229
        %v2364 = vadd.f32 %v2093, %v2234
        %v2365 = vadd.f32 %v2094, %v2239
        %v2366 = vadd.f32 %v2095, %v2244
        %v2367 = vadd.f32 %v2096, %v2249
        %v2368 = vadd.f32 %v2097, %v2254
        %v2369 = vadd.f32 %v2098, %v2259
        %v2370 = vadd.f32 %v2099, %v2264
        %v2371 = vadd.f32 %v2100, %v2269
        %v2372 = vadd.f32 %v2101, %v2274
        %v2373 = vadd.f32 %v2102, %v2279
        %v2374 = vadd.f32 %v2103, %v2284
        %v2375 = vadd.f32 %v2104, %v2289
        %v2376 = vadd.f32 %v2105, %v2294
        %v2377 = vadd.f32 %v2106, %v2299
        %v2378 = vadd.f32 %v2107, %v2304
        %v2379 = vadd.f32 %v2108, %v2309
        %v2380 = vadd.f32 %v2109, %v2314
        %v2381 = vadd.f32 %v2110, %v2319
        %v2382 = vadd.f32 %v2111, %v2324
        %v2383 = vadd.f32 %v2112, %v2329
        %v2384 = vadd.f32 %v2113, %v2334
        %v2385 = vadd.f32 %v2114, %v2339
        %v2386 = vadd.f32 %v2115, %v2344
        %v2387 = vadd.f32 %v2116, %v2349
        %v2388 = vadd.f32 %v2117, %v2354
        %s2389 = scalar_lea.vmem %s1, 24
        %v2390 = vld [vmem:[%s2389] sm:$0xf]
        %v2392 = vsel %vm277, %v449, 0
        %v2395 = vsel %vm277, %v450, 0
        %v2398 = vsel %vm650, %v2390, 0
        %2400 = vmatprep.subr.mxu0 0.0
        %2401 = vmatpush1.msra.mxu0 %v2398
        %2402 = vmatprep.subr.mxu0 0.0
        %2403 = vmatpush1.msra.mxu0 0.0
        %2404 = vmatprep.subr.mxu0 0.0
        %2405 = vmatpush1.msra.mxu0 0.0
        %2406 = vmatprep.subr.mxu0 0.0
        %2407 = vmatpush1.msra.mxu0 0.0
        %2408 = vmatprep.subr.mxu0 0.0
        %2409 = vmatpush1.msra.mxu0 0.0
        %2410 = vmatprep.subr.mxu0 0.0
        %2411 = vmatpush1.msra.mxu0 0.0
        %2412 = vmatprep.subr.mxu0 0.0
        %2413 = vmatpush1.msra.mxu0 0.0
        %2414 = vmatprep.subr.mxu0 0.0
        %2415 = vmatpush1.msra.mxu0 0.0
        %2416 = vmatprep.subr.mxu0 0.0
        %2417 = vmatpush1.msra.mxu0 0.0
        %2418 = vmatprep.subr.mxu0 0.0
        %2419 = vmatpush1.msra.mxu0 0.0
        %2420 = vmatprep.subr.mxu0 0.0
        %2421 = vmatpush1.msra.mxu0 0.0
        %2422 = vmatprep.subr.mxu0 0.0
        %2423 = vmatpush1.msra.mxu0 0.0
        %2424 = vmatprep.subr.mxu0 0.0
        %2425 = vmatpush1.msra.mxu0 0.0
        %2426 = vmatprep.subr.mxu0 0.0
        %2427 = vmatpush1.msra.mxu0 0.0
        %2428 = vmatprep.subr.mxu0 0.0
        %2429 = vmatpush1.msra.mxu0 0.0
        %2430 = vmatprep.subr.mxu0 0.0
        %2431 = vmatpush1.msra.mxu0 0.0
        %2432 = vmatprep.subr.mxu0 0.0
        %2433 = vmatpush1.msra.mxu0 0.0
        %2434 = vmatprep.subr.mxu0 0.0
        %2435 = vmatpush1.msra.mxu0 0.0
        %2436 = vmatprep.subr.mxu0 0.0
        %2437 = vmatpush1.msra.mxu0 0.0
        %2438 = vmatprep.subr.mxu0 0.0
        %2439 = vmatpush1.msra.mxu0 0.0
        %2440 = vmatprep.subr.mxu0 0.0
        %2441 = vmatpush1.msra.mxu0 0.0
        %2442 = vmatprep.subr.mxu0 0.0
        %2443 = vmatpush1.msra.mxu0 0.0
        %2444 = vmatprep.subr.mxu0 0.0
        %2445 = vmatpush1.msra.mxu0 0.0
        %2446 = vmatprep.subr.mxu0 0.0
        %2447 = vmatpush1.msra.mxu0 0.0
        %2448 = vmatprep.subr.mxu0 0.0
        %2449 = vmatpush1.msra.mxu0 0.0
        %2450 = vmatprep.subr.mxu0 0.0
        %2451 = vmatpush1.msra.mxu0 0.0
        %2452 = vmatprep.subr.mxu0 0.0
        %2453 = vmatpush1.msra.mxu0 0.0
        %2454 = vmatprep.subr.mxu0 0.0
        %2455 = vmatpush1.msra.mxu0 0.0
        %2456 = vmatprep.subr.mxu0 0.0
        %2457 = vmatpush1.msra.mxu0 0.0
        %2458 = vmatprep.subr.mxu0 0.0
        %2459 = vmatpush1.msra.mxu0 0.0
        %2460 = vmatprep.subr.mxu0 0.0
        %2461 = vmatpush1.msra.mxu0 0.0
        %2462 = vmatprep.subr.mxu0 0.0
        %2463 = vmatpush1.msra.mxu0 0.0
        %2464 = vmatprep.mubr.f32.mxu0 0.0
        %2465 = vmatmul.mubr.f32.gmra.mrb[0].mxu0 %v887
        %v2466 = vpop.f32.mrb[0].mxu0
        %v2467 = vadd.f32 0.0, %v2466
        %v2468 = vpop.f32.mrb[0].mxu0
        %2469 = vmatprep.mubr.f32.mxu0 0.0
        %2470 = vmatmul.mubr.f32.gmra.mrb[0].mxu0 %v889
        %v2471 = vpop.f32.mrb[0].mxu0
        %v2472 = vadd.f32 0.0, %v2471
        %v2473 = vpop.f32.mrb[0].mxu0
        %2474 = vmatprep.mubr.f32.mxu0 0.0
        %2475 = vmatmul.mubr.f32.gmra.mrb[0].mxu0 %v891
        %v2476 = vpop.f32.mrb[0].mxu0
        %v2477 = vadd.f32 0.0, %v2476
        %v2478 = vpop.f32.mrb[0].mxu0
        %2479 = vmatprep.mubr.f32.mxu0 0.0
        %2480 = vmatmul.mubr.f32.gmra.mrb[0].mxu0 %v893
        %v2481 = vpop.f32.mrb[0].mxu0
        %v2482 = vadd.f32 0.0, %v2481
        %v2483 = vpop.f32.mrb[0].mxu0
        %2484 = vmatprep.mubr.f32.mxu0 0.0
        %2485 = vmatmul.mubr.f32.gmra.mrb[0].mxu0 %v895
        %v2486 = vpop.f32.mrb[0].mxu0
        %v2487 = vadd.f32 0.0, %v2486
        %v2488 = vpop.f32.mrb[0].mxu0
        %2489 = vmatprep.mubr.f32.mxu0 0.0
        %2490 = vmatmul.mubr.f32.gmra.mrb[0].mxu0 %v897
        %v2491 = vpop.f32.mrb[0].mxu0
        %v2492 = vadd.f32 0.0, %v2491
        %v2493 = vpop.f32.mrb[0].mxu0
        %2494 = vmatprep.mubr.f32.mxu0 0.0
        %2495 = vmatmul.mubr.f32.gmra.mrb[0].mxu0 %v899
        %v2496 = vpop.f32.mrb[0].mxu0
        %v2497 = vadd.f32 0.0, %v2496
        %v2498 = vpop.f32.mrb[0].mxu0
        %2499 = vmatprep.mubr.f32.mxu0 0.0
        %2500 = vmatmul.mubr.f32.gmra.mrb[0].mxu0 %v901
        %v2501 = vpop.f32.mrb[0].mxu0
        %v2502 = vadd.f32 0.0, %v2501
        %v2503 = vpop.f32.mrb[0].mxu0
        %2504 = vmatprep.mubr.f32.mxu0 0.0
        %2505 = vmatmul.mubr.f32.gmra.mrb[0].mxu0 %v903
        %v2506 = vpop.f32.mrb[0].mxu0
        %v2507 = vadd.f32 0.0, %v2506
        %v2508 = vpop.f32.mrb[0].mxu0
        %2509 = vmatprep.mubr.f32.mxu0 0.0
        %2510 = vmatmul.mubr.f32.gmra.mrb[0].mxu0 %v905
        %v2511 = vpop.f32.mrb[0].mxu0
        %v2512 = vadd.f32 0.0, %v2511
        %v2513 = vpop.f32.mrb[0].mxu0
        %2514 = vmatprep.mubr.f32.mxu0 0.0
        %2515 = vmatmul.mubr.f32.gmra.mrb[0].mxu0 %v907
        %v2516 = vpop.f32.mrb[0].mxu0
        %v2517 = vadd.f32 0.0, %v2516
        %v2518 = vpop.f32.mrb[0].mxu0
        %2519 = vmatprep.mubr.f32.mxu0 0.0
        %2520 = vmatmul.mubr.f32.gmra.mrb[0].mxu0 %v909
        %v2521 = vpop.f32.mrb[0].mxu0
        %v2522 = vadd.f32 0.0, %v2521
        %v2523 = vpop.f32.mrb[0].mxu0
        %2524 = vmatprep.mubr.f32.mxu0 0.0
        %2525 = vmatmul.mubr.f32.gmra.mrb[0].mxu0 %v911
        %v2526 = vpop.f32.mrb[0].mxu0
        %v2527 = vadd.f32 0.0, %v2526
        %v2528 = vpop.f32.mrb[0].mxu0
        %2529 = vmatprep.mubr.f32.mxu0 0.0
        %2530 = vmatmul.mubr.f32.gmra.mrb[0].mxu0 %v913
        %v2531 = vpop.f32.mrb[0].mxu0
        %v2532 = vadd.f32 0.0, %v2531
        %v2533 = vpop.f32.mrb[0].mxu0
        %2534 = vmatprep.mubr.f32.mxu0 0.0
        %2535 = vmatmul.mubr.f32.gmra.mrb[0].mxu0 %v915
        %v2536 = vpop.f32.mrb[0].mxu0
        %v2537 = vadd.f32 0.0, %v2536
        %v2538 = vpop.f32.mrb[0].mxu0
        %2539 = vmatprep.mubr.f32.mxu0 0.0
        %2540 = vmatmul.mubr.f32.gmra.mrb[0].mxu0 %v917
        %v2541 = vpop.f32.mrb[0].mxu0
        %v2542 = vadd.f32 0.0, %v2541
        %v2543 = vpop.f32.mrb[0].mxu0
        %2544 = vmatprep.mubr.f32.mxu0 0.0
        %2545 = vmatmul.mubr.f32.gmra.mrb[0].mxu0 %v919
        %v2546 = vpop.f32.mrb[0].mxu0
        %v2547 = vadd.f32 0.0, %v2546
        %v2548 = vpop.f32.mrb[0].mxu0
        %2549 = vmatprep.mubr.f32.mxu0 0.0
        %2550 = vmatmul.mubr.f32.gmra.mrb[0].mxu0 %v921
        %v2551 = vpop.f32.mrb[0].mxu0
        %v2552 = vadd.f32 0.0, %v2551
        %v2553 = vpop.f32.mrb[0].mxu0
        %2554 = vmatprep.mubr.f32.mxu0 0.0
        %2555 = vmatmul.mubr.f32.gmra.mrb[0].mxu0 %v923
        %v2556 = vpop.f32.mrb[0].mxu0
        %v2557 = vadd.f32 0.0, %v2556
        %v2558 = vpop.f32.mrb[0].mxu0
        %2559 = vmatprep.mubr.f32.mxu0 0.0
        %2560 = vmatmul.mubr.f32.gmra.mrb[0].mxu0 %v925
        %v2561 = vpop.f32.mrb[0].mxu0
        %v2562 = vadd.f32 0.0, %v2561
        %v2563 = vpop.f32.mrb[0].mxu0
        %2564 = vmatprep.mubr.f32.mxu0 0.0
        %2565 = vmatmul.mubr.f32.gmra.mrb[0].mxu0 %v927
        %v2566 = vpop.f32.mrb[0].mxu0
        %v2567 = vadd.f32 0.0, %v2566
        %v2568 = vpop.f32.mrb[0].mxu0
        %2569 = vmatprep.mubr.f32.mxu0 0.0
        %2570 = vmatmul.mubr.f32.gmra.mrb[0].mxu0 %v929
        %v2571 = vpop.f32.mrb[0].mxu0
        %v2572 = vadd.f32 0.0, %v2571
        %v2573 = vpop.f32.mrb[0].mxu0
        %2574 = vmatprep.mubr.f32.mxu0 0.0
        %2575 = vmatmul.mubr.f32.gmra.mrb[0].mxu0 %v931
        %v2576 = vpop.f32.mrb[0].mxu0
        %v2577 = vadd.f32 0.0, %v2576
        %v2578 = vpop.f32.mrb[0].mxu0
        %2579 = vmatprep.mubr.f32.mxu0 0.0
        %2580 = vmatmul.mubr.f32.gmra.mrb[0].mxu0 %v933
        %v2581 = vpop.f32.mrb[0].mxu0
        %v2582 = vadd.f32 0.0, %v2581
        %v2583 = vpop.f32.mrb[0].mxu0
        %2584 = vmatprep.mubr.f32.mxu0 0.0
        %2585 = vmatmul.mubr.f32.gmra.mrb[0].mxu0 %v935
        %v2586 = vpop.f32.mrb[0].mxu0
        %v2587 = vadd.f32 0.0, %v2586
        %v2588 = vpop.f32.mrb[0].mxu0
        %2589 = vmatprep.mubr.f32.mxu0 0.0
        %2590 = vmatmul.mubr.f32.gmra.mrb[0].mxu0 %v937
        %v2591 = vpop.f32.mrb[0].mxu0
        %v2592 = vadd.f32 0.0, %v2591
        %v2593 = vpop.f32.mrb[0].mxu0
        %2594 = vmatprep.mubr.f32.mxu0 0.0
        %2595 = vmatmul.mubr.f32.gmra.mrb[0].mxu0 %v939
        %v2596 = vpop.f32.mrb[0].mxu0
        %v2597 = vadd.f32 0.0, %v2596
        %v2598 = vpop.f32.mrb[0].mxu0
        %2599 = vmatprep.mubr.f32.mxu0 0.0
        %2600 = vmatmul.mubr.f32.gmra.mrb[0].mxu0 %v941
        %v2601 = vpop.f32.mrb[0].mxu0
        %v2602 = vadd.f32 0.0, %v2601
        %v2603 = vpop.f32.mrb[0].mxu0
        %2604 = vmatprep.mubr.f32.mxu0 0.0
        %2605 = vmatmul.mubr.f32.gmra.mrb[0].mxu0 %v1581
        %v2606 = vpop.f32.mrb[0].mxu0
        %v2607 = vadd.f32 0.0, %v2606
        %v2608 = vpop.f32.mrb[0].mxu0
        %2609 = vmatprep.mubr.f32.mxu0 0.0
        %2610 = vmatmul.mubr.f32.gmra.mrb[0].mxu0 %v1584
        %v2611 = vpop.f32.mrb[0].mxu0
        %v2612 = vadd.f32 0.0, %v2611
        %v2613 = vpop.f32.mrb[0].mxu0
        %2614 = vmatprep.mubr.f32.mxu0 0.0
        %2615 = vmatmul.mubr.f32.gmra.mrb[0].mxu0 %v2392
        %v2616 = vpop.f32.mrb[0].mxu0
        %v2617 = vadd.f32 0.0, %v2616
        %v2618 = vpop.f32.mrb[0].mxu0
        %2619 = vmatprep.mubr.f32.mxu0 0.0
        %2620 = vmatmul.mubr.f32.gmra.mrb[0].mxu0 %v2395
        %v2621 = vpop.f32.mrb[0].mxu0
        %v2622 = vadd.f32 0.0, %v2621
        %v2623 = vpop.f32.mrb[0].mxu0
        %2624 = vdwg.mxu0
        %v2625 = vadd.f32 %v2357, %v2467
        %v2626 = vadd.f32 %v2358, %v2472
        %v2627 = vadd.f32 %v2359, %v2477
        %v2628 = vadd.f32 %v2360, %v2482
        %v2629 = vadd.f32 %v2361, %v2487
        %v2630 = vadd.f32 %v2362, %v2492
        %v2631 = vadd.f32 %v2363, %v2497
        %v2632 = vadd.f32 %v2364, %v2502
        %v2633 = vadd.f32 %v2365, %v2507
        %v2634 = vadd.f32 %v2366, %v2512
        %v2635 = vadd.f32 %v2367, %v2517
        %v2636 = vadd.f32 %v2368, %v2522
        %v2637 = vadd.f32 %v2369, %v2527
        %v2638 = vadd.f32 %v2370, %v2532
        %v2639 = vadd.f32 %v2371, %v2537
        %v2640 = vadd.f32 %v2372, %v2542
        %v2641 = vadd.f32 %v2373, %v2547
        %v2642 = vadd.f32 %v2374, %v2552
        %v2643 = vadd.f32 %v2375, %v2557
        %v2644 = vadd.f32 %v2376, %v2562
        %v2645 = vadd.f32 %v2377, %v2567
        %v2646 = vadd.f32 %v2378, %v2572
        %v2647 = vadd.f32 %v2379, %v2577
        %v2648 = vadd.f32 %v2380, %v2582
        %v2649 = vadd.f32 %v2381, %v2587
        %v2650 = vadd.f32 %v2382, %v2592
        %v2651 = vadd.f32 %v2383, %v2597
        %v2652 = vadd.f32 %v2384, %v2602
        %v2653 = vadd.f32 %v2385, %v2607
        %v2654 = vadd.f32 %v2386, %v2612
        %v2655 = vadd.f32 %v2387, %v2617
        %v2656 = vadd.f32 %v2388, %v2622
        %v2658 = vrot.slane %v449, 1
        %v2659 = vrot.slane %v450, 1
        %v2660 = vsel %vm503, %v2658, %v2659
        %v2661 = vrot.slane %v451, 1
        %v2662 = vsel %vm503, %v2659, %v2661
        %s2663 = scalar_lea.vmem %s1, 28
        %v2664 = vld [vmem:[%s2663] sm:$0xf]
        %v2665 = vsel %vm277, %v2660, 0
        %v2667 = vsel %vm277, %v2662, 0
        %v2670 = vsel %vm650, %v2664, 0
        %2672 = vmatprep.subr.mxu0 0.0
        %2673 = vmatpush1.msra.mxu0 %v2670
        %2674 = vmatprep.subr.mxu0 0.0
        %2675 = vmatpush1.msra.mxu0 0.0
        %2676 = vmatprep.subr.mxu0 0.0
        %2677 = vmatpush1.msra.mxu0 0.0
        %2678 = vmatprep.subr.mxu0 0.0
        %2679 = vmatpush1.msra.mxu0 0.0
        %2680 = vmatprep.subr.mxu0 0.0
        %2681 = vmatpush1.msra.mxu0 0.0
        %2682 = vmatprep.subr.mxu0 0.0
        %2683 = vmatpush1.msra.mxu0 0.0
        %2684 = vmatprep.subr.mxu0 0.0
        %2685 = vmatpush1.msra.mxu0 0.0
        %2686 = vmatprep.subr.mxu0 0.0
        %2687 = vmatpush1.msra.mxu0 0.0
        %2688 = vmatprep.subr.mxu0 0.0
        %2689 = vmatpush1.msra.mxu0 0.0
        %2690 = vmatprep.subr.mxu0 0.0
        %2691 = vmatpush1.msra.mxu0 0.0
        %2692 = vmatprep.subr.mxu0 0.0
        %2693 = vmatpush1.msra.mxu0 0.0
        %2694 = vmatprep.subr.mxu0 0.0
        %2695 = vmatpush1.msra.mxu0 0.0
        %2696 = vmatprep.subr.mxu0 0.0
        %2697 = vmatpush1.msra.mxu0 0.0
        %2698 = vmatprep.subr.mxu0 0.0
        %2699 = vmatpush1.msra.mxu0 0.0
        %2700 = vmatprep.subr.mxu0 0.0
        %2701 = vmatpush1.msra.mxu0 0.0
        %2702 = vmatprep.subr.mxu0 0.0
        %2703 = vmatpush1.msra.mxu0 0.0
        %2704 = vmatprep.subr.mxu0 0.0
        %2705 = vmatpush1.msra.mxu0 0.0
        %2706 = vmatprep.subr.mxu0 0.0
        %2707 = vmatpush1.msra.mxu0 0.0
        %2708 = vmatprep.subr.mxu0 0.0
        %2709 = vmatpush1.msra.mxu0 0.0
        %2710 = vmatprep.subr.mxu0 0.0
        %2711 = vmatpush1.msra.mxu0 0.0
        %2712 = vmatprep.subr.mxu0 0.0
        %2713 = vmatpush1.msra.mxu0 0.0
        %2714 = vmatprep.subr.mxu0 0.0
        %2715 = vmatpush1.msra.mxu0 0.0
        %2716 = vmatprep.subr.mxu0 0.0
        %2717 = vmatpush1.msra.mxu0 0.0
        %2718 = vmatprep.subr.mxu0 0.0
        %2719 = vmatpush1.msra.mxu0 0.0
        %2720 = vmatprep.subr.mxu0 0.0
        %2721 = vmatpush1.msra.mxu0 0.0
        %2722 = vmatprep.subr.mxu0 0.0
        %2723 = vmatpush1.msra.mxu0 0.0
        %2724 = vmatprep.subr.mxu0 0.0
        %2725 = vmatpush1.msra.mxu0 0.0
        %2726 = vmatprep.subr.mxu0 0.0
        %2727 = vmatpush1.msra.mxu0 0.0
        %2728 = vmatprep.subr.mxu0 0.0
        %2729 = vmatpush1.msra.mxu0 0.0
        %2730 = vmatprep.subr.mxu0 0.0
        %2731 = vmatpush1.msra.mxu0 0.0
        %2732 = vmatprep.subr.mxu0 0.0
        %2733 = vmatpush1.msra.mxu0 0.0
        %2734 = vmatprep.subr.mxu0 0.0
        %2735 = vmatpush1.msra.mxu0 0.0
        %2736 = vmatprep.mubr.f32.mxu0 0.0
        %2737 = vmatmul.mubr.f32.gmra.mrb[0].mxu0 %v594
        %v2738 = vpop.f32.mrb[0].mxu0
        %v2739 = vadd.f32 0.0, %v2738
        %v2740 = vpop.f32.mrb[0].mxu0
        %2741 = vmatprep.mubr.f32.mxu0 0.0
        %2742 = vmatmul.mubr.f32.gmra.mrb[0].mxu0 %v596
        %v2743 = vpop.f32.mrb[0].mxu0
        %v2744 = vadd.f32 0.0, %v2743
        %v2745 = vpop.f32.mrb[0].mxu0
        %2746 = vmatprep.mubr.f32.mxu0 0.0
        %2747 = vmatmul.mubr.f32.gmra.mrb[0].mxu0 %v598
        %v2748 = vpop.f32.mrb[0].mxu0
        %v2749 = vadd.f32 0.0, %v2748
        %v2750 = vpop.f32.mrb[0].mxu0
        %2751 = vmatprep.mubr.f32.mxu0 0.0
        %2752 = vmatmul.mubr.f32.gmra.mrb[0].mxu0 %v600
        %v2753 = vpop.f32.mrb[0].mxu0
        %v2754 = vadd.f32 0.0, %v2753
        %v2755 = vpop.f32.mrb[0].mxu0
        %2756 = vmatprep.mubr.f32.mxu0 0.0
        %2757 = vmatmul.mubr.f32.gmra.mrb[0].mxu0 %v602
        %v2758 = vpop.f32.mrb[0].mxu0
        %v2759 = vadd.f32 0.0, %v2758
        %v2760 = vpop.f32.mrb[0].mxu0
        %2761 = vmatprep.mubr.f32.mxu0 0.0
        %2762 = vmatmul.mubr.f32.gmra.mrb[0].mxu0 %v604
        %v2763 = vpop.f32.mrb[0].mxu0
        %v2764 = vadd.f32 0.0, %v2763
        %v2765 = vpop.f32.mrb[0].mxu0
        %2766 = vmatprep.mubr.f32.mxu0 0.0
        %2767 = vmatmul.mubr.f32.gmra.mrb[0].mxu0 %v606
        %v2768 = vpop.f32.mrb[0].mxu0
        %v2769 = vadd.f32 0.0, %v2768
        %v2770 = vpop.f32.mrb[0].mxu0
        %2771 = vmatprep.mubr.f32.mxu0 0.0
        %2772 = vmatmul.mubr.f32.gmra.mrb[0].mxu0 %v608
        %v2773 = vpop.f32.mrb[0].mxu0
        %v2774 = vadd.f32 0.0, %v2773
        %v2775 = vpop.f32.mrb[0].mxu0
        %2776 = vmatprep.mubr.f32.mxu0 0.0
        %2777 = vmatmul.mubr.f32.gmra.mrb[0].mxu0 %v610
        %v2778 = vpop.f32.mrb[0].mxu0
        %v2779 = vadd.f32 0.0, %v2778
        %v2780 = vpop.f32.mrb[0].mxu0
        %2781 = vmatprep.mubr.f32.mxu0 0.0
        %2782 = vmatmul.mubr.f32.gmra.mrb[0].mxu0 %v612
        %v2783 = vpop.f32.mrb[0].mxu0
        %v2784 = vadd.f32 0.0, %v2783
        %v2785 = vpop.f32.mrb[0].mxu0
        %2786 = vmatprep.mubr.f32.mxu0 0.0
        %2787 = vmatmul.mubr.f32.gmra.mrb[0].mxu0 %v614
        %v2788 = vpop.f32.mrb[0].mxu0
        %v2789 = vadd.f32 0.0, %v2788
        %v2790 = vpop.f32.mrb[0].mxu0
        %2791 = vmatprep.mubr.f32.mxu0 0.0
        %2792 = vmatmul.mubr.f32.gmra.mrb[0].mxu0 %v616
        %v2793 = vpop.f32.mrb[0].mxu0
        %v2794 = vadd.f32 0.0, %v2793
        %v2795 = vpop.f32.mrb[0].mxu0
        %2796 = vmatprep.mubr.f32.mxu0 0.0
        %2797 = vmatmul.mubr.f32.gmra.mrb[0].mxu0 %v618
        %v2798 = vpop.f32.mrb[0].mxu0
        %v2799 = vadd.f32 0.0, %v2798
        %v2800 = vpop.f32.mrb[0].mxu0
        %2801 = vmatprep.mubr.f32.mxu0 0.0
        %2802 = vmatmul.mubr.f32.gmra.mrb[0].mxu0 %v620
        %v2803 = vpop.f32.mrb[0].mxu0
        %v2804 = vadd.f32 0.0, %v2803
        %v2805 = vpop.f32.mrb[0].mxu0
        %2806 = vmatprep.mubr.f32.mxu0 0.0
        %2807 = vmatmul.mubr.f32.gmra.mrb[0].mxu0 %v622
        %v2808 = vpop.f32.mrb[0].mxu0
        %v2809 = vadd.f32 0.0, %v2808
        %v2810 = vpop.f32.mrb[0].mxu0
        %2811 = vmatprep.mubr.f32.mxu0 0.0
        %2812 = vmatmul.mubr.f32.gmra.mrb[0].mxu0 %v624
        %v2813 = vpop.f32.mrb[0].mxu0
        %v2814 = vadd.f32 0.0, %v2813
        %v2815 = vpop.f32.mrb[0].mxu0
        %2816 = vmatprep.mubr.f32.mxu0 0.0
        %2817 = vmatmul.mubr.f32.gmra.mrb[0].mxu0 %v626
        %v2818 = vpop.f32.mrb[0].mxu0
        %v2819 = vadd.f32 0.0, %v2818
        %v2820 = vpop.f32.mrb[0].mxu0
        %2821 = vmatprep.mubr.f32.mxu0 0.0
        %2822 = vmatmul.mubr.f32.gmra.mrb[0].mxu0 %v628
        %v2823 = vpop.f32.mrb[0].mxu0
        %v2824 = vadd.f32 0.0, %v2823
        %v2825 = vpop.f32.mrb[0].mxu0
        %2826 = vmatprep.mubr.f32.mxu0 0.0
        %2827 = vmatmul.mubr.f32.gmra.mrb[0].mxu0 %v630
        %v2828 = vpop.f32.mrb[0].mxu0
        %v2829 = vadd.f32 0.0, %v2828
        %v2830 = vpop.f32.mrb[0].mxu0
        %2831 = vmatprep.mubr.f32.mxu0 0.0
        %2832 = vmatmul.mubr.f32.gmra.mrb[0].mxu0 %v632
        %v2833 = vpop.f32.mrb[0].mxu0
        %v2834 = vadd.f32 0.0, %v2833
        %v2835 = vpop.f32.mrb[0].mxu0
        %2836 = vmatprep.mubr.f32.mxu0 0.0
        %2837 = vmatmul.mubr.f32.gmra.mrb[0].mxu0 %v634
        %v2838 = vpop.f32.mrb[0].mxu0
        %v2839 = vadd.f32 0.0, %v2838
        %v2840 = vpop.f32.mrb[0].mxu0
        %2841 = vmatprep.mubr.f32.mxu0 0.0
        %2842 = vmatmul.mubr.f32.gmra.mrb[0].mxu0 %v636
        %v2843 = vpop.f32.mrb[0].mxu0
        %v2844 = vadd.f32 0.0, %v2843
        %v2845 = vpop.f32.mrb[0].mxu0
        %2846 = vmatprep.mubr.f32.mxu0 0.0
        %2847 = vmatmul.mubr.f32.gmra.mrb[0].mxu0 %v638
        %v2848 = vpop.f32.mrb[0].mxu0
        %v2849 = vadd.f32 0.0, %v2848
        %v2850 = vpop.f32.mrb[0].mxu0
        %2851 = vmatprep.mubr.f32.mxu0 0.0
        %2852 = vmatmul.mubr.f32.gmra.mrb[0].mxu0 %v640
        %v2853 = vpop.f32.mrb[0].mxu0
        %v2854 = vadd.f32 0.0, %v2853
        %v2855 = vpop.f32.mrb[0].mxu0
        %2856 = vmatprep.mubr.f32.mxu0 0.0
        %2857 = vmatmul.mubr.f32.gmra.mrb[0].mxu0 %v642
        %v2858 = vpop.f32.mrb[0].mxu0
        %v2859 = vadd.f32 0.0, %v2858
        %v2860 = vpop.f32.mrb[0].mxu0
        %2861 = vmatprep.mubr.f32.mxu0 0.0
        %2862 = vmatmul.mubr.f32.gmra.mrb[0].mxu0 %v644
        %v2863 = vpop.f32.mrb[0].mxu0
        %v2864 = vadd.f32 0.0, %v2863
        %v2865 = vpop.f32.mrb[0].mxu0
        %2866 = vmatprep.mubr.f32.mxu0 0.0
        %2867 = vmatmul.mubr.f32.gmra.mrb[0].mxu0 %v646
        %v2868 = vpop.f32.mrb[0].mxu0
        %v2869 = vadd.f32 0.0, %v2868
        %v2870 = vpop.f32.mrb[0].mxu0
        %2871 = vmatprep.mubr.f32.mxu0 0.0
        %2872 = vmatmul.mubr.f32.gmra.mrb[0].mxu0 %v648
        %v2873 = vpop.f32.mrb[0].mxu0
        %v2874 = vadd.f32 0.0, %v2873
        %v2875 = vpop.f32.mrb[0].mxu0
        %2876 = vmatprep.mubr.f32.mxu0 0.0
        %2877 = vmatmul.mubr.f32.gmra.mrb[0].mxu0 %v1854
        %v2878 = vpop.f32.mrb[0].mxu0
        %v2879 = vadd.f32 0.0, %v2878
        %v2880 = vpop.f32.mrb[0].mxu0
        %2881 = vmatprep.mubr.f32.mxu0 0.0
        %2882 = vmatmul.mubr.f32.gmra.mrb[0].mxu0 %v1856
        %v2883 = vpop.f32.mrb[0].mxu0
        %v2884 = vadd.f32 0.0, %v2883
        %v2885 = vpop.f32.mrb[0].mxu0
        %2886 = vmatprep.mubr.f32.mxu0 0.0
        %2887 = vmatmul.mubr.f32.gmra.mrb[0].mxu0 %v2665
        %v2888 = vpop.f32.mrb[0].mxu0
        %v2889 = vadd.f32 0.0, %v2888
        %v2890 = vpop.f32.mrb[0].mxu0
        %2891 = vmatprep.mubr.f32.mxu0 0.0
        %2892 = vmatmul.mubr.f32.gmra.mrb[0].mxu0 %v2667
        %v2893 = vpop.f32.mrb[0].mxu0
        %v2894 = vadd.f32 0.0, %v2893
        %v2895 = vpop.f32.mrb[0].mxu0
        %2896 = vdwg.mxu0
        %v2897 = vadd.f32 %v2625, %v2739
        %v2898 = vadd.f32 %v2626, %v2744
        %v2899 = vadd.f32 %v2627, %v2749
        %v2900 = vadd.f32 %v2628, %v2754
        %v2901 = vadd.f32 %v2629, %v2759
        %v2902 = vadd.f32 %v2630, %v2764
        %v2903 = vadd.f32 %v2631, %v2769
        %v2904 = vadd.f32 %v2632, %v2774
        %v2905 = vadd.f32 %v2633, %v2779
        %v2906 = vadd.f32 %v2634, %v2784
        %v2907 = vadd.f32 %v2635, %v2789
        %v2908 = vadd.f32 %v2636, %v2794
        %v2909 = vadd.f32 %v2637, %v2799
        %v2910 = vadd.f32 %v2638, %v2804
        %v2911 = vadd.f32 %v2639, %v2809
        %v2912 = vadd.f32 %v2640, %v2814
        %v2913 = vadd.f32 %v2641, %v2819
        %v2914 = vadd.f32 %v2642, %v2824
        %v2915 = vadd.f32 %v2643, %v2829
        %v2916 = vadd.f32 %v2644, %v2834
        %v2917 = vadd.f32 %v2645, %v2839
        %v2918 = vadd.f32 %v2646, %v2844
        %v2919 = vadd.f32 %v2647, %v2849
        %v2920 = vadd.f32 %v2648, %v2854
        %v2921 = vadd.f32 %v2649, %v2859
        %v2922 = vadd.f32 %v2650, %v2864
        %v2923 = vadd.f32 %v2651, %v2869
        %v2924 = vadd.f32 %v2652, %v2874
        %v2925 = vadd.f32 %v2653, %v2879
        %v2926 = vadd.f32 %v2654, %v2884
        %v2927 = vadd.f32 %v2655, %v2889
        %v2928 = vadd.f32 %v2656, %v2894
        %v2929 = vrot.slane %v449, 2
        %v2930 = vrot.slane %v450, 2
        %v2931 = vsel %vm1171, %v2929, %v2930
        %v2932 = vrot.slane %v451, 2
        %v2933 = vsel %vm1171, %v2930, %v2932
        %s2934 = scalar_lea.vmem %s1, 32
        %v2935 = vld [vmem:[%s2934] sm:$0xf]
        %v2936 = vsel %vm277, %v2931, 0
        %v2938 = vsel %vm277, %v2933, 0
        %v2941 = vsel %vm650, %v2935, 0
        %2943 = vmatprep.subr.mxu0 0.0
        %2944 = vmatpush1.msra.mxu0 %v2941
        %2945 = vmatprep.subr.mxu0 0.0
        %2946 = vmatpush1.msra.mxu0 0.0
        %2947 = vmatprep.subr.mxu0 0.0
        %2948 = vmatpush1.msra.mxu0 0.0
        %2949 = vmatprep.subr.mxu0 0.0
        %2950 = vmatpush1.msra.mxu0 0.0
        %2951 = vmatprep.subr.mxu0 0.0
        %2952 = vmatpush1.msra.mxu0 0.0
        %2953 = vmatprep.subr.mxu0 0.0
        %2954 = vmatpush1.msra.mxu0 0.0
        %2955 = vmatprep.subr.mxu0 0.0
        %2956 = vmatpush1.msra.mxu0 0.0
        %2957 = vmatprep.subr.mxu0 0.0
        %2958 = vmatpush1.msra.mxu0 0.0
        %2959 = vmatprep.subr.mxu0 0.0
        %2960 = vmatpush1.msra.mxu0 0.0
        %2961 = vmatprep.subr.mxu0 0.0
        %2962 = vmatpush1.msra.mxu0 0.0
        %2963 = vmatprep.subr.mxu0 0.0
        %2964 = vmatpush1.msra.mxu0 0.0
        %2965 = vmatprep.subr.mxu0 0.0
        %2966 = vmatpush1.msra.mxu0 0.0
        %2967 = vmatprep.subr.mxu0 0.0
        %2968 = vmatpush1.msra.mxu0 0.0
        %2969 = vmatprep.subr.mxu0 0.0
        %2970 = vmatpush1.msra.mxu0 0.0
        %2971 = vmatprep.subr.mxu0 0.0
        %2972 = vmatpush1.msra.mxu0 0.0
        %2973 = vmatprep.subr.mxu0 0.0
        %2974 = vmatpush1.msra.mxu0 0.0
        %2975 = vmatprep.subr.mxu0 0.0
        %2976 = vmatpush1.msra.mxu0 0.0
        %2977 = vmatprep.subr.mxu0 0.0
        %2978 = vmatpush1.msra.mxu0 0.0
        %2979 = vmatprep.subr.mxu0 0.0
        %2980 = vmatpush1.msra.mxu0 0.0
        %2981 = vmatprep.subr.mxu0 0.0
        %2982 = vmatpush1.msra.mxu0 0.0
        %2983 = vmatprep.subr.mxu0 0.0
        %2984 = vmatpush1.msra.mxu0 0.0
        %2985 = vmatprep.subr.mxu0 0.0
        %2986 = vmatpush1.msra.mxu0 0.0
        %2987 = vmatprep.subr.mxu0 0.0
        %2988 = vmatpush1.msra.mxu0 0.0
        %2989 = vmatprep.subr.mxu0 0.0
        %2990 = vmatpush1.msra.mxu0 0.0
        %2991 = vmatprep.subr.mxu0 0.0
        %2992 = vmatpush1.msra.mxu0 0.0
        %2993 = vmatprep.subr.mxu0 0.0
        %2994 = vmatpush1.msra.mxu0 0.0
        %2995 = vmatprep.subr.mxu0 0.0
        %2996 = vmatpush1.msra.mxu0 0.0
        %2997 = vmatprep.subr.mxu0 0.0
        %2998 = vmatpush1.msra.mxu0 0.0
        %2999 = vmatprep.subr.mxu0 0.0
        %3000 = vmatpush1.msra.mxu0 0.0
        %3001 = vmatprep.subr.mxu0 0.0
        %3002 = vmatpush1.msra.mxu0 0.0
        %3003 = vmatprep.subr.mxu0 0.0
        %3004 = vmatpush1.msra.mxu0 0.0
        %3005 = vmatprep.subr.mxu0 0.0
        %3006 = vmatpush1.msra.mxu0 0.0
        %3007 = vmatprep.mubr.f32.mxu0 0.0
        %3008 = vmatmul.mubr.f32.gmra.mrb[0].mxu0 %v1262
        %v3009 = vpop.f32.mrb[0].mxu0
        %v3010 = vadd.f32 0.0, %v3009
        %v3011 = vpop.f32.mrb[0].mxu0
        %3012 = vmatprep.mubr.f32.mxu0 0.0
        %3013 = vmatmul.mubr.f32.gmra.mrb[0].mxu0 %v1264
        %v3014 = vpop.f32.mrb[0].mxu0
        %v3015 = vadd.f32 0.0, %v3014
        %v3016 = vpop.f32.mrb[0].mxu0
        %3017 = vmatprep.mubr.f32.mxu0 0.0
        %3018 = vmatmul.mubr.f32.gmra.mrb[0].mxu0 %v1266
        %v3019 = vpop.f32.mrb[0].mxu0
        %v3020 = vadd.f32 0.0, %v3019
        %v3021 = vpop.f32.mrb[0].mxu0
        %3022 = vmatprep.mubr.f32.mxu0 0.0
        %3023 = vmatmul.mubr.f32.gmra.mrb[0].mxu0 %v1268
        %v3024 = vpop.f32.mrb[0].mxu0
        %v3025 = vadd.f32 0.0, %v3024
        %v3026 = vpop.f32.mrb[0].mxu0
        %3027 = vmatprep.mubr.f32.mxu0 0.0
        %3028 = vmatmul.mubr.f32.gmra.mrb[0].mxu0 %v1270
        %v3029 = vpop.f32.mrb[0].mxu0
        %v3030 = vadd.f32 0.0, %v3029
        %v3031 = vpop.f32.mrb[0].mxu0
        %3032 = vmatprep.mubr.f32.mxu0 0.0
        %3033 = vmatmul.mubr.f32.gmra.mrb[0].mxu0 %v1272
        %v3034 = vpop.f32.mrb[0].mxu0
        %v3035 = vadd.f32 0.0, %v3034
        %v3036 = vpop.f32.mrb[0].mxu0
        %3037 = vmatprep.mubr.f32.mxu0 0.0
        %3038 = vmatmul.mubr.f32.gmra.mrb[0].mxu0 %v1274
        %v3039 = vpop.f32.mrb[0].mxu0
        %v3040 = vadd.f32 0.0, %v3039
        %v3041 = vpop.f32.mrb[0].mxu0
        %3042 = vmatprep.mubr.f32.mxu0 0.0
        %3043 = vmatmul.mubr.f32.gmra.mrb[0].mxu0 %v1276
        %v3044 = vpop.f32.mrb[0].mxu0
        %v3045 = vadd.f32 0.0, %v3044
        %v3046 = vpop.f32.mrb[0].mxu0
        %3047 = vmatprep.mubr.f32.mxu0 0.0
        %3048 = vmatmul.mubr.f32.gmra.mrb[0].mxu0 %v1278
        %v3049 = vpop.f32.mrb[0].mxu0
        %v3050 = vadd.f32 0.0, %v3049
        %v3051 = vpop.f32.mrb[0].mxu0
        %3052 = vmatprep.mubr.f32.mxu0 0.0
        %3053 = vmatmul.mubr.f32.gmra.mrb[0].mxu0 %v1280
        %v3054 = vpop.f32.mrb[0].mxu0
        %v3055 = vadd.f32 0.0, %v3054
        %v3056 = vpop.f32.mrb[0].mxu0
        %3057 = vmatprep.mubr.f32.mxu0 0.0
        %3058 = vmatmul.mubr.f32.gmra.mrb[0].mxu0 %v1282
        %v3059 = vpop.f32.mrb[0].mxu0
        %v3060 = vadd.f32 0.0, %v3059
        %v3061 = vpop.f32.mrb[0].mxu0
        %3062 = vmatprep.mubr.f32.mxu0 0.0
        %3063 = vmatmul.mubr.f32.gmra.mrb[0].mxu0 %v1284
        %v3064 = vpop.f32.mrb[0].mxu0
        %v3065 = vadd.f32 0.0, %v3064
        %v3066 = vpop.f32.mrb[0].mxu0
        %3067 = vmatprep.mubr.f32.mxu0 0.0
        %3068 = vmatmul.mubr.f32.gmra.mrb[0].mxu0 %v1286
        %v3069 = vpop.f32.mrb[0].mxu0
        %v3070 = vadd.f32 0.0, %v3069
        %v3071 = vpop.f32.mrb[0].mxu0
        %3072 = vmatprep.mubr.f32.mxu0 0.0
        %3073 = vmatmul.mubr.f32.gmra.mrb[0].mxu0 %v1288
        %v3074 = vpop.f32.mrb[0].mxu0
        %v3075 = vadd.f32 0.0, %v3074
        %v3076 = vpop.f32.mrb[0].mxu0
        %3077 = vmatprep.mubr.f32.mxu0 0.0
        %3078 = vmatmul.mubr.f32.gmra.mrb[0].mxu0 %v1290
        %v3079 = vpop.f32.mrb[0].mxu0
        %v3080 = vadd.f32 0.0, %v3079
        %v3081 = vpop.f32.mrb[0].mxu0
        %3082 = vmatprep.mubr.f32.mxu0 0.0
        %3083 = vmatmul.mubr.f32.gmra.mrb[0].mxu0 %v1292
        %v3084 = vpop.f32.mrb[0].mxu0
        %v3085 = vadd.f32 0.0, %v3084
        %v3086 = vpop.f32.mrb[0].mxu0
        %3087 = vmatprep.mubr.f32.mxu0 0.0
        %3088 = vmatmul.mubr.f32.gmra.mrb[0].mxu0 %v1294
        %v3089 = vpop.f32.mrb[0].mxu0
        %v3090 = vadd.f32 0.0, %v3089
        %v3091 = vpop.f32.mrb[0].mxu0
        %3092 = vmatprep.mubr.f32.mxu0 0.0
        %3093 = vmatmul.mubr.f32.gmra.mrb[0].mxu0 %v1296
        %v3094 = vpop.f32.mrb[0].mxu0
        %v3095 = vadd.f32 0.0, %v3094
        %v3096 = vpop.f32.mrb[0].mxu0
        %3097 = vmatprep.mubr.f32.mxu0 0.0
        %3098 = vmatmul.mubr.f32.gmra.mrb[0].mxu0 %v1298
        %v3099 = vpop.f32.mrb[0].mxu0
        %v3100 = vadd.f32 0.0, %v3099
        %v3101 = vpop.f32.mrb[0].mxu0
        %3102 = vmatprep.mubr.f32.mxu0 0.0
        %3103 = vmatmul.mubr.f32.gmra.mrb[0].mxu0 %v1300
        %v3104 = vpop.f32.mrb[0].mxu0
        %v3105 = vadd.f32 0.0, %v3104
        %v3106 = vpop.f32.mrb[0].mxu0
        %3107 = vmatprep.mubr.f32.mxu0 0.0
        %3108 = vmatmul.mubr.f32.gmra.mrb[0].mxu0 %v1302
        %v3109 = vpop.f32.mrb[0].mxu0
        %v3110 = vadd.f32 0.0, %v3109
        %v3111 = vpop.f32.mrb[0].mxu0
        %3112 = vmatprep.mubr.f32.mxu0 0.0
        %3113 = vmatmul.mubr.f32.gmra.mrb[0].mxu0 %v1304
        %v3114 = vpop.f32.mrb[0].mxu0
        %v3115 = vadd.f32 0.0, %v3114
        %v3116 = vpop.f32.mrb[0].mxu0
        %3117 = vmatprep.mubr.f32.mxu0 0.0
        %3118 = vmatmul.mubr.f32.gmra.mrb[0].mxu0 %v1306
        %v3119 = vpop.f32.mrb[0].mxu0
        %v3120 = vadd.f32 0.0, %v3119
        %v3121 = vpop.f32.mrb[0].mxu0
        %3122 = vmatprep.mubr.f32.mxu0 0.0
        %3123 = vmatmul.mubr.f32.gmra.mrb[0].mxu0 %v1308
        %v3124 = vpop.f32.mrb[0].mxu0
        %v3125 = vadd.f32 0.0, %v3124
        %v3126 = vpop.f32.mrb[0].mxu0
        %3127 = vmatprep.mubr.f32.mxu0 0.0
        %3128 = vmatmul.mubr.f32.gmra.mrb[0].mxu0 %v1310
        %v3129 = vpop.f32.mrb[0].mxu0
        %v3130 = vadd.f32 0.0, %v3129
        %v3131 = vpop.f32.mrb[0].mxu0
        %3132 = vmatprep.mubr.f32.mxu0 0.0
        %3133 = vmatmul.mubr.f32.gmra.mrb[0].mxu0 %v1312
        %v3134 = vpop.f32.mrb[0].mxu0
        %v3135 = vadd.f32 0.0, %v3134
        %v3136 = vpop.f32.mrb[0].mxu0
        %3137 = vmatprep.mubr.f32.mxu0 0.0
        %3138 = vmatmul.mubr.f32.gmra.mrb[0].mxu0 %v1314
        %v3139 = vpop.f32.mrb[0].mxu0
        %v3140 = vadd.f32 0.0, %v3139
        %v3141 = vpop.f32.mrb[0].mxu0
        %3142 = vmatprep.mubr.f32.mxu0 0.0
        %3143 = vmatmul.mubr.f32.gmra.mrb[0].mxu0 %v1316
        %v3144 = vpop.f32.mrb[0].mxu0
        %v3145 = vadd.f32 0.0, %v3144
        %v3146 = vpop.f32.mrb[0].mxu0
        %3147 = vmatprep.mubr.f32.mxu0 0.0
        %3148 = vmatmul.mubr.f32.gmra.mrb[0].mxu0 %v2125
        %v3149 = vpop.f32.mrb[0].mxu0
        %v3150 = vadd.f32 0.0, %v3149
        %v3151 = vpop.f32.mrb[0].mxu0
        %3152 = vmatprep.mubr.f32.mxu0 0.0
        %3153 = vmatmul.mubr.f32.gmra.mrb[0].mxu0 %v2127
        %v3154 = vpop.f32.mrb[0].mxu0
        %v3155 = vadd.f32 0.0, %v3154
        %v3156 = vpop.f32.mrb[0].mxu0
        %3157 = vmatprep.mubr.f32.mxu0 0.0
        %3158 = vmatmul.mubr.f32.gmra.mrb[0].mxu0 %v2936
        %v3159 = vpop.f32.mrb[0].mxu0
        %v3160 = vadd.f32 0.0, %v3159
        %v3161 = vpop.f32.mrb[0].mxu0
        %3162 = vmatprep.mubr.f32.mxu0 0.0
        %3163 = vmatmul.mubr.f32.gmra.mrb[0].mxu0 %v2938
        %v3164 = vpop.f32.mrb[0].mxu0
        %v3165 = vadd.f32 0.0, %v3164
        %v3166 = vpop.f32.mrb[0].mxu0
        %3167 = vdwg.mxu0
        %v3168 = vadd.f32 %v2897, %v3010
        %v3169 = vadd.f32 %v2898, %v3015
        %v3170 = vadd.f32 %v2899, %v3020
        %v3171 = vadd.f32 %v2900, %v3025
        %v3172 = vadd.f32 %v2901, %v3030
        %v3173 = vadd.f32 %v2902, %v3035
        %v3174 = vadd.f32 %v2903, %v3040
        %v3175 = vadd.f32 %v2904, %v3045
        %v3176 = vadd.f32 %v2905, %v3050
        %v3177 = vadd.f32 %v2906, %v3055
        %v3178 = vadd.f32 %v2907, %v3060
        %v3179 = vadd.f32 %v2908, %v3065
        %v3180 = vadd.f32 %v2909, %v3070
        %v3181 = vadd.f32 %v2910, %v3075
        %v3182 = vadd.f32 %v2911, %v3080
        %v3183 = vadd.f32 %v2912, %v3085
        %v3184 = vadd.f32 %v2913, %v3090
        %v3185 = vadd.f32 %v2914, %v3095
        %v3186 = vadd.f32 %v2915, %v3100
        %v3187 = vadd.f32 %v2916, %v3105
        %v3188 = vadd.f32 %v2917, %v3110
        %v3189 = vadd.f32 %v2918, %v3115
        %v3190 = vadd.f32 %v2919, %v3120
        %v3191 = vadd.f32 %v2920, %v3125
        %v3192 = vadd.f32 %v2921, %v3130
        %v3193 = vadd.f32 %v2922, %v3135
        %v3194 = vadd.f32 %v2923, %v3140
        %v3195 = vadd.f32 %v2924, %v3145
        %v3196 = vadd.f32 %v2925, %v3150
        %v3197 = vadd.f32 %v2926, %v3155
        %v3198 = vadd.f32 %v2927, %v3160
        %v3199 = vadd.f32 %v2928, %v3165
        %v3201 = vlaneseq
        %v3202 = vshrl.u32 %v3201, 7
        %v3203 = vsub.s32 0, %v3202
        %v3204 = vrot.slane %v452, %v3203
        %v3206 = vmul.f32 %v3168, %v3204
        %v3207 = vmul.f32 %v3169, %v3204
        %v3208 = vmul.f32 %v3170, %v3204
        %v3209 = vmul.f32 %v3171, %v3204
        %v3210 = vmul.f32 %v3172, %v3204
        %v3211 = vmul.f32 %v3173, %v3204
        %v3212 = vmul.f32 %v3174, %v3204
        %v3213 = vmul.f32 %v3175, %v3204
        %v3214 = vmul.f32 %v3176, %v3204
        %v3215 = vmul.f32 %v3177, %v3204
        %v3216 = vmul.f32 %v3178, %v3204
        %v3217 = vmul.f32 %v3179, %v3204
        %v3218 = vmul.f32 %v3180, %v3204
        %v3219 = vmul.f32 %v3181, %v3204
        %v3220 = vmul.f32 %v3182, %v3204
        %v3221 = vmul.f32 %v3183, %v3204
        %v3222 = vmul.f32 %v3184, %v3204
        %v3223 = vmul.f32 %v3185, %v3204
        %v3224 = vmul.f32 %v3186, %v3204
        %v3225 = vmul.f32 %v3187, %v3204
        %v3226 = vmul.f32 %v3188, %v3204
        %v3227 = vmul.f32 %v3189, %v3204
        %v3228 = vmul.f32 %v3190, %v3204
        %v3229 = vmul.f32 %v3191, %v3204
        %v3230 = vmul.f32 %v3192, %v3204
        %v3231 = vmul.f32 %v3193, %v3204
        %v3232 = vmul.f32 %v3194, %v3204
        %v3233 = vmul.f32 %v3195, %v3204
        %v3234 = vmul.f32 %v3196, %v3204
        %v3235 = vmul.f32 %v3197, %v3204
        %v3236 = vmul.f32 %v3198, %v3204
        %v3237 = vmul.f32 %v3199, %v3204
        %v3239 = vlaneseq
        %v3240 = vshrl.u32 %v3239, 7
        %v3241 = vsub.s32 0, %v3240
        %v3242 = vrot.slane %v453, %v3241
        %v3244 = vadd.f32 %v3206, %v3242
        %v3245 = vadd.f32 %v3207, %v3242
        %v3246 = vadd.f32 %v3208, %v3242
        %v3247 = vadd.f32 %v3209, %v3242
        %v3248 = vadd.f32 %v3210, %v3242
        %v3249 = vadd.f32 %v3211, %v3242
        %v3250 = vadd.f32 %v3212, %v3242
        %v3251 = vadd.f32 %v3213, %v3242
        %v3252 = vadd.f32 %v3214, %v3242
        %v3253 = vadd.f32 %v3215, %v3242
        %v3254 = vadd.f32 %v3216, %v3242
        %v3255 = vadd.f32 %v3217, %v3242
        %v3256 = vadd.f32 %v3218, %v3242
        %v3257 = vadd.f32 %v3219, %v3242
        %v3258 = vadd.f32 %v3220, %v3242
        %v3259 = vadd.f32 %v3221, %v3242
        %v3260 = vadd.f32 %v3222, %v3242
        %v3261 = vadd.f32 %v3223, %v3242
        %v3262 = vadd.f32 %v3224, %v3242
        %v3263 = vadd.f32 %v3225, %v3242
        %v3264 = vadd.f32 %v3226, %v3242
        %v3265 = vadd.f32 %v3227, %v3242
        %v3266 = vadd.f32 %v3228, %v3242
        %v3267 = vadd.f32 %v3229, %v3242
        %v3268 = vadd.f32 %v3230, %v3242
        %v3269 = vadd.f32 %v3231, %v3242
        %v3270 = vadd.f32 %v3232, %v3242
        %v3271 = vadd.f32 %v3233, %v3242
        %v3272 = vadd.f32 %v3234, %v3242
        %v3273 = vadd.f32 %v3235, %v3242
        %v3274 = vadd.f32 %v3236, %v3242
        %v3275 = vadd.f32 %v3237, %v3242
        %v3276 = vmax.f32 %v3244, 0.0
        %v3277 = vmax.f32 %v3245, 0.0
        %v3278 = vmax.f32 %v3246, 0.0
        %v3279 = vmax.f32 %v3247, 0.0
        %v3280 = vmax.f32 %v3248, 0.0
        %v3281 = vmax.f32 %v3249, 0.0
        %v3282 = vmax.f32 %v3250, 0.0
        %v3283 = vmax.f32 %v3251, 0.0
        %v3284 = vmax.f32 %v3252, 0.0
        %v3285 = vmax.f32 %v3253, 0.0
        %v3286 = vmax.f32 %v3254, 0.0
        %v3287 = vmax.f32 %v3255, 0.0
        %v3288 = vmax.f32 %v3256, 0.0
        %v3289 = vmax.f32 %v3257, 0.0
        %v3290 = vmax.f32 %v3258, 0.0
        %v3291 = vmax.f32 %v3259, 0.0
        %v3292 = vmax.f32 %v3260, 0.0
        %v3293 = vmax.f32 %v3261, 0.0
        %v3294 = vmax.f32 %v3262, 0.0
        %v3295 = vmax.f32 %v3263, 0.0
        %v3296 = vmax.f32 %v3264, 0.0
        %v3297 = vmax.f32 %v3265, 0.0
        %v3298 = vmax.f32 %v3266, 0.0
        %v3299 = vmax.f32 %v3267, 0.0
        %v3300 = vmax.f32 %v3268, 0.0
        %v3301 = vmax.f32 %v3269, 0.0
        %v3302 = vmax.f32 %v3270, 0.0
        %v3303 = vmax.f32 %v3271, 0.0
        %v3304 = vmax.f32 %v3272, 0.0
        %v3305 = vmax.f32 %v3273, 0.0
        %v3306 = vmax.f32 %v3274, 0.0
        %v3307 = vmax.f32 %v3275, 0.0
        %vm3308 = vcmask 64512
        %3309 = vst.msk [vmem:[#allocation3] sm:$0xff] %vm3308, 0.0
        %3310 = vst.msk [vmem:[#allocation3 + $0x8] sm:$0xff] %vm3308, 0.0
        %vm3311 = vcmask 58368
        %3312 = vst.msk [vmem:[#allocation3 + $0x10] sm:$0x3] %vm3311, 0.0
        %3313 = vst.msk [vmem:[#allocation3 + $0x18] sm:$0xff] %vm3308, 0.0
        %3314 = vst.msk [vmem:[#allocation3 + $0x20] sm:$0xff] %vm3308, 0.0
        %3315 = vst.msk [vmem:[#allocation3 + $0x28] sm:$0x3] %vm3311, 0.0
        %3316 = vst.msk [vmem:[#allocation3 + $0x30] sm:$0xff] %vm3308, 0.0
        %3317 = vst.msk [vmem:[#allocation3 + $0x38] sm:$0xff] %vm3308, 0.0
        %3318 = vst.msk [vmem:[#allocation3 + $0x40] sm:$0x3] %vm3311, 0.0
        %3319 = vst.msk [vmem:[#allocation3 + $0x48] sm:$0xff] %vm3308, 0.0
        %3320 = vst.msk [vmem:[#allocation3 + $0x50] sm:$0xff] %vm3308, 0.0
        %3321 = vst.msk [vmem:[#allocation3 + $0x58] sm:$0x3] %vm3311, 0.0
        %3322 = vst.msk [vmem:[#allocation3 + $0x60] sm:$0xff] %vm3308, 0.0
        %3323 = vst.msk [vmem:[#allocation3 + $0x68] sm:$0xff] %vm3308, 0.0
        %3324 = vst.msk [vmem:[#allocation3 + $0x70] sm:$0x3] %vm3311, 0.0
        %3325 = vst.msk [vmem:[#allocation3 + $0x78] sm:$0xff] %vm3308, 0.0
        %3326 = vst.msk [vmem:[#allocation3 + $0x80] sm:$0xff] %vm3308, 0.0
        %3327 = vst.msk [vmem:[#allocation3 + $0x88] sm:$0x3] %vm3311, 0.0
        %3328 = vst.msk [vmem:[#allocation3 + $0x90] sm:$0xff] %vm3308, 0.0
        %3329 = vst.msk [vmem:[#allocation3 + $0x98] sm:$0xff] %vm3308, 0.0
        %3330 = vst.msk [vmem:[#allocation3 + $0xa0] sm:$0x3] %vm3311, 0.0
        %3331 = vst.msk [vmem:[#allocation3 + $0xa8] sm:$0xff] %vm3308, 0.0
        %3332 = vst.msk [vmem:[#allocation3 + $0xb0] sm:$0xff] %vm3308, 0.0
        %3333 = vst.msk [vmem:[#allocation3 + $0xb8] sm:$0x3] %vm3311, 0.0
        %3334 = vst.msk [vmem:[#allocation3 + $0xc0] sm:$0xff] %vm3308, 0.0
        %3335 = vst.msk [vmem:[#allocation3 + $0xc8] sm:$0xff] %vm3308, 0.0
        %3336 = vst.msk [vmem:[#allocation3 + $0xd0] sm:$0x3] %vm3311, 0.0
        %3337 = vst.msk [vmem:[#allocation3 + $0xd8] sm:$0xff] %vm3308, 0.0
        %3338 = vst.msk [vmem:[#allocation3 + $0xe0] sm:$0xff] %vm3308, 0.0
        %3339 = vst.msk [vmem:[#allocation3 + $0xe8] sm:$0x3] %vm3311, 0.0
        %3340 = vst.msk [vmem:[#allocation3 + $0xf0] sm:$0xff] %vm3308, 0.0
        %3341 = vst.msk [vmem:[#allocation3 + $0xf8] sm:$0xff] %vm3308, 0.0
        %3342 = vst.msk [vmem:[#allocation3 + $0x100] sm:$0x3] %vm3311, 0.0
        %3343 = vst.msk [vmem:[#allocation3 + $0x108] sm:$0xff] %vm3308, 0.0
        %3344 = vst.msk [vmem:[#allocation3 + $0x110] sm:$0xff] %vm3308, 0.0
        %3345 = vst.msk [vmem:[#allocation3 + $0x118] sm:$0x3] %vm3311, 0.0
        %3346 = vst.msk [vmem:[#allocation3 + $0x120] sm:$0xff] %vm3308, 0.0
        %3347 = vst.msk [vmem:[#allocation3 + $0x128] sm:$0xff] %vm3308, 0.0
        %3348 = vst.msk [vmem:[#allocation3 + $0x130] sm:$0x3] %vm3311, 0.0
        %3349 = vst.msk [vmem:[#allocation3 + $0x138] sm:$0xff] %vm3308, 0.0
        %3350 = vst.msk [vmem:[#allocation3 + $0x140] sm:$0xff] %vm3308, 0.0
        %3351 = vst.msk [vmem:[#allocation3 + $0x148] sm:$0x3] %vm3311, 0.0
        %3352 = vst.msk [vmem:[#allocation3 + $0x150] sm:$0xff] %vm3308, 0.0
        %3353 = vst.msk [vmem:[#allocation3 + $0x158] sm:$0xff] %vm3308, 0.0
        %3354 = vst.msk [vmem:[#allocation3 + $0x160] sm:$0x3] %vm3311, 0.0
        %3355 = vst.msk [vmem:[#allocation3 + $0x168] sm:$0xff] %vm3308, 0.0
        %3356 = vst.msk [vmem:[#allocation3 + $0x170] sm:$0xff] %vm3308, 0.0
        %3357 = vst.msk [vmem:[#allocation3 + $0x178] sm:$0x3] %vm3311, 0.0
        %3358 = vst.msk [vmem:[#allocation3 + $0x180] sm:$0xff] %vm3308, 0.0
        %3359 = vst.msk [vmem:[#allocation3 + $0x188] sm:$0xff] %vm3308, 0.0
        %3360 = vst.msk [vmem:[#allocation3 + $0x190] sm:$0x3] %vm3311, 0.0
        %3361 = vst.msk [vmem:[#allocation3 + $0x198] sm:$0xff] %vm3308, 0.0
        %3362 = vst.msk [vmem:[#allocation3 + $0x1a0] sm:$0xff] %vm3308, 0.0
        %3363 = vst.msk [vmem:[#allocation3 + $0x1a8] sm:$0x3] %vm3311, 0.0
        %s3364 = scalar_lea.vmem [#allocation3], 24
        %3365 = vst.msk [vmem:[%s3364 + $0x1] sm:$0xff] %vm3308, %v3276
        %3366 = vst.msk [vmem:[%s3364 + $0x9] sm:$0xff] %vm3308, %v3277
        %3367 = vst.msk [vmem:[%s3364 + $0x19] sm:$0xff] %vm3308, %v3278
        %3368 = vst.msk [vmem:[%s3364 + $0x21] sm:$0xff] %vm3308, %v3279
        %3369 = vst.msk [vmem:[%s3364 + $0x31] sm:$0xff] %vm3308, %v3280
        %3370 = vst.msk [vmem:[%s3364 + $0x39] sm:$0xff] %vm3308, %v3281
        %3371 = vst.msk [vmem:[%s3364 + $0x49] sm:$0xff] %vm3308, %v3282
        %3372 = vst.msk [vmem:[%s3364 + $0x51] sm:$0xff] %vm3308, %v3283
        %3373 = vst.msk [vmem:[%s3364 + $0x61] sm:$0xff] %vm3308, %v3284
        %3374 = vst.msk [vmem:[%s3364 + $0x69] sm:$0xff] %vm3308, %v3285
        %3375 = vst.msk [vmem:[%s3364 + $0x79] sm:$0xff] %vm3308, %v3286
        %3376 = vst.msk [vmem:[%s3364 + $0x81] sm:$0xff] %vm3308, %v3287
        %3377 = vst.msk [vmem:[%s3364 + $0x91] sm:$0xff] %vm3308, %v3288
        %3378 = vst.msk [vmem:[%s3364 + $0x99] sm:$0xff] %vm3308, %v3289
        %3379 = vst.msk [vmem:[%s3364 + $0xa9] sm:$0xff] %vm3308, %v3290
        %3380 = vst.msk [vmem:[%s3364 + $0xb1] sm:$0xff] %vm3308, %v3291
        %3381 = vst.msk [vmem:[%s3364 + $0xc1] sm:$0xff] %vm3308, %v3292
        %3382 = vst.msk [vmem:[%s3364 + $0xc9] sm:$0xff] %vm3308, %v3293
        %3383 = vst.msk [vmem:[%s3364 + $0xd9] sm:$0xff] %vm3308, %v3294
        %3384 = vst.msk [vmem:[%s3364 + $0xe1] sm:$0xff] %vm3308, %v3295
        %3385 = vst.msk [vmem:[%s3364 + $0xf1] sm:$0xff] %vm3308, %v3296
        %3386 = vst.msk [vmem:[%s3364 + $0xf9] sm:$0xff] %vm3308, %v3297
        %3387 = vst.msk [vmem:[%s3364 + $0x109] sm:$0xff] %vm3308, %v3298
        %3388 = vst.msk [vmem:[%s3364 + $0x111] sm:$0xff] %vm3308, %v3299
        %3389 = vst.msk [vmem:[%s3364 + $0x121] sm:$0xff] %vm3308, %v3300
        %3390 = vst.msk [vmem:[%s3364 + $0x129] sm:$0xff] %vm3308, %v3301
        %3391 = vst.msk [vmem:[%s3364 + $0x139] sm:$0xff] %vm3308, %v3302
        %3392 = vst.msk [vmem:[%s3364 + $0x141] sm:$0xff] %vm3308, %v3303
        %3393 = vst.msk [vmem:[%s3364 + $0x151] sm:$0xff] %vm3308, %v3304
        %3394 = vst.msk [vmem:[%s3364 + $0x159] sm:$0xff] %vm3308, %v3305
        %3395 = vst.msk [vmem:[%s3364 + $0x169] sm:$0xff] %vm3308, %v3306
        %3396 = vst.msk [vmem:[%s3364 + $0x171] sm:$0xff] %vm3308, %v3307
        %v3397 = vld [vmem:[#allocation3] sm:$0xff]
        %v3398 = vld [vmem:[#allocation3 + $0x8] sm:$0xff]
        %v3399 = vld [vmem:[#allocation3 + $0x10] sm:$0x3]
        %v3400 = vld [vmem:[#allocation3 + $0x18] sm:$0xff]
        %v3401 = vld [vmem:[#allocation3 + $0x20] sm:$0xff]
        %v3402 = vld [vmem:[#allocation3 + $0x28] sm:$0x3]
        %v3403 = vld [vmem:[#allocation3 + $0x30] sm:$0xff]
        %v3404 = vld [vmem:[#allocation3 + $0x38] sm:$0xff]
        %v3405 = vld [vmem:[#allocation3 + $0x40] sm:$0x3]
        %v3406 = vld [vmem:[#allocation3 + $0x48] sm:$0xff]
        %v3407 = vld [vmem:[#allocation3 + $0x50] sm:$0xff]
        %v3408 = vld [vmem:[#allocation3 + $0x58] sm:$0x3]
        %v3409 = vld [vmem:[#allocation3 + $0x60] sm:$0xff]
        %v3410 = vld [vmem:[#allocation3 + $0x68] sm:$0xff]
        %v3411 = vld [vmem:[#allocation3 + $0x70] sm:$0x3]
        %v3412 = vld [vmem:[#allocation3 + $0x78] sm:$0xff]
        %v3413 = vld [vmem:[#allocation3 + $0x80] sm:$0xff]
        %v3414 = vld [vmem:[#allocation3 + $0x88] sm:$0x3]
        %v3415 = vld [vmem:[#allocation3 + $0x90] sm:$0xff]
        %v3416 = vld [vmem:[#allocation3 + $0x98] sm:$0xff]
        %v3417 = vld [vmem:[#allocation3 + $0xa0] sm:$0x3]
        %v3418 = vld [vmem:[#allocation3 + $0xa8] sm:$0xff]
        %v3419 = vld [vmem:[#allocation3 + $0xb0] sm:$0xff]
        %v3420 = vld [vmem:[#allocation3 + $0xb8] sm:$0x3]
        %v3421 = vld [vmem:[#allocation3 + $0xc0] sm:$0xff]
        %v3422 = vld [vmem:[#allocation3 + $0xc8] sm:$0xff]
        %v3423 = vld [vmem:[#allocation3 + $0xd0] sm:$0x3]
        %v3424 = vld [vmem:[#allocation3 + $0xd8] sm:$0xff]
        %v3425 = vld [vmem:[#allocation3 + $0xe0] sm:$0xff]
        %v3426 = vld [vmem:[#allocation3 + $0xe8] sm:$0x3]
        %v3427 = vld [vmem:[#allocation3 + $0xf0] sm:$0xff]
        %v3428 = vld [vmem:[#allocation3 + $0xf8] sm:$0xff]
        %v3429 = vld [vmem:[#allocation3 + $0x100] sm:$0x3]
        %v3430 = vld [vmem:[#allocation3 + $0x108] sm:$0xff]
        %v3431 = vld [vmem:[#allocation3 + $0x110] sm:$0xff]
        %v3432 = vld [vmem:[#allocation3 + $0x118] sm:$0x3]
        %v3433 = vld [vmem:[#allocation3 + $0x120] sm:$0xff]
        %v3434 = vld [vmem:[#allocation3 + $0x128] sm:$0xff]
        %v3435 = vld [vmem:[#allocation3 + $0x130] sm:$0x3]
        %v3436 = vld [vmem:[#allocation3 + $0x138] sm:$0xff]
        %v3437 = vld [vmem:[#allocation3 + $0x140] sm:$0xff]
        %v3438 = vld [vmem:[#allocation3 + $0x148] sm:$0x3]
        %v3439 = vld [vmem:[#allocation3 + $0x150] sm:$0xff]
        %v3440 = vld [vmem:[#allocation3 + $0x158] sm:$0xff]
        %v3441 = vld [vmem:[#allocation3 + $0x160] sm:$0x3]
        %v3442 = vld [vmem:[#allocation3 + $0x168] sm:$0xff]
        %v3443 = vld [vmem:[#allocation3 + $0x170] sm:$0xff]
        %v3444 = vld [vmem:[#allocation3 + $0x178] sm:$0x3]
        %v3445 = vld [vmem:[#allocation3 + $0x180] sm:$0xff]
        %v3446 = vld [vmem:[#allocation3 + $0x188] sm:$0xff]
        %v3447 = vld [vmem:[#allocation3 + $0x190] sm:$0x3]
        %v3448 = vld [vmem:[#allocation3 + $0x198] sm:$0xff]
        %v3449 = vld [vmem:[#allocation3 + $0x1a0] sm:$0xff]
        %v3450 = vld [vmem:[#allocation3 + $0x1a8] sm:$0x3]
        %v3451 = vld [vmem:[%s5] sm:$0x1]
        %v3452 = vld [vmem:[%s6] sm:$0x1]
        %v3453 = vld [vmem:[%s4] sm:$0xff]
        %v3502 = vrot.slane %v3397, 1
        %v3503 = vrot.slane %v3398, 1
        %v3504 = vsel %vm503, %v3502, %v3503
        %v3505 = vrot.slane %v3399, 1
        %v3506 = vsel %vm503, %v3503, %v3505
        %v3507 = vrot.slane %v3400, 1
        %v3508 = vrot.slane %v3401, 1
        %v3509 = vsel %vm503, %v3507, %v3508
        %v3510 = vrot.slane %v3402, 1
        %v3511 = vsel %vm503, %v3508, %v3510
        %v3512 = vrot.slane %v3403, 1
        %v3513 = vrot.slane %v3404, 1
        %v3514 = vsel %vm503, %v3512, %v3513
        %v3515 = vrot.slane %v3405, 1
        %v3516 = vsel %vm503, %v3513, %v3515
        %v3517 = vrot.slane %v3406, 1
        %v3518 = vrot.slane %v3407, 1
        %v3519 = vsel %vm503, %v3517, %v3518
        %v3520 = vrot.slane %v3408, 1
        %v3521 = vsel %vm503, %v3518, %v3520
        %v3522 = vrot.slane %v3409, 1
        %v3523 = vrot.slane %v3410, 1
        %v3524 = vsel %vm503, %v3522, %v3523
        %v3525 = vrot.slane %v3411, 1
        %v3526 = vsel %vm503, %v3523, %v3525
        %v3527 = vrot.slane %v3412, 1
        %v3528 = vrot.slane %v3413, 1
        %v3529 = vsel %vm503, %v3527, %v3528
        %v3530 = vrot.slane %v3414, 1
        %v3531 = vsel %vm503, %v3528, %v3530
        %v3532 = vrot.slane %v3415, 1
        %v3533 = vrot.slane %v3416, 1
        %v3534 = vsel %vm503, %v3532, %v3533
        %v3535 = vrot.slane %v3417, 1
        %v3536 = vsel %vm503, %v3533, %v3535
        %v3537 = vrot.slane %v3418, 1
        %v3538 = vrot.slane %v3419, 1
        %v3539 = vsel %vm503, %v3537, %v3538
        %v3540 = vrot.slane %v3420, 1
        %v3541 = vsel %vm503, %v3538, %v3540
        %v3542 = vrot.slane %v3421, 1
        %v3543 = vrot.slane %v3422, 1
        %v3544 = vsel %vm503, %v3542, %v3543
        %v3545 = vrot.slane %v3423, 1
        %v3546 = vsel %vm503, %v3543, %v3545
        %v3547 = vrot.slane %v3424, 1
        %v3548 = vrot.slane %v3425, 1
        %v3549 = vsel %vm503, %v3547, %v3548
        %v3550 = vrot.slane %v3426, 1
        %v3551 = vsel %vm503, %v3548, %v3550
        %v3552 = vrot.slane %v3427, 1
        %v3553 = vrot.slane %v3428, 1
        %v3554 = vsel %vm503, %v3552, %v3553
        %v3555 = vrot.slane %v3429, 1
        %v3556 = vsel %vm503, %v3553, %v3555
        %v3557 = vrot.slane %v3430, 1
        %v3558 = vrot.slane %v3431, 1
        %v3559 = vsel %vm503, %v3557, %v3558
        %v3560 = vrot.slane %v3432, 1
        %v3561 = vsel %vm503, %v3558, %v3560
        %v3562 = vrot.slane %v3433, 1
        %v3563 = vrot.slane %v3434, 1
        %v3564 = vsel %vm503, %v3562, %v3563
        %v3565 = vrot.slane %v3435, 1
        %v3566 = vsel %vm503, %v3563, %v3565
        %v3567 = vrot.slane %v3436, 1
        %v3568 = vrot.slane %v3437, 1
        %v3569 = vsel %vm503, %v3567, %v3568
        %v3570 = vrot.slane %v3438, 1
        %v3571 = vsel %vm503, %v3568, %v3570
        %v3572 = vrot.slane %v3439, 1
        %v3573 = vrot.slane %v3440, 1
        %v3574 = vsel %vm503, %v3572, %v3573
        %v3575 = vrot.slane %v3441, 1
        %v3576 = vsel %vm503, %v3573, %v3575
        %v3577 = vrot.slane %v3442, 1
        %v3578 = vrot.slane %v3443, 1
        %v3579 = vsel %vm503, %v3577, %v3578
        %v3580 = vrot.slane %v3444, 1
        %v3581 = vsel %vm503, %v3578, %v3580
        %s3582 = scalar_lea.vmem %s4, 8
        %v3583 = vld [vmem:[%s3582] sm:$0xff]
        %v3584 = vsel %vm3308, %v3504, 0
        %v3586 = vsel %vm3308, %v3506, 0
        %v3588 = vsel %vm3308, %v3509, 0
        %v3590 = vsel %vm3308, %v3511, 0
        %v3592 = vsel %vm3308, %v3514, 0
        %v3594 = vsel %vm3308, %v3516, 0
        %v3596 = vsel %vm3308, %v3519, 0
        %v3598 = vsel %vm3308, %v3521, 0
        %v3600 = vsel %vm3308, %v3524, 0
        %v3602 = vsel %vm3308, %v3526, 0
        %v3604 = vsel %vm3308, %v3529, 0
        %v3606 = vsel %vm3308, %v3531, 0
        %v3608 = vsel %vm3308, %v3534, 0
        %v3610 = vsel %vm3308, %v3536, 0
        %v3612 = vsel %vm3308, %v3539, 0
        %v3614 = vsel %vm3308, %v3541, 0
        %v3616 = vsel %vm3308, %v3544, 0
        %v3618 = vsel %vm3308, %v3546, 0
        %v3620 = vsel %vm3308, %v3549, 0
        %v3622 = vsel %vm3308, %v3551, 0
        %v3624 = vsel %vm3308, %v3554, 0
        %v3626 = vsel %vm3308, %v3556, 0
        %v3628 = vsel %vm3308, %v3559, 0
        %v3630 = vsel %vm3308, %v3561, 0
        %v3632 = vsel %vm3308, %v3564, 0
        %v3634 = vsel %vm3308, %v3566, 0
        %v3636 = vsel %vm3308, %v3569, 0
        %v3638 = vsel %vm3308, %v3571, 0
        %v3640 = vsel %vm3308, %v3574, 0
        %v3642 = vsel %vm3308, %v3576, 0
        %v3644 = vsel %vm3308, %v3579, 0
        %v3646 = vsel %vm3308, %v3581, 0
        %3648 = vmatprep.subr.mxu0 0.0
        %3649 = vmatpush1.msra.mxu0 %v3583
        %3650 = vmatprep.subr.mxu0 0.0
        %3651 = vmatpush1.msra.mxu0 0.0
        %3652 = vmatprep.subr.mxu0 0.0
        %3653 = vmatpush1.msra.mxu0 0.0
        %3654 = vmatprep.subr.mxu0 0.0
        %3655 = vmatpush1.msra.mxu0 0.0
        %3656 = vmatprep.subr.mxu0 0.0
        %3657 = vmatpush1.msra.mxu0 0.0
        %3658 = vmatprep.subr.mxu0 0.0
        %3659 = vmatpush1.msra.mxu0 0.0
        %3660 = vmatprep.subr.mxu0 0.0
        %3661 = vmatpush1.msra.mxu0 0.0
        %3662 = vmatprep.subr.mxu0 0.0
        %3663 = vmatpush1.msra.mxu0 0.0
        %3664 = vmatprep.subr.mxu0 0.0
        %3665 = vmatpush1.msra.mxu0 0.0
        %3666 = vmatprep.subr.mxu0 0.0
        %3667 = vmatpush1.msra.mxu0 0.0
        %3668 = vmatprep.subr.mxu0 0.0
        %3669 = vmatpush1.msra.mxu0 0.0
        %3670 = vmatprep.subr.mxu0 0.0
        %3671 = vmatpush1.msra.mxu0 0.0
        %3672 = vmatprep.subr.mxu0 0.0
        %3673 = vmatpush1.msra.mxu0 0.0
        %3674 = vmatprep.subr.mxu0 0.0
        %3675 = vmatpush1.msra.mxu0 0.0
        %3676 = vmatprep.subr.mxu0 0.0
        %3677 = vmatpush1.msra.mxu0 0.0
        %3678 = vmatprep.subr.mxu0 0.0
        %3679 = vmatpush1.msra.mxu0 0.0
        %3680 = vmatprep.subr.mxu0 0.0
        %3681 = vmatpush1.msra.mxu0 0.0
        %3682 = vmatprep.subr.mxu0 0.0
        %3683 = vmatpush1.msra.mxu0 0.0
        %3684 = vmatprep.subr.mxu0 0.0
        %3685 = vmatpush1.msra.mxu0 0.0
        %3686 = vmatprep.subr.mxu0 0.0
        %3687 = vmatpush1.msra.mxu0 0.0
        %3688 = vmatprep.subr.mxu0 0.0
        %3689 = vmatpush1.msra.mxu0 0.0
        %3690 = vmatprep.subr.mxu0 0.0
        %3691 = vmatpush1.msra.mxu0 0.0
        %3692 = vmatprep.subr.mxu0 0.0
        %3693 = vmatpush1.msra.mxu0 0.0
        %3694 = vmatprep.subr.mxu0 0.0
        %3695 = vmatpush1.msra.mxu0 0.0
        %3696 = vmatprep.subr.mxu0 0.0
        %3697 = vmatpush1.msra.mxu0 0.0
        %3698 = vmatprep.subr.mxu0 0.0
        %3699 = vmatpush1.msra.mxu0 0.0
        %3700 = vmatprep.subr.mxu0 0.0
        %3701 = vmatpush1.msra.mxu0 0.0
        %3702 = vmatprep.subr.mxu0 0.0
        %3703 = vmatpush1.msra.mxu0 0.0
        %3704 = vmatprep.subr.mxu0 0.0
        %3705 = vmatpush1.msra.mxu0 0.0
        %3706 = vmatprep.subr.mxu0 0.0
        %3707 = vmatpush1.msra.mxu0 0.0
        %3708 = vmatprep.subr.mxu0 0.0
        %3709 = vmatpush1.msra.mxu0 0.0
        %3710 = vmatprep.subr.mxu0 0.0
        %3711 = vmatpush1.msra.mxu0 0.0
        %3712 = vmatprep.mubr.f32.mxu0 0.0
        %3713 = vmatmul.mubr.f32.gmra.mrb[0].mxu0 %v3584
        %v3714 = vpop.f32.mrb[0].mxu0
        %v3715 = vadd.f32 0.0, %v3714
        %v3716 = vpop.f32.mrb[0].mxu0
        %3717 = vmatprep.mubr.f32.mxu0 0.0
        %3718 = vmatmul.mubr.f32.gmra.mrb[0].mxu0 %v3586
        %v3719 = vpop.f32.mrb[0].mxu0
        %v3720 = vadd.f32 0.0, %v3719
        %v3721 = vpop.f32.mrb[0].mxu0
        %3722 = vmatprep.mubr.f32.mxu0 0.0
        %3723 = vmatmul.mubr.f32.gmra.mrb[0].mxu0 %v3588
        %v3724 = vpop.f32.mrb[0].mxu0
        %v3725 = vadd.f32 0.0, %v3724
        %v3726 = vpop.f32.mrb[0].mxu0
        %3727 = vmatprep.mubr.f32.mxu0 0.0
        %3728 = vmatmul.mubr.f32.gmra.mrb[0].mxu0 %v3590
        %v3729 = vpop.f32.mrb[0].mxu0
        %v3730 = vadd.f32 0.0, %v3729
        %v3731 = vpop.f32.mrb[0].mxu0
        %3732 = vmatprep.mubr.f32.mxu0 0.0
        %3733 = vmatmul.mubr.f32.gmra.mrb[0].mxu0 %v3592
        %v3734 = vpop.f32.mrb[0].mxu0
        %v3735 = vadd.f32 0.0, %v3734
        %v3736 = vpop.f32.mrb[0].mxu0
        %3737 = vmatprep.mubr.f32.mxu0 0.0
        %3738 = vmatmul.mubr.f32.gmra.mrb[0].mxu0 %v3594
        %v3739 = vpop.f32.mrb[0].mxu0
        %v3740 = vadd.f32 0.0, %v3739
        %v3741 = vpop.f32.mrb[0].mxu0
        %3742 = vmatprep.mubr.f32.mxu0 0.0
        %3743 = vmatmul.mubr.f32.gmra.mrb[0].mxu0 %v3596
        %v3744 = vpop.f32.mrb[0].mxu0
        %v3745 = vadd.f32 0.0, %v3744
        %v3746 = vpop.f32.mrb[0].mxu0
        %3747 = vmatprep.mubr.f32.mxu0 0.0
        %3748 = vmatmul.mubr.f32.gmra.mrb[0].mxu0 %v3598
        %v3749 = vpop.f32.mrb[0].mxu0
        %v3750 = vadd.f32 0.0, %v3749
        %v3751 = vpop.f32.mrb[0].mxu0
        %3752 = vmatprep.mubr.f32.mxu0 0.0
        %3753 = vmatmul.mubr.f32.gmra.mrb[0].mxu0 %v3600
        %v3754 = vpop.f32.mrb[0].mxu0
        %v3755 = vadd.f32 0.0, %v3754
        %v3756 = vpop.f32.mrb[0].mxu0
        %3757 = vmatprep.mubr.f32.mxu0 0.0
        %3758 = vmatmul.mubr.f32.gmra.mrb[0].mxu0 %v3602
        %v3759 = vpop.f32.mrb[0].mxu0
        %v3760 = vadd.f32 0.0, %v3759
        %v3761 = vpop.f32.mrb[0].mxu0
        %3762 = vmatprep.mubr.f32.mxu0 0.0
        %3763 = vmatmul.mubr.f32.gmra.mrb[0].mxu0 %v3604
        %v3764 = vpop.f32.mrb[0].mxu0
        %v3765 = vadd.f32 0.0, %v3764
        %v3766 = vpop.f32.mrb[0].mxu0
        %3767 = vmatprep.mubr.f32.mxu0 0.0
        %3768 = vmatmul.mubr.f32.gmra.mrb[0].mxu0 %v3606
        %v3769 = vpop.f32.mrb[0].mxu0
        %v3770 = vadd.f32 0.0, %v3769
        %v3771 = vpop.f32.mrb[0].mxu0
        %3772 = vmatprep.mubr.f32.mxu0 0.0
        %3773 = vmatmul.mubr.f32.gmra.mrb[0].mxu0 %v3608
        %v3774 = vpop.f32.mrb[0].mxu0
        %v3775 = vadd.f32 0.0, %v3774
        %v3776 = vpop.f32.mrb[0].mxu0
        %3777 = vmatprep.mubr.f32.mxu0 0.0
        %3778 = vmatmul.mubr.f32.gmra.mrb[0].mxu0 %v3610
        %v3779 = vpop.f32.mrb[0].mxu0
        %v3780 = vadd.f32 0.0, %v3779
        %v3781 = vpop.f32.mrb[0].mxu0
        %3782 = vmatprep.mubr.f32.mxu0 0.0
        %3783 = vmatmul.mubr.f32.gmra.mrb[0].mxu0 %v3612
        %v3784 = vpop.f32.mrb[0].mxu0
        %v3785 = vadd.f32 0.0, %v3784
        %v3786 = vpop.f32.mrb[0].mxu0
        %3787 = vmatprep.mubr.f32.mxu0 0.0
        %3788 = vmatmul.mubr.f32.gmra.mrb[0].mxu0 %v3614
        %v3789 = vpop.f32.mrb[0].mxu0
        %v3790 = vadd.f32 0.0, %v3789
        %v3791 = vpop.f32.mrb[0].mxu0
        %3792 = vmatprep.mubr.f32.mxu0 0.0
        %3793 = vmatmul.mubr.f32.gmra.mrb[0].mxu0 %v3616
        %v3794 = vpop.f32.mrb[0].mxu0
        %v3795 = vadd.f32 0.0, %v3794
        %v3796 = vpop.f32.mrb[0].mxu0
        %3797 = vmatprep.mubr.f32.mxu0 0.0
        %3798 = vmatmul.mubr.f32.gmra.mrb[0].mxu0 %v3618
        %v3799 = vpop.f32.mrb[0].mxu0
        %v3800 = vadd.f32 0.0, %v3799
        %v3801 = vpop.f32.mrb[0].mxu0
        %3802 = vmatprep.mubr.f32.mxu0 0.0
        %3803 = vmatmul.mubr.f32.gmra.mrb[0].mxu0 %v3620
        %v3804 = vpop.f32.mrb[0].mxu0
        %v3805 = vadd.f32 0.0, %v3804
        %v3806 = vpop.f32.mrb[0].mxu0
        %3807 = vmatprep.mubr.f32.mxu0 0.0
        %3808 = vmatmul.mubr.f32.gmra.mrb[0].mxu0 %v3622
        %v3809 = vpop.f32.mrb[0].mxu0
        %v3810 = vadd.f32 0.0, %v3809
        %v3811 = vpop.f32.mrb[0].mxu0
        %3812 = vmatprep.mubr.f32.mxu0 0.0
        %3813 = vmatmul.mubr.f32.gmra.mrb[0].mxu0 %v3624
        %v3814 = vpop.f32.mrb[0].mxu0
        %v3815 = vadd.f32 0.0, %v3814
        %v3816 = vpop.f32.mrb[0].mxu0
        %3817 = vmatprep.mubr.f32.mxu0 0.0
        %3818 = vmatmul.mubr.f32.gmra.mrb[0].mxu0 %v3626
        %v3819 = vpop.f32.mrb[0].mxu0
        %v3820 = vadd.f32 0.0, %v3819
        %v3821 = vpop.f32.mrb[0].mxu0
        %3822 = vmatprep.mubr.f32.mxu0 0.0
        %3823 = vmatmul.mubr.f32.gmra.mrb[0].mxu0 %v3628
        %v3824 = vpop.f32.mrb[0].mxu0
        %v3825 = vadd.f32 0.0, %v3824
        %v3826 = vpop.f32.mrb[0].mxu0
        %3827 = vmatprep.mubr.f32.mxu0 0.0
        %3828 = vmatmul.mubr.f32.gmra.mrb[0].mxu0 %v3630
        %v3829 = vpop.f32.mrb[0].mxu0
        %v3830 = vadd.f32 0.0, %v3829
        %v3831 = vpop.f32.mrb[0].mxu0
        %3832 = vmatprep.mubr.f32.mxu0 0.0
        %3833 = vmatmul.mubr.f32.gmra.mrb[0].mxu0 %v3632
        %v3834 = vpop.f32.mrb[0].mxu0
        %v3835 = vadd.f32 0.0, %v3834
        %v3836 = vpop.f32.mrb[0].mxu0
        %3837 = vmatprep.mubr.f32.mxu0 0.0
        %3838 = vmatmul.mubr.f32.gmra.mrb[0].mxu0 %v3634
        %v3839 = vpop.f32.mrb[0].mxu0
        %v3840 = vadd.f32 0.0, %v3839
        %v3841 = vpop.f32.mrb[0].mxu0
        %3842 = vmatprep.mubr.f32.mxu0 0.0
        %3843 = vmatmul.mubr.f32.gmra.mrb[0].mxu0 %v3636
        %v3844 = vpop.f32.mrb[0].mxu0
        %v3845 = vadd.f32 0.0, %v3844
        %v3846 = vpop.f32.mrb[0].mxu0
        %3847 = vmatprep.mubr.f32.mxu0 0.0
        %3848 = vmatmul.mubr.f32.gmra.mrb[0].mxu0 %v3638
        %v3849 = vpop.f32.mrb[0].mxu0
        %v3850 = vadd.f32 0.0, %v3849
        %v3851 = vpop.f32.mrb[0].mxu0
        %3852 = vmatprep.mubr.f32.mxu0 0.0
        %3853 = vmatmul.mubr.f32.gmra.mrb[0].mxu0 %v3640
        %v3854 = vpop.f32.mrb[0].mxu0
        %v3855 = vadd.f32 0.0, %v3854
        %v3856 = vpop.f32.mrb[0].mxu0
        %3857 = vmatprep.mubr.f32.mxu0 0.0
        %3858 = vmatmul.mubr.f32.gmra.mrb[0].mxu0 %v3642
        %v3859 = vpop.f32.mrb[0].mxu0
        %v3860 = vadd.f32 0.0, %v3859
        %v3861 = vpop.f32.mrb[0].mxu0
        %3862 = vmatprep.mubr.f32.mxu0 0.0
        %3863 = vmatmul.mubr.f32.gmra.mrb[0].mxu0 %v3644
        %v3864 = vpop.f32.mrb[0].mxu0
        %v3865 = vadd.f32 0.0, %v3864
        %v3866 = vpop.f32.mrb[0].mxu0
        %3867 = vmatprep.mubr.f32.mxu0 0.0
        %3868 = vmatmul.mubr.f32.gmra.mrb[0].mxu0 %v3646
        %v3869 = vpop.f32.mrb[0].mxu0
        %v3870 = vadd.f32 0.0, %v3869
        %v3871 = vpop.f32.mrb[0].mxu0
        %3872 = vdwg.mxu0
        %v3873 = vsel %vm3308, %v3397, 0
        %v3875 = vsel %vm3308, %v3398, 0
        %v3877 = vsel %vm3308, %v3400, 0
        %v3879 = vsel %vm3308, %v3401, 0
        %v3881 = vsel %vm3308, %v3403, 0
        %v3883 = vsel %vm3308, %v3404, 0
        %v3885 = vsel %vm3308, %v3406, 0
        %v3887 = vsel %vm3308, %v3407, 0
        %v3889 = vsel %vm3308, %v3409, 0
        %v3891 = vsel %vm3308, %v3410, 0
        %v3893 = vsel %vm3308, %v3412, 0
        %v3895 = vsel %vm3308, %v3413, 0
        %v3897 = vsel %vm3308, %v3415, 0
        %v3899 = vsel %vm3308, %v3416, 0
        %v3901 = vsel %vm3308, %v3418, 0
        %v3903 = vsel %vm3308, %v3419, 0
        %v3905 = vsel %vm3308, %v3421, 0
        %v3907 = vsel %vm3308, %v3422, 0
        %v3909 = vsel %vm3308, %v3424, 0
        %v3911 = vsel %vm3308, %v3425, 0
        %v3913 = vsel %vm3308, %v3427, 0
        %v3915 = vsel %vm3308, %v3428, 0
        %v3917 = vsel %vm3308, %v3430, 0
        %v3919 = vsel %vm3308, %v3431, 0
        %v3921 = vsel %vm3308, %v3433, 0
        %v3923 = vsel %vm3308, %v3434, 0
        %v3925 = vsel %vm3308, %v3436, 0
        %v3927 = vsel %vm3308, %v3437, 0
        %v3929 = vsel %vm3308, %v3439, 0
        %v3931 = vsel %vm3308, %v3440, 0
        %v3933 = vsel %vm3308, %v3442, 0
        %v3935 = vsel %vm3308, %v3443, 0
        %3937 = vmatprep.subr.mxu0 0.0
        %3938 = vmatpush1.msra.mxu0 %v3453
        %3939 = vmatprep.subr.mxu0 0.0
        %3940 = vmatpush1.msra.mxu0 0.0
        %3941 = vmatprep.subr.mxu0 0.0
        %3942 = vmatpush1.msra.mxu0 0.0
        %3943 = vmatprep.subr.mxu0 0.0
        %3944 = vmatpush1.msra.mxu0 0.0
        %3945 = vmatprep.subr.mxu0 0.0
        %3946 = vmatpush1.msra.mxu0 0.0
        %3947 = vmatprep.subr.mxu0 0.0
        %3948 = vmatpush1.msra.mxu0 0.0
        %3949 = vmatprep.subr.mxu0 0.0
        %3950 = vmatpush1.msra.mxu0 0.0
        %3951 = vmatprep.subr.mxu0 0.0
        %3952 = vmatpush1.msra.mxu0 0.0
        %3953 = vmatprep.subr.mxu0 0.0
        %3954 = vmatpush1.msra.mxu0 0.0
        %3955 = vmatprep.subr.mxu0 0.0
        %3956 = vmatpush1.msra.mxu0 0.0
        %3957 = vmatprep.subr.mxu0 0.0
        %3958 = vmatpush1.msra.mxu0 0.0
        %3959 = vmatprep.subr.mxu0 0.0
        %3960 = vmatpush1.msra.mxu0 0.0
        %3961 = vmatprep.subr.mxu0 0.0
        %3962 = vmatpush1.msra.mxu0 0.0
        %3963 = vmatprep.subr.mxu0 0.0
        %3964 = vmatpush1.msra.mxu0 0.0
        %3965 = vmatprep.subr.mxu0 0.0
        %3966 = vmatpush1.msra.mxu0 0.0
        %3967 = vmatprep.subr.mxu0 0.0
        %3968 = vmatpush1.msra.mxu0 0.0
        %3969 = vmatprep.subr.mxu0 0.0
        %3970 = vmatpush1.msra.mxu0 0.0
        %3971 = vmatprep.subr.mxu0 0.0
        %3972 = vmatpush1.msra.mxu0 0.0
        %3973 = vmatprep.subr.mxu0 0.0
        %3974 = vmatpush1.msra.mxu0 0.0
        %3975 = vmatprep.subr.mxu0 0.0
        %3976 = vmatpush1.msra.mxu0 0.0
        %3977 = vmatprep.subr.mxu0 0.0
        %3978 = vmatpush1.msra.mxu0 0.0
        %3979 = vmatprep.subr.mxu0 0.0
        %3980 = vmatpush1.msra.mxu0 0.0
        %3981 = vmatprep.subr.mxu0 0.0
        %3982 = vmatpush1.msra.mxu0 0.0
        %3983 = vmatprep.subr.mxu0 0.0
        %3984 = vmatpush1.msra.mxu0 0.0
        %3985 = vmatprep.subr.mxu0 0.0
        %3986 = vmatpush1.msra.mxu0 0.0
        %3987 = vmatprep.subr.mxu0 0.0
        %3988 = vmatpush1.msra.mxu0 0.0
        %3989 = vmatprep.subr.mxu0 0.0
        %3990 = vmatpush1.msra.mxu0 0.0
        %3991 = vmatprep.subr.mxu0 0.0
        %3992 = vmatpush1.msra.mxu0 0.0
        %3993 = vmatprep.subr.mxu0 0.0
        %3994 = vmatpush1.msra.mxu0 0.0
        %3995 = vmatprep.subr.mxu0 0.0
        %3996 = vmatpush1.msra.mxu0 0.0
        %3997 = vmatprep.subr.mxu0 0.0
        %3998 = vmatpush1.msra.mxu0 0.0
        %3999 = vmatprep.subr.mxu0 0.0
        %4000 = vmatpush1.msra.mxu0 0.0
        %4001 = vmatprep.mubr.f32.mxu0 0.0
        %4002 = vmatmul.mubr.f32.gmra.mrb[0].mxu0 %v3873
        %v4003 = vpop.f32.mrb[0].mxu0
        %v4004 = vadd.f32 %v3715, %v4003
        %v4005 = vpop.f32.mrb[0].mxu0
        %4006 = vmatprep.mubr.f32.mxu0 0.0
        %4007 = vmatmul.mubr.f32.gmra.mrb[0].mxu0 %v3875
        %v4008 = vpop.f32.mrb[0].mxu0
        %v4009 = vadd.f32 %v3720, %v4008
        %v4010 = vpop.f32.mrb[0].mxu0
        %4011 = vmatprep.mubr.f32.mxu0 0.0
        %4012 = vmatmul.mubr.f32.gmra.mrb[0].mxu0 %v3877
        %v4013 = vpop.f32.mrb[0].mxu0
        %v4014 = vadd.f32 %v3725, %v4013
        %v4015 = vpop.f32.mrb[0].mxu0
        %4016 = vmatprep.mubr.f32.mxu0 0.0
        %4017 = vmatmul.mubr.f32.gmra.mrb[0].mxu0 %v3879
        %v4018 = vpop.f32.mrb[0].mxu0
        %v4019 = vadd.f32 %v3730, %v4018
        %v4020 = vpop.f32.mrb[0].mxu0
        %4021 = vmatprep.mubr.f32.mxu0 0.0
        %4022 = vmatmul.mubr.f32.gmra.mrb[0].mxu0 %v3881
        %v4023 = vpop.f32.mrb[0].mxu0
        %v4024 = vadd.f32 %v3735, %v4023
        %v4025 = vpop.f32.mrb[0].mxu0
        %4026 = vmatprep.mubr.f32.mxu0 0.0
        %4027 = vmatmul.mubr.f32.gmra.mrb[0].mxu0 %v3883
        %v4028 = vpop.f32.mrb[0].mxu0
        %v4029 = vadd.f32 %v3740, %v4028
        %v4030 = vpop.f32.mrb[0].mxu0
        %4031 = vmatprep.mubr.f32.mxu0 0.0
        %4032 = vmatmul.mubr.f32.gmra.mrb[0].mxu0 %v3885
        %v4033 = vpop.f32.mrb[0].mxu0
        %v4034 = vadd.f32 %v3745, %v4033
        %v4035 = vpop.f32.mrb[0].mxu0
        %4036 = vmatprep.mubr.f32.mxu0 0.0
        %4037 = vmatmul.mubr.f32.gmra.mrb[0].mxu0 %v3887
        %v4038 = vpop.f32.mrb[0].mxu0
        %v4039 = vadd.f32 %v3750, %v4038
        %v4040 = vpop.f32.mrb[0].mxu0
        %4041 = vmatprep.mubr.f32.mxu0 0.0
        %4042 = vmatmul.mubr.f32.gmra.mrb[0].mxu0 %v3889
        %v4043 = vpop.f32.mrb[0].mxu0
        %v4044 = vadd.f32 %v3755, %v4043
        %v4045 = vpop.f32.mrb[0].mxu0
        %4046 = vmatprep.mubr.f32.mxu0 0.0
        %4047 = vmatmul.mubr.f32.gmra.mrb[0].mxu0 %v3891
        %v4048 = vpop.f32.mrb[0].mxu0
        %v4049 = vadd.f32 %v3760, %v4048
        %v4050 = vpop.f32.mrb[0].mxu0
        %4051 = vmatprep.mubr.f32.mxu0 0.0
        %4052 = vmatmul.mubr.f32.gmra.mrb[0].mxu0 %v3893
        %v4053 = vpop.f32.mrb[0].mxu0
        %v4054 = vadd.f32 %v3765, %v4053
        %v4055 = vpop.f32.mrb[0].mxu0
        %4056 = vmatprep.mubr.f32.mxu0 0.0
        %4057 = vmatmul.mubr.f32.gmra.mrb[0].mxu0 %v3895
        %v4058 = vpop.f32.mrb[0].mxu0
        %v4059 = vadd.f32 %v3770, %v4058
        %v4060 = vpop.f32.mrb[0].mxu0
        %4061 = vmatprep.mubr.f32.mxu0 0.0
        %4062 = vmatmul.mubr.f32.gmra.mrb[0].mxu0 %v3897
        %v4063 = vpop.f32.mrb[0].mxu0
        %v4064 = vadd.f32 %v3775, %v4063
        %v4065 = vpop.f32.mrb[0].mxu0
        %4066 = vmatprep.mubr.f32.mxu0 0.0
        %4067 = vmatmul.mubr.f32.gmra.mrb[0].mxu0 %v3899
        %v4068 = vpop.f32.mrb[0].mxu0
        %v4069 = vadd.f32 %v3780, %v4068
        %v4070 = vpop.f32.mrb[0].mxu0
        %4071 = vmatprep.mubr.f32.mxu0 0.0
        %4072 = vmatmul.mubr.f32.gmra.mrb[0].mxu0 %v3901
        %v4073 = vpop.f32.mrb[0].mxu0
        %v4074 = vadd.f32 %v3785, %v4073
        %v4075 = vpop.f32.mrb[0].mxu0
        %4076 = vmatprep.mubr.f32.mxu0 0.0
        %4077 = vmatmul.mubr.f32.gmra.mrb[0].mxu0 %v3903
        %v4078 = vpop.f32.mrb[0].mxu0
        %v4079 = vadd.f32 %v3790, %v4078
        %v4080 = vpop.f32.mrb[0].mxu0
        %4081 = vmatprep.mubr.f32.mxu0 0.0
        %4082 = vmatmul.mubr.f32.gmra.mrb[0].mxu0 %v3905
        %v4083 = vpop.f32.mrb[0].mxu0
        %v4084 = vadd.f32 %v3795, %v4083
        %v4085 = vpop.f32.mrb[0].mxu0
        %4086 = vmatprep.mubr.f32.mxu0 0.0
        %4087 = vmatmul.mubr.f32.gmra.mrb[0].mxu0 %v3907
        %v4088 = vpop.f32.mrb[0].mxu0
        %v4089 = vadd.f32 %v3800, %v4088
        %v4090 = vpop.f32.mrb[0].mxu0
        %4091 = vmatprep.mubr.f32.mxu0 0.0
        %4092 = vmatmul.mubr.f32.gmra.mrb[0].mxu0 %v3909
        %v4093 = vpop.f32.mrb[0].mxu0
        %v4094 = vadd.f32 %v3805, %v4093
        %v4095 = vpop.f32.mrb[0].mxu0
        %4096 = vmatprep.mubr.f32.mxu0 0.0
        %4097 = vmatmul.mubr.f32.gmra.mrb[0].mxu0 %v3911
        %v4098 = vpop.f32.mrb[0].mxu0
        %v4099 = vadd.f32 %v3810, %v4098
        %v4100 = vpop.f32.mrb[0].mxu0
        %4101 = vmatprep.mubr.f32.mxu0 0.0
        %4102 = vmatmul.mubr.f32.gmra.mrb[0].mxu0 %v3913
        %v4103 = vpop.f32.mrb[0].mxu0
        %v4104 = vadd.f32 %v3815, %v4103
        %v4105 = vpop.f32.mrb[0].mxu0
        %4106 = vmatprep.mubr.f32.mxu0 0.0
        %4107 = vmatmul.mubr.f32.gmra.mrb[0].mxu0 %v3915
        %v4108 = vpop.f32.mrb[0].mxu0
        %v4109 = vadd.f32 %v3820, %v4108
        %v4110 = vpop.f32.mrb[0].mxu0
        %4111 = vmatprep.mubr.f32.mxu0 0.0
        %4112 = vmatmul.mubr.f32.gmra.mrb[0].mxu0 %v3917
        %v4113 = vpop.f32.mrb[0].mxu0
        %v4114 = vadd.f32 %v3825, %v4113
        %v4115 = vpop.f32.mrb[0].mxu0
        %4116 = vmatprep.mubr.f32.mxu0 0.0
        %4117 = vmatmul.mubr.f32.gmra.mrb[0].mxu0 %v3919
        %v4118 = vpop.f32.mrb[0].mxu0
        %v4119 = vadd.f32 %v3830, %v4118
        %v4120 = vpop.f32.mrb[0].mxu0
        %4121 = vmatprep.mubr.f32.mxu0 0.0
        %4122 = vmatmul.mubr.f32.gmra.mrb[0].mxu0 %v3921
        %v4123 = vpop.f32.mrb[0].mxu0
        %v4124 = vadd.f32 %v3835, %v4123
        %v4125 = vpop.f32.mrb[0].mxu0
        %4126 = vmatprep.mubr.f32.mxu0 0.0
        %4127 = vmatmul.mubr.f32.gmra.mrb[0].mxu0 %v3923
        %v4128 = vpop.f32.mrb[0].mxu0
        %v4129 = vadd.f32 %v3840, %v4128
        %v4130 = vpop.f32.mrb[0].mxu0
        %4131 = vmatprep.mubr.f32.mxu0 0.0
        %4132 = vmatmul.mubr.f32.gmra.mrb[0].mxu0 %v3925
        %v4133 = vpop.f32.mrb[0].mxu0
        %v4134 = vadd.f32 %v3845, %v4133
        %v4135 = vpop.f32.mrb[0].mxu0
        %4136 = vmatprep.mubr.f32.mxu0 0.0
        %4137 = vmatmul.mubr.f32.gmra.mrb[0].mxu0 %v3927
        %v4138 = vpop.f32.mrb[0].mxu0
        %v4139 = vadd.f32 %v3850, %v4138
        %v4140 = vpop.f32.mrb[0].mxu0
        %4141 = vmatprep.mubr.f32.mxu0 0.0
        %4142 = vmatmul.mubr.f32.gmra.mrb[0].mxu0 %v3929
        %v4143 = vpop.f32.mrb[0].mxu0
        %v4144 = vadd.f32 %v3855, %v4143
        %v4145 = vpop.f32.mrb[0].mxu0
        %4146 = vmatprep.mubr.f32.mxu0 0.0
        %4147 = vmatmul.mubr.f32.gmra.mrb[0].mxu0 %v3931
        %v4148 = vpop.f32.mrb[0].mxu0
        %v4149 = vadd.f32 %v3860, %v4148
        %v4150 = vpop.f32.mrb[0].mxu0
        %4151 = vmatprep.mubr.f32.mxu0 0.0
        %4152 = vmatmul.mubr.f32.gmra.mrb[0].mxu0 %v3933
        %v4153 = vpop.f32.mrb[0].mxu0
        %v4154 = vadd.f32 %v3865, %v4153
        %v4155 = vpop.f32.mrb[0].mxu0
        %4156 = vmatprep.mubr.f32.mxu0 0.0
        %4157 = vmatmul.mubr.f32.gmra.mrb[0].mxu0 %v3935
        %v4158 = vpop.f32.mrb[0].mxu0
        %v4159 = vadd.f32 %v3870, %v4158
        %v4160 = vpop.f32.mrb[0].mxu0
        %4161 = vdwg.mxu0
        %v4162 = vrot.slane %v3397, 2
        %v4163 = vrot.slane %v3398, 2
        %v4164 = vsel %vm1171, %v4162, %v4163
        %v4165 = vrot.slane %v3399, 2
        %v4166 = vsel %vm1171, %v4163, %v4165
        %v4167 = vrot.slane %v3400, 2
        %v4168 = vrot.slane %v3401, 2
        %v4169 = vsel %vm1171, %v4167, %v4168
        %v4170 = vrot.slane %v3402, 2
        %v4171 = vsel %vm1171, %v4168, %v4170
        %v4172 = vrot.slane %v3403, 2
        %v4173 = vrot.slane %v3404, 2
        %v4174 = vsel %vm1171, %v4172, %v4173
        %v4175 = vrot.slane %v3405, 2
        %v4176 = vsel %vm1171, %v4173, %v4175
        %v4177 = vrot.slane %v3406, 2
        %v4178 = vrot.slane %v3407, 2
        %v4179 = vsel %vm1171, %v4177, %v4178
        %v4180 = vrot.slane %v3408, 2
        %v4181 = vsel %vm1171, %v4178, %v4180
        %v4182 = vrot.slane %v3409, 2
        %v4183 = vrot.slane %v3410, 2
        %v4184 = vsel %vm1171, %v4182, %v4183
        %v4185 = vrot.slane %v3411, 2
        %v4186 = vsel %vm1171, %v4183, %v4185
        %v4187 = vrot.slane %v3412, 2
        %v4188 = vrot.slane %v3413, 2
        %v4189 = vsel %vm1171, %v4187, %v4188
        %v4190 = vrot.slane %v3414, 2
        %v4191 = vsel %vm1171, %v4188, %v4190
        %v4192 = vrot.slane %v3415, 2
        %v4193 = vrot.slane %v3416, 2
        %v4194 = vsel %vm1171, %v4192, %v4193
        %v4195 = vrot.slane %v3417, 2
        %v4196 = vsel %vm1171, %v4193, %v4195
        %v4197 = vrot.slane %v3418, 2
        %v4198 = vrot.slane %v3419, 2
        %v4199 = vsel %vm1171, %v4197, %v4198
        %v4200 = vrot.slane %v3420, 2
        %v4201 = vsel %vm1171, %v4198, %v4200
        %v4202 = vrot.slane %v3421, 2
        %v4203 = vrot.slane %v3422, 2
        %v4204 = vsel %vm1171, %v4202, %v4203
        %v4205 = vrot.slane %v3423, 2
        %v4206 = vsel %vm1171, %v4203, %v4205
        %v4207 = vrot.slane %v3424, 2
        %v4208 = vrot.slane %v3425, 2
        %v4209 = vsel %vm1171, %v4207, %v4208
        %v4210 = vrot.slane %v3426, 2
        %v4211 = vsel %vm1171, %v4208, %v4210
        %v4212 = vrot.slane %v3427, 2
        %v4213 = vrot.slane %v3428, 2
        %v4214 = vsel %vm1171, %v4212, %v4213
        %v4215 = vrot.slane %v3429, 2
        %v4216 = vsel %vm1171, %v4213, %v4215
        %v4217 = vrot.slane %v3430, 2
        %v4218 = vrot.slane %v3431, 2
        %v4219 = vsel %vm1171, %v4217, %v4218
        %v4220 = vrot.slane %v3432, 2
        %v4221 = vsel %vm1171, %v4218, %v4220
        %v4222 = vrot.slane %v3433, 2
        %v4223 = vrot.slane %v3434, 2
        %v4224 = vsel %vm1171, %v4222, %v4223
        %v4225 = vrot.slane %v3435, 2
        %v4226 = vsel %vm1171, %v4223, %v4225
        %v4227 = vrot.slane %v3436, 2
        %v4228 = vrot.slane %v3437, 2
        %v4229 = vsel %vm1171, %v4227, %v4228
        %v4230 = vrot.slane %v3438, 2
        %v4231 = vsel %vm1171, %v4228, %v4230
        %v4232 = vrot.slane %v3439, 2
        %v4233 = vrot.slane %v3440, 2
        %v4234 = vsel %vm1171, %v4232, %v4233
        %v4235 = vrot.slane %v3441, 2
        %v4236 = vsel %vm1171, %v4233, %v4235
        %v4237 = vrot.slane %v3442, 2
        %v4238 = vrot.slane %v3443, 2
        %v4239 = vsel %vm1171, %v4237, %v4238
        %v4240 = vrot.slane %v3444, 2
        %v4241 = vsel %vm1171, %v4238, %v4240
        %s4242 = scalar_lea.vmem %s4, 16
        %v4243 = vld [vmem:[%s4242] sm:$0xff]
        %v4244 = vsel %vm3308, %v4164, 0
        %v4246 = vsel %vm3308, %v4166, 0
        %v4248 = vsel %vm3308, %v4169, 0
        %v4250 = vsel %vm3308, %v4171, 0
        %v4252 = vsel %vm3308, %v4174, 0
        %v4254 = vsel %vm3308, %v4176, 0
        %v4256 = vsel %vm3308, %v4179, 0
        %v4258 = vsel %vm3308, %v4181, 0
        %v4260 = vsel %vm3308, %v4184, 0
        %v4262 = vsel %vm3308, %v4186, 0
        %v4264 = vsel %vm3308, %v4189, 0
        %v4266 = vsel %vm3308, %v4191, 0
        %v4268 = vsel %vm3308, %v4194, 0
        %v4270 = vsel %vm3308, %v4196, 0
        %v4272 = vsel %vm3308, %v4199, 0
        %v4274 = vsel %vm3308, %v4201, 0
        %v4276 = vsel %vm3308, %v4204, 0
        %v4278 = vsel %vm3308, %v4206, 0
        %v4280 = vsel %vm3308, %v4209, 0
        %v4282 = vsel %vm3308, %v4211, 0
        %v4284 = vsel %vm3308, %v4214, 0
        %v4286 = vsel %vm3308, %v4216, 0
        %v4288 = vsel %vm3308, %v4219, 0
        %v4290 = vsel %vm3308, %v4221, 0
        %v4292 = vsel %vm3308, %v4224, 0
        %v4294 = vsel %vm3308, %v4226, 0
        %v4296 = vsel %vm3308, %v4229, 0
        %v4298 = vsel %vm3308, %v4231, 0
        %v4300 = vsel %vm3308, %v4234, 0
        %v4302 = vsel %vm3308, %v4236, 0
        %v4304 = vsel %vm3308, %v4239, 0
        %v4306 = vsel %vm3308, %v4241, 0
        %4308 = vmatprep.subr.mxu0 0.0
        %4309 = vmatpush1.msra.mxu0 %v4243
        %4310 = vmatprep.subr.mxu0 0.0
        %4311 = vmatpush1.msra.mxu0 0.0
        %4312 = vmatprep.subr.mxu0 0.0
        %4313 = vmatpush1.msra.mxu0 0.0
        %4314 = vmatprep.subr.mxu0 0.0
        %4315 = vmatpush1.msra.mxu0 0.0
        %4316 = vmatprep.subr.mxu0 0.0
        %4317 = vmatpush1.msra.mxu0 0.0
        %4318 = vmatprep.subr.mxu0 0.0
        %4319 = vmatpush1.msra.mxu0 0.0
        %4320 = vmatprep.subr.mxu0 0.0
        %4321 = vmatpush1.msra.mxu0 0.0
        %4322 = vmatprep.subr.mxu0 0.0
        %4323 = vmatpush1.msra.mxu0 0.0
        %4324 = vmatprep.subr.mxu0 0.0
        %4325 = vmatpush1.msra.mxu0 0.0
        %4326 = vmatprep.subr.mxu0 0.0
        %4327 = vmatpush1.msra.mxu0 0.0
        %4328 = vmatprep.subr.mxu0 0.0
        %4329 = vmatpush1.msra.mxu0 0.0
        %4330 = vmatprep.subr.mxu0 0.0
        %4331 = vmatpush1.msra.mxu0 0.0
        %4332 = vmatprep.subr.mxu0 0.0
        %4333 = vmatpush1.msra.mxu0 0.0
        %4334 = vmatprep.subr.mxu0 0.0
        %4335 = vmatpush1.msra.mxu0 0.0
        %4336 = vmatprep.subr.mxu0 0.0
        %4337 = vmatpush1.msra.mxu0 0.0
        %4338 = vmatprep.subr.mxu0 0.0
        %4339 = vmatpush1.msra.mxu0 0.0
        %4340 = vmatprep.subr.mxu0 0.0
        %4341 = vmatpush1.msra.mxu0 0.0
        %4342 = vmatprep.subr.mxu0 0.0
        %4343 = vmatpush1.msra.mxu0 0.0
        %4344 = vmatprep.subr.mxu0 0.0
        %4345 = vmatpush1.msra.mxu0 0.0
        %4346 = vmatprep.subr.mxu0 0.0
        %4347 = vmatpush1.msra.mxu0 0.0
        %4348 = vmatprep.subr.mxu0 0.0
        %4349 = vmatpush1.msra.mxu0 0.0
        %4350 = vmatprep.subr.mxu0 0.0
        %4351 = vmatpush1.msra.mxu0 0.0
        %4352 = vmatprep.subr.mxu0 0.0
        %4353 = vmatpush1.msra.mxu0 0.0
        %4354 = vmatprep.subr.mxu0 0.0
        %4355 = vmatpush1.msra.mxu0 0.0
        %4356 = vmatprep.subr.mxu0 0.0
        %4357 = vmatpush1.msra.mxu0 0.0
        %4358 = vmatprep.subr.mxu0 0.0
        %4359 = vmatpush1.msra.mxu0 0.0
        %4360 = vmatprep.subr.mxu0 0.0
        %4361 = vmatpush1.msra.mxu0 0.0
        %4362 = vmatprep.subr.mxu0 0.0
        %4363 = vmatpush1.msra.mxu0 0.0
        %4364 = vmatprep.subr.mxu0 0.0
        %4365 = vmatpush1.msra.mxu0 0.0
        %4366 = vmatprep.subr.mxu0 0.0
        %4367 = vmatpush1.msra.mxu0 0.0
        %4368 = vmatprep.subr.mxu0 0.0
        %4369 = vmatpush1.msra.mxu0 0.0
        %4370 = vmatprep.subr.mxu0 0.0
        %4371 = vmatpush1.msra.mxu0 0.0
        %4372 = vmatprep.mubr.f32.mxu0 0.0
        %4373 = vmatmul.mubr.f32.gmra.mrb[0].mxu0 %v4244
        %v4374 = vpop.f32.mrb[0].mxu0
        %v4375 = vadd.f32 0.0, %v4374
        %v4376 = vpop.f32.mrb[0].mxu0
        %4377 = vmatprep.mubr.f32.mxu0 0.0
        %4378 = vmatmul.mubr.f32.gmra.mrb[0].mxu0 %v4246
        %v4379 = vpop.f32.mrb[0].mxu0
        %v4380 = vadd.f32 0.0, %v4379
        %v4381 = vpop.f32.mrb[0].mxu0
        %4382 = vmatprep.mubr.f32.mxu0 0.0
        %4383 = vmatmul.mubr.f32.gmra.mrb[0].mxu0 %v4248
        %v4384 = vpop.f32.mrb[0].mxu0
        %v4385 = vadd.f32 0.0, %v4384
        %v4386 = vpop.f32.mrb[0].mxu0
        %4387 = vmatprep.mubr.f32.mxu0 0.0
        %4388 = vmatmul.mubr.f32.gmra.mrb[0].mxu0 %v4250
        %v4389 = vpop.f32.mrb[0].mxu0
        %v4390 = vadd.f32 0.0, %v4389
        %v4391 = vpop.f32.mrb[0].mxu0
        %4392 = vmatprep.mubr.f32.mxu0 0.0
        %4393 = vmatmul.mubr.f32.gmra.mrb[0].mxu0 %v4252
        %v4394 = vpop.f32.mrb[0].mxu0
        %v4395 = vadd.f32 0.0, %v4394
        %v4396 = vpop.f32.mrb[0].mxu0
        %4397 = vmatprep.mubr.f32.mxu0 0.0
        %4398 = vmatmul.mubr.f32.gmra.mrb[0].mxu0 %v4254
        %v4399 = vpop.f32.mrb[0].mxu0
        %v4400 = vadd.f32 0.0, %v4399
        %v4401 = vpop.f32.mrb[0].mxu0
        %4402 = vmatprep.mubr.f32.mxu0 0.0
        %4403 = vmatmul.mubr.f32.gmra.mrb[0].mxu0 %v4256
        %v4404 = vpop.f32.mrb[0].mxu0
        %v4405 = vadd.f32 0.0, %v4404
        %v4406 = vpop.f32.mrb[0].mxu0
        %4407 = vmatprep.mubr.f32.mxu0 0.0
        %4408 = vmatmul.mubr.f32.gmra.mrb[0].mxu0 %v4258
        %v4409 = vpop.f32.mrb[0].mxu0
        %v4410 = vadd.f32 0.0, %v4409
        %v4411 = vpop.f32.mrb[0].mxu0
        %4412 = vmatprep.mubr.f32.mxu0 0.0
        %4413 = vmatmul.mubr.f32.gmra.mrb[0].mxu0 %v4260
        %v4414 = vpop.f32.mrb[0].mxu0
        %v4415 = vadd.f32 0.0, %v4414
        %v4416 = vpop.f32.mrb[0].mxu0
        %4417 = vmatprep.mubr.f32.mxu0 0.0
        %4418 = vmatmul.mubr.f32.gmra.mrb[0].mxu0 %v4262
        %v4419 = vpop.f32.mrb[0].mxu0
        %v4420 = vadd.f32 0.0, %v4419
        %v4421 = vpop.f32.mrb[0].mxu0
        %4422 = vmatprep.mubr.f32.mxu0 0.0
        %4423 = vmatmul.mubr.f32.gmra.mrb[0].mxu0 %v4264
        %v4424 = vpop.f32.mrb[0].mxu0
        %v4425 = vadd.f32 0.0, %v4424
        %v4426 = vpop.f32.mrb[0].mxu0
        %4427 = vmatprep.mubr.f32.mxu0 0.0
        %4428 = vmatmul.mubr.f32.gmra.mrb[0].mxu0 %v4266
        %v4429 = vpop.f32.mrb[0].mxu0
        %v4430 = vadd.f32 0.0, %v4429
        %v4431 = vpop.f32.mrb[0].mxu0
        %4432 = vmatprep.mubr.f32.mxu0 0.0
        %4433 = vmatmul.mubr.f32.gmra.mrb[0].mxu0 %v4268
        %v4434 = vpop.f32.mrb[0].mxu0
        %v4435 = vadd.f32 0.0, %v4434
        %v4436 = vpop.f32.mrb[0].mxu0
        %4437 = vmatprep.mubr.f32.mxu0 0.0
        %4438 = vmatmul.mubr.f32.gmra.mrb[0].mxu0 %v4270
        %v4439 = vpop.f32.mrb[0].mxu0
        %v4440 = vadd.f32 0.0, %v4439
        %v4441 = vpop.f32.mrb[0].mxu0
        %4442 = vmatprep.mubr.f32.mxu0 0.0
        %4443 = vmatmul.mubr.f32.gmra.mrb[0].mxu0 %v4272
        %v4444 = vpop.f32.mrb[0].mxu0
        %v4445 = vadd.f32 0.0, %v4444
        %v4446 = vpop.f32.mrb[0].mxu0
        %4447 = vmatprep.mubr.f32.mxu0 0.0
        %4448 = vmatmul.mubr.f32.gmra.mrb[0].mxu0 %v4274
        %v4449 = vpop.f32.mrb[0].mxu0
        %v4450 = vadd.f32 0.0, %v4449
        %v4451 = vpop.f32.mrb[0].mxu0
        %4452 = vmatprep.mubr.f32.mxu0 0.0
        %4453 = vmatmul.mubr.f32.gmra.mrb[0].mxu0 %v4276
        %v4454 = vpop.f32.mrb[0].mxu0
        %v4455 = vadd.f32 0.0, %v4454
        %v4456 = vpop.f32.mrb[0].mxu0
        %4457 = vmatprep.mubr.f32.mxu0 0.0
        %4458 = vmatmul.mubr.f32.gmra.mrb[0].mxu0 %v4278
        %v4459 = vpop.f32.mrb[0].mxu0
        %v4460 = vadd.f32 0.0, %v4459
        %v4461 = vpop.f32.mrb[0].mxu0
        %4462 = vmatprep.mubr.f32.mxu0 0.0
        %4463 = vmatmul.mubr.f32.gmra.mrb[0].mxu0 %v4280
        %v4464 = vpop.f32.mrb[0].mxu0
        %v4465 = vadd.f32 0.0, %v4464
        %v4466 = vpop.f32.mrb[0].mxu0
        %4467 = vmatprep.mubr.f32.mxu0 0.0
        %4468 = vmatmul.mubr.f32.gmra.mrb[0].mxu0 %v4282
        %v4469 = vpop.f32.mrb[0].mxu0
        %v4470 = vadd.f32 0.0, %v4469
        %v4471 = vpop.f32.mrb[0].mxu0
        %4472 = vmatprep.mubr.f32.mxu0 0.0
        %4473 = vmatmul.mubr.f32.gmra.mrb[0].mxu0 %v4284
        %v4474 = vpop.f32.mrb[0].mxu0
        %v4475 = vadd.f32 0.0, %v4474
        %v4476 = vpop.f32.mrb[0].mxu0
        %4477 = vmatprep.mubr.f32.mxu0 0.0
        %4478 = vmatmul.mubr.f32.gmra.mrb[0].mxu0 %v4286
        %v4479 = vpop.f32.mrb[0].mxu0
        %v4480 = vadd.f32 0.0, %v4479
        %v4481 = vpop.f32.mrb[0].mxu0
        %4482 = vmatprep.mubr.f32.mxu0 0.0
        %4483 = vmatmul.mubr.f32.gmra.mrb[0].mxu0 %v4288
        %v4484 = vpop.f32.mrb[0].mxu0
        %v4485 = vadd.f32 0.0, %v4484
        %v4486 = vpop.f32.mrb[0].mxu0
        %4487 = vmatprep.mubr.f32.mxu0 0.0
        %4488 = vmatmul.mubr.f32.gmra.mrb[0].mxu0 %v4290
        %v4489 = vpop.f32.mrb[0].mxu0
        %v4490 = vadd.f32 0.0, %v4489
        %v4491 = vpop.f32.mrb[0].mxu0
        %4492 = vmatprep.mubr.f32.mxu0 0.0
        %4493 = vmatmul.mubr.f32.gmra.mrb[0].mxu0 %v4292
        %v4494 = vpop.f32.mrb[0].mxu0
        %v4495 = vadd.f32 0.0, %v4494
        %v4496 = vpop.f32.mrb[0].mxu0
        %4497 = vmatprep.mubr.f32.mxu0 0.0
        %4498 = vmatmul.mubr.f32.gmra.mrb[0].mxu0 %v4294
        %v4499 = vpop.f32.mrb[0].mxu0
        %v4500 = vadd.f32 0.0, %v4499
        %v4501 = vpop.f32.mrb[0].mxu0
        %4502 = vmatprep.mubr.f32.mxu0 0.0
        %4503 = vmatmul.mubr.f32.gmra.mrb[0].mxu0 %v4296
        %v4504 = vpop.f32.mrb[0].mxu0
        %v4505 = vadd.f32 0.0, %v4504
        %v4506 = vpop.f32.mrb[0].mxu0
        %4507 = vmatprep.mubr.f32.mxu0 0.0
        %4508 = vmatmul.mubr.f32.gmra.mrb[0].mxu0 %v4298
        %v4509 = vpop.f32.mrb[0].mxu0
        %v4510 = vadd.f32 0.0, %v4509
        %v4511 = vpop.f32.mrb[0].mxu0
        %4512 = vmatprep.mubr.f32.mxu0 0.0
        %4513 = vmatmul.mubr.f32.gmra.mrb[0].mxu0 %v4300
        %v4514 = vpop.f32.mrb[0].mxu0
        %v4515 = vadd.f32 0.0, %v4514
        %v4516 = vpop.f32.mrb[0].mxu0
        %4517 = vmatprep.mubr.f32.mxu0 0.0
        %4518 = vmatmul.mubr.f32.gmra.mrb[0].mxu0 %v4302
        %v4519 = vpop.f32.mrb[0].mxu0
        %v4520 = vadd.f32 0.0, %v4519
        %v4521 = vpop.f32.mrb[0].mxu0
        %4522 = vmatprep.mubr.f32.mxu0 0.0
        %4523 = vmatmul.mubr.f32.gmra.mrb[0].mxu0 %v4304
        %v4524 = vpop.f32.mrb[0].mxu0
        %v4525 = vadd.f32 0.0, %v4524
        %v4526 = vpop.f32.mrb[0].mxu0
        %4527 = vmatprep.mubr.f32.mxu0 0.0
        %4528 = vmatmul.mubr.f32.gmra.mrb[0].mxu0 %v4306
        %v4529 = vpop.f32.mrb[0].mxu0
        %v4530 = vadd.f32 0.0, %v4529
        %v4531 = vpop.f32.mrb[0].mxu0
        %4532 = vdwg.mxu0
        %v4533 = vadd.f32 %v4004, %v4375
        %v4534 = vadd.f32 %v4009, %v4380
        %v4535 = vadd.f32 %v4014, %v4385
        %v4536 = vadd.f32 %v4019, %v4390
        %v4537 = vadd.f32 %v4024, %v4395
        %v4538 = vadd.f32 %v4029, %v4400
        %v4539 = vadd.f32 %v4034, %v4405
        %v4540 = vadd.f32 %v4039, %v4410
        %v4541 = vadd.f32 %v4044, %v4415
        %v4542 = vadd.f32 %v4049, %v4420
        %v4543 = vadd.f32 %v4054, %v4425
        %v4544 = vadd.f32 %v4059, %v4430
        %v4545 = vadd.f32 %v4064, %v4435
        %v4546 = vadd.f32 %v4069, %v4440
        %v4547 = vadd.f32 %v4074, %v4445
        %v4548 = vadd.f32 %v4079, %v4450
        %v4549 = vadd.f32 %v4084, %v4455
        %v4550 = vadd.f32 %v4089, %v4460
        %v4551 = vadd.f32 %v4094, %v4465
        %v4552 = vadd.f32 %v4099, %v4470
        %v4553 = vadd.f32 %v4104, %v4475
        %v4554 = vadd.f32 %v4109, %v4480
        %v4555 = vadd.f32 %v4114, %v4485
        %v4556 = vadd.f32 %v4119, %v4490
        %v4557 = vadd.f32 %v4124, %v4495
        %v4558 = vadd.f32 %v4129, %v4500
        %v4559 = vadd.f32 %v4134, %v4505
        %v4560 = vadd.f32 %v4139, %v4510
        %v4561 = vadd.f32 %v4144, %v4515
        %v4562 = vadd.f32 %v4149, %v4520
        %v4563 = vadd.f32 %v4154, %v4525
        %v4564 = vadd.f32 %v4159, %v4530
        %s4565 = scalar_lea.vmem %s4, 24
        %v4566 = vld [vmem:[%s4565] sm:$0xff]
        %v4568 = vsel %vm3308, %v3445, 0
        %v4571 = vsel %vm3308, %v3446, 0
        %4573 = vmatprep.subr.mxu0 0.0
        %4574 = vmatpush1.msra.mxu0 %v4566
        %4575 = vmatprep.subr.mxu0 0.0
        %4576 = vmatpush1.msra.mxu0 0.0
        %4577 = vmatprep.subr.mxu0 0.0
        %4578 = vmatpush1.msra.mxu0 0.0
        %4579 = vmatprep.subr.mxu0 0.0
        %4580 = vmatpush1.msra.mxu0 0.0
        %4581 = vmatprep.subr.mxu0 0.0
        %4582 = vmatpush1.msra.mxu0 0.0
        %4583 = vmatprep.subr.mxu0 0.0
        %4584 = vmatpush1.msra.mxu0 0.0
        %4585 = vmatprep.subr.mxu0 0.0
        %4586 = vmatpush1.msra.mxu0 0.0
        %4587 = vmatprep.subr.mxu0 0.0
        %4588 = vmatpush1.msra.mxu0 0.0
        %4589 = vmatprep.subr.mxu0 0.0
        %4590 = vmatpush1.msra.mxu0 0.0
        %4591 = vmatprep.subr.mxu0 0.0
        %4592 = vmatpush1.msra.mxu0 0.0
        %4593 = vmatprep.subr.mxu0 0.0
        %4594 = vmatpush1.msra.mxu0 0.0
        %4595 = vmatprep.subr.mxu0 0.0
        %4596 = vmatpush1.msra.mxu0 0.0
        %4597 = vmatprep.subr.mxu0 0.0
        %4598 = vmatpush1.msra.mxu0 0.0
        %4599 = vmatprep.subr.mxu0 0.0
        %4600 = vmatpush1.msra.mxu0 0.0
        %4601 = vmatprep.subr.mxu0 0.0
        %4602 = vmatpush1.msra.mxu0 0.0
        %4603 = vmatprep.subr.mxu0 0.0
        %4604 = vmatpush1.msra.mxu0 0.0
        %4605 = vmatprep.subr.mxu0 0.0
        %4606 = vmatpush1.msra.mxu0 0.0
        %4607 = vmatprep.subr.mxu0 0.0
        %4608 = vmatpush1.msra.mxu0 0.0
        %4609 = vmatprep.subr.mxu0 0.0
        %4610 = vmatpush1.msra.mxu0 0.0
        %4611 = vmatprep.subr.mxu0 0.0
        %4612 = vmatpush1.msra.mxu0 0.0
        %4613 = vmatprep.subr.mxu0 0.0
        %4614 = vmatpush1.msra.mxu0 0.0
        %4615 = vmatprep.subr.mxu0 0.0
        %4616 = vmatpush1.msra.mxu0 0.0
        %4617 = vmatprep.subr.mxu0 0.0
        %4618 = vmatpush1.msra.mxu0 0.0
        %4619 = vmatprep.subr.mxu0 0.0
        %4620 = vmatpush1.msra.mxu0 0.0
        %4621 = vmatprep.subr.mxu0 0.0
        %4622 = vmatpush1.msra.mxu0 0.0
        %4623 = vmatprep.subr.mxu0 0.0
        %4624 = vmatpush1.msra.mxu0 0.0
        %4625 = vmatprep.subr.mxu0 0.0
        %4626 = vmatpush1.msra.mxu0 0.0
        %4627 = vmatprep.subr.mxu0 0.0
        %4628 = vmatpush1.msra.mxu0 0.0
        %4629 = vmatprep.subr.mxu0 0.0
        %4630 = vmatpush1.msra.mxu0 0.0
        %4631 = vmatprep.subr.mxu0 0.0
        %4632 = vmatpush1.msra.mxu0 0.0
        %4633 = vmatprep.subr.mxu0 0.0
        %4634 = vmatpush1.msra.mxu0 0.0
        %4635 = vmatprep.subr.mxu0 0.0
        %4636 = vmatpush1.msra.mxu0 0.0
        %4637 = vmatprep.mubr.f32.mxu0 0.0
        %4638 = vmatmul.mubr.f32.gmra.mrb[0].mxu0 %v3877
        %v4639 = vpop.f32.mrb[0].mxu0
        %v4640 = vadd.f32 0.0, %v4639
        %v4641 = vpop.f32.mrb[0].mxu0
        %4642 = vmatprep.mubr.f32.mxu0 0.0
        %4643 = vmatmul.mubr.f32.gmra.mrb[0].mxu0 %v3879
        %v4644 = vpop.f32.mrb[0].mxu0
        %v4645 = vadd.f32 0.0, %v4644
        %v4646 = vpop.f32.mrb[0].mxu0
        %4647 = vmatprep.mubr.f32.mxu0 0.0
        %4648 = vmatmul.mubr.f32.gmra.mrb[0].mxu0 %v3881
        %v4649 = vpop.f32.mrb[0].mxu0
        %v4650 = vadd.f32 0.0, %v4649
        %v4651 = vpop.f32.mrb[0].mxu0
        %4652 = vmatprep.mubr.f32.mxu0 0.0
        %4653 = vmatmul.mubr.f32.gmra.mrb[0].mxu0 %v3883
        %v4654 = vpop.f32.mrb[0].mxu0
        %v4655 = vadd.f32 0.0, %v4654
        %v4656 = vpop.f32.mrb[0].mxu0
        %4657 = vmatprep.mubr.f32.mxu0 0.0
        %4658 = vmatmul.mubr.f32.gmra.mrb[0].mxu0 %v3885
        %v4659 = vpop.f32.mrb[0].mxu0
        %v4660 = vadd.f32 0.0, %v4659
        %v4661 = vpop.f32.mrb[0].mxu0
        %4662 = vmatprep.mubr.f32.mxu0 0.0
        %4663 = vmatmul.mubr.f32.gmra.mrb[0].mxu0 %v3887
        %v4664 = vpop.f32.mrb[0].mxu0
        %v4665 = vadd.f32 0.0, %v4664
        %v4666 = vpop.f32.mrb[0].mxu0
        %4667 = vmatprep.mubr.f32.mxu0 0.0
        %4668 = vmatmul.mubr.f32.gmra.mrb[0].mxu0 %v3889
        %v4669 = vpop.f32.mrb[0].mxu0
        %v4670 = vadd.f32 0.0, %v4669
        %v4671 = vpop.f32.mrb[0].mxu0
        %4672 = vmatprep.mubr.f32.mxu0 0.0
        %4673 = vmatmul.mubr.f32.gmra.mrb[0].mxu0 %v3891
        %v4674 = vpop.f32.mrb[0].mxu0
        %v4675 = vadd.f32 0.0, %v4674
        %v4676 = vpop.f32.mrb[0].mxu0
        %4677 = vmatprep.mubr.f32.mxu0 0.0
        %4678 = vmatmul.mubr.f32.gmra.mrb[0].mxu0 %v3893
        %v4679 = vpop.f32.mrb[0].mxu0
        %v4680 = vadd.f32 0.0, %v4679
        %v4681 = vpop.f32.mrb[0].mxu0
        %4682 = vmatprep.mubr.f32.mxu0 0.0
        %4683 = vmatmul.mubr.f32.gmra.mrb[0].mxu0 %v3895
        %v4684 = vpop.f32.mrb[0].mxu0
        %v4685 = vadd.f32 0.0, %v4684
        %v4686 = vpop.f32.mrb[0].mxu0
        %4687 = vmatprep.mubr.f32.mxu0 0.0
        %4688 = vmatmul.mubr.f32.gmra.mrb[0].mxu0 %v3897
        %v4689 = vpop.f32.mrb[0].mxu0
        %v4690 = vadd.f32 0.0, %v4689
        %v4691 = vpop.f32.mrb[0].mxu0
        %4692 = vmatprep.mubr.f32.mxu0 0.0
        %4693 = vmatmul.mubr.f32.gmra.mrb[0].mxu0 %v3899
        %v4694 = vpop.f32.mrb[0].mxu0
        %v4695 = vadd.f32 0.0, %v4694
        %v4696 = vpop.f32.mrb[0].mxu0
        %4697 = vmatprep.mubr.f32.mxu0 0.0
        %4698 = vmatmul.mubr.f32.gmra.mrb[0].mxu0 %v3901
        %v4699 = vpop.f32.mrb[0].mxu0
        %v4700 = vadd.f32 0.0, %v4699
        %v4701 = vpop.f32.mrb[0].mxu0
        %4702 = vmatprep.mubr.f32.mxu0 0.0
        %4703 = vmatmul.mubr.f32.gmra.mrb[0].mxu0 %v3903
        %v4704 = vpop.f32.mrb[0].mxu0
        %v4705 = vadd.f32 0.0, %v4704
        %v4706 = vpop.f32.mrb[0].mxu0
        %4707 = vmatprep.mubr.f32.mxu0 0.0
        %4708 = vmatmul.mubr.f32.gmra.mrb[0].mxu0 %v3905
        %v4709 = vpop.f32.mrb[0].mxu0
        %v4710 = vadd.f32 0.0, %v4709
        %v4711 = vpop.f32.mrb[0].mxu0
        %4712 = vmatprep.mubr.f32.mxu0 0.0
        %4713 = vmatmul.mubr.f32.gmra.mrb[0].mxu0 %v3907
        %v4714 = vpop.f32.mrb[0].mxu0
        %v4715 = vadd.f32 0.0, %v4714
        %v4716 = vpop.f32.mrb[0].mxu0
        %4717 = vmatprep.mubr.f32.mxu0 0.0
        %4718 = vmatmul.mubr.f32.gmra.mrb[0].mxu0 %v3909
        %v4719 = vpop.f32.mrb[0].mxu0
        %v4720 = vadd.f32 0.0, %v4719
        %v4721 = vpop.f32.mrb[0].mxu0
        %4722 = vmatprep.mubr.f32.mxu0 0.0
        %4723 = vmatmul.mubr.f32.gmra.mrb[0].mxu0 %v3911
        %v4724 = vpop.f32.mrb[0].mxu0
        %v4725 = vadd.f32 0.0, %v4724
        %v4726 = vpop.f32.mrb[0].mxu0
        %4727 = vmatprep.mubr.f32.mxu0 0.0
        %4728 = vmatmul.mubr.f32.gmra.mrb[0].mxu0 %v3913
        %v4729 = vpop.f32.mrb[0].mxu0
        %v4730 = vadd.f32 0.0, %v4729
        %v4731 = vpop.f32.mrb[0].mxu0
        %4732 = vmatprep.mubr.f32.mxu0 0.0
        %4733 = vmatmul.mubr.f32.gmra.mrb[0].mxu0 %v3915
        %v4734 = vpop.f32.mrb[0].mxu0
        %v4735 = vadd.f32 0.0, %v4734
        %v4736 = vpop.f32.mrb[0].mxu0
        %4737 = vmatprep.mubr.f32.mxu0 0.0
        %4738 = vmatmul.mubr.f32.gmra.mrb[0].mxu0 %v3917
        %v4739 = vpop.f32.mrb[0].mxu0
        %v4740 = vadd.f32 0.0, %v4739
        %v4741 = vpop.f32.mrb[0].mxu0
        %4742 = vmatprep.mubr.f32.mxu0 0.0
        %4743 = vmatmul.mubr.f32.gmra.mrb[0].mxu0 %v3919
        %v4744 = vpop.f32.mrb[0].mxu0
        %v4745 = vadd.f32 0.0, %v4744
        %v4746 = vpop.f32.mrb[0].mxu0
        %4747 = vmatprep.mubr.f32.mxu0 0.0
        %4748 = vmatmul.mubr.f32.gmra.mrb[0].mxu0 %v3921
        %v4749 = vpop.f32.mrb[0].mxu0
        %v4750 = vadd.f32 0.0, %v4749
        %v4751 = vpop.f32.mrb[0].mxu0
        %4752 = vmatprep.mubr.f32.mxu0 0.0
        %4753 = vmatmul.mubr.f32.gmra.mrb[0].mxu0 %v3923
        %v4754 = vpop.f32.mrb[0].mxu0
        %v4755 = vadd.f32 0.0, %v4754
        %v4756 = vpop.f32.mrb[0].mxu0
        %4757 = vmatprep.mubr.f32.mxu0 0.0
        %4758 = vmatmul.mubr.f32.gmra.mrb[0].mxu0 %v3925
        %v4759 = vpop.f32.mrb[0].mxu0
        %v4760 = vadd.f32 0.0, %v4759
        %v4761 = vpop.f32.mrb[0].mxu0
        %4762 = vmatprep.mubr.f32.mxu0 0.0
        %4763 = vmatmul.mubr.f32.gmra.mrb[0].mxu0 %v3927
        %v4764 = vpop.f32.mrb[0].mxu0
        %v4765 = vadd.f32 0.0, %v4764
        %v4766 = vpop.f32.mrb[0].mxu0
        %4767 = vmatprep.mubr.f32.mxu0 0.0
        %4768 = vmatmul.mubr.f32.gmra.mrb[0].mxu0 %v3929
        %v4769 = vpop.f32.mrb[0].mxu0
        %v4770 = vadd.f32 0.0, %v4769
        %v4771 = vpop.f32.mrb[0].mxu0
        %4772 = vmatprep.mubr.f32.mxu0 0.0
        %4773 = vmatmul.mubr.f32.gmra.mrb[0].mxu0 %v3931
        %v4774 = vpop.f32.mrb[0].mxu0
        %v4775 = vadd.f32 0.0, %v4774
        %v4776 = vpop.f32.mrb[0].mxu0
        %4777 = vmatprep.mubr.f32.mxu0 0.0
        %4778 = vmatmul.mubr.f32.gmra.mrb[0].mxu0 %v3933
        %v4779 = vpop.f32.mrb[0].mxu0
        %v4780 = vadd.f32 0.0, %v4779
        %v4781 = vpop.f32.mrb[0].mxu0
        %4782 = vmatprep.mubr.f32.mxu0 0.0
        %4783 = vmatmul.mubr.f32.gmra.mrb[0].mxu0 %v3935
        %v4784 = vpop.f32.mrb[0].mxu0
        %v4785 = vadd.f32 0.0, %v4784
        %v4786 = vpop.f32.mrb[0].mxu0
        %4787 = vmatprep.mubr.f32.mxu0 0.0
        %4788 = vmatmul.mubr.f32.gmra.mrb[0].mxu0 %v4568
        %v4789 = vpop.f32.mrb[0].mxu0
        %v4790 = vadd.f32 0.0, %v4789
        %v4791 = vpop.f32.mrb[0].mxu0
        %4792 = vmatprep.mubr.f32.mxu0 0.0
        %4793 = vmatmul.mubr.f32.gmra.mrb[0].mxu0 %v4571
        %v4794 = vpop.f32.mrb[0].mxu0
        %v4795 = vadd.f32 0.0, %v4794
        %v4796 = vpop.f32.mrb[0].mxu0
        %4797 = vdwg.mxu0
        %v4798 = vadd.f32 %v4533, %v4640
        %v4799 = vadd.f32 %v4534, %v4645
        %v4800 = vadd.f32 %v4535, %v4650
        %v4801 = vadd.f32 %v4536, %v4655
        %v4802 = vadd.f32 %v4537, %v4660
        %v4803 = vadd.f32 %v4538, %v4665
        %v4804 = vadd.f32 %v4539, %v4670
        %v4805 = vadd.f32 %v4540, %v4675
        %v4806 = vadd.f32 %v4541, %v4680
        %v4807 = vadd.f32 %v4542, %v4685
        %v4808 = vadd.f32 %v4543, %v4690
        %v4809 = vadd.f32 %v4544, %v4695
        %v4810 = vadd.f32 %v4545, %v4700
        %v4811 = vadd.f32 %v4546, %v4705
        %v4812 = vadd.f32 %v4547, %v4710
        %v4813 = vadd.f32 %v4548, %v4715
        %v4814 = vadd.f32 %v4549, %v4720
        %v4815 = vadd.f32 %v4550, %v4725
        %v4816 = vadd.f32 %v4551, %v4730
        %v4817 = vadd.f32 %v4552, %v4735
        %v4818 = vadd.f32 %v4553, %v4740
        %v4819 = vadd.f32 %v4554, %v4745
        %v4820 = vadd.f32 %v4555, %v4750
        %v4821 = vadd.f32 %v4556, %v4755
        %v4822 = vadd.f32 %v4557, %v4760
        %v4823 = vadd.f32 %v4558, %v4765
        %v4824 = vadd.f32 %v4559, %v4770
        %v4825 = vadd.f32 %v4560, %v4775
        %v4826 = vadd.f32 %v4561, %v4780
        %v4827 = vadd.f32 %v4562, %v4785
        %v4828 = vadd.f32 %v4563, %v4790
        %v4829 = vadd.f32 %v4564, %v4795
        %v4831 = vrot.slane %v3445, 1
        %v4832 = vrot.slane %v3446, 1
        %v4833 = vsel %vm503, %v4831, %v4832
        %v4834 = vrot.slane %v3447, 1
        %v4835 = vsel %vm503, %v4832, %v4834
        %s4836 = scalar_lea.vmem %s4, 32
        %v4837 = vld [vmem:[%s4836] sm:$0xff]
        %v4838 = vsel %vm3308, %v4833, 0
        %v4840 = vsel %vm3308, %v4835, 0
        %4842 = vmatprep.subr.mxu0 0.0
        %4843 = vmatpush1.msra.mxu0 %v4837
        %4844 = vmatprep.subr.mxu0 0.0
        %4845 = vmatpush1.msra.mxu0 0.0
        %4846 = vmatprep.subr.mxu0 0.0
        %4847 = vmatpush1.msra.mxu0 0.0
        %4848 = vmatprep.subr.mxu0 0.0
        %4849 = vmatpush1.msra.mxu0 0.0
        %4850 = vmatprep.subr.mxu0 0.0
        %4851 = vmatpush1.msra.mxu0 0.0
        %4852 = vmatprep.subr.mxu0 0.0
        %4853 = vmatpush1.msra.mxu0 0.0
        %4854 = vmatprep.subr.mxu0 0.0
        %4855 = vmatpush1.msra.mxu0 0.0
        %4856 = vmatprep.subr.mxu0 0.0
        %4857 = vmatpush1.msra.mxu0 0.0
        %4858 = vmatprep.subr.mxu0 0.0
        %4859 = vmatpush1.msra.mxu0 0.0
        %4860 = vmatprep.subr.mxu0 0.0
        %4861 = vmatpush1.msra.mxu0 0.0
        %4862 = vmatprep.subr.mxu0 0.0
        %4863 = vmatpush1.msra.mxu0 0.0
        %4864 = vmatprep.subr.mxu0 0.0
        %4865 = vmatpush1.msra.mxu0 0.0
        %4866 = vmatprep.subr.mxu0 0.0
        %4867 = vmatpush1.msra.mxu0 0.0
        %4868 = vmatprep.subr.mxu0 0.0
        %4869 = vmatpush1.msra.mxu0 0.0
        %4870 = vmatprep.subr.mxu0 0.0
        %4871 = vmatpush1.msra.mxu0 0.0
        %4872 = vmatprep.subr.mxu0 0.0
        %4873 = vmatpush1.msra.mxu0 0.0
        %4874 = vmatprep.subr.mxu0 0.0
        %4875 = vmatpush1.msra.mxu0 0.0
        %4876 = vmatprep.subr.mxu0 0.0
        %4877 = vmatpush1.msra.mxu0 0.0
        %4878 = vmatprep.subr.mxu0 0.0
        %4879 = vmatpush1.msra.mxu0 0.0
        %4880 = vmatprep.subr.mxu0 0.0
        %4881 = vmatpush1.msra.mxu0 0.0
        %4882 = vmatprep.subr.mxu0 0.0
        %4883 = vmatpush1.msra.mxu0 0.0
        %4884 = vmatprep.subr.mxu0 0.0
        %4885 = vmatpush1.msra.mxu0 0.0
        %4886 = vmatprep.subr.mxu0 0.0
        %4887 = vmatpush1.msra.mxu0 0.0
        %4888 = vmatprep.subr.mxu0 0.0
        %4889 = vmatpush1.msra.mxu0 0.0
        %4890 = vmatprep.subr.mxu0 0.0
        %4891 = vmatpush1.msra.mxu0 0.0
        %4892 = vmatprep.subr.mxu0 0.0
        %4893 = vmatpush1.msra.mxu0 0.0
        %4894 = vmatprep.subr.mxu0 0.0
        %4895 = vmatpush1.msra.mxu0 0.0
        %4896 = vmatprep.subr.mxu0 0.0
        %4897 = vmatpush1.msra.mxu0 0.0
        %4898 = vmatprep.subr.mxu0 0.0
        %4899 = vmatpush1.msra.mxu0 0.0
        %4900 = vmatprep.subr.mxu0 0.0
        %4901 = vmatpush1.msra.mxu0 0.0
        %4902 = vmatprep.subr.mxu0 0.0
        %4903 = vmatpush1.msra.mxu0 0.0
        %4904 = vmatprep.subr.mxu0 0.0
        %4905 = vmatpush1.msra.mxu0 0.0
        %4906 = vmatprep.mubr.f32.mxu0 0.0
        %4907 = vmatmul.mubr.f32.gmra.mrb[0].mxu0 %v3588
        %v4908 = vpop.f32.mrb[0].mxu0
        %v4909 = vadd.f32 0.0, %v4908
        %v4910 = vpop.f32.mrb[0].mxu0
        %4911 = vmatprep.mubr.f32.mxu0 0.0
        %4912 = vmatmul.mubr.f32.gmra.mrb[0].mxu0 %v3590
        %v4913 = vpop.f32.mrb[0].mxu0
        %v4914 = vadd.f32 0.0, %v4913
        %v4915 = vpop.f32.mrb[0].mxu0
        %4916 = vmatprep.mubr.f32.mxu0 0.0
        %4917 = vmatmul.mubr.f32.gmra.mrb[0].mxu0 %v3592
        %v4918 = vpop.f32.mrb[0].mxu0
        %v4919 = vadd.f32 0.0, %v4918
        %v4920 = vpop.f32.mrb[0].mxu0
        %4921 = vmatprep.mubr.f32.mxu0 0.0
        %4922 = vmatmul.mubr.f32.gmra.mrb[0].mxu0 %v3594
        %v4923 = vpop.f32.mrb[0].mxu0
        %v4924 = vadd.f32 0.0, %v4923
        %v4925 = vpop.f32.mrb[0].mxu0
        %4926 = vmatprep.mubr.f32.mxu0 0.0
        %4927 = vmatmul.mubr.f32.gmra.mrb[0].mxu0 %v3596
        %v4928 = vpop.f32.mrb[0].mxu0
        %v4929 = vadd.f32 0.0, %v4928
        %v4930 = vpop.f32.mrb[0].mxu0
        %4931 = vmatprep.mubr.f32.mxu0 0.0
        %4932 = vmatmul.mubr.f32.gmra.mrb[0].mxu0 %v3598
        %v4933 = vpop.f32.mrb[0].mxu0
        %v4934 = vadd.f32 0.0, %v4933
        %v4935 = vpop.f32.mrb[0].mxu0
        %4936 = vmatprep.mubr.f32.mxu0 0.0
        %4937 = vmatmul.mubr.f32.gmra.mrb[0].mxu0 %v3600
        %v4938 = vpop.f32.mrb[0].mxu0
        %v4939 = vadd.f32 0.0, %v4938
        %v4940 = vpop.f32.mrb[0].mxu0
        %4941 = vmatprep.mubr.f32.mxu0 0.0
        %4942 = vmatmul.mubr.f32.gmra.mrb[0].mxu0 %v3602
        %v4943 = vpop.f32.mrb[0].mxu0
        %v4944 = vadd.f32 0.0, %v4943
        %v4945 = vpop.f32.mrb[0].mxu0
        %4946 = vmatprep.mubr.f32.mxu0 0.0
        %4947 = vmatmul.mubr.f32.gmra.mrb[0].mxu0 %v3604
        %v4948 = vpop.f32.mrb[0].mxu0
        %v4949 = vadd.f32 0.0, %v4948
        %v4950 = vpop.f32.mrb[0].mxu0
        %4951 = vmatprep.mubr.f32.mxu0 0.0
        %4952 = vmatmul.mubr.f32.gmra.mrb[0].mxu0 %v3606
        %v4953 = vpop.f32.mrb[0].mxu0
        %v4954 = vadd.f32 0.0, %v4953
        %v4955 = vpop.f32.mrb[0].mxu0
        %4956 = vmatprep.mubr.f32.mxu0 0.0
        %4957 = vmatmul.mubr.f32.gmra.mrb[0].mxu0 %v3608
        %v4958 = vpop.f32.mrb[0].mxu0
        %v4959 = vadd.f32 0.0, %v4958
        %v4960 = vpop.f32.mrb[0].mxu0
        %4961 = vmatprep.mubr.f32.mxu0 0.0
        %4962 = vmatmul.mubr.f32.gmra.mrb[0].mxu0 %v3610
        %v4963 = vpop.f32.mrb[0].mxu0
        %v4964 = vadd.f32 0.0, %v4963
        %v4965 = vpop.f32.mrb[0].mxu0
        %4966 = vmatprep.mubr.f32.mxu0 0.0
        %4967 = vmatmul.mubr.f32.gmra.mrb[0].mxu0 %v3612
        %v4968 = vpop.f32.mrb[0].mxu0
        %v4969 = vadd.f32 0.0, %v4968
        %v4970 = vpop.f32.mrb[0].mxu0
        %4971 = vmatprep.mubr.f32.mxu0 0.0
        %4972 = vmatmul.mubr.f32.gmra.mrb[0].mxu0 %v3614
        %v4973 = vpop.f32.mrb[0].mxu0
        %v4974 = vadd.f32 0.0, %v4973
        %v4975 = vpop.f32.mrb[0].mxu0
        %4976 = vmatprep.mubr.f32.mxu0 0.0
        %4977 = vmatmul.mubr.f32.gmra.mrb[0].mxu0 %v3616
        %v4978 = vpop.f32.mrb[0].mxu0
        %v4979 = vadd.f32 0.0, %v4978
        %v4980 = vpop.f32.mrb[0].mxu0
        %4981 = vmatprep.mubr.f32.mxu0 0.0
        %4982 = vmatmul.mubr.f32.gmra.mrb[0].mxu0 %v3618
        %v4983 = vpop.f32.mrb[0].mxu0
        %v4984 = vadd.f32 0.0, %v4983
        %v4985 = vpop.f32.mrb[0].mxu0
        %4986 = vmatprep.mubr.f32.mxu0 0.0
        %4987 = vmatmul.mubr.f32.gmra.mrb[0].mxu0 %v3620
        %v4988 = vpop.f32.mrb[0].mxu0
        %v4989 = vadd.f32 0.0, %v4988
        %v4990 = vpop.f32.mrb[0].mxu0
        %4991 = vmatprep.mubr.f32.mxu0 0.0
        %4992 = vmatmul.mubr.f32.gmra.mrb[0].mxu0 %v3622
        %v4993 = vpop.f32.mrb[0].mxu0
        %v4994 = vadd.f32 0.0, %v4993
        %v4995 = vpop.f32.mrb[0].mxu0
        %4996 = vmatprep.mubr.f32.mxu0 0.0
        %4997 = vmatmul.mubr.f32.gmra.mrb[0].mxu0 %v3624
        %v4998 = vpop.f32.mrb[0].mxu0
        %v4999 = vadd.f32 0.0, %v4998
        %v5000 = vpop.f32.mrb[0].mxu0
        %5001 = vmatprep.mubr.f32.mxu0 0.0
        %5002 = vmatmul.mubr.f32.gmra.mrb[0].mxu0 %v3626
        %v5003 = vpop.f32.mrb[0].mxu0
        %v5004 = vadd.f32 0.0, %v5003
        %v5005 = vpop.f32.mrb[0].mxu0
        %5006 = vmatprep.mubr.f32.mxu0 0.0
        %5007 = vmatmul.mubr.f32.gmra.mrb[0].mxu0 %v3628
        %v5008 = vpop.f32.mrb[0].mxu0
        %v5009 = vadd.f32 0.0, %v5008
        %v5010 = vpop.f32.mrb[0].mxu0
        %5011 = vmatprep.mubr.f32.mxu0 0.0
        %5012 = vmatmul.mubr.f32.gmra.mrb[0].mxu0 %v3630
        %v5013 = vpop.f32.mrb[0].mxu0
        %v5014 = vadd.f32 0.0, %v5013
        %v5015 = vpop.f32.mrb[0].mxu0
        %5016 = vmatprep.mubr.f32.mxu0 0.0
        %5017 = vmatmul.mubr.f32.gmra.mrb[0].mxu0 %v3632
        %v5018 = vpop.f32.mrb[0].mxu0
        %v5019 = vadd.f32 0.0, %v5018
        %v5020 = vpop.f32.mrb[0].mxu0
        %5021 = vmatprep.mubr.f32.mxu0 0.0
        %5022 = vmatmul.mubr.f32.gmra.mrb[0].mxu0 %v3634
        %v5023 = vpop.f32.mrb[0].mxu0
        %v5024 = vadd.f32 0.0, %v5023
        %v5025 = vpop.f32.mrb[0].mxu0
        %5026 = vmatprep.mubr.f32.mxu0 0.0
        %5027 = vmatmul.mubr.f32.gmra.mrb[0].mxu0 %v3636
        %v5028 = vpop.f32.mrb[0].mxu0
        %v5029 = vadd.f32 0.0, %v5028
        %v5030 = vpop.f32.mrb[0].mxu0
        %5031 = vmatprep.mubr.f32.mxu0 0.0
        %5032 = vmatmul.mubr.f32.gmra.mrb[0].mxu0 %v3638
        %v5033 = vpop.f32.mrb[0].mxu0
        %v5034 = vadd.f32 0.0, %v5033
        %v5035 = vpop.f32.mrb[0].mxu0
        %5036 = vmatprep.mubr.f32.mxu0 0.0
        %5037 = vmatmul.mubr.f32.gmra.mrb[0].mxu0 %v3640
        %v5038 = vpop.f32.mrb[0].mxu0
        %v5039 = vadd.f32 0.0, %v5038
        %v5040 = vpop.f32.mrb[0].mxu0
        %5041 = vmatprep.mubr.f32.mxu0 0.0
        %5042 = vmatmul.mubr.f32.gmra.mrb[0].mxu0 %v3642
        %v5043 = vpop.f32.mrb[0].mxu0
        %v5044 = vadd.f32 0.0, %v5043
        %v5045 = vpop.f32.mrb[0].mxu0
        %5046 = vmatprep.mubr.f32.mxu0 0.0
        %5047 = vmatmul.mubr.f32.gmra.mrb[0].mxu0 %v3644
        %v5048 = vpop.f32.mrb[0].mxu0
        %v5049 = vadd.f32 0.0, %v5048
        %v5050 = vpop.f32.mrb[0].mxu0
        %5051 = vmatprep.mubr.f32.mxu0 0.0
        %5052 = vmatmul.mubr.f32.gmra.mrb[0].mxu0 %v3646
        %v5053 = vpop.f32.mrb[0].mxu0
        %v5054 = vadd.f32 0.0, %v5053
        %v5055 = vpop.f32.mrb[0].mxu0
        %5056 = vmatprep.mubr.f32.mxu0 0.0
        %5057 = vmatmul.mubr.f32.gmra.mrb[0].mxu0 %v4838
        %v5058 = vpop.f32.mrb[0].mxu0
        %v5059 = vadd.f32 0.0, %v5058
        %v5060 = vpop.f32.mrb[0].mxu0
        %5061 = vmatprep.mubr.f32.mxu0 0.0
        %5062 = vmatmul.mubr.f32.gmra.mrb[0].mxu0 %v4840
        %v5063 = vpop.f32.mrb[0].mxu0
        %v5064 = vadd.f32 0.0, %v5063
        %v5065 = vpop.f32.mrb[0].mxu0
        %5066 = vdwg.mxu0
        %v5067 = vadd.f32 %v4798, %v4909
        %v5068 = vadd.f32 %v4799, %v4914
        %v5069 = vadd.f32 %v4800, %v4919
        %v5070 = vadd.f32 %v4801, %v4924
        %v5071 = vadd.f32 %v4802, %v4929
        %v5072 = vadd.f32 %v4803, %v4934
        %v5073 = vadd.f32 %v4804, %v4939
        %v5074 = vadd.f32 %v4805, %v4944
        %v5075 = vadd.f32 %v4806, %v4949
        %v5076 = vadd.f32 %v4807, %v4954
        %v5077 = vadd.f32 %v4808, %v4959
        %v5078 = vadd.f32 %v4809, %v4964
        %v5079 = vadd.f32 %v4810, %v4969
        %v5080 = vadd.f32 %v4811, %v4974
        %v5081 = vadd.f32 %v4812, %v4979
        %v5082 = vadd.f32 %v4813, %v4984
        %v5083 = vadd.f32 %v4814, %v4989
        %v5084 = vadd.f32 %v4815, %v4994
        %v5085 = vadd.f32 %v4816, %v4999
        %v5086 = vadd.f32 %v4817, %v5004
        %v5087 = vadd.f32 %v4818, %v5009
        %v5088 = vadd.f32 %v4819, %v5014
        %v5089 = vadd.f32 %v4820, %v5019
        %v5090 = vadd.f32 %v4821, %v5024
        %v5091 = vadd.f32 %v4822, %v5029
        %v5092 = vadd.f32 %v4823, %v5034
        %v5093 = vadd.f32 %v4824, %v5039
        %v5094 = vadd.f32 %v4825, %v5044
        %v5095 = vadd.f32 %v4826, %v5049
        %v5096 = vadd.f32 %v4827, %v5054
        %v5097 = vadd.f32 %v4828, %v5059
        %v5098 = vadd.f32 %v4829, %v5064
        %v5099 = vrot.slane %v3445, 2
        %v5100 = vrot.slane %v3446, 2
        %v5101 = vsel %vm1171, %v5099, %v5100
        %v5102 = vrot.slane %v3447, 2
        %v5103 = vsel %vm1171, %v5100, %v5102
        %s5104 = scalar_lea.vmem %s4, 40
        %v5105 = vld [vmem:[%s5104] sm:$0xff]
        %v5106 = vsel %vm3308, %v5101, 0
        %v5108 = vsel %vm3308, %v5103, 0
        %5110 = vmatprep.subr.mxu0 0.0
        %5111 = vmatpush1.msra.mxu0 %v5105
        %5112 = vmatprep.subr.mxu0 0.0
        %5113 = vmatpush1.msra.mxu0 0.0
        %5114 = vmatprep.subr.mxu0 0.0
        %5115 = vmatpush1.msra.mxu0 0.0
        %5116 = vmatprep.subr.mxu0 0.0
        %5117 = vmatpush1.msra.mxu0 0.0
        %5118 = vmatprep.subr.mxu0 0.0
        %5119 = vmatpush1.msra.mxu0 0.0
        %5120 = vmatprep.subr.mxu0 0.0
        %5121 = vmatpush1.msra.mxu0 0.0
        %5122 = vmatprep.subr.mxu0 0.0
        %5123 = vmatpush1.msra.mxu0 0.0
        %5124 = vmatprep.subr.mxu0 0.0
        %5125 = vmatpush1.msra.mxu0 0.0
        %5126 = vmatprep.subr.mxu0 0.0
        %5127 = vmatpush1.msra.mxu0 0.0
        %5128 = vmatprep.subr.mxu0 0.0
        %5129 = vmatpush1.msra.mxu0 0.0
        %5130 = vmatprep.subr.mxu0 0.0
        %5131 = vmatpush1.msra.mxu0 0.0
        %5132 = vmatprep.subr.mxu0 0.0
        %5133 = vmatpush1.msra.mxu0 0.0
        %5134 = vmatprep.subr.mxu0 0.0
        %5135 = vmatpush1.msra.mxu0 0.0
        %5136 = vmatprep.subr.mxu0 0.0
        %5137 = vmatpush1.msra.mxu0 0.0
        %5138 = vmatprep.subr.mxu0 0.0
        %5139 = vmatpush1.msra.mxu0 0.0
        %5140 = vmatprep.subr.mxu0 0.0
        %5141 = vmatpush1.msra.mxu0 0.0
        %5142 = vmatprep.subr.mxu0 0.0
        %5143 = vmatpush1.msra.mxu0 0.0
        %5144 = vmatprep.subr.mxu0 0.0
        %5145 = vmatpush1.msra.mxu0 0.0
        %5146 = vmatprep.subr.mxu0 0.0
        %5147 = vmatpush1.msra.mxu0 0.0
        %5148 = vmatprep.subr.mxu0 0.0
        %5149 = vmatpush1.msra.mxu0 0.0
        %5150 = vmatprep.subr.mxu0 0.0
        %5151 = vmatpush1.msra.mxu0 0.0
        %5152 = vmatprep.subr.mxu0 0.0
        %5153 = vmatpush1.msra.mxu0 0.0
        %5154 = vmatprep.subr.mxu0 0.0
        %5155 = vmatpush1.msra.mxu0 0.0
        %5156 = vmatprep.subr.mxu0 0.0
        %5157 = vmatpush1.msra.mxu0 0.0
        %5158 = vmatprep.subr.mxu0 0.0
        %5159 = vmatpush1.msra.mxu0 0.0
        %5160 = vmatprep.subr.mxu0 0.0
        %5161 = vmatpush1.msra.mxu0 0.0
        %5162 = vmatprep.subr.mxu0 0.0
        %5163 = vmatpush1.msra.mxu0 0.0
        %5164 = vmatprep.subr.mxu0 0.0
        %5165 = vmatpush1.msra.mxu0 0.0
        %5166 = vmatprep.subr.mxu0 0.0
        %5167 = vmatpush1.msra.mxu0 0.0
        %5168 = vmatprep.subr.mxu0 0.0
        %5169 = vmatpush1.msra.mxu0 0.0
        %5170 = vmatprep.subr.mxu0 0.0
        %5171 = vmatpush1.msra.mxu0 0.0
        %5172 = vmatprep.subr.mxu0 0.0
        %5173 = vmatpush1.msra.mxu0 0.0
        %5174 = vmatprep.mubr.f32.mxu0 0.0
        %5175 = vmatmul.mubr.f32.gmra.mrb[0].mxu0 %v4248
        %v5176 = vpop.f32.mrb[0].mxu0
        %v5177 = vadd.f32 0.0, %v5176
        %v5178 = vpop.f32.mrb[0].mxu0
        %5179 = vmatprep.mubr.f32.mxu0 0.0
        %5180 = vmatmul.mubr.f32.gmra.mrb[0].mxu0 %v4250
        %v5181 = vpop.f32.mrb[0].mxu0
        %v5182 = vadd.f32 0.0, %v5181
        %v5183 = vpop.f32.mrb[0].mxu0
        %5184 = vmatprep.mubr.f32.mxu0 0.0
        %5185 = vmatmul.mubr.f32.gmra.mrb[0].mxu0 %v4252
        %v5186 = vpop.f32.mrb[0].mxu0
        %v5187 = vadd.f32 0.0, %v5186
        %v5188 = vpop.f32.mrb[0].mxu0
        %5189 = vmatprep.mubr.f32.mxu0 0.0
        %5190 = vmatmul.mubr.f32.gmra.mrb[0].mxu0 %v4254
        %v5191 = vpop.f32.mrb[0].mxu0
        %v5192 = vadd.f32 0.0, %v5191
        %v5193 = vpop.f32.mrb[0].mxu0
        %5194 = vmatprep.mubr.f32.mxu0 0.0
        %5195 = vmatmul.mubr.f32.gmra.mrb[0].mxu0 %v4256
        %v5196 = vpop.f32.mrb[0].mxu0
        %v5197 = vadd.f32 0.0, %v5196
        %v5198 = vpop.f32.mrb[0].mxu0
        %5199 = vmatprep.mubr.f32.mxu0 0.0
        %5200 = vmatmul.mubr.f32.gmra.mrb[0].mxu0 %v4258
        %v5201 = vpop.f32.mrb[0].mxu0
        %v5202 = vadd.f32 0.0, %v5201
        %v5203 = vpop.f32.mrb[0].mxu0
        %5204 = vmatprep.mubr.f32.mxu0 0.0
        %5205 = vmatmul.mubr.f32.gmra.mrb[0].mxu0 %v4260
        %v5206 = vpop.f32.mrb[0].mxu0
        %v5207 = vadd.f32 0.0, %v5206
        %v5208 = vpop.f32.mrb[0].mxu0
        %5209 = vmatprep.mubr.f32.mxu0 0.0
        %5210 = vmatmul.mubr.f32.gmra.mrb[0].mxu0 %v4262
        %v5211 = vpop.f32.mrb[0].mxu0
        %v5212 = vadd.f32 0.0, %v5211
        %v5213 = vpop.f32.mrb[0].mxu0
        %5214 = vmatprep.mubr.f32.mxu0 0.0
        %5215 = vmatmul.mubr.f32.gmra.mrb[0].mxu0 %v4264
        %v5216 = vpop.f32.mrb[0].mxu0
        %v5217 = vadd.f32 0.0, %v5216
        %v5218 = vpop.f32.mrb[0].mxu0
        %5219 = vmatprep.mubr.f32.mxu0 0.0
        %5220 = vmatmul.mubr.f32.gmra.mrb[0].mxu0 %v4266
        %v5221 = vpop.f32.mrb[0].mxu0
        %v5222 = vadd.f32 0.0, %v5221
        %v5223 = vpop.f32.mrb[0].mxu0
        %5224 = vmatprep.mubr.f32.mxu0 0.0
        %5225 = vmatmul.mubr.f32.gmra.mrb[0].mxu0 %v4268
        %v5226 = vpop.f32.mrb[0].mxu0
        %v5227 = vadd.f32 0.0, %v5226
        %v5228 = vpop.f32.mrb[0].mxu0
        %5229 = vmatprep.mubr.f32.mxu0 0.0
        %5230 = vmatmul.mubr.f32.gmra.mrb[0].mxu0 %v4270
        %v5231 = vpop.f32.mrb[0].mxu0
        %v5232 = vadd.f32 0.0, %v5231
        %v5233 = vpop.f32.mrb[0].mxu0
        %5234 = vmatprep.mubr.f32.mxu0 0.0
        %5235 = vmatmul.mubr.f32.gmra.mrb[0].mxu0 %v4272
        %v5236 = vpop.f32.mrb[0].mxu0
        %v5237 = vadd.f32 0.0, %v5236
        %v5238 = vpop.f32.mrb[0].mxu0
        %5239 = vmatprep.mubr.f32.mxu0 0.0
        %5240 = vmatmul.mubr.f32.gmra.mrb[0].mxu0 %v4274
        %v5241 = vpop.f32.mrb[0].mxu0
        %v5242 = vadd.f32 0.0, %v5241
        %v5243 = vpop.f32.mrb[0].mxu0
        %5244 = vmatprep.mubr.f32.mxu0 0.0
        %5245 = vmatmul.mubr.f32.gmra.mrb[0].mxu0 %v4276
        %v5246 = vpop.f32.mrb[0].mxu0
        %v5247 = vadd.f32 0.0, %v5246
        %v5248 = vpop.f32.mrb[0].mxu0
        %5249 = vmatprep.mubr.f32.mxu0 0.0
        %5250 = vmatmul.mubr.f32.gmra.mrb[0].mxu0 %v4278
        %v5251 = vpop.f32.mrb[0].mxu0
        %v5252 = vadd.f32 0.0, %v5251
        %v5253 = vpop.f32.mrb[0].mxu0
        %5254 = vmatprep.mubr.f32.mxu0 0.0
        %5255 = vmatmul.mubr.f32.gmra.mrb[0].mxu0 %v4280
        %v5256 = vpop.f32.mrb[0].mxu0
        %v5257 = vadd.f32 0.0, %v5256
        %v5258 = vpop.f32.mrb[0].mxu0
        %5259 = vmatprep.mubr.f32.mxu0 0.0
        %5260 = vmatmul.mubr.f32.gmra.mrb[0].mxu0 %v4282
        %v5261 = vpop.f32.mrb[0].mxu0
        %v5262 = vadd.f32 0.0, %v5261
        %v5263 = vpop.f32.mrb[0].mxu0
        %5264 = vmatprep.mubr.f32.mxu0 0.0
        %5265 = vmatmul.mubr.f32.gmra.mrb[0].mxu0 %v4284
        %v5266 = vpop.f32.mrb[0].mxu0
        %v5267 = vadd.f32 0.0, %v5266
        %v5268 = vpop.f32.mrb[0].mxu0
        %5269 = vmatprep.mubr.f32.mxu0 0.0
        %5270 = vmatmul.mubr.f32.gmra.mrb[0].mxu0 %v4286
        %v5271 = vpop.f32.mrb[0].mxu0
        %v5272 = vadd.f32 0.0, %v5271
        %v5273 = vpop.f32.mrb[0].mxu0
        %5274 = vmatprep.mubr.f32.mxu0 0.0
        %5275 = vmatmul.mubr.f32.gmra.mrb[0].mxu0 %v4288
        %v5276 = vpop.f32.mrb[0].mxu0
        %v5277 = vadd.f32 0.0, %v5276
        %v5278 = vpop.f32.mrb[0].mxu0
        %5279 = vmatprep.mubr.f32.mxu0 0.0
        %5280 = vmatmul.mubr.f32.gmra.mrb[0].mxu0 %v4290
        %v5281 = vpop.f32.mrb[0].mxu0
        %v5282 = vadd.f32 0.0, %v5281
        %v5283 = vpop.f32.mrb[0].mxu0
        %5284 = vmatprep.mubr.f32.mxu0 0.0
        %5285 = vmatmul.mubr.f32.gmra.mrb[0].mxu0 %v4292
        %v5286 = vpop.f32.mrb[0].mxu0
        %v5287 = vadd.f32 0.0, %v5286
        %v5288 = vpop.f32.mrb[0].mxu0
        %5289 = vmatprep.mubr.f32.mxu0 0.0
        %5290 = vmatmul.mubr.f32.gmra.mrb[0].mxu0 %v4294
        %v5291 = vpop.f32.mrb[0].mxu0
        %v5292 = vadd.f32 0.0, %v5291
        %v5293 = vpop.f32.mrb[0].mxu0
        %5294 = vmatprep.mubr.f32.mxu0 0.0
        %5295 = vmatmul.mubr.f32.gmra.mrb[0].mxu0 %v4296
        %v5296 = vpop.f32.mrb[0].mxu0
        %v5297 = vadd.f32 0.0, %v5296
        %v5298 = vpop.f32.mrb[0].mxu0
        %5299 = vmatprep.mubr.f32.mxu0 0.0
        %5300 = vmatmul.mubr.f32.gmra.mrb[0].mxu0 %v4298
        %v5301 = vpop.f32.mrb[0].mxu0
        %v5302 = vadd.f32 0.0, %v5301
        %v5303 = vpop.f32.mrb[0].mxu0
        %5304 = vmatprep.mubr.f32.mxu0 0.0
        %5305 = vmatmul.mubr.f32.gmra.mrb[0].mxu0 %v4300
        %v5306 = vpop.f32.mrb[0].mxu0
        %v5307 = vadd.f32 0.0, %v5306
        %v5308 = vpop.f32.mrb[0].mxu0
        %5309 = vmatprep.mubr.f32.mxu0 0.0
        %5310 = vmatmul.mubr.f32.gmra.mrb[0].mxu0 %v4302
        %v5311 = vpop.f32.mrb[0].mxu0
        %v5312 = vadd.f32 0.0, %v5311
        %v5313 = vpop.f32.mrb[0].mxu0
        %5314 = vmatprep.mubr.f32.mxu0 0.0
        %5315 = vmatmul.mubr.f32.gmra.mrb[0].mxu0 %v4304
        %v5316 = vpop.f32.mrb[0].mxu0
        %v5317 = vadd.f32 0.0, %v5316
        %v5318 = vpop.f32.mrb[0].mxu0
        %5319 = vmatprep.mubr.f32.mxu0 0.0
        %5320 = vmatmul.mubr.f32.gmra.mrb[0].mxu0 %v4306
        %v5321 = vpop.f32.mrb[0].mxu0
        %v5322 = vadd.f32 0.0, %v5321
        %v5323 = vpop.f32.mrb[0].mxu0
        %5324 = vmatprep.mubr.f32.mxu0 0.0
        %5325 = vmatmul.mubr.f32.gmra.mrb[0].mxu0 %v5106
        %v5326 = vpop.f32.mrb[0].mxu0
        %v5327 = vadd.f32 0.0, %v5326
        %v5328 = vpop.f32.mrb[0].mxu0
        %5329 = vmatprep.mubr.f32.mxu0 0.0
        %5330 = vmatmul.mubr.f32.gmra.mrb[0].mxu0 %v5108
        %v5331 = vpop.f32.mrb[0].mxu0
        %v5332 = vadd.f32 0.0, %v5331
        %v5333 = vpop.f32.mrb[0].mxu0
        %5334 = vdwg.mxu0
        %v5335 = vadd.f32 %v5067, %v5177
        %v5336 = vadd.f32 %v5068, %v5182
        %v5337 = vadd.f32 %v5069, %v5187
        %v5338 = vadd.f32 %v5070, %v5192
        %v5339 = vadd.f32 %v5071, %v5197
        %v5340 = vadd.f32 %v5072, %v5202
        %v5341 = vadd.f32 %v5073, %v5207
        %v5342 = vadd.f32 %v5074, %v5212
        %v5343 = vadd.f32 %v5075, %v5217
        %v5344 = vadd.f32 %v5076, %v5222
        %v5345 = vadd.f32 %v5077, %v5227
        %v5346 = vadd.f32 %v5078, %v5232
        %v5347 = vadd.f32 %v5079, %v5237
        %v5348 = vadd.f32 %v5080, %v5242
        %v5349 = vadd.f32 %v5081, %v5247
        %v5350 = vadd.f32 %v5082, %v5252
        %v5351 = vadd.f32 %v5083, %v5257
        %v5352 = vadd.f32 %v5084, %v5262
        %v5353 = vadd.f32 %v5085, %v5267
        %v5354 = vadd.f32 %v5086, %v5272
        %v5355 = vadd.f32 %v5087, %v5277
        %v5356 = vadd.f32 %v5088, %v5282
        %v5357 = vadd.f32 %v5089, %v5287
        %v5358 = vadd.f32 %v5090, %v5292
        %v5359 = vadd.f32 %v5091, %v5297
        %v5360 = vadd.f32 %v5092, %v5302
        %v5361 = vadd.f32 %v5093, %v5307
        %v5362 = vadd.f32 %v5094, %v5312
        %v5363 = vadd.f32 %v5095, %v5317
        %v5364 = vadd.f32 %v5096, %v5322
        %v5365 = vadd.f32 %v5097, %v5327
        %v5366 = vadd.f32 %v5098, %v5332
        %s5367 = scalar_lea.vmem %s4, 48
        %v5368 = vld [vmem:[%s5367] sm:$0xff]
        %v5370 = vsel %vm3308, %v3448, 0
        %v5373 = vsel %vm3308, %v3449, 0
        %5375 = vmatprep.subr.mxu0 0.0
        %5376 = vmatpush1.msra.mxu0 %v5368
        %5377 = vmatprep.subr.mxu0 0.0
        %5378 = vmatpush1.msra.mxu0 0.0
        %5379 = vmatprep.subr.mxu0 0.0
        %5380 = vmatpush1.msra.mxu0 0.0
        %5381 = vmatprep.subr.mxu0 0.0
        %5382 = vmatpush1.msra.mxu0 0.0
        %5383 = vmatprep.subr.mxu0 0.0
        %5384 = vmatpush1.msra.mxu0 0.0
        %5385 = vmatprep.subr.mxu0 0.0
        %5386 = vmatpush1.msra.mxu0 0.0
        %5387 = vmatprep.subr.mxu0 0.0
        %5388 = vmatpush1.msra.mxu0 0.0
        %5389 = vmatprep.subr.mxu0 0.0
        %5390 = vmatpush1.msra.mxu0 0.0
        %5391 = vmatprep.subr.mxu0 0.0
        %5392 = vmatpush1.msra.mxu0 0.0
        %5393 = vmatprep.subr.mxu0 0.0
        %5394 = vmatpush1.msra.mxu0 0.0
        %5395 = vmatprep.subr.mxu0 0.0
        %5396 = vmatpush1.msra.mxu0 0.0
        %5397 = vmatprep.subr.mxu0 0.0
        %5398 = vmatpush1.msra.mxu0 0.0
        %5399 = vmatprep.subr.mxu0 0.0
        %5400 = vmatpush1.msra.mxu0 0.0
        %5401 = vmatprep.subr.mxu0 0.0
        %5402 = vmatpush1.msra.mxu0 0.0
        %5403 = vmatprep.subr.mxu0 0.0
        %5404 = vmatpush1.msra.mxu0 0.0
        %5405 = vmatprep.subr.mxu0 0.0
        %5406 = vmatpush1.msra.mxu0 0.0
        %5407 = vmatprep.subr.mxu0 0.0
        %5408 = vmatpush1.msra.mxu0 0.0
        %5409 = vmatprep.subr.mxu0 0.0
        %5410 = vmatpush1.msra.mxu0 0.0
        %5411 = vmatprep.subr.mxu0 0.0
        %5412 = vmatpush1.msra.mxu0 0.0
        %5413 = vmatprep.subr.mxu0 0.0
        %5414 = vmatpush1.msra.mxu0 0.0
        %5415 = vmatprep.subr.mxu0 0.0
        %5416 = vmatpush1.msra.mxu0 0.0
        %5417 = vmatprep.subr.mxu0 0.0
        %5418 = vmatpush1.msra.mxu0 0.0
        %5419 = vmatprep.subr.mxu0 0.0
        %5420 = vmatpush1.msra.mxu0 0.0
        %5421 = vmatprep.subr.mxu0 0.0
        %5422 = vmatpush1.msra.mxu0 0.0
        %5423 = vmatprep.subr.mxu0 0.0
        %5424 = vmatpush1.msra.mxu0 0.0
        %5425 = vmatprep.subr.mxu0 0.0
        %5426 = vmatpush1.msra.mxu0 0.0
        %5427 = vmatprep.subr.mxu0 0.0
        %5428 = vmatpush1.msra.mxu0 0.0
        %5429 = vmatprep.subr.mxu0 0.0
        %5430 = vmatpush1.msra.mxu0 0.0
        %5431 = vmatprep.subr.mxu0 0.0
        %5432 = vmatpush1.msra.mxu0 0.0
        %5433 = vmatprep.subr.mxu0 0.0
        %5434 = vmatpush1.msra.mxu0 0.0
        %5435 = vmatprep.subr.mxu0 0.0
        %5436 = vmatpush1.msra.mxu0 0.0
        %5437 = vmatprep.subr.mxu0 0.0
        %5438 = vmatpush1.msra.mxu0 0.0
        %5439 = vmatprep.mubr.f32.mxu0 0.0
        %5440 = vmatmul.mubr.f32.gmra.mrb[0].mxu0 %v3881
        %v5441 = vpop.f32.mrb[0].mxu0
        %v5442 = vadd.f32 0.0, %v5441
        %v5443 = vpop.f32.mrb[0].mxu0
        %5444 = vmatprep.mubr.f32.mxu0 0.0
        %5445 = vmatmul.mubr.f32.gmra.mrb[0].mxu0 %v3883
        %v5446 = vpop.f32.mrb[0].mxu0
        %v5447 = vadd.f32 0.0, %v5446
        %v5448 = vpop.f32.mrb[0].mxu0
        %5449 = vmatprep.mubr.f32.mxu0 0.0
        %5450 = vmatmul.mubr.f32.gmra.mrb[0].mxu0 %v3885
        %v5451 = vpop.f32.mrb[0].mxu0
        %v5452 = vadd.f32 0.0, %v5451
        %v5453 = vpop.f32.mrb[0].mxu0
        %5454 = vmatprep.mubr.f32.mxu0 0.0
        %5455 = vmatmul.mubr.f32.gmra.mrb[0].mxu0 %v3887
        %v5456 = vpop.f32.mrb[0].mxu0
        %v5457 = vadd.f32 0.0, %v5456
        %v5458 = vpop.f32.mrb[0].mxu0
        %5459 = vmatprep.mubr.f32.mxu0 0.0
        %5460 = vmatmul.mubr.f32.gmra.mrb[0].mxu0 %v3889
        %v5461 = vpop.f32.mrb[0].mxu0
        %v5462 = vadd.f32 0.0, %v5461
        %v5463 = vpop.f32.mrb[0].mxu0
        %5464 = vmatprep.mubr.f32.mxu0 0.0
        %5465 = vmatmul.mubr.f32.gmra.mrb[0].mxu0 %v3891
        %v5466 = vpop.f32.mrb[0].mxu0
        %v5467 = vadd.f32 0.0, %v5466
        %v5468 = vpop.f32.mrb[0].mxu0
        %5469 = vmatprep.mubr.f32.mxu0 0.0
        %5470 = vmatmul.mubr.f32.gmra.mrb[0].mxu0 %v3893
        %v5471 = vpop.f32.mrb[0].mxu0
        %v5472 = vadd.f32 0.0, %v5471
        %v5473 = vpop.f32.mrb[0].mxu0
        %5474 = vmatprep.mubr.f32.mxu0 0.0
        %5475 = vmatmul.mubr.f32.gmra.mrb[0].mxu0 %v3895
        %v5476 = vpop.f32.mrb[0].mxu0
        %v5477 = vadd.f32 0.0, %v5476
        %v5478 = vpop.f32.mrb[0].mxu0
        %5479 = vmatprep.mubr.f32.mxu0 0.0
        %5480 = vmatmul.mubr.f32.gmra.mrb[0].mxu0 %v3897
        %v5481 = vpop.f32.mrb[0].mxu0
        %v5482 = vadd.f32 0.0, %v5481
        %v5483 = vpop.f32.mrb[0].mxu0
        %5484 = vmatprep.mubr.f32.mxu0 0.0
        %5485 = vmatmul.mubr.f32.gmra.mrb[0].mxu0 %v3899
        %v5486 = vpop.f32.mrb[0].mxu0
        %v5487 = vadd.f32 0.0, %v5486
        %v5488 = vpop.f32.mrb[0].mxu0
        %5489 = vmatprep.mubr.f32.mxu0 0.0
        %5490 = vmatmul.mubr.f32.gmra.mrb[0].mxu0 %v3901
        %v5491 = vpop.f32.mrb[0].mxu0
        %v5492 = vadd.f32 0.0, %v5491
        %v5493 = vpop.f32.mrb[0].mxu0
        %5494 = vmatprep.mubr.f32.mxu0 0.0
        %5495 = vmatmul.mubr.f32.gmra.mrb[0].mxu0 %v3903
        %v5496 = vpop.f32.mrb[0].mxu0
        %v5497 = vadd.f32 0.0, %v5496
        %v5498 = vpop.f32.mrb[0].mxu0
        %5499 = vmatprep.mubr.f32.mxu0 0.0
        %5500 = vmatmul.mubr.f32.gmra.mrb[0].mxu0 %v3905
        %v5501 = vpop.f32.mrb[0].mxu0
        %v5502 = vadd.f32 0.0, %v5501
        %v5503 = vpop.f32.mrb[0].mxu0
        %5504 = vmatprep.mubr.f32.mxu0 0.0
        %5505 = vmatmul.mubr.f32.gmra.mrb[0].mxu0 %v3907
        %v5506 = vpop.f32.mrb[0].mxu0
        %v5507 = vadd.f32 0.0, %v5506
        %v5508 = vpop.f32.mrb[0].mxu0
        %5509 = vmatprep.mubr.f32.mxu0 0.0
        %5510 = vmatmul.mubr.f32.gmra.mrb[0].mxu0 %v3909
        %v5511 = vpop.f32.mrb[0].mxu0
        %v5512 = vadd.f32 0.0, %v5511
        %v5513 = vpop.f32.mrb[0].mxu0
        %5514 = vmatprep.mubr.f32.mxu0 0.0
        %5515 = vmatmul.mubr.f32.gmra.mrb[0].mxu0 %v3911
        %v5516 = vpop.f32.mrb[0].mxu0
        %v5517 = vadd.f32 0.0, %v5516
        %v5518 = vpop.f32.mrb[0].mxu0
        %5519 = vmatprep.mubr.f32.mxu0 0.0
        %5520 = vmatmul.mubr.f32.gmra.mrb[0].mxu0 %v3913
        %v5521 = vpop.f32.mrb[0].mxu0
        %v5522 = vadd.f32 0.0, %v5521
        %v5523 = vpop.f32.mrb[0].mxu0
        %5524 = vmatprep.mubr.f32.mxu0 0.0
        %5525 = vmatmul.mubr.f32.gmra.mrb[0].mxu0 %v3915
        %v5526 = vpop.f32.mrb[0].mxu0
        %v5527 = vadd.f32 0.0, %v5526
        %v5528 = vpop.f32.mrb[0].mxu0
        %5529 = vmatprep.mubr.f32.mxu0 0.0
        %5530 = vmatmul.mubr.f32.gmra.mrb[0].mxu0 %v3917
        %v5531 = vpop.f32.mrb[0].mxu0
        %v5532 = vadd.f32 0.0, %v5531
        %v5533 = vpop.f32.mrb[0].mxu0
        %5534 = vmatprep.mubr.f32.mxu0 0.0
        %5535 = vmatmul.mubr.f32.gmra.mrb[0].mxu0 %v3919
        %v5536 = vpop.f32.mrb[0].mxu0
        %v5537 = vadd.f32 0.0, %v5536
        %v5538 = vpop.f32.mrb[0].mxu0
        %5539 = vmatprep.mubr.f32.mxu0 0.0
        %5540 = vmatmul.mubr.f32.gmra.mrb[0].mxu0 %v3921
        %v5541 = vpop.f32.mrb[0].mxu0
        %v5542 = vadd.f32 0.0, %v5541
        %v5543 = vpop.f32.mrb[0].mxu0
        %5544 = vmatprep.mubr.f32.mxu0 0.0
        %5545 = vmatmul.mubr.f32.gmra.mrb[0].mxu0 %v3923
        %v5546 = vpop.f32.mrb[0].mxu0
        %v5547 = vadd.f32 0.0, %v5546
        %v5548 = vpop.f32.mrb[0].mxu0
        %5549 = vmatprep.mubr.f32.mxu0 0.0
        %5550 = vmatmul.mubr.f32.gmra.mrb[0].mxu0 %v3925
        %v5551 = vpop.f32.mrb[0].mxu0
        %v5552 = vadd.f32 0.0, %v5551
        %v5553 = vpop.f32.mrb[0].mxu0
        %5554 = vmatprep.mubr.f32.mxu0 0.0
        %5555 = vmatmul.mubr.f32.gmra.mrb[0].mxu0 %v3927
        %v5556 = vpop.f32.mrb[0].mxu0
        %v5557 = vadd.f32 0.0, %v5556
        %v5558 = vpop.f32.mrb[0].mxu0
        %5559 = vmatprep.mubr.f32.mxu0 0.0
        %5560 = vmatmul.mubr.f32.gmra.mrb[0].mxu0 %v3929
        %v5561 = vpop.f32.mrb[0].mxu0
        %v5562 = vadd.f32 0.0, %v5561
        %v5563 = vpop.f32.mrb[0].mxu0
        %5564 = vmatprep.mubr.f32.mxu0 0.0
        %5565 = vmatmul.mubr.f32.gmra.mrb[0].mxu0 %v3931
        %v5566 = vpop.f32.mrb[0].mxu0
        %v5567 = vadd.f32 0.0, %v5566
        %v5568 = vpop.f32.mrb[0].mxu0
        %5569 = vmatprep.mubr.f32.mxu0 0.0
        %5570 = vmatmul.mubr.f32.gmra.mrb[0].mxu0 %v3933
        %v5571 = vpop.f32.mrb[0].mxu0
        %v5572 = vadd.f32 0.0, %v5571
        %v5573 = vpop.f32.mrb[0].mxu0
        %5574 = vmatprep.mubr.f32.mxu0 0.0
        %5575 = vmatmul.mubr.f32.gmra.mrb[0].mxu0 %v3935
        %v5576 = vpop.f32.mrb[0].mxu0
        %v5577 = vadd.f32 0.0, %v5576
        %v5578 = vpop.f32.mrb[0].mxu0
        %5579 = vmatprep.mubr.f32.mxu0 0.0
        %5580 = vmatmul.mubr.f32.gmra.mrb[0].mxu0 %v4568
        %v5581 = vpop.f32.mrb[0].mxu0
        %v5582 = vadd.f32 0.0, %v5581
        %v5583 = vpop.f32.mrb[0].mxu0
        %5584 = vmatprep.mubr.f32.mxu0 0.0
        %5585 = vmatmul.mubr.f32.gmra.mrb[0].mxu0 %v4571
        %v5586 = vpop.f32.mrb[0].mxu0
        %v5587 = vadd.f32 0.0, %v5586
        %v5588 = vpop.f32.mrb[0].mxu0
        %5589 = vmatprep.mubr.f32.mxu0 0.0
        %5590 = vmatmul.mubr.f32.gmra.mrb[0].mxu0 %v5370
        %v5591 = vpop.f32.mrb[0].mxu0
        %v5592 = vadd.f32 0.0, %v5591
        %v5593 = vpop.f32.mrb[0].mxu0
        %5594 = vmatprep.mubr.f32.mxu0 0.0
        %5595 = vmatmul.mubr.f32.gmra.mrb[0].mxu0 %v5373
        %v5596 = vpop.f32.mrb[0].mxu0
        %v5597 = vadd.f32 0.0, %v5596
        %v5598 = vpop.f32.mrb[0].mxu0
        %5599 = vdwg.mxu0
        %v5600 = vadd.f32 %v5335, %v5442
        %v5601 = vadd.f32 %v5336, %v5447
        %v5602 = vadd.f32 %v5337, %v5452
        %v5603 = vadd.f32 %v5338, %v5457
        %v5604 = vadd.f32 %v5339, %v5462
        %v5605 = vadd.f32 %v5340, %v5467
        %v5606 = vadd.f32 %v5341, %v5472
        %v5607 = vadd.f32 %v5342, %v5477
        %v5608 = vadd.f32 %v5343, %v5482
        %v5609 = vadd.f32 %v5344, %v5487
        %v5610 = vadd.f32 %v5345, %v5492
        %v5611 = vadd.f32 %v5346, %v5497
        %v5612 = vadd.f32 %v5347, %v5502
        %v5613 = vadd.f32 %v5348, %v5507
        %v5614 = vadd.f32 %v5349, %v5512
        %v5615 = vadd.f32 %v5350, %v5517
        %v5616 = vadd.f32 %v5351, %v5522
        %v5617 = vadd.f32 %v5352, %v5527
        %v5618 = vadd.f32 %v5353, %v5532
        %v5619 = vadd.f32 %v5354, %v5537
        %v5620 = vadd.f32 %v5355, %v5542
        %v5621 = vadd.f32 %v5356, %v5547
        %v5622 = vadd.f32 %v5357, %v5552
        %v5623 = vadd.f32 %v5358, %v5557
        %v5624 = vadd.f32 %v5359, %v5562
        %v5625 = vadd.f32 %v5360, %v5567
        %v5626 = vadd.f32 %v5361, %v5572
        %v5627 = vadd.f32 %v5362, %v5577
        %v5628 = vadd.f32 %v5363, %v5582
        %v5629 = vadd.f32 %v5364, %v5587
        %v5630 = vadd.f32 %v5365, %v5592
        %v5631 = vadd.f32 %v5366, %v5597
        %v5633 = vrot.slane %v3448, 1
        %v5634 = vrot.slane %v3449, 1
        %v5635 = vsel %vm503, %v5633, %v5634
        %v5636 = vrot.slane %v3450, 1
        %v5637 = vsel %vm503, %v5634, %v5636
        %s5638 = scalar_lea.vmem %s4, 56
        %v5639 = vld [vmem:[%s5638] sm:$0xff]
        %v5640 = vsel %vm3308, %v5635, 0
        %v5642 = vsel %vm3308, %v5637, 0
        %5644 = vmatprep.subr.mxu0 0.0
        %5645 = vmatpush1.msra.mxu0 %v5639
        %5646 = vmatprep.subr.mxu0 0.0
        %5647 = vmatpush1.msra.mxu0 0.0
        %5648 = vmatprep.subr.mxu0 0.0
        %5649 = vmatpush1.msra.mxu0 0.0
        %5650 = vmatprep.subr.mxu0 0.0
        %5651 = vmatpush1.msra.mxu0 0.0
        %5652 = vmatprep.subr.mxu0 0.0
        %5653 = vmatpush1.msra.mxu0 0.0
        %5654 = vmatprep.subr.mxu0 0.0
        %5655 = vmatpush1.msra.mxu0 0.0
        %5656 = vmatprep.subr.mxu0 0.0
        %5657 = vmatpush1.msra.mxu0 0.0
        %5658 = vmatprep.subr.mxu0 0.0
        %5659 = vmatpush1.msra.mxu0 0.0
        %5660 = vmatprep.subr.mxu0 0.0
        %5661 = vmatpush1.msra.mxu0 0.0
        %5662 = vmatprep.subr.mxu0 0.0
        %5663 = vmatpush1.msra.mxu0 0.0
        %5664 = vmatprep.subr.mxu0 0.0
        %5665 = vmatpush1.msra.mxu0 0.0
        %5666 = vmatprep.subr.mxu0 0.0
        %5667 = vmatpush1.msra.mxu0 0.0
        %5668 = vmatprep.subr.mxu0 0.0
        %5669 = vmatpush1.msra.mxu0 0.0
        %5670 = vmatprep.subr.mxu0 0.0
        %5671 = vmatpush1.msra.mxu0 0.0
        %5672 = vmatprep.subr.mxu0 0.0
        %5673 = vmatpush1.msra.mxu0 0.0
        %5674 = vmatprep.subr.mxu0 0.0
        %5675 = vmatpush1.msra.mxu0 0.0
        %5676 = vmatprep.subr.mxu0 0.0
        %5677 = vmatpush1.msra.mxu0 0.0
        %5678 = vmatprep.subr.mxu0 0.0
        %5679 = vmatpush1.msra.mxu0 0.0
        %5680 = vmatprep.subr.mxu0 0.0
        %5681 = vmatpush1.msra.mxu0 0.0
        %5682 = vmatprep.subr.mxu0 0.0
        %5683 = vmatpush1.msra.mxu0 0.0
        %5684 = vmatprep.subr.mxu0 0.0
        %5685 = vmatpush1.msra.mxu0 0.0
        %5686 = vmatprep.subr.mxu0 0.0
        %5687 = vmatpush1.msra.mxu0 0.0
        %5688 = vmatprep.subr.mxu0 0.0
        %5689 = vmatpush1.msra.mxu0 0.0
        %5690 = vmatprep.subr.mxu0 0.0
        %5691 = vmatpush1.msra.mxu0 0.0
        %5692 = vmatprep.subr.mxu0 0.0
        %5693 = vmatpush1.msra.mxu0 0.0
        %5694 = vmatprep.subr.mxu0 0.0
        %5695 = vmatpush1.msra.mxu0 0.0
        %5696 = vmatprep.subr.mxu0 0.0
        %5697 = vmatpush1.msra.mxu0 0.0
        %5698 = vmatprep.subr.mxu0 0.0
        %5699 = vmatpush1.msra.mxu0 0.0
        %5700 = vmatprep.subr.mxu0 0.0
        %5701 = vmatpush1.msra.mxu0 0.0
        %5702 = vmatprep.subr.mxu0 0.0
        %5703 = vmatpush1.msra.mxu0 0.0
        %5704 = vmatprep.subr.mxu0 0.0
        %5705 = vmatpush1.msra.mxu0 0.0
        %5706 = vmatprep.subr.mxu0 0.0
        %5707 = vmatpush1.msra.mxu0 0.0
        %5708 = vmatprep.mubr.f32.mxu0 0.0
        %5709 = vmatmul.mubr.f32.gmra.mrb[0].mxu0 %v3592
        %v5710 = vpop.f32.mrb[0].mxu0
        %v5711 = vadd.f32 0.0, %v5710
        %v5712 = vpop.f32.mrb[0].mxu0
        %5713 = vmatprep.mubr.f32.mxu0 0.0
        %5714 = vmatmul.mubr.f32.gmra.mrb[0].mxu0 %v3594
        %v5715 = vpop.f32.mrb[0].mxu0
        %v5716 = vadd.f32 0.0, %v5715
        %v5717 = vpop.f32.mrb[0].mxu0
        %5718 = vmatprep.mubr.f32.mxu0 0.0
        %5719 = vmatmul.mubr.f32.gmra.mrb[0].mxu0 %v3596
        %v5720 = vpop.f32.mrb[0].mxu0
        %v5721 = vadd.f32 0.0, %v5720
        %v5722 = vpop.f32.mrb[0].mxu0
        %5723 = vmatprep.mubr.f32.mxu0 0.0
        %5724 = vmatmul.mubr.f32.gmra.mrb[0].mxu0 %v3598
        %v5725 = vpop.f32.mrb[0].mxu0
        %v5726 = vadd.f32 0.0, %v5725
        %v5727 = vpop.f32.mrb[0].mxu0
        %5728 = vmatprep.mubr.f32.mxu0 0.0
        %5729 = vmatmul.mubr.f32.gmra.mrb[0].mxu0 %v3600
        %v5730 = vpop.f32.mrb[0].mxu0
        %v5731 = vadd.f32 0.0, %v5730
        %v5732 = vpop.f32.mrb[0].mxu0
        %5733 = vmatprep.mubr.f32.mxu0 0.0
        %5734 = vmatmul.mubr.f32.gmra.mrb[0].mxu0 %v3602
        %v5735 = vpop.f32.mrb[0].mxu0
        %v5736 = vadd.f32 0.0, %v5735
        %v5737 = vpop.f32.mrb[0].mxu0
        %5738 = vmatprep.mubr.f32.mxu0 0.0
        %5739 = vmatmul.mubr.f32.gmra.mrb[0].mxu0 %v3604
        %v5740 = vpop.f32.mrb[0].mxu0
        %v5741 = vadd.f32 0.0, %v5740
        %v5742 = vpop.f32.mrb[0].mxu0
        %5743 = vmatprep.mubr.f32.mxu0 0.0
        %5744 = vmatmul.mubr.f32.gmra.mrb[0].mxu0 %v3606
        %v5745 = vpop.f32.mrb[0].mxu0
        %v5746 = vadd.f32 0.0, %v5745
        %v5747 = vpop.f32.mrb[0].mxu0
        %5748 = vmatprep.mubr.f32.mxu0 0.0
        %5749 = vmatmul.mubr.f32.gmra.mrb[0].mxu0 %v3608
        %v5750 = vpop.f32.mrb[0].mxu0
        %v5751 = vadd.f32 0.0, %v5750
        %v5752 = vpop.f32.mrb[0].mxu0
        %5753 = vmatprep.mubr.f32.mxu0 0.0
        %5754 = vmatmul.mubr.f32.gmra.mrb[0].mxu0 %v3610
        %v5755 = vpop.f32.mrb[0].mxu0
        %v5756 = vadd.f32 0.0, %v5755
        %v5757 = vpop.f32.mrb[0].mxu0
        %5758 = vmatprep.mubr.f32.mxu0 0.0
        %5759 = vmatmul.mubr.f32.gmra.mrb[0].mxu0 %v3612
        %v5760 = vpop.f32.mrb[0].mxu0
        %v5761 = vadd.f32 0.0, %v5760
        %v5762 = vpop.f32.mrb[0].mxu0
        %5763 = vmatprep.mubr.f32.mxu0 0.0
        %5764 = vmatmul.mubr.f32.gmra.mrb[0].mxu0 %v3614
        %v5765 = vpop.f32.mrb[0].mxu0
        %v5766 = vadd.f32 0.0, %v5765
        %v5767 = vpop.f32.mrb[0].mxu0
        %5768 = vmatprep.mubr.f32.mxu0 0.0
        %5769 = vmatmul.mubr.f32.gmra.mrb[0].mxu0 %v3616
        %v5770 = vpop.f32.mrb[0].mxu0
        %v5771 = vadd.f32 0.0, %v5770
        %v5772 = vpop.f32.mrb[0].mxu0
        %5773 = vmatprep.mubr.f32.mxu0 0.0
        %5774 = vmatmul.mubr.f32.gmra.mrb[0].mxu0 %v3618
        %v5775 = vpop.f32.mrb[0].mxu0
        %v5776 = vadd.f32 0.0, %v5775
        %v5777 = vpop.f32.mrb[0].mxu0
        %5778 = vmatprep.mubr.f32.mxu0 0.0
        %5779 = vmatmul.mubr.f32.gmra.mrb[0].mxu0 %v3620
        %v5780 = vpop.f32.mrb[0].mxu0
        %v5781 = vadd.f32 0.0, %v5780
        %v5782 = vpop.f32.mrb[0].mxu0
        %5783 = vmatprep.mubr.f32.mxu0 0.0
        %5784 = vmatmul.mubr.f32.gmra.mrb[0].mxu0 %v3622
        %v5785 = vpop.f32.mrb[0].mxu0
        %v5786 = vadd.f32 0.0, %v5785
        %v5787 = vpop.f32.mrb[0].mxu0
        %5788 = vmatprep.mubr.f32.mxu0 0.0
        %5789 = vmatmul.mubr.f32.gmra.mrb[0].mxu0 %v3624
        %v5790 = vpop.f32.mrb[0].mxu0
        %v5791 = vadd.f32 0.0, %v5790
        %v5792 = vpop.f32.mrb[0].mxu0
        %5793 = vmatprep.mubr.f32.mxu0 0.0
        %5794 = vmatmul.mubr.f32.gmra.mrb[0].mxu0 %v3626
        %v5795 = vpop.f32.mrb[0].mxu0
        %v5796 = vadd.f32 0.0, %v5795
        %v5797 = vpop.f32.mrb[0].mxu0
        %5798 = vmatprep.mubr.f32.mxu0 0.0
        %5799 = vmatmul.mubr.f32.gmra.mrb[0].mxu0 %v3628
        %v5800 = vpop.f32.mrb[0].mxu0
        %v5801 = vadd.f32 0.0, %v5800
        %v5802 = vpop.f32.mrb[0].mxu0
        %5803 = vmatprep.mubr.f32.mxu0 0.0
        %5804 = vmatmul.mubr.f32.gmra.mrb[0].mxu0 %v3630
        %v5805 = vpop.f32.mrb[0].mxu0
        %v5806 = vadd.f32 0.0, %v5805
        %v5807 = vpop.f32.mrb[0].mxu0
        %5808 = vmatprep.mubr.f32.mxu0 0.0
        %5809 = vmatmul.mubr.f32.gmra.mrb[0].mxu0 %v3632
        %v5810 = vpop.f32.mrb[0].mxu0
        %v5811 = vadd.f32 0.0, %v5810
        %v5812 = vpop.f32.mrb[0].mxu0
        %5813 = vmatprep.mubr.f32.mxu0 0.0
        %5814 = vmatmul.mubr.f32.gmra.mrb[0].mxu0 %v3634
        %v5815 = vpop.f32.mrb[0].mxu0
        %v5816 = vadd.f32 0.0, %v5815
        %v5817 = vpop.f32.mrb[0].mxu0
        %5818 = vmatprep.mubr.f32.mxu0 0.0
        %5819 = vmatmul.mubr.f32.gmra.mrb[0].mxu0 %v3636
        %v5820 = vpop.f32.mrb[0].mxu0
        %v5821 = vadd.f32 0.0, %v5820
        %v5822 = vpop.f32.mrb[0].mxu0
        %5823 = vmatprep.mubr.f32.mxu0 0.0
        %5824 = vmatmul.mubr.f32.gmra.mrb[0].mxu0 %v3638
        %v5825 = vpop.f32.mrb[0].mxu0
        %v5826 = vadd.f32 0.0, %v5825
        %v5827 = vpop.f32.mrb[0].mxu0
        %5828 = vmatprep.mubr.f32.mxu0 0.0
        %5829 = vmatmul.mubr.f32.gmra.mrb[0].mxu0 %v3640
        %v5830 = vpop.f32.mrb[0].mxu0
        %v5831 = vadd.f32 0.0, %v5830
        %v5832 = vpop.f32.mrb[0].mxu0
        %5833 = vmatprep.mubr.f32.mxu0 0.0
        %5834 = vmatmul.mubr.f32.gmra.mrb[0].mxu0 %v3642
        %v5835 = vpop.f32.mrb[0].mxu0
        %v5836 = vadd.f32 0.0, %v5835
        %v5837 = vpop.f32.mrb[0].mxu0
        %5838 = vmatprep.mubr.f32.mxu0 0.0
        %5839 = vmatmul.mubr.f32.gmra.mrb[0].mxu0 %v3644
        %v5840 = vpop.f32.mrb[0].mxu0
        %v5841 = vadd.f32 0.0, %v5840
        %v5842 = vpop.f32.mrb[0].mxu0
        %5843 = vmatprep.mubr.f32.mxu0 0.0
        %5844 = vmatmul.mubr.f32.gmra.mrb[0].mxu0 %v3646
        %v5845 = vpop.f32.mrb[0].mxu0
        %v5846 = vadd.f32 0.0, %v5845
        %v5847 = vpop.f32.mrb[0].mxu0
        %5848 = vmatprep.mubr.f32.mxu0 0.0
        %5849 = vmatmul.mubr.f32.gmra.mrb[0].mxu0 %v4838
        %v5850 = vpop.f32.mrb[0].mxu0
        %v5851 = vadd.f32 0.0, %v5850
        %v5852 = vpop.f32.mrb[0].mxu0
        %5853 = vmatprep.mubr.f32.mxu0 0.0
        %5854 = vmatmul.mubr.f32.gmra.mrb[0].mxu0 %v4840
        %v5855 = vpop.f32.mrb[0].mxu0
        %v5856 = vadd.f32 0.0, %v5855
        %v5857 = vpop.f32.mrb[0].mxu0
        %5858 = vmatprep.mubr.f32.mxu0 0.0
        %5859 = vmatmul.mubr.f32.gmra.mrb[0].mxu0 %v5640
        %v5860 = vpop.f32.mrb[0].mxu0
        %v5861 = vadd.f32 0.0, %v5860
        %v5862 = vpop.f32.mrb[0].mxu0
        %5863 = vmatprep.mubr.f32.mxu0 0.0
        %5864 = vmatmul.mubr.f32.gmra.mrb[0].mxu0 %v5642
        %v5865 = vpop.f32.mrb[0].mxu0
        %v5866 = vadd.f32 0.0, %v5865
        %v5867 = vpop.f32.mrb[0].mxu0
        %5868 = vdwg.mxu0
        %v5869 = vadd.f32 %v5600, %v5711
        %v5870 = vadd.f32 %v5601, %v5716
        %v5871 = vadd.f32 %v5602, %v5721
        %v5872 = vadd.f32 %v5603, %v5726
        %v5873 = vadd.f32 %v5604, %v5731
        %v5874 = vadd.f32 %v5605, %v5736
        %v5875 = vadd.f32 %v5606, %v5741
        %v5876 = vadd.f32 %v5607, %v5746
        %v5877 = vadd.f32 %v5608, %v5751
        %v5878 = vadd.f32 %v5609, %v5756
        %v5879 = vadd.f32 %v5610, %v5761
        %v5880 = vadd.f32 %v5611, %v5766
        %v5881 = vadd.f32 %v5612, %v5771
        %v5882 = vadd.f32 %v5613, %v5776
        %v5883 = vadd.f32 %v5614, %v5781
        %v5884 = vadd.f32 %v5615, %v5786
        %v5885 = vadd.f32 %v5616, %v5791
        %v5886 = vadd.f32 %v5617, %v5796
        %v5887 = vadd.f32 %v5618, %v5801
        %v5888 = vadd.f32 %v5619, %v5806
        %v5889 = vadd.f32 %v5620, %v5811
        %v5890 = vadd.f32 %v5621, %v5816
        %v5891 = vadd.f32 %v5622, %v5821
        %v5892 = vadd.f32 %v5623, %v5826
        %v5893 = vadd.f32 %v5624, %v5831
        %v5894 = vadd.f32 %v5625, %v5836
        %v5895 = vadd.f32 %v5626, %v5841
        %v5896 = vadd.f32 %v5627, %v5846
        %v5897 = vadd.f32 %v5628, %v5851
        %v5898 = vadd.f32 %v5629, %v5856
        %v5899 = vadd.f32 %v5630, %v5861
        %v5900 = vadd.f32 %v5631, %v5866
        %v5901 = vrot.slane %v3448, 2
        %v5902 = vrot.slane %v3449, 2
        %v5903 = vsel %vm1171, %v5901, %v5902
        %v5904 = vrot.slane %v3450, 2
        %v5905 = vsel %vm1171, %v5902, %v5904
        %s5906 = scalar_lea.vmem %s4, 64
        %v5907 = vld [vmem:[%s5906] sm:$0xff]
        %v5908 = vsel %vm3308, %v5903, 0
        %v5910 = vsel %vm3308, %v5905, 0
        %5912 = vmatprep.subr.mxu0 0.0
        %5913 = vmatpush1.msra.mxu0 %v5907
        %5914 = vmatprep.subr.mxu0 0.0
        %5915 = vmatpush1.msra.mxu0 0.0
        %5916 = vmatprep.subr.mxu0 0.0
        %5917 = vmatpush1.msra.mxu0 0.0
        %5918 = vmatprep.subr.mxu0 0.0
        %5919 = vmatpush1.msra.mxu0 0.0
        %5920 = vmatprep.subr.mxu0 0.0
        %5921 = vmatpush1.msra.mxu0 0.0
        %5922 = vmatprep.subr.mxu0 0.0
        %5923 = vmatpush1.msra.mxu0 0.0
        %5924 = vmatprep.subr.mxu0 0.0
        %5925 = vmatpush1.msra.mxu0 0.0
        %5926 = vmatprep.subr.mxu0 0.0
        %5927 = vmatpush1.msra.mxu0 0.0
        %5928 = vmatprep.subr.mxu0 0.0
        %5929 = vmatpush1.msra.mxu0 0.0
        %5930 = vmatprep.subr.mxu0 0.0
        %5931 = vmatpush1.msra.mxu0 0.0
        %5932 = vmatprep.subr.mxu0 0.0
        %5933 = vmatpush1.msra.mxu0 0.0
        %5934 = vmatprep.subr.mxu0 0.0
        %5935 = vmatpush1.msra.mxu0 0.0
        %5936 = vmatprep.subr.mxu0 0.0
        %5937 = vmatpush1.msra.mxu0 0.0
        %5938 = vmatprep.subr.mxu0 0.0
        %5939 = vmatpush1.msra.mxu0 0.0
        %5940 = vmatprep.subr.mxu0 0.0
        %5941 = vmatpush1.msra.mxu0 0.0
        %5942 = vmatprep.subr.mxu0 0.0
        %5943 = vmatpush1.msra.mxu0 0.0
        %5944 = vmatprep.subr.mxu0 0.0
        %5945 = vmatpush1.msra.mxu0 0.0
        %5946 = vmatprep.subr.mxu0 0.0
        %5947 = vmatpush1.msra.mxu0 0.0
        %5948 = vmatprep.subr.mxu0 0.0
        %5949 = vmatpush1.msra.mxu0 0.0
        %5950 = vmatprep.subr.mxu0 0.0
        %5951 = vmatpush1.msra.mxu0 0.0
        %5952 = vmatprep.subr.mxu0 0.0
        %5953 = vmatpush1.msra.mxu0 0.0
        %5954 = vmatprep.subr.mxu0 0.0
        %5955 = vmatpush1.msra.mxu0 0.0
        %5956 = vmatprep.subr.mxu0 0.0
        %5957 = vmatpush1.msra.mxu0 0.0
        %5958 = vmatprep.subr.mxu0 0.0
        %5959 = vmatpush1.msra.mxu0 0.0
        %5960 = vmatprep.subr.mxu0 0.0
        %5961 = vmatpush1.msra.mxu0 0.0
        %5962 = vmatprep.subr.mxu0 0.0
        %5963 = vmatpush1.msra.mxu0 0.0
        %5964 = vmatprep.subr.mxu0 0.0
        %5965 = vmatpush1.msra.mxu0 0.0
        %5966 = vmatprep.subr.mxu0 0.0
        %5967 = vmatpush1.msra.mxu0 0.0
        %5968 = vmatprep.subr.mxu0 0.0
        %5969 = vmatpush1.msra.mxu0 0.0
        %5970 = vmatprep.subr.mxu0 0.0
        %5971 = vmatpush1.msra.mxu0 0.0
        %5972 = vmatprep.subr.mxu0 0.0
        %5973 = vmatpush1.msra.mxu0 0.0
        %5974 = vmatprep.subr.mxu0 0.0
        %5975 = vmatpush1.msra.mxu0 0.0
        %5976 = vmatprep.mubr.f32.mxu0 0.0
        %5977 = vmatmul.mubr.f32.gmra.mrb[0].mxu0 %v4252
        %v5978 = vpop.f32.mrb[0].mxu0
        %v5979 = vadd.f32 0.0, %v5978
        %v5980 = vpop.f32.mrb[0].mxu0
        %5981 = vmatprep.mubr.f32.mxu0 0.0
        %5982 = vmatmul.mubr.f32.gmra.mrb[0].mxu0 %v4254
        %v5983 = vpop.f32.mrb[0].mxu0
        %v5984 = vadd.f32 0.0, %v5983
        %v5985 = vpop.f32.mrb[0].mxu0
        %5986 = vmatprep.mubr.f32.mxu0 0.0
        %5987 = vmatmul.mubr.f32.gmra.mrb[0].mxu0 %v4256
        %v5988 = vpop.f32.mrb[0].mxu0
        %v5989 = vadd.f32 0.0, %v5988
        %v5990 = vpop.f32.mrb[0].mxu0
        %5991 = vmatprep.mubr.f32.mxu0 0.0
        %5992 = vmatmul.mubr.f32.gmra.mrb[0].mxu0 %v4258
        %v5993 = vpop.f32.mrb[0].mxu0
        %v5994 = vadd.f32 0.0, %v5993
        %v5995 = vpop.f32.mrb[0].mxu0
        %5996 = vmatprep.mubr.f32.mxu0 0.0
        %5997 = vmatmul.mubr.f32.gmra.mrb[0].mxu0 %v4260
        %v5998 = vpop.f32.mrb[0].mxu0
        %v5999 = vadd.f32 0.0, %v5998
        %v6000 = vpop.f32.mrb[0].mxu0
        %6001 = vmatprep.mubr.f32.mxu0 0.0
        %6002 = vmatmul.mubr.f32.gmra.mrb[0].mxu0 %v4262
        %v6003 = vpop.f32.mrb[0].mxu0
        %v6004 = vadd.f32 0.0, %v6003
        %v6005 = vpop.f32.mrb[0].mxu0
        %6006 = vmatprep.mubr.f32.mxu0 0.0
        %6007 = vmatmul.mubr.f32.gmra.mrb[0].mxu0 %v4264
        %v6008 = vpop.f32.mrb[0].mxu0
        %v6009 = vadd.f32 0.0, %v6008
        %v6010 = vpop.f32.mrb[0].mxu0
        %6011 = vmatprep.mubr.f32.mxu0 0.0
        %6012 = vmatmul.mubr.f32.gmra.mrb[0].mxu0 %v4266
        %v6013 = vpop.f32.mrb[0].mxu0
        %v6014 = vadd.f32 0.0, %v6013
        %v6015 = vpop.f32.mrb[0].mxu0
        %6016 = vmatprep.mubr.f32.mxu0 0.0
        %6017 = vmatmul.mubr.f32.gmra.mrb[0].mxu0 %v4268
        %v6018 = vpop.f32.mrb[0].mxu0
        %v6019 = vadd.f32 0.0, %v6018
        %v6020 = vpop.f32.mrb[0].mxu0
        %6021 = vmatprep.mubr.f32.mxu0 0.0
        %6022 = vmatmul.mubr.f32.gmra.mrb[0].mxu0 %v4270
        %v6023 = vpop.f32.mrb[0].mxu0
        %v6024 = vadd.f32 0.0, %v6023
        %v6025 = vpop.f32.mrb[0].mxu0
        %6026 = vmatprep.mubr.f32.mxu0 0.0
        %6027 = vmatmul.mubr.f32.gmra.mrb[0].mxu0 %v4272
        %v6028 = vpop.f32.mrb[0].mxu0
        %v6029 = vadd.f32 0.0, %v6028
        %v6030 = vpop.f32.mrb[0].mxu0
        %6031 = vmatprep.mubr.f32.mxu0 0.0
        %6032 = vmatmul.mubr.f32.gmra.mrb[0].mxu0 %v4274
        %v6033 = vpop.f32.mrb[0].mxu0
        %v6034 = vadd.f32 0.0, %v6033
        %v6035 = vpop.f32.mrb[0].mxu0
        %6036 = vmatprep.mubr.f32.mxu0 0.0
        %6037 = vmatmul.mubr.f32.gmra.mrb[0].mxu0 %v4276
        %v6038 = vpop.f32.mrb[0].mxu0
        %v6039 = vadd.f32 0.0, %v6038
        %v6040 = vpop.f32.mrb[0].mxu0
        %6041 = vmatprep.mubr.f32.mxu0 0.0
        %6042 = vmatmul.mubr.f32.gmra.mrb[0].mxu0 %v4278
        %v6043 = vpop.f32.mrb[0].mxu0
        %v6044 = vadd.f32 0.0, %v6043
        %v6045 = vpop.f32.mrb[0].mxu0
        %6046 = vmatprep.mubr.f32.mxu0 0.0
        %6047 = vmatmul.mubr.f32.gmra.mrb[0].mxu0 %v4280
        %v6048 = vpop.f32.mrb[0].mxu0
        %v6049 = vadd.f32 0.0, %v6048
        %v6050 = vpop.f32.mrb[0].mxu0
        %6051 = vmatprep.mubr.f32.mxu0 0.0
        %6052 = vmatmul.mubr.f32.gmra.mrb[0].mxu0 %v4282
        %v6053 = vpop.f32.mrb[0].mxu0
        %v6054 = vadd.f32 0.0, %v6053
        %v6055 = vpop.f32.mrb[0].mxu0
        %6056 = vmatprep.mubr.f32.mxu0 0.0
        %6057 = vmatmul.mubr.f32.gmra.mrb[0].mxu0 %v4284
        %v6058 = vpop.f32.mrb[0].mxu0
        %v6059 = vadd.f32 0.0, %v6058
        %v6060 = vpop.f32.mrb[0].mxu0
        %6061 = vmatprep.mubr.f32.mxu0 0.0
        %6062 = vmatmul.mubr.f32.gmra.mrb[0].mxu0 %v4286
        %v6063 = vpop.f32.mrb[0].mxu0
        %v6064 = vadd.f32 0.0, %v6063
        %v6065 = vpop.f32.mrb[0].mxu0
        %6066 = vmatprep.mubr.f32.mxu0 0.0
        %6067 = vmatmul.mubr.f32.gmra.mrb[0].mxu0 %v4288
        %v6068 = vpop.f32.mrb[0].mxu0
        %v6069 = vadd.f32 0.0, %v6068
        %v6070 = vpop.f32.mrb[0].mxu0
        %6071 = vmatprep.mubr.f32.mxu0 0.0
        %6072 = vmatmul.mubr.f32.gmra.mrb[0].mxu0 %v4290
        %v6073 = vpop.f32.mrb[0].mxu0
        %v6074 = vadd.f32 0.0, %v6073
        %v6075 = vpop.f32.mrb[0].mxu0
        %6076 = vmatprep.mubr.f32.mxu0 0.0
        %6077 = vmatmul.mubr.f32.gmra.mrb[0].mxu0 %v4292
        %v6078 = vpop.f32.mrb[0].mxu0
        %v6079 = vadd.f32 0.0, %v6078
        %v6080 = vpop.f32.mrb[0].mxu0
        %6081 = vmatprep.mubr.f32.mxu0 0.0
        %6082 = vmatmul.mubr.f32.gmra.mrb[0].mxu0 %v4294
        %v6083 = vpop.f32.mrb[0].mxu0
        %v6084 = vadd.f32 0.0, %v6083
        %v6085 = vpop.f32.mrb[0].mxu0
        %6086 = vmatprep.mubr.f32.mxu0 0.0
        %6087 = vmatmul.mubr.f32.gmra.mrb[0].mxu0 %v4296
        %v6088 = vpop.f32.mrb[0].mxu0
        %v6089 = vadd.f32 0.0, %v6088
        %v6090 = vpop.f32.mrb[0].mxu0
        %6091 = vmatprep.mubr.f32.mxu0 0.0
        %6092 = vmatmul.mubr.f32.gmra.mrb[0].mxu0 %v4298
        %v6093 = vpop.f32.mrb[0].mxu0
        %v6094 = vadd.f32 0.0, %v6093
        %v6095 = vpop.f32.mrb[0].mxu0
        %6096 = vmatprep.mubr.f32.mxu0 0.0
        %6097 = vmatmul.mubr.f32.gmra.mrb[0].mxu0 %v4300
        %v6098 = vpop.f32.mrb[0].mxu0
        %v6099 = vadd.f32 0.0, %v6098
        %v6100 = vpop.f32.mrb[0].mxu0
        %6101 = vmatprep.mubr.f32.mxu0 0.0
        %6102 = vmatmul.mubr.f32.gmra.mrb[0].mxu0 %v4302
        %v6103 = vpop.f32.mrb[0].mxu0
        %v6104 = vadd.f32 0.0, %v6103
        %v6105 = vpop.f32.mrb[0].mxu0
        %6106 = vmatprep.mubr.f32.mxu0 0.0
        %6107 = vmatmul.mubr.f32.gmra.mrb[0].mxu0 %v4304
        %v6108 = vpop.f32.mrb[0].mxu0
        %v6109 = vadd.f32 0.0, %v6108
        %v6110 = vpop.f32.mrb[0].mxu0
        %6111 = vmatprep.mubr.f32.mxu0 0.0
        %6112 = vmatmul.mubr.f32.gmra.mrb[0].mxu0 %v4306
        %v6113 = vpop.f32.mrb[0].mxu0
        %v6114 = vadd.f32 0.0, %v6113
        %v6115 = vpop.f32.mrb[0].mxu0
        %6116 = vmatprep.mubr.f32.mxu0 0.0
        %6117 = vmatmul.mubr.f32.gmra.mrb[0].mxu0 %v5106
        %v6118 = vpop.f32.mrb[0].mxu0
        %v6119 = vadd.f32 0.0, %v6118
        %v6120 = vpop.f32.mrb[0].mxu0
        %6121 = vmatprep.mubr.f32.mxu0 0.0
        %6122 = vmatmul.mubr.f32.gmra.mrb[0].mxu0 %v5108
        %v6123 = vpop.f32.mrb[0].mxu0
        %v6124 = vadd.f32 0.0, %v6123
        %v6125 = vpop.f32.mrb[0].mxu0
        %6126 = vmatprep.mubr.f32.mxu0 0.0
        %6127 = vmatmul.mubr.f32.gmra.mrb[0].mxu0 %v5908
        %v6128 = vpop.f32.mrb[0].mxu0
        %v6129 = vadd.f32 0.0, %v6128
        %v6130 = vpop.f32.mrb[0].mxu0
        %6131 = vmatprep.mubr.f32.mxu0 0.0
        %6132 = vmatmul.mubr.f32.gmra.mrb[0].mxu0 %v5910
        %v6133 = vpop.f32.mrb[0].mxu0
        %v6134 = vadd.f32 0.0, %v6133
        %v6135 = vpop.f32.mrb[0].mxu0
        %6136 = vdwg.mxu0
        %v6137 = vadd.f32 %v5869, %v5979
        %v6138 = vadd.f32 %v5870, %v5984
        %v6139 = vadd.f32 %v5871, %v5989
        %v6140 = vadd.f32 %v5872, %v5994
        %v6141 = vadd.f32 %v5873, %v5999
        %v6142 = vadd.f32 %v5874, %v6004
        %v6143 = vadd.f32 %v5875, %v6009
        %v6144 = vadd.f32 %v5876, %v6014
        %v6145 = vadd.f32 %v5877, %v6019
        %v6146 = vadd.f32 %v5878, %v6024
        %v6147 = vadd.f32 %v5879, %v6029
        %v6148 = vadd.f32 %v5880, %v6034
        %v6149 = vadd.f32 %v5881, %v6039
        %v6150 = vadd.f32 %v5882, %v6044
        %v6151 = vadd.f32 %v5883, %v6049
        %v6152 = vadd.f32 %v5884, %v6054
        %v6153 = vadd.f32 %v5885, %v6059
        %v6154 = vadd.f32 %v5886, %v6064
        %v6155 = vadd.f32 %v5887, %v6069
        %v6156 = vadd.f32 %v5888, %v6074
        %v6157 = vadd.f32 %v5889, %v6079
        %v6158 = vadd.f32 %v5890, %v6084
        %v6159 = vadd.f32 %v5891, %v6089
        %v6160 = vadd.f32 %v5892, %v6094
        %v6161 = vadd.f32 %v5893, %v6099
        %v6162 = vadd.f32 %v5894, %v6104
        %v6163 = vadd.f32 %v5895, %v6109
        %v6164 = vadd.f32 %v5896, %v6114
        %v6165 = vadd.f32 %v5897, %v6119
        %v6166 = vadd.f32 %v5898, %v6124
        %v6167 = vadd.f32 %v5899, %v6129
        %v6168 = vadd.f32 %v5900, %v6134
        %v6170 = vlaneseq
        %v6171 = vshrl.u32 %v6170, 7
        %v6172 = vsub.s32 0, %v6171
        %v6173 = vrot.slane %v3451, %v6172
        %v6175 = vmul.f32 %v6137, %v6173
        %v6176 = vmul.f32 %v6138, %v6173
        %v6177 = vmul.f32 %v6139, %v6173
        %v6178 = vmul.f32 %v6140, %v6173
        %v6179 = vmul.f32 %v6141, %v6173
        %v6180 = vmul.f32 %v6142, %v6173
        %v6181 = vmul.f32 %v6143, %v6173
        %v6182 = vmul.f32 %v6144, %v6173
        %v6183 = vmul.f32 %v6145, %v6173
        %v6184 = vmul.f32 %v6146, %v6173
        %v6185 = vmul.f32 %v6147, %v6173
        %v6186 = vmul.f32 %v6148, %v6173
        %v6187 = vmul.f32 %v6149, %v6173
        %v6188 = vmul.f32 %v6150, %v6173
        %v6189 = vmul.f32 %v6151, %v6173
        %v6190 = vmul.f32 %v6152, %v6173
        %v6191 = vmul.f32 %v6153, %v6173
        %v6192 = vmul.f32 %v6154, %v6173
        %v6193 = vmul.f32 %v6155, %v6173
        %v6194 = vmul.f32 %v6156, %v6173
        %v6195 = vmul.f32 %v6157, %v6173
        %v6196 = vmul.f32 %v6158, %v6173
        %v6197 = vmul.f32 %v6159, %v6173
        %v6198 = vmul.f32 %v6160, %v6173
        %v6199 = vmul.f32 %v6161, %v6173
        %v6200 = vmul.f32 %v6162, %v6173
        %v6201 = vmul.f32 %v6163, %v6173
        %v6202 = vmul.f32 %v6164, %v6173
        %v6203 = vmul.f32 %v6165, %v6173
        %v6204 = vmul.f32 %v6166, %v6173
        %v6205 = vmul.f32 %v6167, %v6173
        %v6206 = vmul.f32 %v6168, %v6173
        %v6208 = vlaneseq
        %v6209 = vshrl.u32 %v6208, 7
        %v6210 = vsub.s32 0, %v6209
        %v6211 = vrot.slane %v3452, %v6210
        %v6213 = vadd.f32 %v6175, %v6211
        %v6214 = vadd.f32 %v6176, %v6211
        %v6215 = vadd.f32 %v6177, %v6211
        %v6216 = vadd.f32 %v6178, %v6211
        %v6217 = vadd.f32 %v6179, %v6211
        %v6218 = vadd.f32 %v6180, %v6211
        %v6219 = vadd.f32 %v6181, %v6211
        %v6220 = vadd.f32 %v6182, %v6211
        %v6221 = vadd.f32 %v6183, %v6211
        %v6222 = vadd.f32 %v6184, %v6211
        %v6223 = vadd.f32 %v6185, %v6211
        %v6224 = vadd.f32 %v6186, %v6211
        %v6225 = vadd.f32 %v6187, %v6211
        %v6226 = vadd.f32 %v6188, %v6211
        %v6227 = vadd.f32 %v6189, %v6211
        %v6228 = vadd.f32 %v6190, %v6211
        %v6229 = vadd.f32 %v6191, %v6211
        %v6230 = vadd.f32 %v6192, %v6211
        %v6231 = vadd.f32 %v6193, %v6211
        %v6232 = vadd.f32 %v6194, %v6211
        %v6233 = vadd.f32 %v6195, %v6211
        %v6234 = vadd.f32 %v6196, %v6211
        %v6235 = vadd.f32 %v6197, %v6211
        %v6236 = vadd.f32 %v6198, %v6211
        %v6237 = vadd.f32 %v6199, %v6211
        %v6238 = vadd.f32 %v6200, %v6211
        %v6239 = vadd.f32 %v6201, %v6211
        %v6240 = vadd.f32 %v6202, %v6211
        %v6241 = vadd.f32 %v6203, %v6211
        %v6242 = vadd.f32 %v6204, %v6211
        %v6243 = vadd.f32 %v6205, %v6211
        %v6244 = vadd.f32 %v6206, %v6211
        %v6245 = vmax.f32 %v6213, 0.0
        %v6246 = vmax.f32 %v6214, 0.0
        %v6247 = vmax.f32 %v6215, 0.0
        %v6248 = vmax.f32 %v6216, 0.0
        %v6249 = vmax.f32 %v6217, 0.0
        %v6250 = vmax.f32 %v6218, 0.0
        %v6251 = vmax.f32 %v6219, 0.0
        %v6252 = vmax.f32 %v6220, 0.0
        %v6253 = vmax.f32 %v6221, 0.0
        %v6254 = vmax.f32 %v6222, 0.0
        %v6255 = vmax.f32 %v6223, 0.0
        %v6256 = vmax.f32 %v6224, 0.0
        %v6257 = vmax.f32 %v6225, 0.0
        %v6258 = vmax.f32 %v6226, 0.0
        %v6259 = vmax.f32 %v6227, 0.0
        %v6260 = vmax.f32 %v6228, 0.0
        %v6261 = vmax.f32 %v6229, 0.0
        %v6262 = vmax.f32 %v6230, 0.0
        %v6263 = vmax.f32 %v6231, 0.0
        %v6264 = vmax.f32 %v6232, 0.0
        %v6265 = vmax.f32 %v6233, 0.0
        %v6266 = vmax.f32 %v6234, 0.0
        %v6267 = vmax.f32 %v6235, 0.0
        %v6268 = vmax.f32 %v6236, 0.0
        %v6269 = vmax.f32 %v6237, 0.0
        %v6270 = vmax.f32 %v6238, 0.0
        %v6271 = vmax.f32 %v6239, 0.0
        %v6272 = vmax.f32 %v6240, 0.0
        %v6273 = vmax.f32 %v6241, 0.0
        %v6274 = vmax.f32 %v6242, 0.0
        %v6275 = vmax.f32 %v6243, 0.0
        %v6276 = vmax.f32 %v6244, 0.0
        %v6277 = vsel %vm3308, %v6245, -inf
        %v6278 = vsel %vm3308, %v6247, -inf
        %v6279 = vmax.f32 %v6277, %v6278
        %v6280 = vsel %vm3308, %v6246, -inf
        %v6281 = vsel %vm3308, %v6248, -inf
        %v6282 = vmax.f32 %v6280, %v6281
        %v6283 = vsel %vm3308, %v6249, -inf
        %v6284 = vsel %vm3308, %v6251, -inf
        %v6285 = vmax.f32 %v6283, %v6284
        %v6286 = vsel %vm3308, %v6250, -inf
        %v6287 = vsel %vm3308, %v6252, -inf
        %v6288 = vmax.f32 %v6286, %v6287
        %v6289 = vsel %vm3308, %v6253, -inf
        %v6290 = vsel %vm3308, %v6255, -inf
        %v6291 = vmax.f32 %v6289, %v6290
        %v6292 = vsel %vm3308, %v6254, -inf
        %v6293 = vsel %vm3308, %v6256, -inf
        %v6294 = vmax.f32 %v6292, %v6293
        %v6295 = vsel %vm3308, %v6257, -inf
        %v6296 = vsel %vm3308, %v6259, -inf
        %v6297 = vmax.f32 %v6295, %v6296
        %v6298 = vsel %vm3308, %v6258, -inf
        %v6299 = vsel %vm3308, %v6260, -inf
        %v6300 = vmax.f32 %v6298, %v6299
        %v6301 = vsel %vm3308, %v6261, -inf
        %v6302 = vsel %vm3308, %v6263, -inf
        %v6303 = vmax.f32 %v6301, %v6302
        %v6304 = vsel %vm3308, %v6262, -inf
        %v6305 = vsel %vm3308, %v6264, -inf
        %v6306 = vmax.f32 %v6304, %v6305
        %v6307 = vsel %vm3308, %v6265, -inf
        %v6308 = vsel %vm3308, %v6267, -inf
        %v6309 = vmax.f32 %v6307, %v6308
        %v6310 = vsel %vm3308, %v6266, -inf
        %v6311 = vsel %vm3308, %v6268, -inf
        %v6312 = vmax.f32 %v6310, %v6311
        %v6313 = vsel %vm3308, %v6269, -inf
        %v6314 = vsel %vm3308, %v6271, -inf
        %v6315 = vmax.f32 %v6313, %v6314
        %v6316 = vsel %vm3308, %v6270, -inf
        %v6317 = vsel %vm3308, %v6272, -inf
        %v6318 = vmax.f32 %v6316, %v6317
        %v6319 = vsel %vm3308, %v6273, -inf
        %v6320 = vsel %vm3308, %v6275, -inf
        %v6321 = vmax.f32 %v6319, %v6320
        %v6322 = vsel %vm3308, %v6274, -inf
        %v6323 = vsel %vm3308, %v6276, -inf
        %v6324 = vmax.f32 %v6322, %v6323
        %6325 = vst.msk [vmem:[#allocation4] sm:$0xff] %vm3308, %v6279
        %6326 = vst.msk [vmem:[#allocation4 + $0x8] sm:$0xff] %vm3308, %v6282
        %6327 = vst.msk [vmem:[#allocation4 + $0x10] sm:$0xff] %vm3308, %v6285
        %6328 = vst.msk [vmem:[#allocation4 + $0x18] sm:$0xff] %vm3308, %v6288
        %6329 = vst.msk [vmem:[#allocation4 + $0x20] sm:$0xff] %vm3308, %v6291
        %6330 = vst.msk [vmem:[#allocation4 + $0x28] sm:$0xff] %vm3308, %v6294
        %6331 = vst.msk [vmem:[#allocation4 + $0x30] sm:$0xff] %vm3308, %v6297
        %6332 = vst.msk [vmem:[#allocation4 + $0x38] sm:$0xff] %vm3308, %v6300
        %6333 = vst.msk [vmem:[#allocation4 + $0x40] sm:$0xff] %vm3308, %v6303
        %6334 = vst.msk [vmem:[#allocation4 + $0x48] sm:$0xff] %vm3308, %v6306
        %6335 = vst.msk [vmem:[#allocation4 + $0x50] sm:$0xff] %vm3308, %v6309
        %6336 = vst.msk [vmem:[#allocation4 + $0x58] sm:$0xff] %vm3308, %v6312
        %6337 = vst.msk [vmem:[#allocation4 + $0x60] sm:$0xff] %vm3308, %v6315
        %6338 = vst.msk [vmem:[#allocation4 + $0x68] sm:$0xff] %vm3308, %v6318
        %6339 = vst.msk [vmem:[#allocation4 + $0x70] sm:$0xff] %vm3308, %v6321
        %6340 = vst.msk [vmem:[#allocation4 + $0x78] sm:$0xff] %vm3308, %v6324
        %v6341 = vld [vmem:[#allocation4] ss:$2 sm:$0xff]
        %s6342 = scalar_lea.vmem [#allocation4], 16
        %v6343 = vld [vmem:[%s6342] ss:$2 sm:$0xff]
        %s6344 = scalar_lea.vmem [#allocation4], 32
        %v6345 = vld [vmem:[%s6344] ss:$2 sm:$0xff]
        %s6346 = scalar_lea.vmem [#allocation4], 48
        %v6347 = vld [vmem:[%s6346] ss:$2 sm:$0xff]
        %s6348 = scalar_lea.vmem [#allocation4], 64
        %v6349 = vld [vmem:[%s6348] ss:$2 sm:$0xff]
        %s6350 = scalar_lea.vmem [#allocation4], 80
        %v6351 = vld [vmem:[%s6350] ss:$2 sm:$0xff]
        %s6352 = scalar_lea.vmem [#allocation4], 96
        %v6353 = vld [vmem:[%s6352] ss:$2 sm:$0xff]
        %s6354 = scalar_lea.vmem [#allocation4], 112
        %v6355 = vld [vmem:[%s6354] ss:$2 sm:$0xff]
        %s6356 = scalar_lea.vmem [#allocation4], 1
        %v6357 = vld [vmem:[%s6356] ss:$2 sm:$0xff]
        %s6358 = scalar_lea.vmem [#allocation4], 17
        %v6359 = vld [vmem:[%s6358] ss:$2 sm:$0xff]
        %s6360 = scalar_lea.vmem [#allocation4], 33
        %v6361 = vld [vmem:[%s6360] ss:$2 sm:$0xff]
        %s6362 = scalar_lea.vmem [#allocation4], 49
        %v6363 = vld [vmem:[%s6362] ss:$2 sm:$0xff]
        %s6364 = scalar_lea.vmem [#allocation4], 65
        %v6365 = vld [vmem:[%s6364] ss:$2 sm:$0xff]
        %s6366 = scalar_lea.vmem [#allocation4], 81
        %v6367 = vld [vmem:[%s6366] ss:$2 sm:$0xff]
        %s6368 = scalar_lea.vmem [#allocation4], 97
        %v6369 = vld [vmem:[%s6368] ss:$2 sm:$0xff]
        %s6370 = scalar_lea.vmem [#allocation4], 113
        %v6371 = vld [vmem:[%s6370] ss:$2 sm:$0xff]
        %v6372 = vmax.f32 %v6341, %v6357
        %v6373 = vmax.f32 %v6343, %v6359
        %v6374 = vmax.f32 %v6345, %v6361
        %v6375 = vmax.f32 %v6347, %v6363
        %v6376 = vmax.f32 %v6349, %v6365
        %v6377 = vmax.f32 %v6351, %v6367
        %v6378 = vmax.f32 %v6353, %v6369
        %v6379 = vmax.f32 %v6355, %v6371
        %6380 = vst.msk [vmem:[%s271] sm:$0xff] %vm3308, %v6372
        %6381 = vst.msk [vmem:[%s271 + $0x8] sm:$0xff] %vm3308, %v6373
        %6382 = vst.msk [vmem:[%s271 + $0x10] sm:$0xff] %vm3308, %v6374
        %6383 = vst.msk [vmem:[%s271 + $0x18] sm:$0xff] %vm3308, %v6375
        %6384 = vst.msk [vmem:[%s271 + $0x20] sm:$0xff] %vm3308, %v6376
        %6385 = vst.msk [vmem:[%s271 + $0x28] sm:$0xff] %vm3308, %v6377
        %6386 = vst.msk [vmem:[%s271 + $0x30] sm:$0xff] %vm3308, %v6378
        %6387 = vst.msk [vmem:[%s271 + $0x38] sm:$0xff] %vm3308, %v6379
        %s6388 = sand.u32 %s181, 1
        %s6389 = scalar_lea.sflag [#allocation6], %s6388
        %s6390 = sand.u32 %s181, 1
        %s6391 = smul.addr %s6390, 64
        %s6392 = scalar_lea.vmem [#allocation5], %s6391
        // Predicated region
        $region49: #{tpu_custom_call.1} parent=47 // pred_check
          %p6393 = pneg %p191
        $region50: #{tpu_custom_call.1} parent=47 // pred_check_branch
          %6395 = sbr.rel (%p6393) target = $region52
        $region51: #{tpu_custom_call.1} parent=47 // pred_region
          %s6397 = ssub.s32 1024, 1024
          %6398 = vsyncadd %s6389, %s6397
          %s6399 = smul.addr %s21, 8
          %s6400 = smul.addr %s6399, 128
          %s6401 = scalar_lea.hbm %s7, %s6400
          %s6402 = sshll.u32 %s6392, 4
          %s6403 = int_to_ptr.vmem [resolvable:$true] %s6402
          %6408 = dma.vmem_to_hbm [thread:$0]  %s6403, 1024, %s6401, %s6389, 128, 128, 8
        $region52: #{tpu_custom_call.1} parent=47 // pred_fallthru
          _
      $region48: #{tpu_custom_call.1} parent=5 // pred_fallthru
        _
      %p6409 = scmp.le.s32.totalorder 2, %s16
      // Predicated region
      $region53: #{tpu_custom_call.1} parent=5 // pred_check
        %p6410 = pneg %p6409
      $region54: #{tpu_custom_call.1} parent=5 // pred_check_branch
        %6412 = sbr.rel (%p6410) target = $region56
      $region55: #{tpu_custom_call.1} parent=5 // pred_region
        %s6413 = ssub.s32 %s16, 2
        // Predicated region
        $region57: #{tpu_custom_call.1} parent=55 // pred_check
          %p6414 = pneg %p197
        $region58: #{tpu_custom_call.1} parent=55 // pred_check_branch
          %6416 = sbr.rel (%p6414) target = $region60
        $region59: #{tpu_custom_call.1} parent=55 // pred_region
          %s6417 = sand.u32 %s182, 1
          %s6418 = scalar_lea.sflag [#allocation6], %s6417
          %s6419 = sand.u32 %s182, 1
          %s6420 = smul.addr %s6419, 64
          %s6421 = scalar_lea.vmem [#allocation5], %s6420
          %6422 = dma.done %s6418, 1024
        $region60: #{tpu_custom_call.1} parent=55 // pred_fallthru
          _
      $region56: #{tpu_custom_call.1} parent=5 // pred_fallthru
        _
    $region6: #{tpu_custom_call.1} parent=1 // loop_footer
      %s20 = sadd.s32 1, %s16
    $region7: #{tpu_custom_call.1} parent=1 // loop_footer_branch
      %15 = sbr.rel target = $region3
    $region8: #{tpu_custom_call.1} parent=1 // loop_exit
      _
    %6423 = vsyncpa [#allocation6], 1
    %s6424 = scalar_lea.sflag [#allocation6], 1
    %6425 = vsyncpa %s6424, 1

</llo_original>
